<compile_context>
chip_gen: v5e
topology: v5e:2x2
jax: 0.10.0
libtpu: 0.0.40
codegen_flags: <defaults>
</compile_context>

<pallas_src>
import functools

import jax
import jax.numpy as jnp
from jax.experimental import pallas as pl
from jax.experimental.pallas import tpu as pltpu


# ------------------------------ helpers ------------------------------------ #

def _round_up(x, m):
    return (x + m - 1) // m * m


# --------------------------- Pallas kernels -------------------------------- #

def _matmul_kernel(*refs, slope, apply_act, add_bias):
    """Tiled (tm,tk)@(tk,tn) matmul with f32 accumulator and fused epilogue."""
    if add_bias:
        a_ref, b_ref, bias_ref, o_ref, acc_ref = refs
    else:
        a_ref, b_ref, o_ref, acc_ref = refs
        bias_ref = None

    @pl.when(pl.program_id(2) == 0)
    def _():
        acc_ref[...] = jnp.zeros_like(acc_ref)

    acc_ref[...] += jnp.dot(a_ref[...], b_ref[...],
                            preferred_element_type=jnp.float32)

    @pl.when(pl.program_id(2) == pl.num_programs(2) - 1)
    def _():
        acc = acc_ref[...]
        if add_bias:
            acc = acc + bias_ref[...]          # (1, tn) broadcasts over rows
        if apply_act:
            acc = jnp.where(acc >= 0, acc, slope * acc)   # LeakyReLU(0.2)
        o_ref[...] = acc.astype(o_ref.dtype)


def matmul_bias_act(a, b, bias, *, slope=0.2, apply_act=False, add_bias=True):
    """(M,K)@(K,N) [+bias] [+LeakyReLU] with a tiled, pipelined Pallas matmul.

    a, b expected in bf16; accumulation in f32; output f32 of shape (M, N).
    """
    M, K = a.shape
    Kb, N = b.shape
    assert K == Kb

    # Tile sizes: lane/sublane aligned, VMEM-budgeted for all of v5e/v6e/v7x.
    tm = 512 if M >= 512 else _round_up(M, 8)
    tn = 256 if N >= 256 else _round_up(N, 128)
    tk = 512 if K >= 512 else _round_up(K, 128)
    Mp, Np, Kp = _round_up(M, tm), _round_up(N, tn), _round_up(K, tk)

    a_p = a if (Mp == M and Kp == K) else jnp.pad(a, ((0, Mp - M), (0, Kp - K)))
    b_p = b if (Kp == K and Np == N) else jnp.pad(b, ((0, Kp - K), (0, Np - N)))

    in_specs = [
        pl.BlockSpec((tm, tk), lambda i, j, k: (i, k)),
        pl.BlockSpec((tk, tn), lambda i, j, k: (k, j)),
    ]
    args = [a_p, b_p]
    if add_bias:
        bias_p = bias.astype(jnp.float32)
        if Np != N:
            bias_p = jnp.pad(bias_p, (0, Np - N))
        args.append(bias_p.reshape(1, Np))
        in_specs.append(pl.BlockSpec((1, tn), lambda i, j, k: (0, j)))

    kernel = functools.partial(_matmul_kernel, slope=slope,
                               apply_act=apply_act, add_bias=add_bias)

    bytes_accessed = int(a_p.size * 2 + b_p.size * 2 + Mp * Np * 4)
    out = pl.pallas_call(
        kernel,
        out_shape=jax.ShapeDtypeStruct((Mp, Np), jnp.float32),
        grid_spec=pltpu.PrefetchScalarGridSpec(
            num_scalar_prefetch=0,
            grid=(Mp // tm, Np // tn, Kp // tk),
            in_specs=in_specs,
            out_specs=pl.BlockSpec((tm, tn), lambda i, j, k: (i, j)),
            scratch_shapes=[pltpu.VMEM((tm, tn), jnp.float32)]),
        compiler_params=pltpu.CompilerParams(
            dimension_semantics=("parallel", "parallel", "arbitrary"),
            vmem_limit_bytes=48 * 1024 * 1024),
        cost_estimate=pl.CostEstimate(flops=2 * Mp * Np * Kp,
                                      transcendentals=0,
                                      bytes_accessed=bytes_accessed),
    )(*args)

    if Mp != M or Np != N:
        out = out[:M, :N]
    return out


def _inorm_lrelu_kernel(x_ref, o_ref, *, eps, slope):
    x = x_ref[...].astype(jnp.float32)                 # (1, H*W, tc)
    mean = jnp.mean(x, axis=1, keepdims=True)
    var = jnp.mean(jnp.square(x - mean), axis=1, keepdims=True)  # biased (PyTorch IN)
    y = (x - mean) * jax.lax.rsqrt(var + eps)
    o_ref[...] = jnp.where(y >= 0, y, slope * y).astype(o_ref.dtype)


def instance_norm_lrelu_nhwc(x, *, eps=1e-5, slope=0.2):
    """InstanceNorm2d(affine=False) + LeakyReLU(0.2) on an NHWC activation."""
    N, H, W, C = x.shape
    HW = H * W
    tc = 128 if C % 128 == 0 else C
    x3 = x.reshape(N, HW, C)
    kernel = functools.partial(_inorm_lrelu_kernel, eps=eps, slope=slope)
    out = pl.pallas_call(
        kernel,
        out_shape=jax.ShapeDtypeStruct((N, HW, C), x.dtype),
        grid_spec=pltpu.PrefetchScalarGridSpec(
            num_scalar_prefetch=0,
            grid=(N, C // tc),
            in_specs=[pl.BlockSpec((1, HW, tc), lambda n, c: (n, 0, c))],
            out_specs=pl.BlockSpec((1, HW, tc), lambda n, c: (n, 0, c))),
        compiler_params=pltpu.CompilerParams(
            dimension_semantics=("parallel", "parallel")),
    )(x3)
    return out.reshape(N, H, W, C)


# ------------------------------- JAX glue ----------------------------------- #

def im2col_nhwc(x, k, stride, pad):
    """NHWC -> (N*Ho*Wo, k*k*C) patch matrix (column order kh, kw, C). Reshape-only output."""
    N, H, W, C = x.shape
    xp = jnp.pad(x, ((0, 0), (pad, pad), (pad, pad), (0, 0)))
    Ho = (H + 2 * pad - k) // stride + 1
    Wo = (W + 2 * pad - k) // stride + 1
    cols = []
    for i in range(k):
        for j in range(k):
            cols.append(xp[:, i:i + stride * Ho:stride, j:j + stride * Wo:stride, :])
    col = jnp.concatenate(cols, axis=-1)               # (N, Ho, Wo, k*k*C)
    return col.reshape(N * Ho * Wo, k * k * C), Ho, Wo


def conv2d_layer_nhwc(x, w, b, *, stride, pad, apply_act=False, add_bias=True,
                      slope=0.2):
    """Conv2d (PyTorch OIHW weight) on NHWC input via im2col + tiled Pallas matmul."""
    Cout, Cin, k, _ = w.shape
    N = x.shape[0]
    col, Ho, Wo = im2col_nhwc(x.astype(jnp.bfloat16), k, stride, pad)
    # OIHW -> (kh, kw, Cin, Cout) -> (k*k*Cin, Cout): matches im2col column order.
    w2 = jnp.transpose(w, (2, 3, 1, 0)).reshape(k * k * Cin, Cout).astype(jnp.bfloat16)
    out = matmul_bias_act(col, w2, b, slope=slope,
                          apply_act=apply_act, add_bias=add_bias)
    return out.reshape(N, Ho, Wo, Cout)                # NHWC, lane-dense Cout


# Layer configs: (Cin, Cout, k, stride, pad, kind)
LAYER_CFG = [
    (3,   64,  4, 2, 1, "lrelu"),   # conv + fused LeakyReLU
    (64,  128, 4, 2, 1, "in"),      # conv (bias dropped) + InstanceNorm + LReLU
    (128, 256, 4, 2, 1, "in"),
    (256, 512, 4, 1, 1, "in"),
    (512, 1,   4, 1, 1, "none"),    # final conv: bias, no norm, no activation
]


def init_params(key):
    params = []
    for (cin, cout, k, _, _, _) in LAYER_CFG:
        key, wk = jax.random.split(key)
        w = 0.02 * jax.random.normal(wk, (cout, cin, k, k), jnp.float32)  # normal(0, 0.02)
        b = jnp.zeros((cout,), jnp.float32)
        params.append((w, b))
    return params


def discriminator_forward(x_nchw, params):
    x = jnp.transpose(x_nchw, (0, 2, 3, 1))            # NCHW -> NHWC (once)
    for (w, b), (_, _, _, stride, pad, kind) in zip(params, LAYER_CFG):
        if kind == "in":
            # bias before InstanceNorm is mathematically cancelled -> skip it
            x = conv2d_layer_nhwc(x, w, b, stride=stride, pad=pad,
                                  apply_act=False, add_bias=False)
            x = instance_norm_lrelu_nhwc(x)
        elif kind == "lrelu":
            x = conv2d_layer_nhwc(x, w, b, stride=stride, pad=pad,
                                  apply_act=True, add_bias=True)
        else:
            x = conv2d_layer_nhwc(x, w, b, stride=stride, pad=pad,
                                  apply_act=False, add_bias=True)
    return jnp.transpose(x, (0, 3, 1, 2))              # NHWC -> NCHW (once)


# ------------------------- pure-JAX reference check ------------------------- #

def _ref_forward(x, params):
    """Reference with the same numerics (bf16 conv inputs, f32 accumulate)."""
    def conv(x, w, b, stride, pad):
        y = jax.lax.conv_general_dilated(
            x.astype(jnp.bfloat16), w.astype(jnp.bfloat16),
            window_strides=(stride, stride),
            padding=((pad, pad), (pad, pad)),
            dimension_numbers=("NCHW", "OIHW", "NCHW"),
            preferred_element_type=jnp.float32)
        return y + b.reshape(1, -1, 1, 1)

    def lrelu(x):
        return jnp.where(x >= 0, x, 0.2 * x)

    def inorm(x, eps=1e-5):
        m = jnp.mean(x, axis=(2, 3), keepdims=True)
        v = jnp.mean((x - m) ** 2, axis=(2, 3), keepdims=True)
        return (x - m) * jax.lax.rsqrt(v + eps)

    for (w, b), (_, _, _, stride, pad, kind) in zip(params, LAYER_CFG):
        x = conv(x, w, b, stride, pad)
        if kind == "in":
            x = lrelu(inorm(x))
        elif kind == "lrelu":
            x = lrelu(x)
    return x


# ----------------------------------- main ------------------------------------ #

if __name__ == "__main__":
    key = jax.random.PRNGKey(0)
    pkey, xkey = jax.random.split(key)
    params = init_params(pkey)

    # Small input consistent with Conv2d(3, ...): batch=2, C=3, 32x32 spatial.
    x = jax.random.normal(xkey, (2, 3, 32, 32), jnp.float32)

    fwd = jax.jit(discriminator_forward)
    out = jax.block_until_ready(fwd(x, params))
    assert out.shape == (2, 1, 2, 2), out.shape

    ref = jax.block_until_ready(_ref_forward(x, params))
    max_err = float(jnp.max(jnp.abs(out - ref)))
    assert jnp.allclose(out, ref, rtol=2e-2, atol=2e-2), max_err

    print("KERNEL_OK")
</pallas_src>

<mosaic_0001>
module attributes {stable_mosaic.version = 11 : i64} {
  func.func @_matmul_kernel(%arg0: i32, %arg1: i32, %arg2: i32, %arg3: memref<512x128xbf16, #tpu.memory_space<vmem>>, %arg4: memref<128x128xbf16, #tpu.memory_space<vmem>>, %arg5: memref<1x128xf32, #tpu.memory_space<vmem>>, %arg6: memref<512x128xf32, #tpu.memory_space<vmem>>, %arg7: memref<512x128xf32, #tpu.memory_space<vmem>>) attributes {dimension_semantics = [#tpu.dimension_semantics<parallel>, #tpu.dimension_semantics<parallel>, #tpu.dimension_semantics<arbitrary>], iteration_bounds = array<i64: 1, 1, 1>, scalar_prefetch = 0 : i64, scratch_operands = 1 : i64, tpu.core_type = #tpu.core_type<tc>, window_params = [{transform_indices = @transform_0, window_bounds = array<i64: 512, 128>}, {transform_indices = @transform_1, window_bounds = array<i64: 128, 128>}, {transform_indices = @transform_2, window_bounds = array<i64: 1, 128>}, {transform_indices = @transform_3, window_bounds = array<i64: 512, 128>}]} {
    %c0_i32 = arith.constant 0 : i32
    %0 = arith.cmpi eq, %arg2, %c0_i32 : i32
    %1 = arith.extui %0 : i1 to i32
    %c0_i32_0 = arith.constant 0 : i32
    %2 = arith.cmpi ne, %1, %c0_i32_0 : i32
    scf.if %2 {
      %cst_10 = arith.constant 0.000000e+00 : f32
      %12 = vector.broadcast %cst_10 : f32 to vector<512x128xf32>
      %c0_11 = arith.constant 0 : index
      %c0_12 = arith.constant 0 : index
      %13 = vector.load %arg7[%c0_11, %c0_12] : memref<512x128xf32, #tpu.memory_space<vmem>>, vector<512x128xf32>
      tpu.vector_store %arg7[%c0_11, %c0_12], %12 {strides = array<i32>} : memref<512x128xf32, #tpu.memory_space<vmem>>, vector<512x128xf32>,
    } else {
    }
    %c0 = arith.constant 0 : index
    %c0_1 = arith.constant 0 : index
    %3 = vector.load %arg7[%c0, %c0_1] : memref<512x128xf32, #tpu.memory_space<vmem>>, vector<512x128xf32>
    %c0_2 = arith.constant 0 : index
    %c0_3 = arith.constant 0 : index
    %4 = vector.load %arg3[%c0_2, %c0_3] : memref<512x128xbf16, #tpu.memory_space<vmem>>, vector<512x128xbf16>
    %c0_4 = arith.constant 0 : index
    %c0_5 = arith.constant 0 : index
    %5 = vector.load %arg4[%c0_4, %c0_5] : memref<128x128xbf16, #tpu.memory_space<vmem>>, vector<128x128xbf16>
    %cst = arith.constant dense<0.000000e+00> : vector<512x128xf32>
    %6 = tpu.matmul %4, %5, %cst {dimension_numbers = #tpu.dot_dimension_numbers<[1], [0], [0], [1], [0, 0, 1, 1], [], []>} : vector<512x128xbf16>, vector<128x128xbf16>, vector<512x128xf32> -> vector<512x128xf32>
    %7 = arith.addf %3, %6 : vector<512x128xf32>
    %c0_6 = arith.constant 0 : index
    %c0_7 = arith.constant 0 : index
    %8 = vector.load %arg7[%c0_6, %c0_7] : memref<512x128xf32, #tpu.memory_space<vmem>>, vector<512x128xf32>
    tpu.vector_store %arg7[%c0_6, %c0_7], %7 {strides = array<i32>} : memref<512x128xf32, #tpu.memory_space<vmem>>, vector<512x128xf32>,
    %c0_i32_8 = arith.constant 0 : i32
    %9 = arith.cmpi eq, %arg2, %c0_i32_8 : i32
    %10 = arith.extui %9 : i1 to i32
    %c0_i32_9 = arith.constant 0 : i32
    %11 = arith.cmpi ne, %10, %c0_i32_9 : i32
    scf.if %11 {
      %c0_10 = arith.constant 0 : index
      %c0_11 = arith.constant 0 : index
      %12 = vector.load %arg7[%c0_10, %c0_11] : memref<512x128xf32, #tpu.memory_space<vmem>>, vector<512x128xf32>
      %c0_12 = arith.constant 0 : index
      %c0_13 = arith.constant 0 : index
      %13 = vector.load %arg5[%c0_12, %c0_13] : memref<1x128xf32, #tpu.memory_space<vmem>>, vector<1x128xf32>
      %14 = vector.broadcast %13 : vector<1x128xf32> to vector<512x128xf32>
      %15 = arith.addf %12, %14 : vector<512x128xf32>
      %cst_14 = arith.constant 0.000000e+00 : f32
      %16 = vector.broadcast %cst_14 : f32 to vector<512x128xf32>
      %17 = arith.cmpf oge, %15, %16 : vector<512x128xf32>
      %cst_15 = arith.constant 2.000000e-01 : f32
      %18 = vector.broadcast %cst_15 : f32 to vector<512x128xf32>
      %19 = arith.mulf %18, %15 : vector<512x128xf32>
      %20 = arith.select %17, %15, %19 : vector<512x128xi1>, vector<512x128xf32>
      %c0_16 = arith.constant 0 : index
      %c0_17 = arith.constant 0 : index
      %21 = vector.load %arg6[%c0_16, %c0_17] : memref<512x128xf32, #tpu.memory_space<vmem>>, vector<512x128xf32>
      tpu.vector_store %arg6[%c0_16, %c0_17], %20 {strides = array<i32>} : memref<512x128xf32, #tpu.memory_space<vmem>>, vector<512x128xf32>,
    } else {
    }
    return
  }
  func.func @transform_0(%arg0: i32, %arg1: i32, %arg2: i32) -> (i32, i32) {
    %c0_i32 = arith.constant 0 : i32
    return %arg0, %arg2 : i32, i32
  }
  func.func @transform_1(%arg0: i32, %arg1: i32, %arg2: i32) -> (i32, i32) {
    %c0_i32 = arith.constant 0 : i32
    return %arg2, %arg1 : i32, i32
  }
  func.func @transform_2(%arg0: i32, %arg1: i32, %arg2: i32) -> (i32, i32) {
    %c0_i32 = arith.constant 0 : i32
    %c0_i32_0 = arith.constant 0 : i32
    return %c0_i32, %arg1 : i32, i32
  }
  func.func @transform_3(%arg0: i32, %arg1: i32, %arg2: i32) -> (i32, i32) {
    %c0_i32 = arith.constant 0 : i32
    return %arg0, %arg1 : i32, i32
  }
}

module attributes {stable_mosaic.version = 11 : i64} {
  func.func @_matmul_kernel(%arg0: i32, %arg1: i32, %arg2: i32, %arg3: memref<128x512xbf16, #tpu.memory_space<vmem>>, %arg4: memref<512x128xbf16, #tpu.memory_space<vmem>>, %arg5: memref<128x128xf32, #tpu.memory_space<vmem>>, %arg6: memref<128x128xf32, #tpu.memory_space<vmem>>) attributes {dimension_semantics = [#tpu.dimension_semantics<parallel>, #tpu.dimension_semantics<parallel>, #tpu.dimension_semantics<arbitrary>], iteration_bounds = array<i64: 1, 1, 2>, scalar_prefetch = 0 : i64, scratch_operands = 1 : i64, tpu.core_type = #tpu.core_type<tc>, window_params = [{transform_indices = @transform_0, window_bounds = array<i64: 128, 512>}, {transform_indices = @transform_1, window_bounds = array<i64: 512, 128>}, {transform_indices = @transform_2, window_bounds = array<i64: 128, 128>}]} {
    %c0_i32 = arith.constant 0 : i32
    %0 = arith.cmpi eq, %arg2, %c0_i32 : i32
    %1 = arith.extui %0 : i1 to i32
    %c0_i32_0 = arith.constant 0 : i32
    %2 = arith.cmpi ne, %1, %c0_i32_0 : i32
    scf.if %2 {
      %cst_9 = arith.constant 0.000000e+00 : f32
      %12 = vector.broadcast %cst_9 : f32 to vector<128x128xf32>
      %c0_10 = arith.constant 0 : index
      %c0_11 = arith.constant 0 : index
      %13 = vector.load %arg6[%c0_10, %c0_11] : memref<128x128xf32, #tpu.memory_space<vmem>>, vector<128x128xf32>
      tpu.vector_store %arg6[%c0_10, %c0_11], %12 {strides = array<i32>} : memref<128x128xf32, #tpu.memory_space<vmem>>, vector<128x128xf32>,
    } else {
    }
    %c0 = arith.constant 0 : index
    %c0_1 = arith.constant 0 : index
    %3 = vector.load %arg6[%c0, %c0_1] : memref<128x128xf32, #tpu.memory_space<vmem>>, vector<128x128xf32>
    %c0_2 = arith.constant 0 : index
    %c0_3 = arith.constant 0 : index
    %4 = vector.load %arg3[%c0_2, %c0_3] : memref<128x512xbf16, #tpu.memory_space<vmem>>, vector<128x512xbf16>
    %c0_4 = arith.constant 0 : index
    %c0_5 = arith.constant 0 : index
    %5 = vector.load %arg4[%c0_4, %c0_5] : memref<512x128xbf16, #tpu.memory_space<vmem>>, vector<512x128xbf16>
    %cst = arith.constant dense<0.000000e+00> : vector<128x128xf32>
    %6 = tpu.matmul %4, %5, %cst {dimension_numbers = #tpu.dot_dimension_numbers<[1], [0], [0], [1], [0, 0, 1, 1], [], []>} : vector<128x512xbf16>, vector<512x128xbf16>, vector<128x128xf32> -> vector<128x128xf32>
    %7 = arith.addf %3, %6 : vector<128x128xf32>
    %c0_6 = arith.constant 0 : index
    %c0_7 = arith.constant 0 : index
    %8 = vector.load %arg6[%c0_6, %c0_7] : memref<128x128xf32, #tpu.memory_space<vmem>>, vector<128x128xf32>
    tpu.vector_store %arg6[%c0_6, %c0_7], %7 {strides = array<i32>} : memref<128x128xf32, #tpu.memory_space<vmem>>, vector<128x128xf32>,
    %c1_i32 = arith.constant 1 : i32
    %9 = arith.cmpi eq, %arg2, %c1_i32 : i32
    %10 = arith.extui %9 : i1 to i32
    %c0_i32_8 = arith.constant 0 : i32
    %11 = arith.cmpi ne, %10, %c0_i32_8 : i32
    scf.if %11 {
      %c0_9 = arith.constant 0 : index
      %c0_10 = arith.constant 0 : index
      %12 = vector.load %arg6[%c0_9, %c0_10] : memref<128x128xf32, #tpu.memory_space<vmem>>, vector<128x128xf32>
      %c0_11 = arith.constant 0 : index
      %c0_12 = arith.constant 0 : index
      %13 = vector.load %arg5[%c0_11, %c0_12] : memref<128x128xf32, #tpu.memory_space<vmem>>, vector<128x128xf32>
      tpu.vector_store %arg5[%c0_11, %c0_12], %12 {strides = array<i32>} : memref<128x128xf32, #tpu.memory_space<vmem>>, vector<128x128xf32>,
    } else {
    }
    return
  }
  func.func @transform_0(%arg0: i32, %arg1: i32, %arg2: i32) -> (i32, i32) {
    %c0_i32 = arith.constant 0 : i32
    return %arg0, %arg2 : i32, i32
  }
  func.func @transform_1(%arg0: i32, %arg1: i32, %arg2: i32) -> (i32, i32) {
    %c0_i32 = arith.constant 0 : i32
    return %arg2, %arg1 : i32, i32
  }
  func.func @transform_2(%arg0: i32, %arg1: i32, %arg2: i32) -> (i32, i32) {
    %c0_i32 = arith.constant 0 : i32
    return %arg0, %arg1 : i32, i32
  }
}

module attributes {stable_mosaic.version = 11 : i64} {
  func.func @_inorm_lrelu_kernel(%arg0: i32, %arg1: i32, %arg2: memref<1x64x128xf32, #tpu.memory_space<vmem>>, %arg3: memref<1x64x128xf32, #tpu.memory_space<vmem>>) attributes {dimension_semantics = [#tpu.dimension_semantics<parallel>, #tpu.dimension_semantics<parallel>], iteration_bounds = array<i64: 2, 1>, scalar_prefetch = 0 : i64, scratch_operands = 0 : i64, tpu.core_type = #tpu.core_type<tc>, window_params = [{transform_indices = @transform_0, window_bounds = array<i64: 1, 64, 128>}, {transform_indices = @transform_1, window_bounds = array<i64: 1, 64, 128>}]} {
    %c0 = arith.constant 0 : index
    %c0_0 = arith.constant 0 : index
    %c0_1 = arith.constant 0 : index
    %0 = vector.load %arg2[%c0, %c0_0, %c0_1] : memref<1x64x128xf32, #tpu.memory_space<vmem>>, vector<1x64x128xf32>
    %cst = arith.constant dense<0.000000e+00> : vector<1x128xf32>
    %1 = vector.multi_reduction <add>, %0, %cst [1] : vector<1x64x128xf32> to vector<1x128xf32>
    %2 = vector.shape_cast %1 : vector<1x128xf32> to vector<1x1x128xf32>
    %cst_2 = arith.constant 6.400000e+01 : f32
    %3 = vector.broadcast %cst_2 : f32 to vector<1x1x128xf32>
    %4 = arith.divf %2, %3 : vector<1x1x128xf32>
    %5 = vector.broadcast %4 : vector<1x1x128xf32> to vector<1x64x128xf32>
    %6 = arith.subf %0, %5 : vector<1x64x128xf32>
    %7 = arith.mulf %6, %6 : vector<1x64x128xf32>
    %cst_3 = arith.constant dense<0.000000e+00> : vector<1x128xf32>
    %8 = vector.multi_reduction <add>, %7, %cst_3 [1] : vector<1x64x128xf32> to vector<1x128xf32>
    %9 = vector.shape_cast %8 : vector<1x128xf32> to vector<1x1x128xf32>
    %cst_4 = arith.constant 6.400000e+01 : f32
    %10 = vector.broadcast %cst_4 : f32 to vector<1x1x128xf32>
    %11 = arith.divf %9, %10 : vector<1x1x128xf32>
    %12 = vector.broadcast %4 : vector<1x1x128xf32> to vector<1x64x128xf32>
    %13 = arith.subf %0, %12 : vector<1x64x128xf32>
    %cst_5 = arith.constant 9.99999974E-6 : f32
    %14 = vector.broadcast %cst_5 : f32 to vector<1x1x128xf32>
    %15 = arith.addf %11, %14 : vector<1x1x128xf32>
    %16 = math.rsqrt %15 : vector<1x1x128xf32>
    %17 = vector.broadcast %16 : vector<1x1x128xf32> to vector<1x64x128xf32>
    %18 = arith.mulf %13, %17 : vector<1x64x128xf32>
    %cst_6 = arith.constant 0.000000e+00 : f32
    %19 = vector.broadcast %cst_6 : f32 to vector<1x64x128xf32>
    %20 = arith.cmpf oge, %18, %19 : vector<1x64x128xf32>
    %cst_7 = arith.constant 2.000000e-01 : f32
    %21 = vector.broadcast %cst_7 : f32 to vector<1x64x128xf32>
    %22 = arith.mulf %21, %18 : vector<1x64x128xf32>
    %23 = arith.select %20, %18, %22 : vector<1x64x128xi1>, vector<1x64x128xf32>
    %c0_8 = arith.constant 0 : index
    %c0_9 = arith.constant 0 : index
    %c0_10 = arith.constant 0 : index
    %24 = vector.load %arg3[%c0_8, %c0_9, %c0_10] : memref<1x64x128xf32, #tpu.memory_space<vmem>>, vector<1x64x128xf32>
    tpu.vector_store %arg3[%c0_8, %c0_9, %c0_10], %23 {strides = array<i32>} : memref<1x64x128xf32, #tpu.memory_space<vmem>>, vector<1x64x128xf32>,
    return
  }
  func.func @transform_0(%arg0: i32, %arg1: i32) -> (i32, i32, i32) {
    %c0_i32 = arith.constant 0 : i32
    %c0_i32_0 = arith.constant 0 : i32
    return %arg0, %c0_i32, %arg1 : i32, i32, i32
  }
  func.func @transform_1(%arg0: i32, %arg1: i32) -> (i32, i32, i32) {
    %c0_i32 = arith.constant 0 : i32
    %c0_i32_0 = arith.constant 0 : i32
    return %arg0, %c0_i32, %arg1 : i32, i32, i32
  }
}

module attributes {stable_mosaic.version = 11 : i64} {
  func.func @_matmul_kernel(%arg0: i32, %arg1: i32, %arg2: i32, %arg3: memref<32x512xbf16, #tpu.memory_space<vmem>>, %arg4: memref<512x256xbf16, #tpu.memory_space<vmem>>, %arg5: memref<32x256xf32, #tpu.memory_space<vmem>>, %arg6: memref<32x256xf32, #tpu.memory_space<vmem>>) attributes {dimension_semantics = [#tpu.dimension_semantics<parallel>, #tpu.dimension_semantics<parallel>, #tpu.dimension_semantics<arbitrary>], iteration_bounds = array<i64: 1, 1, 4>, scalar_prefetch = 0 : i64, scratch_operands = 1 : i64, tpu.core_type = #tpu.core_type<tc>, window_params = [{transform_indices = @transform_0, window_bounds = array<i64: 32, 512>}, {transform_indices = @transform_1, window_bounds = array<i64: 512, 256>}, {transform_indices = @transform_2, window_bounds = array<i64: 32, 256>}]} {
    %c0_i32 = arith.constant 0 : i32
    %0 = arith.cmpi eq, %arg2, %c0_i32 : i32
    %1 = arith.extui %0 : i1 to i32
    %c0_i32_0 = arith.constant 0 : i32
    %2 = arith.cmpi ne, %1, %c0_i32_0 : i32
    scf.if %2 {
      %cst_9 = arith.constant 0.000000e+00 : f32
      %12 = vector.broadcast %cst_9 : f32 to vector<32x256xf32>
      %c0_10 = arith.constant 0 : index
      %c0_11 = arith.constant 0 : index
      %13 = vector.load %arg6[%c0_10, %c0_11] : memref<32x256xf32, #tpu.memory_space<vmem>>, vector<32x256xf32>
      tpu.vector_store %arg6[%c0_10, %c0_11], %12 {strides = array<i32>} : memref<32x256xf32, #tpu.memory_space<vmem>>, vector<32x256xf32>,
    } else {
    }
    %c0 = arith.constant 0 : index
    %c0_1 = arith.constant 0 : index
    %3 = vector.load %arg6[%c0, %c0_1] : memref<32x256xf32, #tpu.memory_space<vmem>>, vector<32x256xf32>
    %c0_2 = arith.constant 0 : index
    %c0_3 = arith.constant 0 : index
    %4 = vector.load %arg3[%c0_2, %c0_3] : memref<32x512xbf16, #tpu.memory_space<vmem>>, vector<32x512xbf16>
    %c0_4 = arith.constant 0 : index
    %c0_5 = arith.constant 0 : index
    %5 = vector.load %arg4[%c0_4, %c0_5] : memref<512x256xbf16, #tpu.memory_space<vmem>>, vector<512x256xbf16>
    %cst = arith.constant dense<0.000000e+00> : vector<32x256xf32>
    %6 = tpu.matmul %4, %5, %cst {dimension_numbers = #tpu.dot_dimension_numbers<[1], [0], [0], [1], [0, 0, 1, 1], [], []>} : vector<32x512xbf16>, vector<512x256xbf16>, vector<32x256xf32> -> vector<32x256xf32>
    %7 = arith.addf %3, %6 : vector<32x256xf32>
    %c0_6 = arith.constant 0 : index
    %c0_7 = arith.constant 0 : index
    %8 = vector.load %arg6[%c0_6, %c0_7] : memref<32x256xf32, #tpu.memory_space<vmem>>, vector<32x256xf32>
    tpu.vector_store %arg6[%c0_6, %c0_7], %7 {strides = array<i32>} : memref<32x256xf32, #tpu.memory_space<vmem>>, vector<32x256xf32>,
    %c3_i32 = arith.constant 3 : i32
    %9 = arith.cmpi eq, %arg2, %c3_i32 : i32
    %10 = arith.extui %9 : i1 to i32
    %c0_i32_8 = arith.constant 0 : i32
    %11 = arith.cmpi ne, %10, %c0_i32_8 : i32
    scf.if %11 {
      %c0_9 = arith.constant 0 : index
      %c0_10 = arith.constant 0 : index
      %12 = vector.load %arg6[%c0_9, %c0_10] : memref<32x256xf32, #tpu.memory_space<vmem>>, vector<32x256xf32>
      %c0_11 = arith.constant 0 : index
      %c0_12 = arith.constant 0 : index
      %13 = vector.load %arg5[%c0_11, %c0_12] : memref<32x256xf32, #tpu.memory_space<vmem>>, vector<32x256xf32>
      tpu.vector_store %arg5[%c0_11, %c0_12], %12 {strides = array<i32>} : memref<32x256xf32, #tpu.memory_space<vmem>>, vector<32x256xf32>,
    } else {
    }
    return
  }
  func.func @transform_0(%arg0: i32, %arg1: i32, %arg2: i32) -> (i32, i32) {
    %c0_i32 = arith.constant 0 : i32
    return %arg0, %arg2 : i32, i32
  }
  func.func @transform_1(%arg0: i32, %arg1: i32, %arg2: i32) -> (i32, i32) {
    %c0_i32 = arith.constant 0 : i32
    return %arg2, %arg1 : i32, i32
  }
  func.func @transform_2(%arg0: i32, %arg1: i32, %arg2: i32) -> (i32, i32) {
    %c0_i32 = arith.constant 0 : i32
    return %arg0, %arg1 : i32, i32
  }
}

module attributes {stable_mosaic.version = 11 : i64} {
  func.func @_inorm_lrelu_kernel(%arg0: i32, %arg1: i32, %arg2: memref<1x16x128xf32, #tpu.memory_space<vmem>>, %arg3: memref<1x16x128xf32, #tpu.memory_space<vmem>>) attributes {dimension_semantics = [#tpu.dimension_semantics<parallel>, #tpu.dimension_semantics<parallel>], iteration_bounds = array<i64: 2, 2>, scalar_prefetch = 0 : i64, scratch_operands = 0 : i64, tpu.core_type = #tpu.core_type<tc>, window_params = [{transform_indices = @transform_0, window_bounds = array<i64: 1, 16, 128>}, {transform_indices = @transform_1, window_bounds = array<i64: 1, 16, 128>}]} {
    %c0 = arith.constant 0 : index
    %c0_0 = arith.constant 0 : index
    %c0_1 = arith.constant 0 : index
    %0 = vector.load %arg2[%c0, %c0_0, %c0_1] : memref<1x16x128xf32, #tpu.memory_space<vmem>>, vector<1x16x128xf32>
    %cst = arith.constant dense<0.000000e+00> : vector<1x128xf32>
    %1 = vector.multi_reduction <add>, %0, %cst [1] : vector<1x16x128xf32> to vector<1x128xf32>
    %2 = vector.shape_cast %1 : vector<1x128xf32> to vector<1x1x128xf32>
    %cst_2 = arith.constant 1.600000e+01 : f32
    %3 = vector.broadcast %cst_2 : f32 to vector<1x1x128xf32>
    %4 = arith.divf %2, %3 : vector<1x1x128xf32>
    %5 = vector.broadcast %4 : vector<1x1x128xf32> to vector<1x16x128xf32>
    %6 = arith.subf %0, %5 : vector<1x16x128xf32>
    %7 = arith.mulf %6, %6 : vector<1x16x128xf32>
    %cst_3 = arith.constant dense<0.000000e+00> : vector<1x128xf32>
    %8 = vector.multi_reduction <add>, %7, %cst_3 [1] : vector<1x16x128xf32> to vector<1x128xf32>
    %9 = vector.shape_cast %8 : vector<1x128xf32> to vector<1x1x128xf32>
    %cst_4 = arith.constant 1.600000e+01 : f32
    %10 = vector.broadcast %cst_4 : f32 to vector<1x1x128xf32>
    %11 = arith.divf %9, %10 : vector<1x1x128xf32>
    %12 = vector.broadcast %4 : vector<1x1x128xf32> to vector<1x16x128xf32>
    %13 = arith.subf %0, %12 : vector<1x16x128xf32>
    %cst_5 = arith.constant 9.99999974E-6 : f32
    %14 = vector.broadcast %cst_5 : f32 to vector<1x1x128xf32>
    %15 = arith.addf %11, %14 : vector<1x1x128xf32>
    %16 = math.rsqrt %15 : vector<1x1x128xf32>
    %17 = vector.broadcast %16 : vector<1x1x128xf32> to vector<1x16x128xf32>
    %18 = arith.mulf %13, %17 : vector<1x16x128xf32>
    %cst_6 = arith.constant 0.000000e+00 : f32
    %19 = vector.broadcast %cst_6 : f32 to vector<1x16x128xf32>
    %20 = arith.cmpf oge, %18, %19 : vector<1x16x128xf32>
    %cst_7 = arith.constant 2.000000e-01 : f32
    %21 = vector.broadcast %cst_7 : f32 to vector<1x16x128xf32>
    %22 = arith.mulf %21, %18 : vector<1x16x128xf32>
    %23 = arith.select %20, %18, %22 : vector<1x16x128xi1>, vector<1x16x128xf32>
    %c0_8 = arith.constant 0 : index
    %c0_9 = arith.constant 0 : index
    %c0_10 = arith.constant 0 : index
    %24 = vector.load %arg3[%c0_8, %c0_9, %c0_10] : memref<1x16x128xf32, #tpu.memory_space<vmem>>, vector<1x16x128xf32>
    tpu.vector_store %arg3[%c0_8, %c0_9, %c0_10], %23 {strides = array<i32>} : memref<1x16x128xf32, #tpu.memory_space<vmem>>, vector<1x16x128xf32>,
    return
  }
  func.func @transform_0(%arg0: i32, %arg1: i32) -> (i32, i32, i32) {
    %c0_i32 = arith.constant 0 : i32
    %c0_i32_0 = arith.constant 0 : i32
    return %arg0, %c0_i32, %arg1 : i32, i32, i32
  }
  func.func @transform_1(%arg0: i32, %arg1: i32) -> (i32, i32, i32) {
    %c0_i32 = arith.constant 0 : i32
    %c0_i32_0 = arith.constant 0 : i32
    return %arg0, %c0_i32, %arg1 : i32, i32, i32
  }
}

module attributes {stable_mosaic.version = 11 : i64} {
  func.func @_matmul_kernel(%arg0: i32, %arg1: i32, %arg2: i32, %arg3: memref<24x512xbf16, #tpu.memory_space<vmem>>, %arg4: memref<512x256xbf16, #tpu.memory_space<vmem>>, %arg5: memref<24x256xf32, #tpu.memory_space<vmem>>, %arg6: memref<24x256xf32, #tpu.memory_space<vmem>>) attributes {dimension_semantics = [#tpu.dimension_semantics<parallel>, #tpu.dimension_semantics<parallel>, #tpu.dimension_semantics<arbitrary>], iteration_bounds = array<i64: 1, 2, 8>, scalar_prefetch = 0 : i64, scratch_operands = 1 : i64, tpu.core_type = #tpu.core_type<tc>, window_params = [{transform_indices = @transform_0, window_bounds = array<i64: 24, 512>}, {transform_indices = @transform_1, window_bounds = array<i64: 512, 256>}, {transform_indices = @transform_2, window_bounds = array<i64: 24, 256>}]} {
    %c0_i32 = arith.constant 0 : i32
    %0 = arith.cmpi eq, %arg2, %c0_i32 : i32
    %1 = arith.extui %0 : i1 to i32
    %c0_i32_0 = arith.constant 0 : i32
    %2 = arith.cmpi ne, %1, %c0_i32_0 : i32
    scf.if %2 {
      %cst_9 = arith.constant 0.000000e+00 : f32
      %12 = vector.broadcast %cst_9 : f32 to vector<24x256xf32>
      %c0_10 = arith.constant 0 : index
      %c0_11 = arith.constant 0 : index
      %13 = vector.load %arg6[%c0_10, %c0_11] : memref<24x256xf32, #tpu.memory_space<vmem>>, vector<24x256xf32>
      tpu.vector_store %arg6[%c0_10, %c0_11], %12 {strides = array<i32>} : memref<24x256xf32, #tpu.memory_space<vmem>>, vector<24x256xf32>,
    } else {
    }
    %c0 = arith.constant 0 : index
    %c0_1 = arith.constant 0 : index
    %3 = vector.load %arg6[%c0, %c0_1] : memref<24x256xf32, #tpu.memory_space<vmem>>, vector<24x256xf32>
    %c0_2 = arith.constant 0 : index
    %c0_3 = arith.constant 0 : index
    %4 = vector.load %arg3[%c0_2, %c0_3] : memref<24x512xbf16, #tpu.memory_space<vmem>>, vector<24x512xbf16>
    %c0_4 = arith.constant 0 : index
    %c0_5 = arith.constant 0 : index
    %5 = vector.load %arg4[%c0_4, %c0_5] : memref<512x256xbf16, #tpu.memory_space<vmem>>, vector<512x256xbf16>
    %cst = arith.constant dense<0.000000e+00> : vector<24x256xf32>
    %6 = tpu.matmul %4, %5, %cst {dimension_numbers = #tpu.dot_dimension_numbers<[1], [0], [0], [1], [0, 0, 1, 1], [], []>} : vector<24x512xbf16>, vector<512x256xbf16>, vector<24x256xf32> -> vector<24x256xf32>
    %7 = arith.addf %3, %6 : vector<24x256xf32>
    %c0_6 = arith.constant 0 : index
    %c0_7 = arith.constant 0 : index
    %8 = vector.load %arg6[%c0_6, %c0_7] : memref<24x256xf32, #tpu.memory_space<vmem>>, vector<24x256xf32>
    tpu.vector_store %arg6[%c0_6, %c0_7], %7 {strides = array<i32>} : memref<24x256xf32, #tpu.memory_space<vmem>>, vector<24x256xf32>,
    %c7_i32 = arith.constant 7 : i32
    %9 = arith.cmpi eq, %arg2, %c7_i32 : i32
    %10 = arith.extui %9 : i1 to i32
    %c0_i32_8 = arith.constant 0 : i32
    %11 = arith.cmpi ne, %10, %c0_i32_8 : i32
    scf.if %11 {
      %c0_9 = arith.constant 0 : index
      %c0_10 = arith.constant 0 : index
      %12 = vector.load %arg6[%c0_9, %c0_10] : memref<24x256xf32, #tpu.memory_space<vmem>>, vector<24x256xf32>
      %c0_11 = arith.constant 0 : index
      %c0_12 = arith.constant 0 : index
      %13 = vector.load %arg5[%c0_11, %c0_12] : memref<24x256xf32, #tpu.memory_space<vmem>>, vector<24x256xf32>
      tpu.vector_store %arg5[%c0_11, %c0_12], %12 {strides = array<i32>} : memref<24x256xf32, #tpu.memory_space<vmem>>, vector<24x256xf32>,
    } else {
    }
    return
  }
  func.func @transform_0(%arg0: i32, %arg1: i32, %arg2: i32) -> (i32, i32) {
    %c0_i32 = arith.constant 0 : i32
    return %arg0, %arg2 : i32, i32
  }
  func.func @transform_1(%arg0: i32, %arg1: i32, %arg2: i32) -> (i32, i32) {
    %c0_i32 = arith.constant 0 : i32
    return %arg2, %arg1 : i32, i32
  }
  func.func @transform_2(%arg0: i32, %arg1: i32, %arg2: i32) -> (i32, i32) {
    %c0_i32 = arith.constant 0 : i32
    return %arg0, %arg1 : i32, i32
  }
}

module attributes {stable_mosaic.version = 11 : i64} {
  func.func @_inorm_lrelu_kernel(%arg0: i32, %arg1: i32, %arg2: memref<1x9x128xf32, #tpu.memory_space<vmem>>, %arg3: memref<1x9x128xf32, #tpu.memory_space<vmem>>) attributes {dimension_semantics = [#tpu.dimension_semantics<parallel>, #tpu.dimension_semantics<parallel>], iteration_bounds = array<i64: 2, 4>, scalar_prefetch = 0 : i64, scratch_operands = 0 : i64, tpu.core_type = #tpu.core_type<tc>, window_params = [{transform_indices = @transform_0, window_bounds = array<i64: 1, 9, 128>}, {transform_indices = @transform_1, window_bounds = array<i64: 1, 9, 128>}]} {
    %c0 = arith.constant 0 : index
    %c0_0 = arith.constant 0 : index
    %c0_1 = arith.constant 0 : index
    %0 = vector.load %arg2[%c0, %c0_0, %c0_1] : memref<1x9x128xf32, #tpu.memory_space<vmem>>, vector<1x9x128xf32>
    %cst = arith.constant dense<0.000000e+00> : vector<1x128xf32>
    %1 = vector.multi_reduction <add>, %0, %cst [1] : vector<1x9x128xf32> to vector<1x128xf32>
    %2 = vector.shape_cast %1 : vector<1x128xf32> to vector<1x1x128xf32>
    %cst_2 = arith.constant 9.000000e+00 : f32
    %3 = vector.broadcast %cst_2 : f32 to vector<1x1x128xf32>
    %4 = arith.divf %2, %3 : vector<1x1x128xf32>
    %5 = vector.broadcast %4 : vector<1x1x128xf32> to vector<1x9x128xf32>
    %6 = arith.subf %0, %5 : vector<1x9x128xf32>
    %7 = arith.mulf %6, %6 : vector<1x9x128xf32>
    %cst_3 = arith.constant dense<0.000000e+00> : vector<1x128xf32>
    %8 = vector.multi_reduction <add>, %7, %cst_3 [1] : vector<1x9x128xf32> to vector<1x128xf32>
    %9 = vector.shape_cast %8 : vector<1x128xf32> to vector<1x1x128xf32>
    %cst_4 = arith.constant 9.000000e+00 : f32
    %10 = vector.broadcast %cst_4 : f32 to vector<1x1x128xf32>
    %11 = arith.divf %9, %10 : vector<1x1x128xf32>
    %12 = vector.broadcast %4 : vector<1x1x128xf32> to vector<1x9x128xf32>
    %13 = arith.subf %0, %12 : vector<1x9x128xf32>
    %cst_5 = arith.constant 9.99999974E-6 : f32
    %14 = vector.broadcast %cst_5 : f32 to vector<1x1x128xf32>
    %15 = arith.addf %11, %14 : vector<1x1x128xf32>
    %16 = math.rsqrt %15 : vector<1x1x128xf32>
    %17 = vector.broadcast %16 : vector<1x1x128xf32> to vector<1x9x128xf32>
    %18 = arith.mulf %13, %17 : vector<1x9x128xf32>
    %cst_6 = arith.constant 0.000000e+00 : f32
    %19 = vector.broadcast %cst_6 : f32 to vector<1x9x128xf32>
    %20 = arith.cmpf oge, %18, %19 : vector<1x9x128xf32>
    %cst_7 = arith.constant 2.000000e-01 : f32
    %21 = vector.broadcast %cst_7 : f32 to vector<1x9x128xf32>
    %22 = arith.mulf %21, %18 : vector<1x9x128xf32>
    %23 = arith.select %20, %18, %22 : vector<1x9x128xi1>, vector<1x9x128xf32>
    %c0_8 = arith.constant 0 : index
    %c0_9 = arith.constant 0 : index
    %c0_10 = arith.constant 0 : index
    %24 = vector.load %arg3[%c0_8, %c0_9, %c0_10] : memref<1x9x128xf32, #tpu.memory_space<vmem>>, vector<1x9x128xf32>
    tpu.vector_store %arg3[%c0_8, %c0_9, %c0_10], %23 {strides = array<i32>} : memref<1x9x128xf32, #tpu.memory_space<vmem>>, vector<1x9x128xf32>,
    return
  }
  func.func @transform_0(%arg0: i32, %arg1: i32) -> (i32, i32, i32) {
    %c0_i32 = arith.constant 0 : i32
    %c0_i32_0 = arith.constant 0 : i32
    return %arg0, %c0_i32, %arg1 : i32, i32, i32
  }
  func.func @transform_1(%arg0: i32, %arg1: i32) -> (i32, i32, i32) {
    %c0_i32 = arith.constant 0 : i32
    %c0_i32_0 = arith.constant 0 : i32
    return %arg0, %c0_i32, %arg1 : i32, i32, i32
  }
}

module attributes {stable_mosaic.version = 11 : i64} {
  func.func @_matmul_kernel(%arg0: i32, %arg1: i32, %arg2: i32, %arg3: memref<8x512xbf16, #tpu.memory_space<vmem>>, %arg4: memref<512x128xbf16, #tpu.memory_space<vmem>>, %arg5: memref<1x128xf32, #tpu.memory_space<vmem>>, %arg6: memref<8x128xf32, #tpu.memory_space<vmem>>, %arg7: memref<8x128xf32, #tpu.memory_space<vmem>>) attributes {dimension_semantics = [#tpu.dimension_semantics<parallel>, #tpu.dimension_semantics<parallel>, #tpu.dimension_semantics<arbitrary>], iteration_bounds = array<i64: 1, 1, 16>, scalar_prefetch = 0 : i64, scratch_operands = 1 : i64, tpu.core_type = #tpu.core_type<tc>, window_params = [{transform_indices = @transform_0, window_bounds = array<i64: 8, 512>}, {transform_indices = @transform_1, window_bounds = array<i64: 512, 128>}, {transform_indices = @transform_2, window_bounds = array<i64: 1, 128>}, {transform_indices = @transform_3, window_bounds = array<i64: 8, 128>}]} {
    %c0_i32 = arith.constant 0 : i32
    %0 = arith.cmpi eq, %arg2, %c0_i32 : i32
    %1 = arith.extui %0 : i1 to i32
    %c0_i32_0 = arith.constant 0 : i32
    %2 = arith.cmpi ne, %1, %c0_i32_0 : i32
    scf.if %2 {
      %cst_9 = arith.constant 0.000000e+00 : f32
      %12 = vector.broadcast %cst_9 : f32 to vector<8x128xf32>
      %c0_10 = arith.constant 0 : index
      %c0_11 = arith.constant 0 : index
      %13 = vector.load %arg7[%c0_10, %c0_11] : memref<8x128xf32, #tpu.memory_space<vmem>>, vector<8x128xf32>
      tpu.vector_store %arg7[%c0_10, %c0_11], %12 {strides = array<i32>} : memref<8x128xf32, #tpu.memory_space<vmem>>, vector<8x128xf32>,
    } else {
    }
    %c0 = arith.constant 0 : index
    %c0_1 = arith.constant 0 : index
    %3 = vector.load %arg7[%c0, %c0_1] : memref<8x128xf32, #tpu.memory_space<vmem>>, vector<8x128xf32>
    %c0_2 = arith.constant 0 : index
    %c0_3 = arith.constant 0 : index
    %4 = vector.load %arg3[%c0_2, %c0_3] : memref<8x512xbf16, #tpu.memory_space<vmem>>, vector<8x512xbf16>
    %c0_4 = arith.constant 0 : index
    %c0_5 = arith.constant 0 : index
    %5 = vector.load %arg4[%c0_4, %c0_5] : memref<512x128xbf16, #tpu.memory_space<vmem>>, vector<512x128xbf16>
    %cst = arith.constant dense<0.000000e+00> : vector<8x128xf32>
    %6 = tpu.matmul %4, %5, %cst {dimension_numbers = #tpu.dot_dimension_numbers<[1], [0], [0], [1], [0, 0, 1, 1], [], []>} : vector<8x512xbf16>, vector<512x128xbf16>, vector<8x128xf32> -> vector<8x128xf32>
    %7 = arith.addf %3, %6 : vector<8x128xf32>
    %c0_6 = arith.constant 0 : index
    %c0_7 = arith.constant 0 : index
    %8 = vector.load %arg7[%c0_6, %c0_7] : memref<8x128xf32, #tpu.memory_space<vmem>>, vector<8x128xf32>
    tpu.vector_store %arg7[%c0_6, %c0_7], %7 {strides = array<i32>} : memref<8x128xf32, #tpu.memory_space<vmem>>, vector<8x128xf32>,
    %c15_i32 = arith.constant 15 : i32
    %9 = arith.cmpi eq, %arg2, %c15_i32 : i32
    %10 = arith.extui %9 : i1 to i32
    %c0_i32_8 = arith.constant 0 : i32
    %11 = arith.cmpi ne, %10, %c0_i32_8 : i32
    scf.if %11 {
      %c0_9 = arith.constant 0 : index
      %c0_10 = arith.constant 0 : index
      %12 = vector.load %arg7[%c0_9, %c0_10] : memref<8x128xf32, #tpu.memory_space<vmem>>, vector<8x128xf32>
      %c0_11 = arith.constant 0 : index
      %c0_12 = arith.constant 0 : index
      %13 = vector.load %arg5[%c0_11, %c0_12] : memref<1x128xf32, #tpu.memory_space<vmem>>, vector<1x128xf32>
      %14 = vector.broadcast %13 : vector<1x128xf32> to vector<8x128xf32>
      %15 = arith.addf %12, %14 : vector<8x128xf32>
      %c0_13 = arith.constant 0 : index
      %c0_14 = arith.constant 0 : index
      %16 = vector.load %arg6[%c0_13, %c0_14] : memref<8x128xf32, #tpu.memory_space<vmem>>, vector<8x128xf32>
      tpu.vector_store %arg6[%c0_13, %c0_14], %15 {strides = array<i32>} : memref<8x128xf32, #tpu.memory_space<vmem>>, vector<8x128xf32>,
    } else {
    }
    return
  }
  func.func @transform_0(%arg0: i32, %arg1: i32, %arg2: i32) -> (i32, i32) {
    %c0_i32 = arith.constant 0 : i32
    return %arg0, %arg2 : i32, i32
  }
  func.func @transform_1(%arg0: i32, %arg1: i32, %arg2: i32) -> (i32, i32) {
    %c0_i32 = arith.constant 0 : i32
    return %arg2, %arg1 : i32, i32
  }
  func.func @transform_2(%arg0: i32, %arg1: i32, %arg2: i32) -> (i32, i32) {
    %c0_i32 = arith.constant 0 : i32
    %c0_i32_0 = arith.constant 0 : i32
    return %c0_i32, %arg1 : i32, i32
  }
  func.func @transform_3(%arg0: i32, %arg1: i32, %arg2: i32) -> (i32, i32) {
    %c0_i32 = arith.constant 0 : i32
    return %arg0, %arg1 : i32, i32
  }
}

</mosaic_0001>

<llo_original>
// kernel: discriminator_forward.8
$region0: #{discriminator_forward.8}
  #allocation0 [shape = 'u32[]', space=smem, size = 0x4, offset = 0x4, fixed_abs, tag = 'smem constant byte address 0x4 - core index']
  #allocation1 [shape = 'u32[72,128]{1,0:T(1,128)}', space=vmem, size = 0x9000, scoped, tag = 'internal scratch']
  #allocation2 [shape = 'f32[512,128]{1,0:T(8,128)}', space=vmem, size = 0x40000, scoped, tag = 'scratch operand']
  %s0 = inlined_call_operand.vmem [shape: bf16[512,128], index: 0, kind: input, shape index: {}]
  %s1 = inlined_call_operand.vmem [shape: bf16[128,128], index: 1, kind: input, shape index: {}]
  %s2 = inlined_call_operand.vmem [shape: f32[1,128], index: 2, kind: input, shape index: {}]
  %s3 = inlined_call_operand.vmem [shape: f32[512,128], index: 3, kind: output, shape index: {}]
  %s4 = sld [smem:[#allocation0]]
  $region30: #{discriminator_forward.8} parent=0
    _
  %s6 = ssub.s32 1, %s4
  %s7 = scalar_select 0, %s6, %s4
  // Predicated region
  $region2: #{discriminator_forward.8} parent=0 // pred_check
    _
  $region3: #{discriminator_forward.8} parent=0 // pred_check_branch
    %9 = sbr.rel (0) target = $region5
  $region4: #{discriminator_forward.8} parent=0 // pred_region
    _
  $region5: #{discriminator_forward.8} parent=0 // pred_fallthru
    _
  // Predicated region
  $region6: #{discriminator_forward.8} parent=0 // pred_check
    _
  $region7: #{discriminator_forward.8} parent=0 // pred_check_branch
    %11 = sbr.rel (0) target = $region9
  $region8: #{discriminator_forward.8} parent=0 // pred_region
    _
  $region9: #{discriminator_forward.8} parent=0 // pred_fallthru
    _
  // Predicated region
  $region10: #{discriminator_forward.8} parent=0 // pred_check
    _
  $region11: #{discriminator_forward.8} parent=0 // pred_check_branch
    %13 = sbr.rel (0) target = $region13
  $region12: #{discriminator_forward.8} parent=0 // pred_region
    _
  $region13: #{discriminator_forward.8} parent=0 // pred_fallthru
    _
  %p14 = scmp.eq.s32.totalorder 0, 0
  // Predicated region
  $region14: #{discriminator_forward.8} parent=0 // pred_check
    %p15 = pneg %p14
  $region15: #{discriminator_forward.8} parent=0 // pred_check_branch
    %17 = sbr.rel (%p15) target = $region17
  $region16: #{discriminator_forward.8} parent=0 // pred_region
    %18 = vst [vmem:[#allocation2] sm:$0xff] 0.0
    %19 = vst [vmem:[#allocation2 + $0x8] sm:$0xff] 0.0
    %20 = vst [vmem:[#allocation2 + $0x10] sm:$0xff] 0.0
    %21 = vst [vmem:[#allocation2 + $0x18] sm:$0xff] 0.0
    %22 = vst [vmem:[#allocation2 + $0x20] sm:$0xff] 0.0
    %23 = vst [vmem:[#allocation2 + $0x28] sm:$0xff] 0.0
    %24 = vst [vmem:[#allocation2 + $0x30] sm:$0xff] 0.0
    %25 = vst [vmem:[#allocation2 + $0x38] sm:$0xff] 0.0
    %26 = vst [vmem:[#allocation2 + $0x40] sm:$0xff] 0.0
    %27 = vst [vmem:[#allocation2 + $0x48] sm:$0xff] 0.0
    %28 = vst [vmem:[#allocation2 + $0x50] sm:$0xff] 0.0
    %29 = vst [vmem:[#allocation2 + $0x58] sm:$0xff] 0.0
    %30 = vst [vmem:[#allocation2 + $0x60] sm:$0xff] 0.0
    %31 = vst [vmem:[#allocation2 + $0x68] sm:$0xff] 0.0
    %32 = vst [vmem:[#allocation2 + $0x70] sm:$0xff] 0.0
    %33 = vst [vmem:[#allocation2 + $0x78] sm:$0xff] 0.0
    %34 = vst [vmem:[#allocation2 + $0x80] sm:$0xff] 0.0
    %35 = vst [vmem:[#allocation2 + $0x88] sm:$0xff] 0.0
    %36 = vst [vmem:[#allocation2 + $0x90] sm:$0xff] 0.0
    %37 = vst [vmem:[#allocation2 + $0x98] sm:$0xff] 0.0
    %38 = vst [vmem:[#allocation2 + $0xa0] sm:$0xff] 0.0
    %39 = vst [vmem:[#allocation2 + $0xa8] sm:$0xff] 0.0
    %40 = vst [vmem:[#allocation2 + $0xb0] sm:$0xff] 0.0
    %41 = vst [vmem:[#allocation2 + $0xb8] sm:$0xff] 0.0
    %42 = vst [vmem:[#allocation2 + $0xc0] sm:$0xff] 0.0
    %43 = vst [vmem:[#allocation2 + $0xc8] sm:$0xff] 0.0
    %44 = vst [vmem:[#allocation2 + $0xd0] sm:$0xff] 0.0
    %45 = vst [vmem:[#allocation2 + $0xd8] sm:$0xff] 0.0
    %46 = vst [vmem:[#allocation2 + $0xe0] sm:$0xff] 0.0
    %47 = vst [vmem:[#allocation2 + $0xe8] sm:$0xff] 0.0
    %48 = vst [vmem:[#allocation2 + $0xf0] sm:$0xff] 0.0
    %49 = vst [vmem:[#allocation2 + $0xf8] sm:$0xff] 0.0
    %50 = vst [vmem:[#allocation2 + $0x100] sm:$0xff] 0.0
    %51 = vst [vmem:[#allocation2 + $0x108] sm:$0xff] 0.0
    %52 = vst [vmem:[#allocation2 + $0x110] sm:$0xff] 0.0
    %53 = vst [vmem:[#allocation2 + $0x118] sm:$0xff] 0.0
    %54 = vst [vmem:[#allocation2 + $0x120] sm:$0xff] 0.0
    %55 = vst [vmem:[#allocation2 + $0x128] sm:$0xff] 0.0
    %56 = vst [vmem:[#allocation2 + $0x130] sm:$0xff] 0.0
    %57 = vst [vmem:[#allocation2 + $0x138] sm:$0xff] 0.0
    %58 = vst [vmem:[#allocation2 + $0x140] sm:$0xff] 0.0
    %59 = vst [vmem:[#allocation2 + $0x148] sm:$0xff] 0.0
    %60 = vst [vmem:[#allocation2 + $0x150] sm:$0xff] 0.0
    %61 = vst [vmem:[#allocation2 + $0x158] sm:$0xff] 0.0
    %62 = vst [vmem:[#allocation2 + $0x160] sm:$0xff] 0.0
    %63 = vst [vmem:[#allocation2 + $0x168] sm:$0xff] 0.0
    %64 = vst [vmem:[#allocation2 + $0x170] sm:$0xff] 0.0
    %65 = vst [vmem:[#allocation2 + $0x178] sm:$0xff] 0.0
    %66 = vst [vmem:[#allocation2 + $0x180] sm:$0xff] 0.0
    %67 = vst [vmem:[#allocation2 + $0x188] sm:$0xff] 0.0
    %68 = vst [vmem:[#allocation2 + $0x190] sm:$0xff] 0.0
    %69 = vst [vmem:[#allocation2 + $0x198] sm:$0xff] 0.0
    %70 = vst [vmem:[#allocation2 + $0x1a0] sm:$0xff] 0.0
    %71 = vst [vmem:[#allocation2 + $0x1a8] sm:$0xff] 0.0
    %72 = vst [vmem:[#allocation2 + $0x1b0] sm:$0xff] 0.0
    %73 = vst [vmem:[#allocation2 + $0x1b8] sm:$0xff] 0.0
    %74 = vst [vmem:[#allocation2 + $0x1c0] sm:$0xff] 0.0
    %75 = vst [vmem:[#allocation2 + $0x1c8] sm:$0xff] 0.0
    %76 = vst [vmem:[#allocation2 + $0x1d0] sm:$0xff] 0.0
    %77 = vst [vmem:[#allocation2 + $0x1d8] sm:$0xff] 0.0
    %78 = vst [vmem:[#allocation2 + $0x1e0] sm:$0xff] 0.0
    %79 = vst [vmem:[#allocation2 + $0x1e8] sm:$0xff] 0.0
    %80 = vst [vmem:[#allocation2 + $0x1f0] sm:$0xff] 0.0
    %81 = vst [vmem:[#allocation2 + $0x1f8] sm:$0xff] 0.0
  $region17: #{discriminator_forward.8} parent=0 // pred_fallthru
    _
  %v82 = vld [vmem:[#allocation2] sm:$0xff]
  %v83 = vld [vmem:[#allocation2 + $0x8] sm:$0xff]
  %v84 = vld [vmem:[#allocation2 + $0x10] sm:$0xff]
  %v85 = vld [vmem:[#allocation2 + $0x18] sm:$0xff]
  %v86 = vld [vmem:[#allocation2 + $0x20] sm:$0xff]
  %v87 = vld [vmem:[#allocation2 + $0x28] sm:$0xff]
  %v88 = vld [vmem:[#allocation2 + $0x30] sm:$0xff]
  %v89 = vld [vmem:[#allocation2 + $0x38] sm:$0xff]
  %v90 = vld [vmem:[#allocation2 + $0x40] sm:$0xff]
  %v91 = vld [vmem:[#allocation2 + $0x48] sm:$0xff]
  %v92 = vld [vmem:[#allocation2 + $0x50] sm:$0xff]
  %v93 = vld [vmem:[#allocation2 + $0x58] sm:$0xff]
  %v94 = vld [vmem:[#allocation2 + $0x60] sm:$0xff]
  %v95 = vld [vmem:[#allocation2 + $0x68] sm:$0xff]
  %v96 = vld [vmem:[#allocation2 + $0x70] sm:$0xff]
  %v97 = vld [vmem:[#allocation2 + $0x78] sm:$0xff]
  %v98 = vld [vmem:[#allocation2 + $0x80] sm:$0xff]
  %v99 = vld [vmem:[#allocation2 + $0x88] sm:$0xff]
  %v100 = vld [vmem:[#allocation2 + $0x90] sm:$0xff]
  %v101 = vld [vmem:[#allocation2 + $0x98] sm:$0xff]
  %v102 = vld [vmem:[#allocation2 + $0xa0] sm:$0xff]
  %v103 = vld [vmem:[#allocation2 + $0xa8] sm:$0xff]
  %v104 = vld [vmem:[#allocation2 + $0xb0] sm:$0xff]
  %v105 = vld [vmem:[#allocation2 + $0xb8] sm:$0xff]
  %v106 = vld [vmem:[#allocation2 + $0xc0] sm:$0xff]
  %v107 = vld [vmem:[#allocation2 + $0xc8] sm:$0xff]
  %v108 = vld [vmem:[#allocation2 + $0xd0] sm:$0xff]
  %v109 = vld [vmem:[#allocation2 + $0xd8] sm:$0xff]
  %v110 = vld [vmem:[#allocation2 + $0xe0] sm:$0xff]
  %v111 = vld [vmem:[#allocation2 + $0xe8] sm:$0xff]
  %v112 = vld [vmem:[#allocation2 + $0xf0] sm:$0xff]
  %v113 = vld [vmem:[#allocation2 + $0xf8] sm:$0xff]
  %v114 = vld [vmem:[#allocation2 + $0x100] sm:$0xff]
  %v115 = vld [vmem:[#allocation2 + $0x108] sm:$0xff]
  %v116 = vld [vmem:[#allocation2 + $0x110] sm:$0xff]
  %v117 = vld [vmem:[#allocation2 + $0x118] sm:$0xff]
  %v118 = vld [vmem:[#allocation2 + $0x120] sm:$0xff]
  %v119 = vld [vmem:[#allocation2 + $0x128] sm:$0xff]
  %v120 = vld [vmem:[#allocation2 + $0x130] sm:$0xff]
  %v121 = vld [vmem:[#allocation2 + $0x138] sm:$0xff]
  %v122 = vld [vmem:[#allocation2 + $0x140] sm:$0xff]
  %v123 = vld [vmem:[#allocation2 + $0x148] sm:$0xff]
  %v124 = vld [vmem:[#allocation2 + $0x150] sm:$0xff]
  %v125 = vld [vmem:[#allocation2 + $0x158] sm:$0xff]
  %v126 = vld [vmem:[#allocation2 + $0x160] sm:$0xff]
  %v127 = vld [vmem:[#allocation2 + $0x168] sm:$0xff]
  %v128 = vld [vmem:[#allocation2 + $0x170] sm:$0xff]
  %v129 = vld [vmem:[#allocation2 + $0x178] sm:$0xff]
  %v130 = vld [vmem:[#allocation2 + $0x180] sm:$0xff]
  %v131 = vld [vmem:[#allocation2 + $0x188] sm:$0xff]
  %v132 = vld [vmem:[#allocation2 + $0x190] sm:$0xff]
  %v133 = vld [vmem:[#allocation2 + $0x198] sm:$0xff]
  %v134 = vld [vmem:[#allocation2 + $0x1a0] sm:$0xff]
  %v135 = vld [vmem:[#allocation2 + $0x1a8] sm:$0xff]
  %v136 = vld [vmem:[#allocation2 + $0x1b0] sm:$0xff]
  %v137 = vld [vmem:[#allocation2 + $0x1b8] sm:$0xff]
  %v138 = vld [vmem:[#allocation2 + $0x1c0] sm:$0xff]
  %v139 = vld [vmem:[#allocation2 + $0x1c8] sm:$0xff]
  %v140 = vld [vmem:[#allocation2 + $0x1d0] sm:$0xff]
  %v141 = vld [vmem:[#allocation2 + $0x1d8] sm:$0xff]
  %v142 = vld [vmem:[#allocation2 + $0x1e0] sm:$0xff]
  %v143 = vld [vmem:[#allocation2 + $0x1e8] sm:$0xff]
  %v144 = vld [vmem:[#allocation2 + $0x1f0] sm:$0xff]
  %v145 = vld [vmem:[#allocation2 + $0x1f8] sm:$0xff]
  %v146 = vld [vmem:[%s0] sm:$0xf]
  %v147 = vld [vmem:[%s0 + $0x4] sm:$0xf]
  %v148 = vld [vmem:[%s0 + $0x8] sm:$0xf]
  %v149 = vld [vmem:[%s0 + $0xc] sm:$0xf]
  %v150 = vld [vmem:[%s0 + $0x10] sm:$0xf]
  %v151 = vld [vmem:[%s0 + $0x14] sm:$0xf]
  %v152 = vld [vmem:[%s0 + $0x18] sm:$0xf]
  %v153 = vld [vmem:[%s0 + $0x1c] sm:$0xf]
  %v154 = vld [vmem:[%s0 + $0x20] sm:$0xf]
  %v155 = vld [vmem:[%s0 + $0x24] sm:$0xf]
  %v156 = vld [vmem:[%s0 + $0x28] sm:$0xf]
  %v157 = vld [vmem:[%s0 + $0x2c] sm:$0xf]
  %v158 = vld [vmem:[%s0 + $0x30] sm:$0xf]
  %v159 = vld [vmem:[%s0 + $0x34] sm:$0xf]
  %v160 = vld [vmem:[%s0 + $0x38] sm:$0xf]
  %v161 = vld [vmem:[%s0 + $0x3c] sm:$0xf]
  %v162 = vld [vmem:[%s0 + $0x40] sm:$0xf]
  %v163 = vld [vmem:[%s0 + $0x44] sm:$0xf]
  %v164 = vld [vmem:[%s0 + $0x48] sm:$0xf]
  %v165 = vld [vmem:[%s0 + $0x4c] sm:$0xf]
  %v166 = vld [vmem:[%s0 + $0x50] sm:$0xf]
  %v167 = vld [vmem:[%s0 + $0x54] sm:$0xf]
  %v168 = vld [vmem:[%s0 + $0x58] sm:$0xf]
  %v169 = vld [vmem:[%s0 + $0x5c] sm:$0xf]
  %v170 = vld [vmem:[%s0 + $0x60] sm:$0xf]
  %v171 = vld [vmem:[%s0 + $0x64] sm:$0xf]
  %v172 = vld [vmem:[%s0 + $0x68] sm:$0xf]
  %v173 = vld [vmem:[%s0 + $0x6c] sm:$0xf]
  %v174 = vld [vmem:[%s0 + $0x70] sm:$0xf]
  %v175 = vld [vmem:[%s0 + $0x74] sm:$0xf]
  %v176 = vld [vmem:[%s0 + $0x78] sm:$0xf]
  %v177 = vld [vmem:[%s0 + $0x7c] sm:$0xf]
  %v178 = vld [vmem:[%s0 + $0x80] sm:$0xf]
  %v179 = vld [vmem:[%s0 + $0x84] sm:$0xf]
  %v180 = vld [vmem:[%s0 + $0x88] sm:$0xf]
  %v181 = vld [vmem:[%s0 + $0x8c] sm:$0xf]
  %v182 = vld [vmem:[%s0 + $0x90] sm:$0xf]
  %v183 = vld [vmem:[%s0 + $0x94] sm:$0xf]
  %v184 = vld [vmem:[%s0 + $0x98] sm:$0xf]
  %v185 = vld [vmem:[%s0 + $0x9c] sm:$0xf]
  %v186 = vld [vmem:[%s0 + $0xa0] sm:$0xf]
  %v187 = vld [vmem:[%s0 + $0xa4] sm:$0xf]
  %v188 = vld [vmem:[%s0 + $0xa8] sm:$0xf]
  %v189 = vld [vmem:[%s0 + $0xac] sm:$0xf]
  %v190 = vld [vmem:[%s0 + $0xb0] sm:$0xf]
  %v191 = vld [vmem:[%s0 + $0xb4] sm:$0xf]
  %v192 = vld [vmem:[%s0 + $0xb8] sm:$0xf]
  %v193 = vld [vmem:[%s0 + $0xbc] sm:$0xf]
  %v194 = vld [vmem:[%s0 + $0xc0] sm:$0xf]
  %v195 = vld [vmem:[%s0 + $0xc4] sm:$0xf]
  %v196 = vld [vmem:[%s0 + $0xc8] sm:$0xf]
  %v197 = vld [vmem:[%s0 + $0xcc] sm:$0xf]
  %v198 = vld [vmem:[%s0 + $0xd0] sm:$0xf]
  %v199 = vld [vmem:[%s0 + $0xd4] sm:$0xf]
  %v200 = vld [vmem:[%s0 + $0xd8] sm:$0xf]
  %v201 = vld [vmem:[%s0 + $0xdc] sm:$0xf]
  %v202 = vld [vmem:[%s0 + $0xe0] sm:$0xf]
  %v203 = vld [vmem:[%s0 + $0xe4] sm:$0xf]
  %v204 = vld [vmem:[%s0 + $0xe8] sm:$0xf]
  %v205 = vld [vmem:[%s0 + $0xec] sm:$0xf]
  %v206 = vld [vmem:[%s0 + $0xf0] sm:$0xf]
  %v207 = vld [vmem:[%s0 + $0xf4] sm:$0xf]
  %v208 = vld [vmem:[%s0 + $0xf8] sm:$0xf]
  %v209 = vld [vmem:[%s0 + $0xfc] sm:$0xf]
  %v210 = vld [vmem:[%s1] sm:$0xf]
  %v211 = vld [vmem:[%s1 + $0x4] sm:$0xf]
  %v212 = vld [vmem:[%s1 + $0x8] sm:$0xf]
  %v213 = vld [vmem:[%s1 + $0xc] sm:$0xf]
  %v214 = vld [vmem:[%s1 + $0x10] sm:$0xf]
  %v215 = vld [vmem:[%s1 + $0x14] sm:$0xf]
  %v216 = vld [vmem:[%s1 + $0x18] sm:$0xf]
  %v217 = vld [vmem:[%s1 + $0x1c] sm:$0xf]
  %v218 = vld [vmem:[%s1 + $0x20] sm:$0xf]
  %v219 = vld [vmem:[%s1 + $0x24] sm:$0xf]
  %v220 = vld [vmem:[%s1 + $0x28] sm:$0xf]
  %v221 = vld [vmem:[%s1 + $0x2c] sm:$0xf]
  %v222 = vld [vmem:[%s1 + $0x30] sm:$0xf]
  %v223 = vld [vmem:[%s1 + $0x34] sm:$0xf]
  %v224 = vld [vmem:[%s1 + $0x38] sm:$0xf]
  %v225 = vld [vmem:[%s1 + $0x3c] sm:$0xf]
  %v290 = vunpack.c.l.b16 %v146
  %v291 = vunpack.c.l.b16 %v147
  %v292 = vunpack.c.l.b16 %v148
  %v293 = vunpack.c.l.b16 %v149
  %v294 = vunpack.c.l.b16 %v150
  %v295 = vunpack.c.l.b16 %v151
  %v296 = vunpack.c.l.b16 %v152
  %v297 = vunpack.c.l.b16 %v153
  %v298 = vunpack.c.l.b16 %v154
  %v299 = vunpack.c.l.b16 %v155
  %v300 = vunpack.c.l.b16 %v156
  %v301 = vunpack.c.l.b16 %v157
  %v302 = vunpack.c.l.b16 %v158
  %v303 = vunpack.c.l.b16 %v159
  %v304 = vunpack.c.l.b16 %v160
  %v305 = vunpack.c.l.b16 %v161
  %v306 = vunpack.c.l.b16 %v162
  %v307 = vunpack.c.l.b16 %v163
  %v308 = vunpack.c.l.b16 %v164
  %v309 = vunpack.c.l.b16 %v165
  %v310 = vunpack.c.l.b16 %v166
  %v311 = vunpack.c.l.b16 %v167
  %v312 = vunpack.c.l.b16 %v168
  %v313 = vunpack.c.l.b16 %v169
  %v314 = vunpack.c.l.b16 %v170
  %v315 = vunpack.c.l.b16 %v171
  %v316 = vunpack.c.l.b16 %v172
  %v317 = vunpack.c.l.b16 %v173
  %v318 = vunpack.c.l.b16 %v174
  %v319 = vunpack.c.l.b16 %v175
  %v320 = vunpack.c.l.b16 %v176
  %v321 = vunpack.c.l.b16 %v177
  %v322 = vunpack.c.l.b16 %v178
  %v323 = vunpack.c.l.b16 %v179
  %v324 = vunpack.c.l.b16 %v180
  %v325 = vunpack.c.l.b16 %v181
  %v326 = vunpack.c.l.b16 %v182
  %v327 = vunpack.c.l.b16 %v183
  %v328 = vunpack.c.l.b16 %v184
  %v329 = vunpack.c.l.b16 %v185
  %v330 = vunpack.c.l.b16 %v186
  %v331 = vunpack.c.l.b16 %v187
  %v332 = vunpack.c.l.b16 %v188
  %v333 = vunpack.c.l.b16 %v189
  %v334 = vunpack.c.l.b16 %v190
  %v335 = vunpack.c.l.b16 %v191
  %v336 = vunpack.c.l.b16 %v192
  %v337 = vunpack.c.l.b16 %v193
  %v338 = vunpack.c.l.b16 %v194
  %v339 = vunpack.c.l.b16 %v195
  %v340 = vunpack.c.l.b16 %v196
  %v341 = vunpack.c.l.b16 %v197
  %v342 = vunpack.c.l.b16 %v198
  %v343 = vunpack.c.l.b16 %v199
  %v344 = vunpack.c.l.b16 %v200
  %v345 = vunpack.c.l.b16 %v201
  %v346 = vunpack.c.l.b16 %v202
  %v347 = vunpack.c.l.b16 %v203
  %v348 = vunpack.c.l.b16 %v204
  %v349 = vunpack.c.l.b16 %v205
  %v350 = vunpack.c.l.b16 %v206
  %v351 = vunpack.c.l.b16 %v207
  %v352 = vunpack.c.l.b16 %v208
  %v353 = vunpack.c.l.b16 %v209
  %v354 = vpack.c.b16 %v291, %v290
  %v355 = vpack.c.b16 %v293, %v292
  %v356 = vpack.c.b16 %v295, %v294
  %v357 = vpack.c.b16 %v297, %v296
  %v358 = vpack.c.b16 %v299, %v298
  %v359 = vpack.c.b16 %v301, %v300
  %v360 = vpack.c.b16 %v303, %v302
  %v361 = vpack.c.b16 %v305, %v304
  %v362 = vpack.c.b16 %v307, %v306
  %v363 = vpack.c.b16 %v309, %v308
  %v364 = vpack.c.b16 %v311, %v310
  %v365 = vpack.c.b16 %v313, %v312
  %v366 = vpack.c.b16 %v315, %v314
  %v367 = vpack.c.b16 %v317, %v316
  %v368 = vpack.c.b16 %v319, %v318
  %v369 = vpack.c.b16 %v321, %v320
  %v370 = vpack.c.b16 %v323, %v322
  %v371 = vpack.c.b16 %v325, %v324
  %v372 = vpack.c.b16 %v327, %v326
  %v373 = vpack.c.b16 %v329, %v328
  %v374 = vpack.c.b16 %v331, %v330
  %v375 = vpack.c.b16 %v333, %v332
  %v376 = vpack.c.b16 %v335, %v334
  %v377 = vpack.c.b16 %v337, %v336
  %v378 = vpack.c.b16 %v339, %v338
  %v379 = vpack.c.b16 %v341, %v340
  %v380 = vpack.c.b16 %v343, %v342
  %v381 = vpack.c.b16 %v345, %v344
  %v382 = vpack.c.b16 %v347, %v346
  %v383 = vpack.c.b16 %v349, %v348
  %v384 = vpack.c.b16 %v351, %v350
  %v385 = vpack.c.b16 %v353, %v352
  %v434 = vunpack.c.l.b16 %v210
  %v435 = vunpack.c.l.b16 %v211
  %v436 = vunpack.c.l.b16 %v212
  %v437 = vunpack.c.l.b16 %v213
  %v438 = vunpack.c.l.b16 %v214
  %v439 = vunpack.c.l.b16 %v215
  %v440 = vunpack.c.l.b16 %v216
  %v441 = vunpack.c.l.b16 %v217
  %v442 = vunpack.c.l.b16 %v218
  %v443 = vunpack.c.l.b16 %v219
  %v444 = vunpack.c.l.b16 %v220
  %v445 = vunpack.c.l.b16 %v221
  %v446 = vunpack.c.l.b16 %v222
  %v447 = vunpack.c.l.b16 %v223
  %v448 = vunpack.c.l.b16 %v224
  %v449 = vunpack.c.l.b16 %v225
  %v450 = vpack.c.b16 %v435, %v434
  %v451 = vpack.c.b16 %v437, %v436
  %v452 = vpack.c.b16 %v439, %v438
  %v453 = vpack.c.b16 %v441, %v440
  %v454 = vpack.c.b16 %v443, %v442
  %v455 = vpack.c.b16 %v445, %v444
  %v456 = vpack.c.b16 %v447, %v446
  %v457 = vpack.c.b16 %v449, %v448
  %466 = vmatpush.bf16.msra.mxu0 %v457
  %467 = vmatpush.bf16.msra.mxu0 %v456
  %468 = vmatpush.bf16.msra.mxu0 %v455
  %469 = vmatpush.bf16.msra.mxu0 %v454
  %470 = vmatpush.bf16.msra.mxu0 %v453
  %471 = vmatpush.bf16.msra.mxu0 %v452
  %472 = vmatpush.bf16.msra.mxu0 %v451
  %473 = vmatpush.bf16.msra.mxu0 %v450
  %474 = vmatmul.bf16.gmra.mxu0 %v354
  %v475 = vpop.f32.mrf.mxu0
  %v476 = vadd.f32 0.0, %v475
  %v477 = vpop.f32.mrf.mxu0
  %v478 = vadd.f32 0.0, %v477
  %479 = vmatmul.bf16.gmra.mxu0 %v355
  %v480 = vpop.f32.mrf.mxu0
  %v481 = vadd.f32 0.0, %v480
  %v482 = vpop.f32.mrf.mxu0
  %v483 = vadd.f32 0.0, %v482
  %484 = vmatmul.bf16.gmra.mxu0 %v356
  %v485 = vpop.f32.mrf.mxu0
  %v486 = vadd.f32 0.0, %v485
  %v487 = vpop.f32.mrf.mxu0
  %v488 = vadd.f32 0.0, %v487
  %489 = vmatmul.bf16.gmra.mxu0 %v357
  %v490 = vpop.f32.mrf.mxu0
  %v491 = vadd.f32 0.0, %v490
  %v492 = vpop.f32.mrf.mxu0
  %v493 = vadd.f32 0.0, %v492
  %494 = vmatmul.bf16.gmra.mxu0 %v358
  %v495 = vpop.f32.mrf.mxu0
  %v496 = vadd.f32 0.0, %v495
  %v497 = vpop.f32.mrf.mxu0
  %v498 = vadd.f32 0.0, %v497
  %499 = vmatmul.bf16.gmra.mxu0 %v359
  %v500 = vpop.f32.mrf.mxu0
  %v501 = vadd.f32 0.0, %v500
  %v502 = vpop.f32.mrf.mxu0
  %v503 = vadd.f32 0.0, %v502
  %504 = vmatmul.bf16.gmra.mxu0 %v360
  %v505 = vpop.f32.mrf.mxu0
  %v506 = vadd.f32 0.0, %v505
  %v507 = vpop.f32.mrf.mxu0
  %v508 = vadd.f32 0.0, %v507
  %509 = vmatmul.bf16.gmra.mxu0 %v361
  %v510 = vpop.f32.mrf.mxu0
  %v511 = vadd.f32 0.0, %v510
  %v512 = vpop.f32.mrf.mxu0
  %v513 = vadd.f32 0.0, %v512
  %514 = vmatmul.bf16.gmra.mxu0 %v362
  %v515 = vpop.f32.mrf.mxu0
  %v516 = vadd.f32 0.0, %v515
  %v517 = vpop.f32.mrf.mxu0
  %v518 = vadd.f32 0.0, %v517
  %519 = vmatmul.bf16.gmra.mxu0 %v363
  %v520 = vpop.f32.mrf.mxu0
  %v521 = vadd.f32 0.0, %v520
  %v522 = vpop.f32.mrf.mxu0
  %v523 = vadd.f32 0.0, %v522
  %524 = vmatmul.bf16.gmra.mxu0 %v364
  %v525 = vpop.f32.mrf.mxu0
  %v526 = vadd.f32 0.0, %v525
  %v527 = vpop.f32.mrf.mxu0
  %v528 = vadd.f32 0.0, %v527
  %529 = vmatmul.bf16.gmra.mxu0 %v365
  %v530 = vpop.f32.mrf.mxu0
  %v531 = vadd.f32 0.0, %v530
  %v532 = vpop.f32.mrf.mxu0
  %v533 = vadd.f32 0.0, %v532
  %534 = vmatmul.bf16.gmra.mxu0 %v366
  %v535 = vpop.f32.mrf.mxu0
  %v536 = vadd.f32 0.0, %v535
  %v537 = vpop.f32.mrf.mxu0
  %v538 = vadd.f32 0.0, %v537
  %539 = vmatmul.bf16.gmra.mxu0 %v367
  %v540 = vpop.f32.mrf.mxu0
  %v541 = vadd.f32 0.0, %v540
  %v542 = vpop.f32.mrf.mxu0
  %v543 = vadd.f32 0.0, %v542
  %544 = vmatmul.bf16.gmra.mxu0 %v368
  %v545 = vpop.f32.mrf.mxu0
  %v546 = vadd.f32 0.0, %v545
  %v547 = vpop.f32.mrf.mxu0
  %v548 = vadd.f32 0.0, %v547
  %549 = vmatmul.bf16.gmra.mxu0 %v369
  %v550 = vpop.f32.mrf.mxu0
  %v551 = vadd.f32 0.0, %v550
  %v552 = vpop.f32.mrf.mxu0
  %v553 = vadd.f32 0.0, %v552
  %554 = vmatmul.bf16.gmra.mxu0 %v370
  %v555 = vpop.f32.mrf.mxu0
  %v556 = vadd.f32 0.0, %v555
  %v557 = vpop.f32.mrf.mxu0
  %v558 = vadd.f32 0.0, %v557
  %559 = vmatmul.bf16.gmra.mxu0 %v371
  %v560 = vpop.f32.mrf.mxu0
  %v561 = vadd.f32 0.0, %v560
  %v562 = vpop.f32.mrf.mxu0
  %v563 = vadd.f32 0.0, %v562
  %564 = vmatmul.bf16.gmra.mxu0 %v372
  %v565 = vpop.f32.mrf.mxu0
  %v566 = vadd.f32 0.0, %v565
  %v567 = vpop.f32.mrf.mxu0
  %v568 = vadd.f32 0.0, %v567
  %569 = vmatmul.bf16.gmra.mxu0 %v373
  %v570 = vpop.f32.mrf.mxu0
  %v571 = vadd.f32 0.0, %v570
  %v572 = vpop.f32.mrf.mxu0
  %v573 = vadd.f32 0.0, %v572
  %574 = vmatmul.bf16.gmra.mxu0 %v374
  %v575 = vpop.f32.mrf.mxu0
  %v576 = vadd.f32 0.0, %v575
  %v577 = vpop.f32.mrf.mxu0
  %v578 = vadd.f32 0.0, %v577
  %579 = vmatmul.bf16.gmra.mxu0 %v375
  %v580 = vpop.f32.mrf.mxu0
  %v581 = vadd.f32 0.0, %v580
  %v582 = vpop.f32.mrf.mxu0
  %v583 = vadd.f32 0.0, %v582
  %584 = vmatmul.bf16.gmra.mxu0 %v376
  %v585 = vpop.f32.mrf.mxu0
  %v586 = vadd.f32 0.0, %v585
  %v587 = vpop.f32.mrf.mxu0
  %v588 = vadd.f32 0.0, %v587
  %589 = vmatmul.bf16.gmra.mxu0 %v377
  %v590 = vpop.f32.mrf.mxu0
  %v591 = vadd.f32 0.0, %v590
  %v592 = vpop.f32.mrf.mxu0
  %v593 = vadd.f32 0.0, %v592
  %594 = vmatmul.bf16.gmra.mxu0 %v378
  %v595 = vpop.f32.mrf.mxu0
  %v596 = vadd.f32 0.0, %v595
  %v597 = vpop.f32.mrf.mxu0
  %v598 = vadd.f32 0.0, %v597
  %599 = vmatmul.bf16.gmra.mxu0 %v379
  %v600 = vpop.f32.mrf.mxu0
  %v601 = vadd.f32 0.0, %v600
  %v602 = vpop.f32.mrf.mxu0
  %v603 = vadd.f32 0.0, %v602
  %604 = vmatmul.bf16.gmra.mxu0 %v380
  %v605 = vpop.f32.mrf.mxu0
  %v606 = vadd.f32 0.0, %v605
  %v607 = vpop.f32.mrf.mxu0
  %v608 = vadd.f32 0.0, %v607
  %609 = vmatmul.bf16.gmra.mxu0 %v381
  %v610 = vpop.f32.mrf.mxu0
  %v611 = vadd.f32 0.0, %v610
  %v612 = vpop.f32.mrf.mxu0
  %v613 = vadd.f32 0.0, %v612
  %614 = vmatmul.bf16.gmra.mxu0 %v382
  %v615 = vpop.f32.mrf.mxu0
  %v616 = vadd.f32 0.0, %v615
  %v617 = vpop.f32.mrf.mxu0
  %v618 = vadd.f32 0.0, %v617
  %619 = vmatmul.bf16.gmra.mxu0 %v383
  %v620 = vpop.f32.mrf.mxu0
  %v621 = vadd.f32 0.0, %v620
  %v622 = vpop.f32.mrf.mxu0
  %v623 = vadd.f32 0.0, %v622
  %624 = vmatmul.bf16.gmra.mxu0 %v384
  %v625 = vpop.f32.mrf.mxu0
  %v626 = vadd.f32 0.0, %v625
  %v627 = vpop.f32.mrf.mxu0
  %v628 = vadd.f32 0.0, %v627
  %629 = vmatmul.bf16.gmra.mxu0 %v385
  %v630 = vpop.f32.mrf.mxu0
  %v631 = vadd.f32 0.0, %v630
  %v632 = vpop.f32.mrf.mxu0
  %v633 = vadd.f32 0.0, %v632
  %634 = vdwg.mxu0
  %v635 = vadd.f32 %v82, %v476
  %v636 = vadd.f32 %v83, %v478
  %v637 = vadd.f32 %v84, %v481
  %v638 = vadd.f32 %v85, %v483
  %v639 = vadd.f32 %v86, %v486
  %v640 = vadd.f32 %v87, %v488
  %v641 = vadd.f32 %v88, %v491
  %v642 = vadd.f32 %v89, %v493
  %v643 = vadd.f32 %v90, %v496
  %v644 = vadd.f32 %v91, %v498
  %v645 = vadd.f32 %v92, %v501
  %v646 = vadd.f32 %v93, %v503
  %v647 = vadd.f32 %v94, %v506
  %v648 = vadd.f32 %v95, %v508
  %v649 = vadd.f32 %v96, %v511
  %v650 = vadd.f32 %v97, %v513
  %v651 = vadd.f32 %v98, %v516
  %v652 = vadd.f32 %v99, %v518
  %v653 = vadd.f32 %v100, %v521
  %v654 = vadd.f32 %v101, %v523
  %v655 = vadd.f32 %v102, %v526
  %v656 = vadd.f32 %v103, %v528
  %v657 = vadd.f32 %v104, %v531
  %v658 = vadd.f32 %v105, %v533
  %v659 = vadd.f32 %v106, %v536
  %v660 = vadd.f32 %v107, %v538
  %v661 = vadd.f32 %v108, %v541
  %v662 = vadd.f32 %v109, %v543
  %v663 = vadd.f32 %v110, %v546
  %v664 = vadd.f32 %v111, %v548
  %v665 = vadd.f32 %v112, %v551
  %v666 = vadd.f32 %v113, %v553
  %v667 = vadd.f32 %v114, %v556
  %v668 = vadd.f32 %v115, %v558
  %v669 = vadd.f32 %v116, %v561
  %v670 = vadd.f32 %v117, %v563
  %v671 = vadd.f32 %v118, %v566
  %v672 = vadd.f32 %v119, %v568
  %v673 = vadd.f32 %v120, %v571
  %v674 = vadd.f32 %v121, %v573
  %v675 = vadd.f32 %v122, %v576
  %v676 = vadd.f32 %v123, %v578
  %v677 = vadd.f32 %v124, %v581
  %v678 = vadd.f32 %v125, %v583
  %v679 = vadd.f32 %v126, %v586
  %v680 = vadd.f32 %v127, %v588
  %v681 = vadd.f32 %v128, %v591
  %v682 = vadd.f32 %v129, %v593
  %v683 = vadd.f32 %v130, %v596
  %v684 = vadd.f32 %v131, %v598
  %v685 = vadd.f32 %v132, %v601
  %v686 = vadd.f32 %v133, %v603
  %v687 = vadd.f32 %v134, %v606
  %v688 = vadd.f32 %v135, %v608
  %v689 = vadd.f32 %v136, %v611
  %v690 = vadd.f32 %v137, %v613
  %v691 = vadd.f32 %v138, %v616
  %v692 = vadd.f32 %v139, %v618
  %v693 = vadd.f32 %v140, %v621
  %v694 = vadd.f32 %v141, %v623
  %v695 = vadd.f32 %v142, %v626
  %v696 = vadd.f32 %v143, %v628
  %v697 = vadd.f32 %v144, %v631
  %v698 = vadd.f32 %v145, %v633
  %699 = vst [vmem:[#allocation2] sm:$0xff] %v635
  %700 = vst [vmem:[#allocation2 + $0x8] sm:$0xff] %v636
  %701 = vst [vmem:[#allocation2 + $0x10] sm:$0xff] %v637
  %702 = vst [vmem:[#allocation2 + $0x18] sm:$0xff] %v638
  %703 = vst [vmem:[#allocation2 + $0x20] sm:$0xff] %v639
  %704 = vst [vmem:[#allocation2 + $0x28] sm:$0xff] %v640
  %705 = vst [vmem:[#allocation2 + $0x30] sm:$0xff] %v641
  %706 = vst [vmem:[#allocation2 + $0x38] sm:$0xff] %v642
  %707 = vst [vmem:[#allocation2 + $0x40] sm:$0xff] %v643
  %708 = vst [vmem:[#allocation2 + $0x48] sm:$0xff] %v644
  %709 = vst [vmem:[#allocation2 + $0x50] sm:$0xff] %v645
  %710 = vst [vmem:[#allocation2 + $0x58] sm:$0xff] %v646
  %711 = vst [vmem:[#allocation2 + $0x60] sm:$0xff] %v647
  %712 = vst [vmem:[#allocation2 + $0x68] sm:$0xff] %v648
  %713 = vst [vmem:[#allocation2 + $0x70] sm:$0xff] %v649
  %714 = vst [vmem:[#allocation2 + $0x78] sm:$0xff] %v650
  %715 = vst [vmem:[#allocation2 + $0x80] sm:$0xff] %v651
  %716 = vst [vmem:[#allocation2 + $0x88] sm:$0xff] %v652
  %717 = vst [vmem:[#allocation2 + $0x90] sm:$0xff] %v653
  %718 = vst [vmem:[#allocation2 + $0x98] sm:$0xff] %v654
  %719 = vst [vmem:[#allocation2 + $0xa0] sm:$0xff] %v655
  %720 = vst [vmem:[#allocation2 + $0xa8] sm:$0xff] %v656
  %721 = vst [vmem:[#allocation2 + $0xb0] sm:$0xff] %v657
  %722 = vst [vmem:[#allocation2 + $0xb8] sm:$0xff] %v658
  %723 = vst [vmem:[#allocation2 + $0xc0] sm:$0xff] %v659
  %724 = vst [vmem:[#allocation2 + $0xc8] sm:$0xff] %v660
  %725 = vst [vmem:[#allocation2 + $0xd0] sm:$0xff] %v661
  %726 = vst [vmem:[#allocation2 + $0xd8] sm:$0xff] %v662
  %727 = vst [vmem:[#allocation2 + $0xe0] sm:$0xff] %v663
  %728 = vst [vmem:[#allocation2 + $0xe8] sm:$0xff] %v664
  %729 = vst [vmem:[#allocation2 + $0xf0] sm:$0xff] %v665
  %730 = vst [vmem:[#allocation2 + $0xf8] sm:$0xff] %v666
  %731 = vst [vmem:[#allocation2 + $0x100] sm:$0xff] %v667
  %732 = vst [vmem:[#allocation2 + $0x108] sm:$0xff] %v668
  %733 = vst [vmem:[#allocation2 + $0x110] sm:$0xff] %v669
  %734 = vst [vmem:[#allocation2 + $0x118] sm:$0xff] %v670
  %735 = vst [vmem:[#allocation2 + $0x120] sm:$0xff] %v671
  %736 = vst [vmem:[#allocation2 + $0x128] sm:$0xff] %v672
  %737 = vst [vmem:[#allocation2 + $0x130] sm:$0xff] %v673
  %738 = vst [vmem:[#allocation2 + $0x138] sm:$0xff] %v674
  %739 = vst [vmem:[#allocation2 + $0x140] sm:$0xff] %v675
  %740 = vst [vmem:[#allocation2 + $0x148] sm:$0xff] %v676
  %741 = vst [vmem:[#allocation2 + $0x150] sm:$0xff] %v677
  %742 = vst [vmem:[#allocation2 + $0x158] sm:$0xff] %v678
  %743 = vst [vmem:[#allocation2 + $0x160] sm:$0xff] %v679
  %744 = vst [vmem:[#allocation2 + $0x168] sm:$0xff] %v680
  %745 = vst [vmem:[#allocation2 + $0x170] sm:$0xff] %v681
  %746 = vst [vmem:[#allocation2 + $0x178] sm:$0xff] %v682
  %747 = vst [vmem:[#allocation2 + $0x180] sm:$0xff] %v683
  %748 = vst [vmem:[#allocation2 + $0x188] sm:$0xff] %v684
  %749 = vst [vmem:[#allocation2 + $0x190] sm:$0xff] %v685
  %750 = vst [vmem:[#allocation2 + $0x198] sm:$0xff] %v686
  %751 = vst [vmem:[#allocation2 + $0x1a0] sm:$0xff] %v687
  %752 = vst [vmem:[#allocation2 + $0x1a8] sm:$0xff] %v688
  %753 = vst [vmem:[#allocation2 + $0x1b0] sm:$0xff] %v689
  %754 = vst [vmem:[#allocation2 + $0x1b8] sm:$0xff] %v690
  %755 = vst [vmem:[#allocation2 + $0x1c0] sm:$0xff] %v691
  %756 = vst [vmem:[#allocation2 + $0x1c8] sm:$0xff] %v692
  %757 = vst [vmem:[#allocation2 + $0x1d0] sm:$0xff] %v693
  %758 = vst [vmem:[#allocation2 + $0x1d8] sm:$0xff] %v694
  %759 = vst [vmem:[#allocation2 + $0x1e0] sm:$0xff] %v695
  %760 = vst [vmem:[#allocation2 + $0x1e8] sm:$0xff] %v696
  %761 = vst [vmem:[#allocation2 + $0x1f0] sm:$0xff] %v697
  %762 = vst [vmem:[#allocation2 + $0x1f8] sm:$0xff] %v698
  // Predicated region
  $region18: #{discriminator_forward.8} parent=0 // pred_check
    %p763 = pneg %p14
  $region19: #{discriminator_forward.8} parent=0 // pred_check_branch
    %765 = sbr.rel (%p763) target = $region21
  $region20: #{discriminator_forward.8} parent=0 // pred_region
    %v766 = vld [vmem:[#allocation2] sm:$0xff]
    %v767 = vld [vmem:[#allocation2 + $0x8] sm:$0xff]
    %v768 = vld [vmem:[#allocation2 + $0x10] sm:$0xff]
    %v769 = vld [vmem:[#allocation2 + $0x18] sm:$0xff]
    %v770 = vld [vmem:[#allocation2 + $0x20] sm:$0xff]
    %v771 = vld [vmem:[#allocation2 + $0x28] sm:$0xff]
    %v772 = vld [vmem:[#allocation2 + $0x30] sm:$0xff]
    %v773 = vld [vmem:[#allocation2 + $0x38] sm:$0xff]
    %v774 = vld [vmem:[#allocation2 + $0x40] sm:$0xff]
    %v775 = vld [vmem:[#allocation2 + $0x48] sm:$0xff]
    %v776 = vld [vmem:[#allocation2 + $0x50] sm:$0xff]
    %v777 = vld [vmem:[#allocation2 + $0x58] sm:$0xff]
    %v778 = vld [vmem:[#allocation2 + $0x60] sm:$0xff]
    %v779 = vld [vmem:[#allocation2 + $0x68] sm:$0xff]
    %v780 = vld [vmem:[#allocation2 + $0x70] sm:$0xff]
    %v781 = vld [vmem:[#allocation2 + $0x78] sm:$0xff]
    %v782 = vld [vmem:[#allocation2 + $0x80] sm:$0xff]
    %v783 = vld [vmem:[#allocation2 + $0x88] sm:$0xff]
    %v784 = vld [vmem:[#allocation2 + $0x90] sm:$0xff]
    %v785 = vld [vmem:[#allocation2 + $0x98] sm:$0xff]
    %v786 = vld [vmem:[#allocation2 + $0xa0] sm:$0xff]
    %v787 = vld [vmem:[#allocation2 + $0xa8] sm:$0xff]
    %v788 = vld [vmem:[#allocation2 + $0xb0] sm:$0xff]
    %v789 = vld [vmem:[#allocation2 + $0xb8] sm:$0xff]
    %v790 = vld [vmem:[#allocation2 + $0xc0] sm:$0xff]
    %v791 = vld [vmem:[#allocation2 + $0xc8] sm:$0xff]
    %v792 = vld [vmem:[#allocation2 + $0xd0] sm:$0xff]
    %v793 = vld [vmem:[#allocation2 + $0xd8] sm:$0xff]
    %v794 = vld [vmem:[#allocation2 + $0xe0] sm:$0xff]
    %v795 = vld [vmem:[#allocation2 + $0xe8] sm:$0xff]
    %v796 = vld [vmem:[#allocation2 + $0xf0] sm:$0xff]
    %v797 = vld [vmem:[#allocation2 + $0xf8] sm:$0xff]
    %v798 = vld [vmem:[#allocation2 + $0x100] sm:$0xff]
    %v799 = vld [vmem:[#allocation2 + $0x108] sm:$0xff]
    %v800 = vld [vmem:[#allocation2 + $0x110] sm:$0xff]
    %v801 = vld [vmem:[#allocation2 + $0x118] sm:$0xff]
    %v802 = vld [vmem:[#allocation2 + $0x120] sm:$0xff]
    %v803 = vld [vmem:[#allocation2 + $0x128] sm:$0xff]
    %v804 = vld [vmem:[#allocation2 + $0x130] sm:$0xff]
    %v805 = vld [vmem:[#allocation2 + $0x138] sm:$0xff]
    %v806 = vld [vmem:[#allocation2 + $0x140] sm:$0xff]
    %v807 = vld [vmem:[#allocation2 + $0x148] sm:$0xff]
    %v808 = vld [vmem:[#allocation2 + $0x150] sm:$0xff]
    %v809 = vld [vmem:[#allocation2 + $0x158] sm:$0xff]
    %v810 = vld [vmem:[#allocation2 + $0x160] sm:$0xff]
    %v811 = vld [vmem:[#allocation2 + $0x168] sm:$0xff]
    %v812 = vld [vmem:[#allocation2 + $0x170] sm:$0xff]
    %v813 = vld [vmem:[#allocation2 + $0x178] sm:$0xff]
    %v814 = vld [vmem:[#allocation2 + $0x180] sm:$0xff]
    %v815 = vld [vmem:[#allocation2 + $0x188] sm:$0xff]
    %v816 = vld [vmem:[#allocation2 + $0x190] sm:$0xff]
    %v817 = vld [vmem:[#allocation2 + $0x198] sm:$0xff]
    %v818 = vld [vmem:[#allocation2 + $0x1a0] sm:$0xff]
    %v819 = vld [vmem:[#allocation2 + $0x1a8] sm:$0xff]
    %v820 = vld [vmem:[#allocation2 + $0x1b0] sm:$0xff]
    %v821 = vld [vmem:[#allocation2 + $0x1b8] sm:$0xff]
    %v822 = vld [vmem:[#allocation2 + $0x1c0] sm:$0xff]
    %v823 = vld [vmem:[#allocation2 + $0x1c8] sm:$0xff]
    %v824 = vld [vmem:[#allocation2 + $0x1d0] sm:$0xff]
    %v825 = vld [vmem:[#allocation2 + $0x1d8] sm:$0xff]
    %v826 = vld [vmem:[#allocation2 + $0x1e0] sm:$0xff]
    %v827 = vld [vmem:[#allocation2 + $0x1e8] sm:$0xff]
    %v828 = vld [vmem:[#allocation2 + $0x1f0] sm:$0xff]
    %v829 = vld [vmem:[#allocation2 + $0x1f8] sm:$0xff]
    %v830 = vld [vmem:[%s2] sm:$0x1]
    %v832 = vperm.slane %v830, 0
    %v834 = vadd.f32 %v766, %v832
    %v835 = vadd.f32 %v767, %v832
    %v836 = vadd.f32 %v768, %v832
    %v837 = vadd.f32 %v769, %v832
    %v838 = vadd.f32 %v770, %v832
    %v839 = vadd.f32 %v771, %v832
    %v840 = vadd.f32 %v772, %v832
    %v841 = vadd.f32 %v773, %v832
    %v842 = vadd.f32 %v774, %v832
    %v843 = vadd.f32 %v775, %v832
    %v844 = vadd.f32 %v776, %v832
    %v845 = vadd.f32 %v777, %v832
    %v846 = vadd.f32 %v778, %v832
    %v847 = vadd.f32 %v779, %v832
    %v848 = vadd.f32 %v780, %v832
    %v849 = vadd.f32 %v781, %v832
    %v850 = vadd.f32 %v782, %v832
    %v851 = vadd.f32 %v783, %v832
    %v852 = vadd.f32 %v784, %v832
    %v853 = vadd.f32 %v785, %v832
    %v854 = vadd.f32 %v786, %v832
    %v855 = vadd.f32 %v787, %v832
    %v856 = vadd.f32 %v788, %v832
    %v857 = vadd.f32 %v789, %v832
    %v858 = vadd.f32 %v790, %v832
    %v859 = vadd.f32 %v791, %v832
    %v860 = vadd.f32 %v792, %v832
    %v861 = vadd.f32 %v793, %v832
    %v862 = vadd.f32 %v794, %v832
    %v863 = vadd.f32 %v795, %v832
    %v864 = vadd.f32 %v796, %v832
    %v865 = vadd.f32 %v797, %v832
    %v866 = vadd.f32 %v798, %v832
    %v867 = vadd.f32 %v799, %v832
    %v868 = vadd.f32 %v800, %v832
    %v869 = vadd.f32 %v801, %v832
    %v870 = vadd.f32 %v802, %v832
    %v871 = vadd.f32 %v803, %v832
    %v872 = vadd.f32 %v804, %v832
    %v873 = vadd.f32 %v805, %v832
    %v874 = vadd.f32 %v806, %v832
    %v875 = vadd.f32 %v807, %v832
    %v876 = vadd.f32 %v808, %v832
    %v877 = vadd.f32 %v809, %v832
    %v878 = vadd.f32 %v810, %v832
    %v879 = vadd.f32 %v811, %v832
    %v880 = vadd.f32 %v812, %v832
    %v881 = vadd.f32 %v813, %v832
    %v882 = vadd.f32 %v814, %v832
    %v883 = vadd.f32 %v815, %v832
    %v884 = vadd.f32 %v816, %v832
    %v885 = vadd.f32 %v817, %v832
    %v886 = vadd.f32 %v818, %v832
    %v887 = vadd.f32 %v819, %v832
    %v888 = vadd.f32 %v820, %v832
    %v889 = vadd.f32 %v821, %v832
    %v890 = vadd.f32 %v822, %v832
    %v891 = vadd.f32 %v823, %v832
    %v892 = vadd.f32 %v824, %v832
    %v893 = vadd.f32 %v825, %v832
    %v894 = vadd.f32 %v826, %v832
    %v895 = vadd.f32 %v827, %v832
    %v896 = vadd.f32 %v828, %v832
    %v897 = vadd.f32 %v829, %v832
    %vm898 = vcmp.ge.f32.partialorder %v834, 0.0
    %vm899 = vcmp.ge.f32.partialorder %v835, 0.0
    %vm900 = vcmp.ge.f32.partialorder %v836, 0.0
    %vm901 = vcmp.ge.f32.partialorder %v837, 0.0
    %vm902 = vcmp.ge.f32.partialorder %v838, 0.0
    %vm903 = vcmp.ge.f32.partialorder %v839, 0.0
    %vm904 = vcmp.ge.f32.partialorder %v840, 0.0
    %vm905 = vcmp.ge.f32.partialorder %v841, 0.0
    %vm906 = vcmp.ge.f32.partialorder %v842, 0.0
    %vm907 = vcmp.ge.f32.partialorder %v843, 0.0
    %vm908 = vcmp.ge.f32.partialorder %v844, 0.0
    %vm909 = vcmp.ge.f32.partialorder %v845, 0.0
    %vm910 = vcmp.ge.f32.partialorder %v846, 0.0
    %vm911 = vcmp.ge.f32.partialorder %v847, 0.0
    %vm912 = vcmp.ge.f32.partialorder %v848, 0.0
    %vm913 = vcmp.ge.f32.partialorder %v849, 0.0
    %vm914 = vcmp.ge.f32.partialorder %v850, 0.0
    %vm915 = vcmp.ge.f32.partialorder %v851, 0.0
    %vm916 = vcmp.ge.f32.partialorder %v852, 0.0
    %vm917 = vcmp.ge.f32.partialorder %v853, 0.0
    %vm918 = vcmp.ge.f32.partialorder %v854, 0.0
    %vm919 = vcmp.ge.f32.partialorder %v855, 0.0
    %vm920 = vcmp.ge.f32.partialorder %v856, 0.0
    %vm921 = vcmp.ge.f32.partialorder %v857, 0.0
    %vm922 = vcmp.ge.f32.partialorder %v858, 0.0
    %vm923 = vcmp.ge.f32.partialorder %v859, 0.0
    %vm924 = vcmp.ge.f32.partialorder %v860, 0.0
    %vm925 = vcmp.ge.f32.partialorder %v861, 0.0
    %vm926 = vcmp.ge.f32.partialorder %v862, 0.0
    %vm927 = vcmp.ge.f32.partialorder %v863, 0.0
    %vm928 = vcmp.ge.f32.partialorder %v864, 0.0
    %vm929 = vcmp.ge.f32.partialorder %v865, 0.0
    %vm930 = vcmp.ge.f32.partialorder %v866, 0.0
    %vm931 = vcmp.ge.f32.partialorder %v867, 0.0
    %vm932 = vcmp.ge.f32.partialorder %v868, 0.0
    %vm933 = vcmp.ge.f32.partialorder %v869, 0.0
    %vm934 = vcmp.ge.f32.partialorder %v870, 0.0
    %vm935 = vcmp.ge.f32.partialorder %v871, 0.0
    %vm936 = vcmp.ge.f32.partialorder %v872, 0.0
    %vm937 = vcmp.ge.f32.partialorder %v873, 0.0
    %vm938 = vcmp.ge.f32.partialorder %v874, 0.0
    %vm939 = vcmp.ge.f32.partialorder %v875, 0.0
    %vm940 = vcmp.ge.f32.partialorder %v876, 0.0
    %vm941 = vcmp.ge.f32.partialorder %v877, 0.0
    %vm942 = vcmp.ge.f32.partialorder %v878, 0.0
    %vm943 = vcmp.ge.f32.partialorder %v879, 0.0
    %vm944 = vcmp.ge.f32.partialorder %v880, 0.0
    %vm945 = vcmp.ge.f32.partialorder %v881, 0.0
    %vm946 = vcmp.ge.f32.partialorder %v882, 0.0
    %vm947 = vcmp.ge.f32.partialorder %v883, 0.0
    %vm948 = vcmp.ge.f32.partialorder %v884, 0.0
    %vm949 = vcmp.ge.f32.partialorder %v885, 0.0
    %vm950 = vcmp.ge.f32.partialorder %v886, 0.0
    %vm951 = vcmp.ge.f32.partialorder %v887, 0.0
    %vm952 = vcmp.ge.f32.partialorder %v888, 0.0
    %vm953 = vcmp.ge.f32.partialorder %v889, 0.0
    %vm954 = vcmp.ge.f32.partialorder %v890, 0.0
    %vm955 = vcmp.ge.f32.partialorder %v891, 0.0
    %vm956 = vcmp.ge.f32.partialorder %v892, 0.0
    %vm957 = vcmp.ge.f32.partialorder %v893, 0.0
    %vm958 = vcmp.ge.f32.partialorder %v894, 0.0
    %vm959 = vcmp.ge.f32.partialorder %v895, 0.0
    %vm960 = vcmp.ge.f32.partialorder %v896, 0.0
    %vm961 = vcmp.ge.f32.partialorder %v897, 0.0
    %v962 = vmul.f32 %v834, 0.2
    %v963 = vmul.f32 %v835, 0.2
    %v964 = vmul.f32 %v836, 0.2
    %v965 = vmul.f32 %v837, 0.2
    %v966 = vmul.f32 %v838, 0.2
    %v967 = vmul.f32 %v839, 0.2
    %v968 = vmul.f32 %v840, 0.2
    %v969 = vmul.f32 %v841, 0.2
    %v970 = vmul.f32 %v842, 0.2
    %v971 = vmul.f32 %v843, 0.2
    %v972 = vmul.f32 %v844, 0.2
    %v973 = vmul.f32 %v845, 0.2
    %v974 = vmul.f32 %v846, 0.2
    %v975 = vmul.f32 %v847, 0.2
    %v976 = vmul.f32 %v848, 0.2
    %v977 = vmul.f32 %v849, 0.2
    %v978 = vmul.f32 %v850, 0.2
    %v979 = vmul.f32 %v851, 0.2
    %v980 = vmul.f32 %v852, 0.2
    %v981 = vmul.f32 %v853, 0.2
    %v982 = vmul.f32 %v854, 0.2
    %v983 = vmul.f32 %v855, 0.2
    %v984 = vmul.f32 %v856, 0.2
    %v985 = vmul.f32 %v857, 0.2
    %v986 = vmul.f32 %v858, 0.2
    %v987 = vmul.f32 %v859, 0.2
    %v988 = vmul.f32 %v860, 0.2
    %v989 = vmul.f32 %v861, 0.2
    %v990 = vmul.f32 %v862, 0.2
    %v991 = vmul.f32 %v863, 0.2
    %v992 = vmul.f32 %v864, 0.2
    %v993 = vmul.f32 %v865, 0.2
    %v994 = vmul.f32 %v866, 0.2
    %v995 = vmul.f32 %v867, 0.2
    %v996 = vmul.f32 %v868, 0.2
    %v997 = vmul.f32 %v869, 0.2
    %v998 = vmul.f32 %v870, 0.2
    %v999 = vmul.f32 %v871, 0.2
    %v1000 = vmul.f32 %v872, 0.2
    %v1001 = vmul.f32 %v873, 0.2
    %v1002 = vmul.f32 %v874, 0.2
    %v1003 = vmul.f32 %v875, 0.2
    %v1004 = vmul.f32 %v876, 0.2
    %v1005 = vmul.f32 %v877, 0.2
    %v1006 = vmul.f32 %v878, 0.2
    %v1007 = vmul.f32 %v879, 0.2
    %v1008 = vmul.f32 %v880, 0.2
    %v1009 = vmul.f32 %v881, 0.2
    %v1010 = vmul.f32 %v882, 0.2
    %v1011 = vmul.f32 %v883, 0.2
    %v1012 = vmul.f32 %v884, 0.2
    %v1013 = vmul.f32 %v885, 0.2
    %v1014 = vmul.f32 %v886, 0.2
    %v1015 = vmul.f32 %v887, 0.2
    %v1016 = vmul.f32 %v888, 0.2
    %v1017 = vmul.f32 %v889, 0.2
    %v1018 = vmul.f32 %v890, 0.2
    %v1019 = vmul.f32 %v891, 0.2
    %v1020 = vmul.f32 %v892, 0.2
    %v1021 = vmul.f32 %v893, 0.2
    %v1022 = vmul.f32 %v894, 0.2
    %v1023 = vmul.f32 %v895, 0.2
    %v1024 = vmul.f32 %v896, 0.2
    %v1025 = vmul.f32 %v897, 0.2
    %v1026 = vsel %vm898, %v834, %v962
    %v1027 = vsel %vm899, %v835, %v963
    %v1028 = vsel %vm900, %v836, %v964
    %v1029 = vsel %vm901, %v837, %v965
    %v1030 = vsel %vm902, %v838, %v966
    %v1031 = vsel %vm903, %v839, %v967
    %v1032 = vsel %vm904, %v840, %v968
    %v1033 = vsel %vm905, %v841, %v969
    %v1034 = vsel %vm906, %v842, %v970
    %v1035 = vsel %vm907, %v843, %v971
    %v1036 = vsel %vm908, %v844, %v972
    %v1037 = vsel %vm909, %v845, %v973
    %v1038 = vsel %vm910, %v846, %v974
    %v1039 = vsel %vm911, %v847, %v975
    %v1040 = vsel %vm912, %v848, %v976
    %v1041 = vsel %vm913, %v849, %v977
    %v1042 = vsel %vm914, %v850, %v978
    %v1043 = vsel %vm915, %v851, %v979
    %v1044 = vsel %vm916, %v852, %v980
    %v1045 = vsel %vm917, %v853, %v981
    %v1046 = vsel %vm918, %v854, %v982
    %v1047 = vsel %vm919, %v855, %v983
    %v1048 = vsel %vm920, %v856, %v984
    %v1049 = vsel %vm921, %v857, %v985
    %v1050 = vsel %vm922, %v858, %v986
    %v1051 = vsel %vm923, %v859, %v987
    %v1052 = vsel %vm924, %v860, %v988
    %v1053 = vsel %vm925, %v861, %v989
    %v1054 = vsel %vm926, %v862, %v990
    %v1055 = vsel %vm927, %v863, %v991
    %v1056 = vsel %vm928, %v864, %v992
    %v1057 = vsel %vm929, %v865, %v993
    %v1058 = vsel %vm930, %v866, %v994
    %v1059 = vsel %vm931, %v867, %v995
    %v1060 = vsel %vm932, %v868, %v996
    %v1061 = vsel %vm933, %v869, %v997
    %v1062 = vsel %vm934, %v870, %v998
    %v1063 = vsel %vm935, %v871, %v999
    %v1064 = vsel %vm936, %v872, %v1000
    %v1065 = vsel %vm937, %v873, %v1001
    %v1066 = vsel %vm938, %v874, %v1002
    %v1067 = vsel %vm939, %v875, %v1003
    %v1068 = vsel %vm940, %v876, %v1004
    %v1069 = vsel %vm941, %v877, %v1005
    %v1070 = vsel %vm942, %v878, %v1006
    %v1071 = vsel %vm943, %v879, %v1007
    %v1072 = vsel %vm944, %v880, %v1008
    %v1073 = vsel %vm945, %v881, %v1009
    %v1074 = vsel %vm946, %v882, %v1010
    %v1075 = vsel %vm947, %v883, %v1011
    %v1076 = vsel %vm948, %v884, %v1012
    %v1077 = vsel %vm949, %v885, %v1013
    %v1078 = vsel %vm950, %v886, %v1014
    %v1079 = vsel %vm951, %v887, %v1015
    %v1080 = vsel %vm952, %v888, %v1016
    %v1081 = vsel %vm953, %v889, %v1017
    %v1082 = vsel %vm954, %v890, %v1018
    %v1083 = vsel %vm955, %v891, %v1019
    %v1084 = vsel %vm956, %v892, %v1020
    %v1085 = vsel %vm957, %v893, %v1021
    %v1086 = vsel %vm958, %v894, %v1022
    %v1087 = vsel %vm959, %v895, %v1023
    %v1088 = vsel %vm960, %v896, %v1024
    %v1089 = vsel %vm961, %v897, %v1025
    %1090 = vst [vmem:[%s3] sm:$0xff] %v1026
    %1091 = vst [vmem:[%s3 + $0x8] sm:$0xff] %v1027
    %1092 = vst [vmem:[%s3 + $0x10] sm:$0xff] %v1028
    %1093 = vst [vmem:[%s3 + $0x18] sm:$0xff] %v1029
    %1094 = vst [vmem:[%s3 + $0x20] sm:$0xff] %v1030
    %1095 = vst [vmem:[%s3 + $0x28] sm:$0xff] %v1031
    %1096 = vst [vmem:[%s3 + $0x30] sm:$0xff] %v1032
    %1097 = vst [vmem:[%s3 + $0x38] sm:$0xff] %v1033
    %1098 = vst [vmem:[%s3 + $0x40] sm:$0xff] %v1034
    %1099 = vst [vmem:[%s3 + $0x48] sm:$0xff] %v1035
    %1100 = vst [vmem:[%s3 + $0x50] sm:$0xff] %v1036
    %1101 = vst [vmem:[%s3 + $0x58] sm:$0xff] %v1037
    %1102 = vst [vmem:[%s3 + $0x60] sm:$0xff] %v1038
    %1103 = vst [vmem:[%s3 + $0x68] sm:$0xff] %v1039
    %1104 = vst [vmem:[%s3 + $0x70] sm:$0xff] %v1040
    %1105 = vst [vmem:[%s3 + $0x78] sm:$0xff] %v1041
    %1106 = vst [vmem:[%s3 + $0x80] sm:$0xff] %v1042
    %1107 = vst [vmem:[%s3 + $0x88] sm:$0xff] %v1043
    %1108 = vst [vmem:[%s3 + $0x90] sm:$0xff] %v1044
    %1109 = vst [vmem:[%s3 + $0x98] sm:$0xff] %v1045
    %1110 = vst [vmem:[%s3 + $0xa0] sm:$0xff] %v1046
    %1111 = vst [vmem:[%s3 + $0xa8] sm:$0xff] %v1047
    %1112 = vst [vmem:[%s3 + $0xb0] sm:$0xff] %v1048
    %1113 = vst [vmem:[%s3 + $0xb8] sm:$0xff] %v1049
    %1114 = vst [vmem:[%s3 + $0xc0] sm:$0xff] %v1050
    %1115 = vst [vmem:[%s3 + $0xc8] sm:$0xff] %v1051
    %1116 = vst [vmem:[%s3 + $0xd0] sm:$0xff] %v1052
    %1117 = vst [vmem:[%s3 + $0xd8] sm:$0xff] %v1053
    %1118 = vst [vmem:[%s3 + $0xe0] sm:$0xff] %v1054
    %1119 = vst [vmem:[%s3 + $0xe8] sm:$0xff] %v1055
    %1120 = vst [vmem:[%s3 + $0xf0] sm:$0xff] %v1056
    %1121 = vst [vmem:[%s3 + $0xf8] sm:$0xff] %v1057
    %1122 = vst [vmem:[%s3 + $0x100] sm:$0xff] %v1058
    %1123 = vst [vmem:[%s3 + $0x108] sm:$0xff] %v1059
    %1124 = vst [vmem:[%s3 + $0x110] sm:$0xff] %v1060
    %1125 = vst [vmem:[%s3 + $0x118] sm:$0xff] %v1061
    %1126 = vst [vmem:[%s3 + $0x120] sm:$0xff] %v1062
    %1127 = vst [vmem:[%s3 + $0x128] sm:$0xff] %v1063
    %1128 = vst [vmem:[%s3 + $0x130] sm:$0xff] %v1064
    %1129 = vst [vmem:[%s3 + $0x138] sm:$0xff] %v1065
    %1130 = vst [vmem:[%s3 + $0x140] sm:$0xff] %v1066
    %1131 = vst [vmem:[%s3 + $0x148] sm:$0xff] %v1067
    %1132 = vst [vmem:[%s3 + $0x150] sm:$0xff] %v1068
    %1133 = vst [vmem:[%s3 + $0x158] sm:$0xff] %v1069
    %1134 = vst [vmem:[%s3 + $0x160] sm:$0xff] %v1070
    %1135 = vst [vmem:[%s3 + $0x168] sm:$0xff] %v1071
    %1136 = vst [vmem:[%s3 + $0x170] sm:$0xff] %v1072
    %1137 = vst [vmem:[%s3 + $0x178] sm:$0xff] %v1073
    %1138 = vst [vmem:[%s3 + $0x180] sm:$0xff] %v1074
    %1139 = vst [vmem:[%s3 + $0x188] sm:$0xff] %v1075
    %1140 = vst [vmem:[%s3 + $0x190] sm:$0xff] %v1076
    %1141 = vst [vmem:[%s3 + $0x198] sm:$0xff] %v1077
    %1142 = vst [vmem:[%s3 + $0x1a0] sm:$0xff] %v1078
    %1143 = vst [vmem:[%s3 + $0x1a8] sm:$0xff] %v1079
    %1144 = vst [vmem:[%s3 + $0x1b0] sm:$0xff] %v1080
    %1145 = vst [vmem:[%s3 + $0x1b8] sm:$0xff] %v1081
    %1146 = vst [vmem:[%s3 + $0x1c0] sm:$0xff] %v1082
    %1147 = vst [vmem:[%s3 + $0x1c8] sm:$0xff] %v1083
    %1148 = vst [vmem:[%s3 + $0x1d0] sm:$0xff] %v1084
    %1149 = vst [vmem:[%s3 + $0x1d8] sm:$0xff] %v1085
    %1150 = vst [vmem:[%s3 + $0x1e0] sm:$0xff] %v1086
    %1151 = vst [vmem:[%s3 + $0x1e8] sm:$0xff] %v1087
    %1152 = vst [vmem:[%s3 + $0x1f0] sm:$0xff] %v1088
    %1153 = vst [vmem:[%s3 + $0x1f8] sm:$0xff] %v1089
  $region21: #{discriminator_forward.8} parent=0 // pred_fallthru
    _
  // Predicated region
  $region22: #{discriminator_forward.8} parent=0 // pred_check
    _
  $region23: #{discriminator_forward.8} parent=0 // pred_check_branch
    %1155 = sbr.rel (0) target = $region25
  $region24: #{discriminator_forward.8} parent=0 // pred_region
    _
  $region25: #{discriminator_forward.8} parent=0 // pred_fallthru
    _
  // Predicated region
  $region26: #{discriminator_forward.8} parent=0 // pred_check
    _
  $region27: #{discriminator_forward.8} parent=0 // pred_check_branch
    %1157 = sbr.rel (0) target = $region29
  $region28: #{discriminator_forward.8} parent=0 // pred_region
    _
  $region29: #{discriminator_forward.8} parent=0 // pred_fallthru
    _

// kernel: discriminator_forward.10
$region0: #{discriminator_forward.10}
  #allocation0 [shape = 'u32[]', space=smem, size = 0x4, offset = 0x4, fixed_abs, tag = 'smem constant byte address 0x4 - core index']
  #allocation1 [shape = 'u32[72,128]{1,0:T(1,128)}', space=vmem, size = 0x9000, scoped, tag = 'internal scratch']
  %s0 = inlined_call_operand.vmem [shape: f32[2,64,128], index: 0, kind: input, shape index: {}]
  %s1 = inlined_call_operand.vmem [shape: f32[2,64,128], index: 1, kind: output, shape index: {}]
  %s2 = sld [smem:[#allocation0]]
  $region37: #{discriminator_forward.10} parent=0
    _
  %s4 = ssub.s32 1, %s2
  %s5 = scalar_select 0, %s4, %s2
  loop: start=0, step=1, limit=4
  $region2: #{discriminator_forward.10} parent=0 // loop_pre_header
    _
  $region3: #{discriminator_forward.10} parent=0 // loop_header
    %s7 = sphi 0, %s11
    %p8 = scmp.ge.s32.totalorder %s7, 4
    %s14 = sphi 0, %s26
    %s15 = sphi 0, %s22
    %s16 = sphi 0, %s14
    %s17 = sphi 0, %s15
    %s18 = sphi 0, %s16
    %s19 = sphi 0, %s17
    %s31 = sphi 0, %s33
    %s34 = sphi 0, %s31
    %s35 = sphi 0, %s34
    %s51 = sphi 0, %s35
    %s59 = sphi 0, %s61
    %s62 = sphi 0, %s59
    %s63 = sphi 0, %s62
    %s79 = sphi 0, %s63
  $region4: #{discriminator_forward.10} parent=0 // loop_header_branch
    %10 = sbr.rel (%p8) target = $region8
  $region5: #{discriminator_forward.10} parent=0 // loop_body
    %s12 = ssub.s32 %s7, 1
    %s13 = ssub.s32 %s7, 2
    %s20 = sadd.s32 1, %s15
    %p21 = scmp.ge.s32.totalorder %s20, 1
    %s22 = scalar_select %p21, 0, %s20
    %s23 = sadd.s32 1, %s14
    %s24 = scalar_select %p21, %s23, %s14
    %p25 = scmp.ge.s32.totalorder %s24, 2
    %s26 = scalar_select %p25, 0, %s24
    %s27 = ssub.s32 %s14, %s26
    %s28 = ssub.s32 %s15, %s22
    %s29 = sor.u32 %s27, %s28
    %p30 = scmp.eq.s32.totalorder %s29, 0
    %s32 = sadd.s32 %s31, 1
    %s33 = scalar_select %p30, %s31, %s32
    %p36 = pneg %p30
    %p37 = scmp.eq.s32.totalorder %s7, 1
    %p38 = por %p36, %p37
    %p39 = scmp.ne.s32.totalorder %s31, %s34
    %p40 = scmp.eq.s32.totalorder %s7, 0
    %p41 = por %p39, %p40
    %p42 = scmp.ne.s32.totalorder %s31, %s34
    %p43 = scmp.eq.s32.totalorder %s12, 1
    %p44 = por %p42, %p43
    %p45 = scmp.ne.s32.totalorder %s34, %s35
    %p46 = scmp.eq.s32.totalorder %s12, 0
    %p47 = por %p45, %p46
    %p48 = scmp.ne.s32.totalorder %s34, %s35
    %p49 = scmp.eq.s32.totalorder %s13, 1
    %p50 = por %p48, %p49
    %p52 = scmp.ne.s32.totalorder %s35, %s51
    %p53 = scmp.eq.s32.totalorder %s13, 0
    %p54 = por %p52, %p53
    %s55 = ssub.s32 %s14, %s26
    %s56 = ssub.s32 %s15, %s22
    %s57 = sor.u32 %s55, %s56
    %p58 = scmp.eq.s32.totalorder %s57, 0
    %s60 = sadd.s32 %s59, 1
    %s61 = scalar_select %p58, %s59, %s60
    %p64 = pneg %p58
    %p65 = scmp.eq.s32.totalorder %s7, 1
    %p66 = por %p64, %p65
    %p67 = scmp.ne.s32.totalorder %s59, %s62
    %p68 = scmp.eq.s32.totalorder %s7, 0
    %p69 = por %p67, %p68
    %p70 = scmp.ne.s32.totalorder %s59, %s62
    %p71 = scmp.eq.s32.totalorder %s12, 1
    %p72 = por %p70, %p71
    %p73 = scmp.ne.s32.totalorder %s62, %s63
    %p74 = scmp.eq.s32.totalorder %s12, 0
    %p75 = por %p73, %p74
    %p76 = scmp.ne.s32.totalorder %s62, %s63
    %p77 = scmp.eq.s32.totalorder %s13, 1
    %p78 = por %p76, %p77
    %p80 = scmp.ne.s32.totalorder %s63, %s79
    %p81 = scmp.eq.s32.totalorder %s13, 0
    %p82 = por %p80, %p81
    %p83 = scmp.le.s32.totalorder 1, %s7
    %p84 = scmp.lt.s32.totalorder %s7, 3
    %p85 = pnand %p83, %p84
    %p86 = pneg %p85
    // Predicated region
    $region9: #{discriminator_forward.10} parent=5 // pred_check
      _
    $region10: #{discriminator_forward.10} parent=5 // pred_check_branch
      %88 = sbr.rel (%p85) target = $region12
    $region11: #{discriminator_forward.10} parent=5 // pred_region
      %s89 = ssub.s32 %s7, 1
    $region12: #{discriminator_forward.10} parent=5 // pred_fallthru
      _
    %p90 = scmp.lt.s32.totalorder %s7, 2
    // Predicated region
    $region13: #{discriminator_forward.10} parent=5 // pred_check
      %p91 = pneg %p90
    $region14: #{discriminator_forward.10} parent=5 // pred_check_branch
      %93 = sbr.rel (%p91) target = $region16
    $region15: #{discriminator_forward.10} parent=5 // pred_region
      // Predicated region
      $region17: #{discriminator_forward.10} parent=15 // pred_check
        %p94 = pneg %p41
      $region18: #{discriminator_forward.10} parent=15 // pred_check_branch
        %96 = sbr.rel (%p94) target = $region20
      $region19: #{discriminator_forward.10} parent=15 // pred_region
        %p97 = scmp.lt.s32.totalorder %s14, 1
        %s98 = scalar_select %p97, %s14, 1
        %p99 = scmp.lt.s32.totalorder %s15, 0
        %s100 = scalar_select %p99, %s15, 0
        %s101 = smul.addr %s98, 8
        %s102 = sadd.s32 %s100, %s101
        %s103 = smul.addr %s102, 8
        %s104 = scalar_lea.vmem %s0, %s103
      $region20: #{discriminator_forward.10} parent=15 // pred_fallthru
        _
    $region16: #{discriminator_forward.10} parent=5 // pred_fallthru
      _
    %p105 = scmp.le.s32.totalorder 1, %s7
    %p106 = scmp.lt.s32.totalorder %s7, 3
    %p107 = pnand %p105, %p106
    %p108 = pneg %p107
    // Predicated region
    $region21: #{discriminator_forward.10} parent=5 // pred_check
      _
    $region22: #{discriminator_forward.10} parent=5 // pred_check_branch
      %110 = sbr.rel (%p107) target = $region24
    $region23: #{discriminator_forward.10} parent=5 // pred_region
      %s111 = ssub.s32 %s7, 1
      %p112 = scmp.lt.s32.totalorder %s16, 1
      %s113 = scalar_select %p112, %s16, 1
      %p114 = scmp.lt.s32.totalorder %s17, 0
      %s115 = scalar_select %p114, %s17, 0
      %s116 = smul.addr %s113, 8
      %s117 = sadd.s32 %s115, %s116
      %s118 = smul.addr %s117, 8
      %s119 = scalar_lea.vmem %s0, %s118
      %p120 = pneg %p47
      %p121 = pneg %p44
      %p122 = pneg %p75
      %p123 = pneg %p72
      %p124 = scmp.lt.s32.totalorder %s16, 1
      %s125 = scalar_select %p124, %s16, 1
      %p126 = scmp.lt.s32.totalorder %s17, 0
      %s127 = scalar_select %p126, %s17, 0
      %s128 = smul.addr %s125, 8
      %s129 = sadd.s32 %s127, %s128
      %s130 = smul.addr %s129, 8
      %s131 = scalar_lea.vmem %s1, %s130
      %p132 = scmp.lt.s32.totalorder %s16, 1
      %s133 = scalar_select %p132, %s16, 1
      %p134 = scmp.lt.s32.totalorder %s17, 0
      %s135 = scalar_select %p134, %s17, 0
      %s136 = smul.addr %s133, 8
      %s137 = sadd.s32 %s135, %s136
      %s138 = smul.addr %s137, 8
      %s139 = scalar_lea.vmem %s0, %s138
      %p140 = scmp.lt.s32.totalorder %s16, 1
      %s141 = scalar_select %p140, %s16, 1
      %p142 = scmp.lt.s32.totalorder %s17, 0
      %s143 = scalar_select %p142, %s17, 0
      %s144 = smul.addr %s141, 8
      %s145 = sadd.s32 %s143, %s144
      %s146 = smul.addr %s145, 8
      %s147 = scalar_lea.vmem %s1, %s146
      %v148 = vld [vmem:[%s139] sm:$0xff]
      %v149 = vld [vmem:[%s139 + $0x8] sm:$0xff]
      %v150 = vld [vmem:[%s139 + $0x10] sm:$0xff]
      %v151 = vld [vmem:[%s139 + $0x18] sm:$0xff]
      %v152 = vld [vmem:[%s139 + $0x20] sm:$0xff]
      %v153 = vld [vmem:[%s139 + $0x28] sm:$0xff]
      %v154 = vld [vmem:[%s139 + $0x30] sm:$0xff]
      %v155 = vld [vmem:[%s139 + $0x38] sm:$0xff]
      %v156 = vadd.f32 %v148, %v149
      %v157 = vadd.f32 %v156, %v150
      %v158 = vadd.f32 %v157, %v151
      %v159 = vadd.f32 %v158, %v152
      %v160 = vadd.f32 %v159, %v153
      %v161 = vadd.f32 %v160, %v154
      %v162 = vadd.f32 %v161, %v155
      %v163 = vrot.slane %v162, 4
      %v164 = vadd.f32 %v162, %v163
      %v165 = vrot.slane %v164, 2
      %v166 = vadd.f32 %v164, %v165
      %v167 = vrot.slane %v166, 1
      %v168 = vadd.f32 %v166, %v167
      %v169 = vrcp.pop 64.0
      %v170 = vmul.f32 64.0, %v169
      %v171 = vsub.f32 1.0, %v170
      %v172 = vmul.f32 %v169, %v171
      %v173 = vadd.f32 %v169, %v172
      %vm174 = vweird.f32 %v169
      %v175 = vsel %vm174, %v169, %v173
      %v176 = vmul.f32 %v168, %v175
      %v177 = vsub.f32 %v148, %v176
      %v178 = vsub.f32 %v149, %v176
      %v179 = vsub.f32 %v150, %v176
      %v180 = vsub.f32 %v151, %v176
      %v181 = vsub.f32 %v152, %v176
      %v182 = vsub.f32 %v153, %v176
      %v183 = vsub.f32 %v154, %v176
      %v184 = vsub.f32 %v155, %v176
      %v185 = vmul.f32 %v177, %v177
      %v186 = vmul.f32 %v178, %v178
      %v187 = vmul.f32 %v179, %v179
      %v188 = vmul.f32 %v180, %v180
      %v189 = vmul.f32 %v181, %v181
      %v190 = vmul.f32 %v182, %v182
      %v191 = vmul.f32 %v183, %v183
      %v192 = vmul.f32 %v184, %v184
      %v193 = vadd.f32 %v185, %v186
      %v194 = vadd.f32 %v193, %v187
      %v195 = vadd.f32 %v194, %v188
      %v196 = vadd.f32 %v195, %v189
      %v197 = vadd.f32 %v196, %v190
      %v198 = vadd.f32 %v197, %v191
      %v199 = vadd.f32 %v198, %v192
      %v200 = vrot.slane %v199, 4
      %v201 = vadd.f32 %v199, %v200
      %v202 = vrot.slane %v201, 2
      %v203 = vadd.f32 %v201, %v202
      %v204 = vrot.slane %v203, 1
      %v205 = vadd.f32 %v203, %v204
      %v206 = vmul.f32 %v205, %v175
      %v207 = vadd.f32 %v206, 1e-05
      %v208 = vrsqrt.pop %v207
      %v209 = vmul.f32 %v208, %v207
      %v210 = vmul.f32 %v209, %v208
      %v211 = vmul.f32 0.5, %v210
      %v212 = vsub.f32 1.5, %v211
      %v213 = vmul.f32 %v208, %v212
      %vm214 = vweird.f32 %v207
      %vm215 = vweird.f32 %v208
      %vm216 = vmor %vm214, %vm215
      %v217 = vsel %vm216, %v208, %v213
      %v218 = vmul.f32 %v177, %v217
      %v219 = vmul.f32 %v178, %v217
      %v220 = vmul.f32 %v179, %v217
      %v221 = vmul.f32 %v180, %v217
      %v222 = vmul.f32 %v181, %v217
      %v223 = vmul.f32 %v182, %v217
      %v224 = vmul.f32 %v183, %v217
      %v225 = vmul.f32 %v184, %v217
      %vm226 = vcmp.ge.f32.partialorder %v218, 0.0
      %vm227 = vcmp.ge.f32.partialorder %v219, 0.0
      %vm228 = vcmp.ge.f32.partialorder %v220, 0.0
      %vm229 = vcmp.ge.f32.partialorder %v221, 0.0
      %vm230 = vcmp.ge.f32.partialorder %v222, 0.0
      %vm231 = vcmp.ge.f32.partialorder %v223, 0.0
      %vm232 = vcmp.ge.f32.partialorder %v224, 0.0
      %vm233 = vcmp.ge.f32.partialorder %v225, 0.0
      %v234 = vmul.f32 %v218, 0.2
      %v235 = vmul.f32 %v219, 0.2
      %v236 = vmul.f32 %v220, 0.2
      %v237 = vmul.f32 %v221, 0.2
      %v238 = vmul.f32 %v222, 0.2
      %v239 = vmul.f32 %v223, 0.2
      %v240 = vmul.f32 %v224, 0.2
      %v241 = vmul.f32 %v225, 0.2
      %v242 = vsel %vm226, %v218, %v234
      %v243 = vsel %vm227, %v219, %v235
      %v244 = vsel %vm228, %v220, %v236
      %v245 = vsel %vm229, %v221, %v237
      %v246 = vsel %vm230, %v222, %v238
      %v247 = vsel %vm231, %v223, %v239
      %v248 = vsel %vm232, %v224, %v240
      %v249 = vsel %vm233, %v225, %v241
      %250 = vst [vmem:[%s147] sm:$0xff] %v242
      %251 = vst [vmem:[%s147 + $0x8] sm:$0xff] %v243
      %252 = vst [vmem:[%s147 + $0x10] sm:$0xff] %v244
      %253 = vst [vmem:[%s147 + $0x18] sm:$0xff] %v245
      %254 = vst [vmem:[%s147 + $0x20] sm:$0xff] %v246
      %255 = vst [vmem:[%s147 + $0x28] sm:$0xff] %v247
      %256 = vst [vmem:[%s147 + $0x30] sm:$0xff] %v248
      %257 = vst [vmem:[%s147 + $0x38] sm:$0xff] %v249
      %p258 = scmp.lt.s32.totalorder %s16, 1
      %s259 = scalar_select %p258, %s16, 1
      %p260 = scmp.lt.s32.totalorder %s17, 0
      %s261 = scalar_select %p260, %s17, 0
      %s262 = smul.addr %s259, 8
      %s263 = sadd.s32 %s261, %s262
      %s264 = smul.addr %s263, 8
      %s265 = scalar_lea.vmem %s1, %s264
      // Predicated region
      $region25: #{discriminator_forward.10} parent=23 // pred_check
        %p266 = pneg %p72
      $region26: #{discriminator_forward.10} parent=23 // pred_check_branch
        %268 = sbr.rel (%p266) target = $region28
      $region27: #{discriminator_forward.10} parent=23 // pred_region
        _
      $region28: #{discriminator_forward.10} parent=23 // pred_fallthru
        _
    $region24: #{discriminator_forward.10} parent=5 // pred_fallthru
      _
    %p269 = scmp.le.s32.totalorder 2, %s7
    // Predicated region
    $region29: #{discriminator_forward.10} parent=5 // pred_check
      %p270 = pneg %p269
    $region30: #{discriminator_forward.10} parent=5 // pred_check_branch
      %272 = sbr.rel (%p270) target = $region32
    $region31: #{discriminator_forward.10} parent=5 // pred_region
      %s273 = ssub.s32 %s7, 2
      // Predicated region
      $region33: #{discriminator_forward.10} parent=31 // pred_check
        %p274 = pneg %p78
      $region34: #{discriminator_forward.10} parent=31 // pred_check_branch
        %276 = sbr.rel (%p274) target = $region36
      $region35: #{discriminator_forward.10} parent=31 // pred_region
        %p277 = scmp.lt.s32.totalorder %s18, 1
        %s278 = scalar_select %p277, %s18, 1
        %p279 = scmp.lt.s32.totalorder %s19, 0
        %s280 = scalar_select %p279, %s19, 0
        %s281 = smul.addr %s278, 8
        %s282 = sadd.s32 %s280, %s281
        %s283 = smul.addr %s282, 8
        %s284 = scalar_lea.vmem %s1, %s283
      $region36: #{discriminator_forward.10} parent=31 // pred_fallthru
        _
    $region32: #{discriminator_forward.10} parent=5 // pred_fallthru
      _
  $region6: #{discriminator_forward.10} parent=0 // loop_footer
    %s11 = sadd.s32 1, %s7
  $region7: #{discriminator_forward.10} parent=0 // loop_footer_branch
    %6 = sbr.rel target = $region3
  $region8: #{discriminator_forward.10} parent=0 // loop_exit
    _

// kernel: discriminator_forward.9
$region0: #{discriminator_forward.9}
  #allocation0 [shape = 'u32[]', space=smem, size = 0x4, offset = 0x4, fixed_abs, tag = 'smem constant byte address 0x4 - core index']
  #allocation1 [shape = 'u32[72,128]{1,0:T(1,128)}', space=vmem, size = 0x9000, scoped, tag = 'internal scratch']
  #allocation2 [shape = 'f32[128,128]{1,0:T(8,128)}', space=vmem, size = 0x10000, scoped, tag = 'scratch operand']
  %s0 = inlined_call_operand.vmem [shape: bf16[128,1024], index: 0, kind: input, shape index: {}]
  %s1 = inlined_call_operand.vmem [shape: bf16[1024,128], index: 1, kind: input, shape index: {}]
  %s2 = inlined_call_operand.vmem [shape: f32[128,128], index: 2, kind: output, shape index: {}]
  %s3 = sld [smem:[#allocation0]]
  $region72: #{discriminator_forward.9} parent=0
    _
  %s5 = ssub.s32 1, %s3
  %s6 = scalar_select 0, %s5, %s3
  $region1: #{discriminator_forward.9} parent=0
    #allocation3 [shape = 'u8[262144]{0}', space=vmem, size = 0x40000, scoped, tag = 'input window, operand 0']
    loop: start=0, step=1, limit=4
    $region2: #{discriminator_forward.9} parent=1 // loop_pre_header
      _
    $region3: #{discriminator_forward.9} parent=1 // loop_header
      %s8 = sphi 0, %s12
      %p9 = scmp.ge.s32.totalorder %s8, 4
      %s15 = sphi 0, %s34
      %s16 = sphi 0, %s30
      %s17 = sphi 0, %s26
      %s18 = sphi 0, %s15
      %s19 = sphi 0, %s16
      %s20 = sphi 0, %s17
      %s21 = sphi 0, %s18
      %s22 = sphi 0, %s19
      %s23 = sphi 0, %s20
      %s39 = sphi 0, %s41
      %s42 = sphi 0, %s39
      %s43 = sphi 0, %s42
      %s59 = sphi 0, %s43
      %s67 = sphi 0, %s69
      %s70 = sphi 0, %s67
      %s71 = sphi 0, %s70
      %s87 = sphi 0, %s71
      %s95 = sphi 0, %s97
      %s98 = sphi 0, %s95
      %s99 = sphi 0, %s98
      %s115 = sphi 0, %s99
    $region4: #{discriminator_forward.9} parent=1 // loop_header_branch
      %11 = sbr.rel (%p9) target = $region8
    $region5: #{discriminator_forward.9} parent=1 // loop_body
      %s13 = ssub.s32 %s8, 1
      %s14 = ssub.s32 %s8, 2
      %s24 = sadd.s32 1, %s17
      %p25 = scmp.ge.s32.totalorder %s24, 2
      %s26 = scalar_select %p25, 0, %s24
      %s27 = sadd.s32 1, %s16
      %s28 = scalar_select %p25, %s27, %s16
      %p29 = scmp.ge.s32.totalorder %s28, 1
      %s30 = scalar_select %p29, 0, %s28
      %s31 = sadd.s32 1, %s15
      %s32 = scalar_select %p29, %s31, %s15
      %p33 = scmp.ge.s32.totalorder %s32, 1
      %s34 = scalar_select %p33, 0, %s32
      %s35 = ssub.s32 %s15, %s34
      %s36 = ssub.s32 %s17, %s26
      %s37 = sor.u32 %s35, %s36
      %p38 = scmp.eq.s32.totalorder %s37, 0
      %s40 = sadd.s32 %s39, 1
      %s41 = scalar_select %p38, %s39, %s40
      %p44 = pneg %p38
      %p45 = scmp.eq.s32.totalorder %s8, 1
      %p46 = por %p44, %p45
      %p47 = scmp.ne.s32.totalorder %s39, %s42
      %p48 = scmp.eq.s32.totalorder %s8, 0
      %p49 = por %p47, %p48
      %p50 = scmp.ne.s32.totalorder %s39, %s42
      %p51 = scmp.eq.s32.totalorder %s13, 1
      %p52 = por %p50, %p51
      %p53 = scmp.ne.s32.totalorder %s42, %s43
      %p54 = scmp.eq.s32.totalorder %s13, 0
      %p55 = por %p53, %p54
      %p56 = scmp.ne.s32.totalorder %s42, %s43
      %p57 = scmp.eq.s32.totalorder %s14, 1
      %p58 = por %p56, %p57
      %p60 = scmp.ne.s32.totalorder %s43, %s59
      %p61 = scmp.eq.s32.totalorder %s14, 0
      %p62 = por %p60, %p61
      %s63 = ssub.s32 %s17, %s26
      %s64 = ssub.s32 %s16, %s30
      %s65 = sor.u32 %s63, %s64
      %p66 = scmp.eq.s32.totalorder %s65, 0
      %s68 = sadd.s32 %s67, 1
      %s69 = scalar_select %p66, %s67, %s68
      %p72 = pneg %p66
      %p73 = scmp.eq.s32.totalorder %s8, 1
      %p74 = por %p72, %p73
      %p75 = scmp.ne.s32.totalorder %s67, %s70
      %p76 = scmp.eq.s32.totalorder %s8, 0
      %p77 = por %p75, %p76
      %p78 = scmp.ne.s32.totalorder %s67, %s70
      %p79 = scmp.eq.s32.totalorder %s13, 1
      %p80 = por %p78, %p79
      %p81 = scmp.ne.s32.totalorder %s70, %s71
      %p82 = scmp.eq.s32.totalorder %s13, 0
      %p83 = por %p81, %p82
      %p84 = scmp.ne.s32.totalorder %s70, %s71
      %p85 = scmp.eq.s32.totalorder %s14, 1
      %p86 = por %p84, %p85
      %p88 = scmp.ne.s32.totalorder %s71, %s87
      %p89 = scmp.eq.s32.totalorder %s14, 0
      %p90 = por %p88, %p89
      %s91 = ssub.s32 %s15, %s34
      %s92 = ssub.s32 %s16, %s30
      %s93 = sor.u32 %s91, %s92
      %p94 = scmp.eq.s32.totalorder %s93, 0
      %s96 = sadd.s32 %s95, 1
      %s97 = scalar_select %p94, %s95, %s96
      %p100 = pneg %p94
      %p101 = scmp.eq.s32.totalorder %s8, 1
      %p102 = por %p100, %p101
      %p103 = scmp.ne.s32.totalorder %s95, %s98
      %p104 = scmp.eq.s32.totalorder %s8, 0
      %p105 = por %p103, %p104
      %p106 = scmp.ne.s32.totalorder %s95, %s98
      %p107 = scmp.eq.s32.totalorder %s13, 1
      %p108 = por %p106, %p107
      %p109 = scmp.ne.s32.totalorder %s98, %s99
      %p110 = scmp.eq.s32.totalorder %s13, 0
      %p111 = por %p109, %p110
      %p112 = scmp.ne.s32.totalorder %s98, %s99
      %p113 = scmp.eq.s32.totalorder %s14, 1
      %p114 = por %p112, %p113
      %p116 = scmp.ne.s32.totalorder %s99, %s115
      %p117 = scmp.eq.s32.totalorder %s14, 0
      %p118 = por %p116, %p117
      %p119 = scmp.le.s32.totalorder 1, %s8
      %p120 = scmp.lt.s32.totalorder %s8, 3
      %p121 = pnand %p119, %p120
      %p122 = pneg %p121
      // Predicated region
      $region9: #{discriminator_forward.9} parent=5 // pred_check
        _
      $region10: #{discriminator_forward.9} parent=5 // pred_check_branch
        %124 = sbr.rel (%p121) target = $region12
      $region11: #{discriminator_forward.9} parent=5 // pred_region
        %s125 = ssub.s32 %s8, 1
      $region12: #{discriminator_forward.9} parent=5 // pred_fallthru
        _
      %p126 = scmp.lt.s32.totalorder %s8, 2
      // Predicated region
      $region13: #{discriminator_forward.9} parent=5 // pred_check
        %p127 = pneg %p126
      $region14: #{discriminator_forward.9} parent=5 // pred_check_branch
        %129 = sbr.rel (%p127) target = $region16
      $region15: #{discriminator_forward.9} parent=5 // pred_region
        // Predicated region
        $region17: #{discriminator_forward.9} parent=15 // pred_check
          %p130 = pneg %p49
        $region18: #{discriminator_forward.9} parent=15 // pred_check_branch
          %132 = sbr.rel (%p130) target = $region20
        $region19: #{discriminator_forward.9} parent=15 // pred_region
          %s133 = sand.u32 %s39, 1
          %s134 = sand.u32 %s39, 1
          %s135 = smul.addr %s134, 256
          %s136 = scalar_lea.vmem [#allocation3], %s135
          %s137 = smul.u32 16, %s15
          %s138 = smul.u32 4, %s17
          %s139 = smul.addr %s137, 8
          %s140 = sadd.s32 %s138, %s139
          %s141 = smul.addr %s140, 4
          %s142 = scalar_lea.vmem %s0, %s141
          // Predicated region
          $region21: #{discriminator_forward.9} parent=19 // pred_check
            _
          $region22: #{discriminator_forward.9} parent=19 // pred_check_branch
            %144 = sbr.rel (0) target = $region24
          $region23: #{discriminator_forward.9} parent=19 // pred_region
            // Predicated region
            $region25: #{discriminator_forward.9} parent=23 // pred_check
              _
            $region26: #{discriminator_forward.9} parent=23 // pred_check_branch
              %146 = sbr.rel (0) target = $region28
            $region27: #{discriminator_forward.9} parent=23 // pred_region
              loop: start=0, step=1, limit=1
              $region29: #{discriminator_forward.9} parent=27 // loop_pre_header
                _
              $region30: #{discriminator_forward.9} parent=27 // loop_header
                %s148 = sphi 0, %s152
                %p149 = scmp.ge.s32.totalorder %s148, 1
                %s153 = sphi %s142, %s142
                %s154 = sphi %s136, %s136
              $region31: #{discriminator_forward.9} parent=27 // loop_header_branch
                %151 = sbr.rel (%p149) target = $region35
              $region32: #{discriminator_forward.9} parent=27 // loop_body
                %v155 = vld [vmem:[%s153] sm:$0xff]
                %156 = vst [vmem:[%s154] sm:$0xff] %v155
                %v157 = vld [vmem:[%s153 + $0x8] sm:$0xff]
                %158 = vst [vmem:[%s154 + $0x8] sm:$0xff] %v157
                %v159 = vld [vmem:[%s153 + $0x20] sm:$0xff]
                %160 = vst [vmem:[%s154 + $0x10] sm:$0xff] %v159
                %v161 = vld [vmem:[%s153 + $0x28] sm:$0xff]
                %162 = vst [vmem:[%s154 + $0x18] sm:$0xff] %v161
                %v163 = vld [vmem:[%s153 + $0x40] sm:$0xff]
                %164 = vst [vmem:[%s154 + $0x20] sm:$0xff] %v163
                %v165 = vld [vmem:[%s153 + $0x48] sm:$0xff]
                %166 = vst [vmem:[%s154 + $0x28] sm:$0xff] %v165
                %v167 = vld [vmem:[%s153 + $0x60] sm:$0xff]
                %168 = vst [vmem:[%s154 + $0x30] sm:$0xff] %v167
                %v169 = vld [vmem:[%s153 + $0x68] sm:$0xff]
                %170 = vst [vmem:[%s154 + $0x38] sm:$0xff] %v169
                %v171 = vld [vmem:[%s153 + $0x80] sm:$0xff]
                %172 = vst [vmem:[%s154 + $0x40] sm:$0xff] %v171
                %v173 = vld [vmem:[%s153 + $0x88] sm:$0xff]
                %174 = vst [vmem:[%s154 + $0x48] sm:$0xff] %v173
                %v175 = vld [vmem:[%s153 + $0xa0] sm:$0xff]
                %176 = vst [vmem:[%s154 + $0x50] sm:$0xff] %v175
                %v177 = vld [vmem:[%s153 + $0xa8] sm:$0xff]
                %178 = vst [vmem:[%s154 + $0x58] sm:$0xff] %v177
                %v179 = vld [vmem:[%s153 + $0xc0] sm:$0xff]
                %180 = vst [vmem:[%s154 + $0x60] sm:$0xff] %v179
                %v181 = vld [vmem:[%s153 + $0xc8] sm:$0xff]
                %182 = vst [vmem:[%s154 + $0x68] sm:$0xff] %v181
                %v183 = vld [vmem:[%s153 + $0xe0] sm:$0xff]
                %184 = vst [vmem:[%s154 + $0x70] sm:$0xff] %v183
                %v185 = vld [vmem:[%s153 + $0xe8] sm:$0xff]
                %186 = vst [vmem:[%s154 + $0x78] sm:$0xff] %v185
                %v187 = vld [vmem:[%s153 + $0x100] sm:$0xff]
                %188 = vst [vmem:[%s154 + $0x80] sm:$0xff] %v187
                %v189 = vld [vmem:[%s153 + $0x108] sm:$0xff]
                %190 = vst [vmem:[%s154 + $0x88] sm:$0xff] %v189
                %v191 = vld [vmem:[%s153 + $0x120] sm:$0xff]
                %192 = vst [vmem:[%s154 + $0x90] sm:$0xff] %v191
                %v193 = vld [vmem:[%s153 + $0x128] sm:$0xff]
                %194 = vst [vmem:[%s154 + $0x98] sm:$0xff] %v193
                %v195 = vld [vmem:[%s153 + $0x140] sm:$0xff]
                %196 = vst [vmem:[%s154 + $0xa0] sm:$0xff] %v195
                %v197 = vld [vmem:[%s153 + $0x148] sm:$0xff]
                %198 = vst [vmem:[%s154 + $0xa8] sm:$0xff] %v197
                %v199 = vld [vmem:[%s153 + $0x160] sm:$0xff]
                %200 = vst [vmem:[%s154 + $0xb0] sm:$0xff] %v199
                %v201 = vld [vmem:[%s153 + $0x168] sm:$0xff]
                %202 = vst [vmem:[%s154 + $0xb8] sm:$0xff] %v201
                %v203 = vld [vmem:[%s153 + $0x180] sm:$0xff]
                %204 = vst [vmem:[%s154 + $0xc0] sm:$0xff] %v203
                %v205 = vld [vmem:[%s153 + $0x188] sm:$0xff]
                %206 = vst [vmem:[%s154 + $0xc8] sm:$0xff] %v205
                %v207 = vld [vmem:[%s153 + $0x1a0] sm:$0xff]
                %208 = vst [vmem:[%s154 + $0xd0] sm:$0xff] %v207
                %v209 = vld [vmem:[%s153 + $0x1a8] sm:$0xff]
                %210 = vst [vmem:[%s154 + $0xd8] sm:$0xff] %v209
                %v211 = vld [vmem:[%s153 + $0x1c0] sm:$0xff]
                %212 = vst [vmem:[%s154 + $0xe0] sm:$0xff] %v211
                %v213 = vld [vmem:[%s153 + $0x1c8] sm:$0xff]
                %214 = vst [vmem:[%s154 + $0xe8] sm:$0xff] %v213
                %v215 = vld [vmem:[%s153 + $0x1e0] sm:$0xff]
                %216 = vst [vmem:[%s154 + $0xf0] sm:$0xff] %v215
                %v217 = vld [vmem:[%s153 + $0x1e8] sm:$0xff]
                %218 = vst [vmem:[%s154 + $0xf8] sm:$0xff] %v217
              $region33: #{discriminator_forward.9} parent=27 // loop_footer
                %s152 = sadd.s32 1, %s148
              $region34: #{discriminator_forward.9} parent=27 // loop_footer_branch
                %147 = sbr.rel target = $region30
              $region35: #{discriminator_forward.9} parent=27 // loop_exit
                _
            $region28: #{discriminator_forward.9} parent=23 // pred_fallthru
              _
            // Predicated region
            $region36: #{discriminator_forward.9} parent=23 // pred_check
              _
            $region37: #{discriminator_forward.9} parent=23 // pred_check_branch
              %220 = sbr.rel target = $region39
            $region38: #{discriminator_forward.9} parent=23 // pred_region
              _
            $region39: #{discriminator_forward.9} parent=23 // pred_fallthru
              _
          $region24: #{discriminator_forward.9} parent=19 // pred_fallthru
            _
          %221 = vnop
        $region20: #{discriminator_forward.9} parent=15 // pred_fallthru
          _
        // Predicated region
        $region40: #{discriminator_forward.9} parent=15 // pred_check
          %p222 = pneg %p77
        $region41: #{discriminator_forward.9} parent=15 // pred_check_branch
          %224 = sbr.rel (%p222) target = $region43
        $region42: #{discriminator_forward.9} parent=15 // pred_region
          %s225 = smul.u32 64, %s17
          %p226 = scmp.lt.s32.totalorder %s225, 127
          %s227 = scalar_select %p226, %s225, 127
          %p228 = scmp.lt.s32.totalorder %s16, 0
          %s229 = scalar_select %p228, %s16, 0
          %s230 = sadd.s32 %s229, %s227
          %s231 = smul.addr %s230, 4
          %s232 = scalar_lea.vmem %s1, %s231
          %s233 = smul.u32 64, %s17
        $region43: #{discriminator_forward.9} parent=15 // pred_fallthru
          _
      $region16: #{discriminator_forward.9} parent=5 // pred_fallthru
        _
      %p234 = scmp.le.s32.totalorder 1, %s8
      %p235 = scmp.lt.s32.totalorder %s8, 3
      %p236 = pnand %p234, %p235
      %p237 = pneg %p236
      // Predicated region
      $region44: #{discriminator_forward.9} parent=5 // pred_check
        _
      $region45: #{discriminator_forward.9} parent=5 // pred_check_branch
        %239 = sbr.rel (%p236) target = $region47
      $region46: #{discriminator_forward.9} parent=5 // pred_region
        %s240 = ssub.s32 %s8, 1
        %s241 = sand.u32 %s42, 1
        %s242 = sand.u32 %s42, 1
        %s243 = smul.addr %s242, 256
        %s244 = scalar_lea.vmem [#allocation3], %s243
        // Predicated region
        $region48: #{discriminator_forward.9} parent=46 // pred_check
          %p245 = pneg %p55
        $region49: #{discriminator_forward.9} parent=46 // pred_check_branch
          %247 = sbr.rel (%p245) target = $region51
        $region50: #{discriminator_forward.9} parent=46 // pred_region
          _
        $region51: #{discriminator_forward.9} parent=46 // pred_fallthru
          _
        %s248 = sand.u32 %s42, 1
        %s249 = sand.u32 %s42, 1
        %s250 = smul.addr %s249, 256
        %s251 = scalar_lea.vmem [#allocation3], %s250
        %p252 = pneg %p55
        %p253 = pneg %p52
        %s254 = smul.u32 64, %s20
        %p255 = scmp.lt.s32.totalorder %s254, 127
        %s256 = scalar_select %p255, %s254, 127
        %p257 = scmp.lt.s32.totalorder %s19, 0
        %s258 = scalar_select %p257, %s19, 0
        %s259 = sadd.s32 %s258, %s256
        %s260 = smul.addr %s259, 4
        %s261 = scalar_lea.vmem %s1, %s260
        %p262 = pneg %p83
        %p263 = pneg %p80
        %p264 = pneg %p111
        %p265 = pneg %p108
        %s266 = smul.u32 16, %s18
        %p267 = scmp.lt.s32.totalorder %s266, 15
        %s268 = scalar_select %p267, %s266, 15
        %p269 = scmp.lt.s32.totalorder %s19, 0
        %s270 = scalar_select %p269, %s19, 0
        %s271 = sadd.s32 %s270, %s268
        %s272 = smul.addr %s271, 8
        %s273 = scalar_lea.vmem %s2, %s272
        %s274 = smul.u32 16, %s18
        %s275 = smul.u32 4, %s20
        %s276 = smul.u32 64, %s20
        %p277 = scmp.lt.s32.totalorder %s276, 127
        %s278 = scalar_select %p277, %s276, 127
        %p279 = scmp.lt.s32.totalorder %s19, 0
        %s280 = scalar_select %p279, %s19, 0
        %s281 = sadd.s32 %s280, %s278
        %s282 = smul.addr %s281, 4
        %s283 = scalar_lea.vmem %s1, %s282
        %s284 = smul.u32 64, %s20
        %s285 = smul.u32 16, %s18
        %p286 = scmp.lt.s32.totalorder %s285, 15
        %s287 = scalar_select %p286, %s285, 15
        %p288 = scmp.lt.s32.totalorder %s19, 0
        %s289 = scalar_select %p288, %s19, 0
        %s290 = sadd.s32 %s289, %s287
        %s291 = smul.addr %s290, 8
        %s292 = scalar_lea.vmem %s2, %s291
        %s293 = smul.u32 16, %s18
        %p294 = scmp.eq.s32.totalorder %s20, 0
        // Predicated region
        $region52: #{discriminator_forward.9} parent=46 // pred_check
          %p295 = pneg %p294
        $region53: #{discriminator_forward.9} parent=46 // pred_check_branch
          %297 = sbr.rel (%p295) target = $region55
        $region54: #{discriminator_forward.9} parent=46 // pred_region
          %298 = vst [vmem:[#allocation2] sm:$0xff] 0.0
          %299 = vst [vmem:[#allocation2 + $0x8] sm:$0xff] 0.0
          %300 = vst [vmem:[#allocation2 + $0x10] sm:$0xff] 0.0
          %301 = vst [vmem:[#allocation2 + $0x18] sm:$0xff] 0.0
          %302 = vst [vmem:[#allocation2 + $0x20] sm:$0xff] 0.0
          %303 = vst [vmem:[#allocation2 + $0x28] sm:$0xff] 0.0
          %304 = vst [vmem:[#allocation2 + $0x30] sm:$0xff] 0.0
          %305 = vst [vmem:[#allocation2 + $0x38] sm:$0xff] 0.0
          %306 = vst [vmem:[#allocation2 + $0x40] sm:$0xff] 0.0
          %307 = vst [vmem:[#allocation2 + $0x48] sm:$0xff] 0.0
          %308 = vst [vmem:[#allocation2 + $0x50] sm:$0xff] 0.0
          %309 = vst [vmem:[#allocation2 + $0x58] sm:$0xff] 0.0
          %310 = vst [vmem:[#allocation2 + $0x60] sm:$0xff] 0.0
          %311 = vst [vmem:[#allocation2 + $0x68] sm:$0xff] 0.0
          %312 = vst [vmem:[#allocation2 + $0x70] sm:$0xff] 0.0
          %313 = vst [vmem:[#allocation2 + $0x78] sm:$0xff] 0.0
        $region55: #{discriminator_forward.9} parent=46 // pred_fallthru
          _
        %v314 = vld [vmem:[#allocation2] sm:$0xff]
        %v315 = vld [vmem:[#allocation2 + $0x8] sm:$0xff]
        %v316 = vld [vmem:[#allocation2 + $0x10] sm:$0xff]
        %v317 = vld [vmem:[#allocation2 + $0x18] sm:$0xff]
        %v318 = vld [vmem:[#allocation2 + $0x20] sm:$0xff]
        %v319 = vld [vmem:[#allocation2 + $0x28] sm:$0xff]
        %v320 = vld [vmem:[#allocation2 + $0x30] sm:$0xff]
        %v321 = vld [vmem:[#allocation2 + $0x38] sm:$0xff]
        %v322 = vld [vmem:[#allocation2 + $0x40] sm:$0xff]
        %v323 = vld [vmem:[#allocation2 + $0x48] sm:$0xff]
        %v324 = vld [vmem:[#allocation2 + $0x50] sm:$0xff]
        %v325 = vld [vmem:[#allocation2 + $0x58] sm:$0xff]
        %v326 = vld [vmem:[#allocation2 + $0x60] sm:$0xff]
        %v327 = vld [vmem:[#allocation2 + $0x68] sm:$0xff]
        %v328 = vld [vmem:[#allocation2 + $0x70] sm:$0xff]
        %v329 = vld [vmem:[#allocation2 + $0x78] sm:$0xff]
        %v330 = vld [vmem:[%s244] sm:$0xff]
        %v331 = vld [vmem:[%s244 + $0x8] sm:$0xff]
        %v332 = vld [vmem:[%s244 + $0x10] sm:$0xff]
        %v333 = vld [vmem:[%s244 + $0x18] sm:$0xff]
        %v334 = vld [vmem:[%s244 + $0x20] sm:$0xff]
        %v335 = vld [vmem:[%s244 + $0x28] sm:$0xff]
        %v336 = vld [vmem:[%s244 + $0x30] sm:$0xff]
        %v337 = vld [vmem:[%s244 + $0x38] sm:$0xff]
        %v338 = vld [vmem:[%s244 + $0x40] sm:$0xff]
        %v339 = vld [vmem:[%s244 + $0x48] sm:$0xff]
        %v340 = vld [vmem:[%s244 + $0x50] sm:$0xff]
        %v341 = vld [vmem:[%s244 + $0x58] sm:$0xff]
        %v342 = vld [vmem:[%s244 + $0x60] sm:$0xff]
        %v343 = vld [vmem:[%s244 + $0x68] sm:$0xff]
        %v344 = vld [vmem:[%s244 + $0x70] sm:$0xff]
        %v345 = vld [vmem:[%s244 + $0x78] sm:$0xff]
        %v346 = vld [vmem:[%s244 + $0x80] sm:$0xff]
        %v347 = vld [vmem:[%s244 + $0x88] sm:$0xff]
        %v348 = vld [vmem:[%s244 + $0x90] sm:$0xff]
        %v349 = vld [vmem:[%s244 + $0x98] sm:$0xff]
        %v350 = vld [vmem:[%s244 + $0xa0] sm:$0xff]
        %v351 = vld [vmem:[%s244 + $0xa8] sm:$0xff]
        %v352 = vld [vmem:[%s244 + $0xb0] sm:$0xff]
        %v353 = vld [vmem:[%s244 + $0xb8] sm:$0xff]
        %v354 = vld [vmem:[%s244 + $0xc0] sm:$0xff]
        %v355 = vld [vmem:[%s244 + $0xc8] sm:$0xff]
        %v356 = vld [vmem:[%s244 + $0xd0] sm:$0xff]
        %v357 = vld [vmem:[%s244 + $0xd8] sm:$0xff]
        %v358 = vld [vmem:[%s244 + $0xe0] sm:$0xff]
        %v359 = vld [vmem:[%s244 + $0xe8] sm:$0xff]
        %v360 = vld [vmem:[%s244 + $0xf0] sm:$0xff]
        %v361 = vld [vmem:[%s244 + $0xf8] sm:$0xff]
        %v362 = vld [vmem:[%s283] sm:$0xf]
        %v363 = vld [vmem:[%s283 + $0x4] sm:$0xf]
        %v364 = vld [vmem:[%s283 + $0x8] sm:$0xf]
        %v365 = vld [vmem:[%s283 + $0xc] sm:$0xf]
        %v366 = vld [vmem:[%s283 + $0x10] sm:$0xf]
        %v367 = vld [vmem:[%s283 + $0x14] sm:$0xf]
        %v368 = vld [vmem:[%s283 + $0x18] sm:$0xf]
        %v369 = vld [vmem:[%s283 + $0x1c] sm:$0xf]
        %v370 = vld [vmem:[%s283 + $0x20] sm:$0xf]
        %v371 = vld [vmem:[%s283 + $0x24] sm:$0xf]
        %v372 = vld [vmem:[%s283 + $0x28] sm:$0xf]
        %v373 = vld [vmem:[%s283 + $0x2c] sm:$0xf]
        %v374 = vld [vmem:[%s283 + $0x30] sm:$0xf]
        %v375 = vld [vmem:[%s283 + $0x34] sm:$0xf]
        %v376 = vld [vmem:[%s283 + $0x38] sm:$0xf]
        %v377 = vld [vmem:[%s283 + $0x3c] sm:$0xf]
        %v378 = vld [vmem:[%s283 + $0x40] sm:$0xf]
        %v379 = vld [vmem:[%s283 + $0x44] sm:$0xf]
        %v380 = vld [vmem:[%s283 + $0x48] sm:$0xf]
        %v381 = vld [vmem:[%s283 + $0x4c] sm:$0xf]
        %v382 = vld [vmem:[%s283 + $0x50] sm:$0xf]
        %v383 = vld [vmem:[%s283 + $0x54] sm:$0xf]
        %v384 = vld [vmem:[%s283 + $0x58] sm:$0xf]
        %v385 = vld [vmem:[%s283 + $0x5c] sm:$0xf]
        %v386 = vld [vmem:[%s283 + $0x60] sm:$0xf]
        %v387 = vld [vmem:[%s283 + $0x64] sm:$0xf]
        %v388 = vld [vmem:[%s283 + $0x68] sm:$0xf]
        %v389 = vld [vmem:[%s283 + $0x6c] sm:$0xf]
        %v390 = vld [vmem:[%s283 + $0x70] sm:$0xf]
        %v391 = vld [vmem:[%s283 + $0x74] sm:$0xf]
        %v392 = vld [vmem:[%s283 + $0x78] sm:$0xf]
        %v393 = vld [vmem:[%s283 + $0x7c] sm:$0xf]
        %v394 = vld [vmem:[%s283 + $0x80] sm:$0xf]
        %v395 = vld [vmem:[%s283 + $0x84] sm:$0xf]
        %v396 = vld [vmem:[%s283 + $0x88] sm:$0xf]
        %v397 = vld [vmem:[%s283 + $0x8c] sm:$0xf]
        %v398 = vld [vmem:[%s283 + $0x90] sm:$0xf]
        %v399 = vld [vmem:[%s283 + $0x94] sm:$0xf]
        %v400 = vld [vmem:[%s283 + $0x98] sm:$0xf]
        %v401 = vld [vmem:[%s283 + $0x9c] sm:$0xf]
        %v402 = vld [vmem:[%s283 + $0xa0] sm:$0xf]
        %v403 = vld [vmem:[%s283 + $0xa4] sm:$0xf]
        %v404 = vld [vmem:[%s283 + $0xa8] sm:$0xf]
        %v405 = vld [vmem:[%s283 + $0xac] sm:$0xf]
        %v406 = vld [vmem:[%s283 + $0xb0] sm:$0xf]
        %v407 = vld [vmem:[%s283 + $0xb4] sm:$0xf]
        %v408 = vld [vmem:[%s283 + $0xb8] sm:$0xf]
        %v409 = vld [vmem:[%s283 + $0xbc] sm:$0xf]
        %v410 = vld [vmem:[%s283 + $0xc0] sm:$0xf]
        %v411 = vld [vmem:[%s283 + $0xc4] sm:$0xf]
        %v412 = vld [vmem:[%s283 + $0xc8] sm:$0xf]
        %v413 = vld [vmem:[%s283 + $0xcc] sm:$0xf]
        %v414 = vld [vmem:[%s283 + $0xd0] sm:$0xf]
        %v415 = vld [vmem:[%s283 + $0xd4] sm:$0xf]
        %v416 = vld [vmem:[%s283 + $0xd8] sm:$0xf]
        %v417 = vld [vmem:[%s283 + $0xdc] sm:$0xf]
        %v418 = vld [vmem:[%s283 + $0xe0] sm:$0xf]
        %v419 = vld [vmem:[%s283 + $0xe4] sm:$0xf]
        %v420 = vld [vmem:[%s283 + $0xe8] sm:$0xf]
        %v421 = vld [vmem:[%s283 + $0xec] sm:$0xf]
        %v422 = vld [vmem:[%s283 + $0xf0] sm:$0xf]
        %v423 = vld [vmem:[%s283 + $0xf4] sm:$0xf]
        %v424 = vld [vmem:[%s283 + $0xf8] sm:$0xf]
        %v425 = vld [vmem:[%s283 + $0xfc] sm:$0xf]
        %v458 = vunpack.c.l.b16 %v330
        %v459 = vunpack.c.h.b16 %v330
        %v460 = vunpack.c.l.b16 %v331
        %v461 = vunpack.c.h.b16 %v331
        %v462 = vunpack.c.l.b16 %v332
        %v463 = vunpack.c.h.b16 %v332
        %v464 = vunpack.c.l.b16 %v333
        %v465 = vunpack.c.h.b16 %v333
        %v466 = vunpack.c.l.b16 %v334
        %v467 = vunpack.c.h.b16 %v334
        %v468 = vunpack.c.l.b16 %v335
        %v469 = vunpack.c.h.b16 %v335
        %v470 = vunpack.c.l.b16 %v336
        %v471 = vunpack.c.h.b16 %v336
        %v472 = vunpack.c.l.b16 %v337
        %v473 = vunpack.c.h.b16 %v337
        %v474 = vunpack.c.l.b16 %v338
        %v475 = vunpack.c.h.b16 %v338
        %v476 = vunpack.c.l.b16 %v339
        %v477 = vunpack.c.h.b16 %v339
        %v478 = vunpack.c.l.b16 %v340
        %v479 = vunpack.c.h.b16 %v340
        %v480 = vunpack.c.l.b16 %v341
        %v481 = vunpack.c.h.b16 %v341
        %v482 = vunpack.c.l.b16 %v342
        %v483 = vunpack.c.h.b16 %v342
        %v484 = vunpack.c.l.b16 %v343
        %v485 = vunpack.c.h.b16 %v343
        %v486 = vunpack.c.l.b16 %v344
        %v487 = vunpack.c.h.b16 %v344
        %v488 = vunpack.c.l.b16 %v345
        %v489 = vunpack.c.h.b16 %v345
        %v490 = vunpack.c.l.b16 %v346
        %v491 = vunpack.c.h.b16 %v346
        %v492 = vunpack.c.l.b16 %v347
        %v493 = vunpack.c.h.b16 %v347
        %v494 = vunpack.c.l.b16 %v348
        %v495 = vunpack.c.h.b16 %v348
        %v496 = vunpack.c.l.b16 %v349
        %v497 = vunpack.c.h.b16 %v349
        %v498 = vunpack.c.l.b16 %v350
        %v499 = vunpack.c.h.b16 %v350
        %v500 = vunpack.c.l.b16 %v351
        %v501 = vunpack.c.h.b16 %v351
        %v502 = vunpack.c.l.b16 %v352
        %v503 = vunpack.c.h.b16 %v352
        %v504 = vunpack.c.l.b16 %v353
        %v505 = vunpack.c.h.b16 %v353
        %v506 = vunpack.c.l.b16 %v354
        %v507 = vunpack.c.h.b16 %v354
        %v508 = vunpack.c.l.b16 %v355
        %v509 = vunpack.c.h.b16 %v355
        %v510 = vunpack.c.l.b16 %v356
        %v511 = vunpack.c.h.b16 %v356
        %v512 = vunpack.c.l.b16 %v357
        %v513 = vunpack.c.h.b16 %v357
        %v514 = vunpack.c.l.b16 %v358
        %v515 = vunpack.c.h.b16 %v358
        %v516 = vunpack.c.l.b16 %v359
        %v517 = vunpack.c.h.b16 %v359
        %v518 = vunpack.c.l.b16 %v360
        %v519 = vunpack.c.h.b16 %v360
        %v520 = vunpack.c.l.b16 %v361
        %v521 = vunpack.c.h.b16 %v361
        %v522 = vpack.c.b16 %v462, %v458
        %v523 = vpack.c.b16 %v463, %v459
        %v524 = vpack.c.b16 %v464, %v460
        %v525 = vpack.c.b16 %v465, %v461
        %v526 = vpack.c.b16 %v470, %v466
        %v527 = vpack.c.b16 %v471, %v467
        %v528 = vpack.c.b16 %v472, %v468
        %v529 = vpack.c.b16 %v473, %v469
        %v530 = vpack.c.b16 %v478, %v474
        %v531 = vpack.c.b16 %v479, %v475
        %v532 = vpack.c.b16 %v480, %v476
        %v533 = vpack.c.b16 %v481, %v477
        %v534 = vpack.c.b16 %v486, %v482
        %v535 = vpack.c.b16 %v487, %v483
        %v536 = vpack.c.b16 %v488, %v484
        %v537 = vpack.c.b16 %v489, %v485
        %v538 = vpack.c.b16 %v494, %v490
        %v539 = vpack.c.b16 %v495, %v491
        %v540 = vpack.c.b16 %v496, %v492
        %v541 = vpack.c.b16 %v497, %v493
        %v542 = vpack.c.b16 %v502, %v498
        %v543 = vpack.c.b16 %v503, %v499
        %v544 = vpack.c.b16 %v504, %v500
        %v545 = vpack.c.b16 %v505, %v501
        %v546 = vpack.c.b16 %v510, %v506
        %v547 = vpack.c.b16 %v511, %v507
        %v548 = vpack.c.b16 %v512, %v508
        %v549 = vpack.c.b16 %v513, %v509
        %v550 = vpack.c.b16 %v518, %v514
        %v551 = vpack.c.b16 %v519, %v515
        %v552 = vpack.c.b16 %v520, %v516
        %v553 = vpack.c.b16 %v521, %v517
        %v650 = vunpack.c.l.b16 %v362
        %v651 = vunpack.c.l.b16 %v363
        %v652 = vunpack.c.l.b16 %v364
        %v653 = vunpack.c.l.b16 %v365
        %v654 = vunpack.c.l.b16 %v366
        %v655 = vunpack.c.l.b16 %v367
        %v656 = vunpack.c.l.b16 %v368
        %v657 = vunpack.c.l.b16 %v369
        %v658 = vunpack.c.l.b16 %v370
        %v659 = vunpack.c.l.b16 %v371
        %v660 = vunpack.c.l.b16 %v372
        %v661 = vunpack.c.l.b16 %v373
        %v662 = vunpack.c.l.b16 %v374
        %v663 = vunpack.c.l.b16 %v375
        %v664 = vunpack.c.l.b16 %v376
        %v665 = vunpack.c.l.b16 %v377
        %v666 = vunpack.c.l.b16 %v378
        %v667 = vunpack.c.l.b16 %v379
        %v668 = vunpack.c.l.b16 %v380
        %v669 = vunpack.c.l.b16 %v381
        %v670 = vunpack.c.l.b16 %v382
        %v671 = vunpack.c.l.b16 %v383
        %v672 = vunpack.c.l.b16 %v384
        %v673 = vunpack.c.l.b16 %v385
        %v674 = vunpack.c.l.b16 %v386
        %v675 = vunpack.c.l.b16 %v387
        %v676 = vunpack.c.l.b16 %v388
        %v677 = vunpack.c.l.b16 %v389
        %v678 = vunpack.c.l.b16 %v390
        %v679 = vunpack.c.l.b16 %v391
        %v680 = vunpack.c.l.b16 %v392
        %v681 = vunpack.c.l.b16 %v393
        %v682 = vunpack.c.l.b16 %v394
        %v683 = vunpack.c.l.b16 %v395
        %v684 = vunpack.c.l.b16 %v396
        %v685 = vunpack.c.l.b16 %v397
        %v686 = vunpack.c.l.b16 %v398
        %v687 = vunpack.c.l.b16 %v399
        %v688 = vunpack.c.l.b16 %v400
        %v689 = vunpack.c.l.b16 %v401
        %v690 = vunpack.c.l.b16 %v402
        %v691 = vunpack.c.l.b16 %v403
        %v692 = vunpack.c.l.b16 %v404
        %v693 = vunpack.c.l.b16 %v405
        %v694 = vunpack.c.l.b16 %v406
        %v695 = vunpack.c.l.b16 %v407
        %v696 = vunpack.c.l.b16 %v408
        %v697 = vunpack.c.l.b16 %v409
        %v698 = vunpack.c.l.b16 %v410
        %v699 = vunpack.c.l.b16 %v411
        %v700 = vunpack.c.l.b16 %v412
        %v701 = vunpack.c.l.b16 %v413
        %v702 = vunpack.c.l.b16 %v414
        %v703 = vunpack.c.l.b16 %v415
        %v704 = vunpack.c.l.b16 %v416
        %v705 = vunpack.c.l.b16 %v417
        %v706 = vunpack.c.l.b16 %v418
        %v707 = vunpack.c.l.b16 %v419
        %v708 = vunpack.c.l.b16 %v420
        %v709 = vunpack.c.l.b16 %v421
        %v710 = vunpack.c.l.b16 %v422
        %v711 = vunpack.c.l.b16 %v423
        %v712 = vunpack.c.l.b16 %v424
        %v713 = vunpack.c.l.b16 %v425
        %v714 = vpack.c.b16 %v651, %v650
        %v715 = vpack.c.b16 %v653, %v652
        %v716 = vpack.c.b16 %v655, %v654
        %v717 = vpack.c.b16 %v657, %v656
        %v718 = vpack.c.b16 %v659, %v658
        %v719 = vpack.c.b16 %v661, %v660
        %v720 = vpack.c.b16 %v663, %v662
        %v721 = vpack.c.b16 %v665, %v664
        %v722 = vpack.c.b16 %v667, %v666
        %v723 = vpack.c.b16 %v669, %v668
        %v724 = vpack.c.b16 %v671, %v670
        %v725 = vpack.c.b16 %v673, %v672
        %v726 = vpack.c.b16 %v675, %v674
        %v727 = vpack.c.b16 %v677, %v676
        %v728 = vpack.c.b16 %v679, %v678
        %v729 = vpack.c.b16 %v681, %v680
        %v730 = vpack.c.b16 %v683, %v682
        %v731 = vpack.c.b16 %v685, %v684
        %v732 = vpack.c.b16 %v687, %v686
        %v733 = vpack.c.b16 %v689, %v688
        %v734 = vpack.c.b16 %v691, %v690
        %v735 = vpack.c.b16 %v693, %v692
        %v736 = vpack.c.b16 %v695, %v694
        %v737 = vpack.c.b16 %v697, %v696
        %v738 = vpack.c.b16 %v699, %v698
        %v739 = vpack.c.b16 %v701, %v700
        %v740 = vpack.c.b16 %v703, %v702
        %v741 = vpack.c.b16 %v705, %v704
        %v742 = vpack.c.b16 %v707, %v706
        %v743 = vpack.c.b16 %v709, %v708
        %v744 = vpack.c.b16 %v711, %v710
        %v745 = vpack.c.b16 %v713, %v712
        %778 = vmatpush.bf16.msra.mxu0 %v721
        %779 = vmatpush.bf16.msra.mxu0 %v720
        %780 = vmatpush.bf16.msra.mxu0 %v719
        %781 = vmatpush.bf16.msra.mxu0 %v718
        %782 = vmatpush.bf16.msra.mxu0 %v717
        %783 = vmatpush.bf16.msra.mxu0 %v716
        %784 = vmatpush.bf16.msra.mxu0 %v715
        %785 = vmatpush.bf16.msra.mxu0 %v714
        %786 = vmatmul.bf16.gmra.mxu0 %v522
        %v787 = vpop.f32.mrf.mxu0
        %v788 = vadd.f32 0.0, %v787
        %v789 = vpop.f32.mrf.mxu0
        %v790 = vadd.f32 0.0, %v789
        %791 = vmatmul.bf16.gmra.mxu0 %v526
        %v792 = vpop.f32.mrf.mxu0
        %v793 = vadd.f32 0.0, %v792
        %v794 = vpop.f32.mrf.mxu0
        %v795 = vadd.f32 0.0, %v794
        %796 = vmatmul.bf16.gmra.mxu0 %v530
        %v797 = vpop.f32.mrf.mxu0
        %v798 = vadd.f32 0.0, %v797
        %v799 = vpop.f32.mrf.mxu0
        %v800 = vadd.f32 0.0, %v799
        %801 = vmatmul.bf16.gmra.mxu0 %v534
        %v802 = vpop.f32.mrf.mxu0
        %v803 = vadd.f32 0.0, %v802
        %v804 = vpop.f32.mrf.mxu0
        %v805 = vadd.f32 0.0, %v804
        %806 = vmatmul.bf16.gmra.mxu0 %v538
        %v807 = vpop.f32.mrf.mxu0
        %v808 = vadd.f32 0.0, %v807
        %v809 = vpop.f32.mrf.mxu0
        %v810 = vadd.f32 0.0, %v809
        %811 = vmatmul.bf16.gmra.mxu0 %v542
        %v812 = vpop.f32.mrf.mxu0
        %v813 = vadd.f32 0.0, %v812
        %v814 = vpop.f32.mrf.mxu0
        %v815 = vadd.f32 0.0, %v814
        %816 = vmatmul.bf16.gmra.mxu0 %v546
        %v817 = vpop.f32.mrf.mxu0
        %v818 = vadd.f32 0.0, %v817
        %v819 = vpop.f32.mrf.mxu0
        %v820 = vadd.f32 0.0, %v819
        %821 = vmatmul.bf16.gmra.mxu0 %v550
        %v822 = vpop.f32.mrf.mxu0
        %v823 = vadd.f32 0.0, %v822
        %v824 = vpop.f32.mrf.mxu0
        %v825 = vadd.f32 0.0, %v824
        %826 = vdwg.mxu0
        %827 = vmatpush.bf16.msra.mxu0 %v729
        %828 = vmatpush.bf16.msra.mxu0 %v728
        %829 = vmatpush.bf16.msra.mxu0 %v727
        %830 = vmatpush.bf16.msra.mxu0 %v726
        %831 = vmatpush.bf16.msra.mxu0 %v725
        %832 = vmatpush.bf16.msra.mxu0 %v724
        %833 = vmatpush.bf16.msra.mxu0 %v723
        %834 = vmatpush.bf16.msra.mxu0 %v722
        %835 = vmatmul.bf16.gmra.mxu0 %v523
        %v836 = vpop.f32.mrf.mxu0
        %v837 = vadd.f32 %v788, %v836
        %v838 = vpop.f32.mrf.mxu0
        %v839 = vadd.f32 %v790, %v838
        %840 = vmatmul.bf16.gmra.mxu0 %v527
        %v841 = vpop.f32.mrf.mxu0
        %v842 = vadd.f32 %v793, %v841
        %v843 = vpop.f32.mrf.mxu0
        %v844 = vadd.f32 %v795, %v843
        %845 = vmatmul.bf16.gmra.mxu0 %v531
        %v846 = vpop.f32.mrf.mxu0
        %v847 = vadd.f32 %v798, %v846
        %v848 = vpop.f32.mrf.mxu0
        %v849 = vadd.f32 %v800, %v848
        %850 = vmatmul.bf16.gmra.mxu0 %v535
        %v851 = vpop.f32.mrf.mxu0
        %v852 = vadd.f32 %v803, %v851
        %v853 = vpop.f32.mrf.mxu0
        %v854 = vadd.f32 %v805, %v853
        %855 = vmatmul.bf16.gmra.mxu0 %v539
        %v856 = vpop.f32.mrf.mxu0
        %v857 = vadd.f32 %v808, %v856
        %v858 = vpop.f32.mrf.mxu0
        %v859 = vadd.f32 %v810, %v858
        %860 = vmatmul.bf16.gmra.mxu0 %v543
        %v861 = vpop.f32.mrf.mxu0
        %v862 = vadd.f32 %v813, %v861
        %v863 = vpop.f32.mrf.mxu0
        %v864 = vadd.f32 %v815, %v863
        %865 = vmatmul.bf16.gmra.mxu0 %v547
        %v866 = vpop.f32.mrf.mxu0
        %v867 = vadd.f32 %v818, %v866
        %v868 = vpop.f32.mrf.mxu0
        %v869 = vadd.f32 %v820, %v868
        %870 = vmatmul.bf16.gmra.mxu0 %v551
        %v871 = vpop.f32.mrf.mxu0
        %v872 = vadd.f32 %v823, %v871
        %v873 = vpop.f32.mrf.mxu0
        %v874 = vadd.f32 %v825, %v873
        %875 = vdwg.mxu0
        %876 = vmatpush.bf16.msra.mxu0 %v737
        %877 = vmatpush.bf16.msra.mxu0 %v736
        %878 = vmatpush.bf16.msra.mxu0 %v735
        %879 = vmatpush.bf16.msra.mxu0 %v734
        %880 = vmatpush.bf16.msra.mxu0 %v733
        %881 = vmatpush.bf16.msra.mxu0 %v732
        %882 = vmatpush.bf16.msra.mxu0 %v731
        %883 = vmatpush.bf16.msra.mxu0 %v730
        %884 = vmatmul.bf16.gmra.mxu0 %v524
        %v885 = vpop.f32.mrf.mxu0
        %v886 = vadd.f32 %v837, %v885
        %v887 = vpop.f32.mrf.mxu0
        %v888 = vadd.f32 %v839, %v887
        %889 = vmatmul.bf16.gmra.mxu0 %v528
        %v890 = vpop.f32.mrf.mxu0
        %v891 = vadd.f32 %v842, %v890
        %v892 = vpop.f32.mrf.mxu0
        %v893 = vadd.f32 %v844, %v892
        %894 = vmatmul.bf16.gmra.mxu0 %v532
        %v895 = vpop.f32.mrf.mxu0
        %v896 = vadd.f32 %v847, %v895
        %v897 = vpop.f32.mrf.mxu0
        %v898 = vadd.f32 %v849, %v897
        %899 = vmatmul.bf16.gmra.mxu0 %v536
        %v900 = vpop.f32.mrf.mxu0
        %v901 = vadd.f32 %v852, %v900
        %v902 = vpop.f32.mrf.mxu0
        %v903 = vadd.f32 %v854, %v902
        %904 = vmatmul.bf16.gmra.mxu0 %v540
        %v905 = vpop.f32.mrf.mxu0
        %v906 = vadd.f32 %v857, %v905
        %v907 = vpop.f32.mrf.mxu0
        %v908 = vadd.f32 %v859, %v907
        %909 = vmatmul.bf16.gmra.mxu0 %v544
        %v910 = vpop.f32.mrf.mxu0
        %v911 = vadd.f32 %v862, %v910
        %v912 = vpop.f32.mrf.mxu0
        %v913 = vadd.f32 %v864, %v912
        %914 = vmatmul.bf16.gmra.mxu0 %v548
        %v915 = vpop.f32.mrf.mxu0
        %v916 = vadd.f32 %v867, %v915
        %v917 = vpop.f32.mrf.mxu0
        %v918 = vadd.f32 %v869, %v917
        %919 = vmatmul.bf16.gmra.mxu0 %v552
        %v920 = vpop.f32.mrf.mxu0
        %v921 = vadd.f32 %v872, %v920
        %v922 = vpop.f32.mrf.mxu0
        %v923 = vadd.f32 %v874, %v922
        %924 = vdwg.mxu0
        %925 = vmatpush.bf16.msra.mxu0 %v745
        %926 = vmatpush.bf16.msra.mxu0 %v744
        %927 = vmatpush.bf16.msra.mxu0 %v743
        %928 = vmatpush.bf16.msra.mxu0 %v742
        %929 = vmatpush.bf16.msra.mxu0 %v741
        %930 = vmatpush.bf16.msra.mxu0 %v740
        %931 = vmatpush.bf16.msra.mxu0 %v739
        %932 = vmatpush.bf16.msra.mxu0 %v738
        %933 = vmatmul.bf16.gmra.mxu0 %v525
        %v934 = vpop.f32.mrf.mxu0
        %v935 = vadd.f32 %v886, %v934
        %v936 = vpop.f32.mrf.mxu0
        %v937 = vadd.f32 %v888, %v936
        %938 = vmatmul.bf16.gmra.mxu0 %v529
        %v939 = vpop.f32.mrf.mxu0
        %v940 = vadd.f32 %v891, %v939
        %v941 = vpop.f32.mrf.mxu0
        %v942 = vadd.f32 %v893, %v941
        %943 = vmatmul.bf16.gmra.mxu0 %v533
        %v944 = vpop.f32.mrf.mxu0
        %v945 = vadd.f32 %v896, %v944
        %v946 = vpop.f32.mrf.mxu0
        %v947 = vadd.f32 %v898, %v946
        %948 = vmatmul.bf16.gmra.mxu0 %v537
        %v949 = vpop.f32.mrf.mxu0
        %v950 = vadd.f32 %v901, %v949
        %v951 = vpop.f32.mrf.mxu0
        %v952 = vadd.f32 %v903, %v951
        %953 = vmatmul.bf16.gmra.mxu0 %v541
        %v954 = vpop.f32.mrf.mxu0
        %v955 = vadd.f32 %v906, %v954
        %v956 = vpop.f32.mrf.mxu0
        %v957 = vadd.f32 %v908, %v956
        %958 = vmatmul.bf16.gmra.mxu0 %v545
        %v959 = vpop.f32.mrf.mxu0
        %v960 = vadd.f32 %v911, %v959
        %v961 = vpop.f32.mrf.mxu0
        %v962 = vadd.f32 %v913, %v961
        %963 = vmatmul.bf16.gmra.mxu0 %v549
        %v964 = vpop.f32.mrf.mxu0
        %v965 = vadd.f32 %v916, %v964
        %v966 = vpop.f32.mrf.mxu0
        %v967 = vadd.f32 %v918, %v966
        %968 = vmatmul.bf16.gmra.mxu0 %v553
        %v969 = vpop.f32.mrf.mxu0
        %v970 = vadd.f32 %v921, %v969
        %v971 = vpop.f32.mrf.mxu0
        %v972 = vadd.f32 %v923, %v971
        %973 = vdwg.mxu0
        %v974 = vadd.f32 %v314, %v935
        %v975 = vadd.f32 %v315, %v937
        %v976 = vadd.f32 %v316, %v940
        %v977 = vadd.f32 %v317, %v942
        %v978 = vadd.f32 %v318, %v945
        %v979 = vadd.f32 %v319, %v947
        %v980 = vadd.f32 %v320, %v950
        %v981 = vadd.f32 %v321, %v952
        %v982 = vadd.f32 %v322, %v955
        %v983 = vadd.f32 %v323, %v957
        %v984 = vadd.f32 %v324, %v960
        %v985 = vadd.f32 %v325, %v962
        %v986 = vadd.f32 %v326, %v965
        %v987 = vadd.f32 %v327, %v967
        %v988 = vadd.f32 %v328, %v970
        %v989 = vadd.f32 %v329, %v972
        %990 = vst [vmem:[#allocation2] sm:$0xff] %v974
        %991 = vst [vmem:[#allocation2 + $0x8] sm:$0xff] %v975
        %992 = vst [vmem:[#allocation2 + $0x10] sm:$0xff] %v976
        %993 = vst [vmem:[#allocation2 + $0x18] sm:$0xff] %v977
        %994 = vst [vmem:[#allocation2 + $0x20] sm:$0xff] %v978
        %995 = vst [vmem:[#allocation2 + $0x28] sm:$0xff] %v979
        %996 = vst [vmem:[#allocation2 + $0x30] sm:$0xff] %v980
        %997 = vst [vmem:[#allocation2 + $0x38] sm:$0xff] %v981
        %998 = vst [vmem:[#allocation2 + $0x40] sm:$0xff] %v982
        %999 = vst [vmem:[#allocation2 + $0x48] sm:$0xff] %v983
        %1000 = vst [vmem:[#allocation2 + $0x50] sm:$0xff] %v984
        %1001 = vst [vmem:[#allocation2 + $0x58] sm:$0xff] %v985
        %1002 = vst [vmem:[#allocation2 + $0x60] sm:$0xff] %v986
        %1003 = vst [vmem:[#allocation2 + $0x68] sm:$0xff] %v987
        %1004 = vst [vmem:[#allocation2 + $0x70] sm:$0xff] %v988
        %1005 = vst [vmem:[#allocation2 + $0x78] sm:$0xff] %v989
        %p1006 = scmp.eq.s32.totalorder %s20, 1
        // Predicated region
        $region56: #{discriminator_forward.9} parent=46 // pred_check
          %p1007 = pneg %p1006
        $region57: #{discriminator_forward.9} parent=46 // pred_check_branch
          %1009 = sbr.rel (%p1007) target = $region59
        $region58: #{discriminator_forward.9} parent=46 // pred_region
          %v1010 = vld [vmem:[#allocation2] sm:$0xff]
          %v1011 = vld [vmem:[#allocation2 + $0x8] sm:$0xff]
          %v1012 = vld [vmem:[#allocation2 + $0x10] sm:$0xff]
          %v1013 = vld [vmem:[#allocation2 + $0x18] sm:$0xff]
          %v1014 = vld [vmem:[#allocation2 + $0x20] sm:$0xff]
          %v1015 = vld [vmem:[#allocation2 + $0x28] sm:$0xff]
          %v1016 = vld [vmem:[#allocation2 + $0x30] sm:$0xff]
          %v1017 = vld [vmem:[#allocation2 + $0x38] sm:$0xff]
          %v1018 = vld [vmem:[#allocation2 + $0x40] sm:$0xff]
          %v1019 = vld [vmem:[#allocation2 + $0x48] sm:$0xff]
          %v1020 = vld [vmem:[#allocation2 + $0x50] sm:$0xff]
          %v1021 = vld [vmem:[#allocation2 + $0x58] sm:$0xff]
          %v1022 = vld [vmem:[#allocation2 + $0x60] sm:$0xff]
          %v1023 = vld [vmem:[#allocation2 + $0x68] sm:$0xff]
          %v1024 = vld [vmem:[#allocation2 + $0x70] sm:$0xff]
          %v1025 = vld [vmem:[#allocation2 + $0x78] sm:$0xff]
          %1026 = vst [vmem:[%s292] sm:$0xff] %v1010
          %1027 = vst [vmem:[%s292 + $0x8] sm:$0xff] %v1011
          %1028 = vst [vmem:[%s292 + $0x10] sm:$0xff] %v1012
          %1029 = vst [vmem:[%s292 + $0x18] sm:$0xff] %v1013
          %1030 = vst [vmem:[%s292 + $0x20] sm:$0xff] %v1014
          %1031 = vst [vmem:[%s292 + $0x28] sm:$0xff] %v1015
          %1032 = vst [vmem:[%s292 + $0x30] sm:$0xff] %v1016
          %1033 = vst [vmem:[%s292 + $0x38] sm:$0xff] %v1017
          %1034 = vst [vmem:[%s292 + $0x40] sm:$0xff] %v1018
          %1035 = vst [vmem:[%s292 + $0x48] sm:$0xff] %v1019
          %1036 = vst [vmem:[%s292 + $0x50] sm:$0xff] %v1020
          %1037 = vst [vmem:[%s292 + $0x58] sm:$0xff] %v1021
          %1038 = vst [vmem:[%s292 + $0x60] sm:$0xff] %v1022
          %1039 = vst [vmem:[%s292 + $0x68] sm:$0xff] %v1023
          %1040 = vst [vmem:[%s292 + $0x70] sm:$0xff] %v1024
          %1041 = vst [vmem:[%s292 + $0x78] sm:$0xff] %v1025
        $region59: #{discriminator_forward.9} parent=46 // pred_fallthru
          _
        %s1042 = smul.u32 16, %s18
        %p1043 = scmp.lt.s32.totalorder %s1042, 15
        %s1044 = scalar_select %p1043, %s1042, 15
        %p1045 = scmp.lt.s32.totalorder %s19, 0
        %s1046 = scalar_select %p1045, %s19, 0
        %s1047 = sadd.s32 %s1046, %s1044
        %s1048 = smul.addr %s1047, 8
        %s1049 = scalar_lea.vmem %s2, %s1048
        // Predicated region
        $region60: #{discriminator_forward.9} parent=46 // pred_check
          %p1050 = pneg %p108
        $region61: #{discriminator_forward.9} parent=46 // pred_check_branch
          %1052 = sbr.rel (%p1050) target = $region63
        $region62: #{discriminator_forward.9} parent=46 // pred_region
          %s1053 = smul.u32 16, %s18
        $region63: #{discriminator_forward.9} parent=46 // pred_fallthru
          _
        // Predicated region
        $region64: #{discriminator_forward.9} parent=46 // pred_check
          %p1054 = pneg %p108
        $region65: #{discriminator_forward.9} parent=46 // pred_check_branch
          %1056 = sbr.rel (%p1054) target = $region67
        $region66: #{discriminator_forward.9} parent=46 // pred_region
          %s1057 = smul.u32 16, %s18
          %p1058 = scmp.lt.s32.totalorder %s1057, 15
          %s1059 = scalar_select %p1058, %s1057, 15
          %p1060 = scmp.lt.s32.totalorder %s19, 0
          %s1061 = scalar_select %p1060, %s19, 0
          %s1062 = sadd.s32 %s1061, %s1059
          %s1063 = smul.addr %s1062, 8
          %s1064 = scalar_lea.vmem %s2, %s1063
        $region67: #{discriminator_forward.9} parent=46 // pred_fallthru
          _
      $region47: #{discriminator_forward.9} parent=5 // pred_fallthru
        _
      %p1065 = scmp.le.s32.totalorder 2, %s8
      // Predicated region
      $region68: #{discriminator_forward.9} parent=5 // pred_check
        %p1066 = pneg %p1065
      $region69: #{discriminator_forward.9} parent=5 // pred_check_branch
        %1068 = sbr.rel (%p1066) target = $region71
      $region70: #{discriminator_forward.9} parent=5 // pred_region
        %s1069 = ssub.s32 %s8, 2
      $region71: #{discriminator_forward.9} parent=5 // pred_fallthru
        _
    $region6: #{discriminator_forward.9} parent=1 // loop_footer
      %s12 = sadd.s32 1, %s8
    $region7: #{discriminator_forward.9} parent=1 // loop_footer_branch
      %7 = sbr.rel target = $region3
    $region8: #{discriminator_forward.9} parent=1 // loop_exit
      _

// kernel: discriminator_forward.12
$region0: #{discriminator_forward.12}
  #allocation0 [shape = 'u32[]', space=smem, size = 0x4, offset = 0x4, fixed_abs, tag = 'smem constant byte address 0x4 - core index']
  #allocation1 [shape = 'u32[72,128]{1,0:T(1,128)}', space=vmem, size = 0x9000, scoped, tag = 'internal scratch']
  %s0 = inlined_call_operand.vmem [shape: f32[2,16,256], index: 0, kind: input, shape index: {}]
  %s1 = inlined_call_operand.vmem [shape: f32[2,16,256], index: 1, kind: output, shape index: {}]
  %s2 = sld [smem:[#allocation0]]
  $region109: #{discriminator_forward.12} parent=0
    _
  %s4 = ssub.s32 1, %s2
  %s5 = scalar_select 0, %s4, %s2
  $region1: #{discriminator_forward.12} parent=0
    #allocation2 [shape = 'u8[16384]{0}', space=vmem, size = 0x4000, scoped, tag = 'input window, operand 0']
    #allocation3 [shape = 'u8[16384]{0}', space=vmem, size = 0x4000, scoped, tag = 'output window, operand 0']
    loop: start=0, step=1, limit=6
    $region2: #{discriminator_forward.12} parent=1 // loop_pre_header
      _
    $region3: #{discriminator_forward.12} parent=1 // loop_header
      %s7 = sphi 0, %s11
      %p8 = scmp.ge.s32.totalorder %s7, 6
      %s14 = sphi 0, %s26
      %s15 = sphi 0, %s22
      %s16 = sphi 0, %s14
      %s17 = sphi 0, %s15
      %s18 = sphi 0, %s16
      %s19 = sphi 0, %s17
      %s31 = sphi 0, %s33
      %s34 = sphi 0, %s31
      %s35 = sphi 0, %s34
      %s51 = sphi 0, %s35
      %s59 = sphi 0, %s61
      %s62 = sphi 0, %s59
      %s63 = sphi 0, %s62
      %s79 = sphi 0, %s63
    $region4: #{discriminator_forward.12} parent=1 // loop_header_branch
      %10 = sbr.rel (%p8) target = $region8
    $region5: #{discriminator_forward.12} parent=1 // loop_body
      %s12 = ssub.s32 %s7, 1
      %s13 = ssub.s32 %s7, 2
      %s20 = sadd.s32 1, %s15
      %p21 = scmp.ge.s32.totalorder %s20, 2
      %s22 = scalar_select %p21, 0, %s20
      %s23 = sadd.s32 1, %s14
      %s24 = scalar_select %p21, %s23, %s14
      %p25 = scmp.ge.s32.totalorder %s24, 2
      %s26 = scalar_select %p25, 0, %s24
      %s27 = ssub.s32 %s14, %s26
      %s28 = ssub.s32 %s15, %s22
      %s29 = sor.u32 %s27, %s28
      %p30 = scmp.eq.s32.totalorder %s29, 0
      %s32 = sadd.s32 %s31, 1
      %s33 = scalar_select %p30, %s31, %s32
      %p36 = pneg %p30
      %p37 = scmp.eq.s32.totalorder %s7, 3
      %p38 = por %p36, %p37
      %p39 = scmp.ne.s32.totalorder %s31, %s34
      %p40 = scmp.eq.s32.totalorder %s7, 0
      %p41 = por %p39, %p40
      %p42 = scmp.ne.s32.totalorder %s31, %s34
      %p43 = scmp.eq.s32.totalorder %s12, 3
      %p44 = por %p42, %p43
      %p45 = scmp.ne.s32.totalorder %s34, %s35
      %p46 = scmp.eq.s32.totalorder %s12, 0
      %p47 = por %p45, %p46
      %p48 = scmp.ne.s32.totalorder %s34, %s35
      %p49 = scmp.eq.s32.totalorder %s13, 3
      %p50 = por %p48, %p49
      %p52 = scmp.ne.s32.totalorder %s35, %s51
      %p53 = scmp.eq.s32.totalorder %s13, 0
      %p54 = por %p52, %p53
      %s55 = ssub.s32 %s14, %s26
      %s56 = ssub.s32 %s15, %s22
      %s57 = sor.u32 %s55, %s56
      %p58 = scmp.eq.s32.totalorder %s57, 0
      %s60 = sadd.s32 %s59, 1
      %s61 = scalar_select %p58, %s59, %s60
      %p64 = pneg %p58
      %p65 = scmp.eq.s32.totalorder %s7, 3
      %p66 = por %p64, %p65
      %p67 = scmp.ne.s32.totalorder %s59, %s62
      %p68 = scmp.eq.s32.totalorder %s7, 0
      %p69 = por %p67, %p68
      %p70 = scmp.ne.s32.totalorder %s59, %s62
      %p71 = scmp.eq.s32.totalorder %s12, 3
      %p72 = por %p70, %p71
      %p73 = scmp.ne.s32.totalorder %s62, %s63
      %p74 = scmp.eq.s32.totalorder %s12, 0
      %p75 = por %p73, %p74
      %p76 = scmp.ne.s32.totalorder %s62, %s63
      %p77 = scmp.eq.s32.totalorder %s13, 3
      %p78 = por %p76, %p77
      %p80 = scmp.ne.s32.totalorder %s63, %s79
      %p81 = scmp.eq.s32.totalorder %s13, 0
      %p82 = por %p80, %p81
      %p83 = scmp.le.s32.totalorder 1, %s7
      %p84 = scmp.lt.s32.totalorder %s7, 5
      %p85 = pnand %p83, %p84
      %p86 = pneg %p85
      // Predicated region
      $region9: #{discriminator_forward.12} parent=5 // pred_check
        _
      $region10: #{discriminator_forward.12} parent=5 // pred_check_branch
        %88 = sbr.rel (%p85) target = $region12
      $region11: #{discriminator_forward.12} parent=5 // pred_region
        %s89 = ssub.s32 %s7, 1
      $region12: #{discriminator_forward.12} parent=5 // pred_fallthru
        _
      %p90 = scmp.lt.s32.totalorder %s7, 4
      // Predicated region
      $region13: #{discriminator_forward.12} parent=5 // pred_check
        %p91 = pneg %p90
      $region14: #{discriminator_forward.12} parent=5 // pred_check_branch
        %93 = sbr.rel (%p91) target = $region16
      $region15: #{discriminator_forward.12} parent=5 // pred_region
        // Predicated region
        $region17: #{discriminator_forward.12} parent=15 // pred_check
          %p94 = pneg %p41
        $region18: #{discriminator_forward.12} parent=15 // pred_check_branch
          %96 = sbr.rel (%p94) target = $region20
        $region19: #{discriminator_forward.12} parent=15 // pred_region
          %s97 = sand.u32 %s31, 1
          %s98 = sand.u32 %s31, 1
          %s99 = smul.addr %s98, 16
          %s100 = scalar_lea.vmem [#allocation2], %s99
          %s101 = smul.addr %s14, 4
          %s102 = sadd.s32 %s15, %s101
          %s103 = smul.addr %s102, 8
          %s104 = scalar_lea.vmem %s0, %s103
          // Predicated region
          $region21: #{discriminator_forward.12} parent=19 // pred_check
            _
          $region22: #{discriminator_forward.12} parent=19 // pred_check_branch
            %106 = sbr.rel (0) target = $region24
          $region23: #{discriminator_forward.12} parent=19 // pred_region
            // Predicated region
            $region25: #{discriminator_forward.12} parent=23 // pred_check
              _
            $region26: #{discriminator_forward.12} parent=23 // pred_check_branch
              %108 = sbr.rel (0) target = $region28
            $region27: #{discriminator_forward.12} parent=23 // pred_region
              // Predicated region
              $region40: #{discriminator_forward.12} parent=27 // pred_check
                _
              $region41: #{discriminator_forward.12} parent=27 // pred_check_branch
                %126 = sbr.rel (0) target = $region43
              $region42: #{discriminator_forward.12} parent=27 // pred_region
                loop: start=0, step=1, limit=1
                $region44: #{discriminator_forward.12} parent=42 // loop_pre_header
                  _
                $region45: #{discriminator_forward.12} parent=42 // loop_header
                  %s128 = sphi 0, %s132
                  %p129 = scmp.ge.s32.totalorder %s128, 1
                  %s133 = sphi %s104, %s104
                  %s134 = sphi %s100, %s100
                $region46: #{discriminator_forward.12} parent=42 // loop_header_branch
                  %131 = sbr.rel (%p129) target = $region50
                $region47: #{discriminator_forward.12} parent=42 // loop_body
                  %v135 = vld [vmem:[%s133] sm:$0xff]
                  %136 = vst [vmem:[%s134] sm:$0xff] %v135
                  %v137 = vld [vmem:[%s133 + $0x10] sm:$0xff]
                  %138 = vst [vmem:[%s134 + $0x8] sm:$0xff] %v137
                $region48: #{discriminator_forward.12} parent=42 // loop_footer
                  %s132 = sadd.s32 1, %s128
                $region49: #{discriminator_forward.12} parent=42 // loop_footer_branch
                  %127 = sbr.rel target = $region45
                $region50: #{discriminator_forward.12} parent=42 // loop_exit
                  _
              $region43: #{discriminator_forward.12} parent=27 // pred_fallthru
                _
              // Predicated region
              $region51: #{discriminator_forward.12} parent=27 // pred_check
                _
              $region52: #{discriminator_forward.12} parent=27 // pred_check_branch
                %140 = sbr.rel target = $region54
              $region53: #{discriminator_forward.12} parent=27 // pred_region
                _
              $region54: #{discriminator_forward.12} parent=27 // pred_fallthru
                _
            $region28: #{discriminator_forward.12} parent=23 // pred_fallthru
              _
            // Predicated region
            $region29: #{discriminator_forward.12} parent=23 // pred_check
              _
            $region30: #{discriminator_forward.12} parent=23 // pred_check_branch
              %110 = sbr.rel target = $region32
            $region31: #{discriminator_forward.12} parent=23 // pred_region
              %s112 = ssub.s32 256, 1
              loop: start=0, step=1, limit=1
              $region33: #{discriminator_forward.12} parent=31 // loop_pre_header
                _
              $region34: #{discriminator_forward.12} parent=31 // loop_header
                %s114 = sphi 0, %s118
                %p115 = scmp.ge.s32.totalorder %s114, 1
                %s119 = sphi %s104, %s104
                %s120 = sphi %s100, %s100
              $region35: #{discriminator_forward.12} parent=31 // loop_header_branch
                %117 = sbr.rel (%p115) target = $region39
              $region36: #{discriminator_forward.12} parent=31 // loop_body
                %v121 = vld [vmem:[%s119] sm:%s112]
                %122 = vst [vmem:[%s120] sm:%s112] %v121
                %v123 = vld [vmem:[%s119 + $0x10] sm:%s112]
                %124 = vst [vmem:[%s120 + $0x8] sm:%s112] %v123
              $region37: #{discriminator_forward.12} parent=31 // loop_footer
                %s118 = sadd.s32 1, %s114
              $region38: #{discriminator_forward.12} parent=31 // loop_footer_branch
                %113 = sbr.rel target = $region34
              $region39: #{discriminator_forward.12} parent=31 // loop_exit
                _
            $region32: #{discriminator_forward.12} parent=23 // pred_fallthru
              _
          $region24: #{discriminator_forward.12} parent=19 // pred_fallthru
            _
          %141 = vnop
        $region20: #{discriminator_forward.12} parent=15 // pred_fallthru
          _
      $region16: #{discriminator_forward.12} parent=5 // pred_fallthru
        _
      %p142 = scmp.le.s32.totalorder 1, %s7
      %p143 = scmp.lt.s32.totalorder %s7, 5
      %p144 = pnand %p142, %p143
      %p145 = pneg %p144
      // Predicated region
      $region55: #{discriminator_forward.12} parent=5 // pred_check
        _
      $region56: #{discriminator_forward.12} parent=5 // pred_check_branch
        %147 = sbr.rel (%p144) target = $region58
      $region57: #{discriminator_forward.12} parent=5 // pred_region
        %s148 = ssub.s32 %s7, 1
        %s149 = sand.u32 %s34, 1
        %s150 = sand.u32 %s34, 1
        %s151 = smul.addr %s150, 16
        %s152 = scalar_lea.vmem [#allocation2], %s151
        // Predicated region
        $region59: #{discriminator_forward.12} parent=57 // pred_check
          %p153 = pneg %p47
        $region60: #{discriminator_forward.12} parent=57 // pred_check_branch
          %155 = sbr.rel (%p153) target = $region62
        $region61: #{discriminator_forward.12} parent=57 // pred_region
          _
        $region62: #{discriminator_forward.12} parent=57 // pred_fallthru
          _
        %s156 = sand.u32 %s34, 1
        %s157 = sand.u32 %s34, 1
        %s158 = smul.addr %s157, 16
        %s159 = scalar_lea.vmem [#allocation2], %s158
        %p160 = pneg %p47
        %p161 = pneg %p44
        %p162 = pneg %p75
        %p163 = pneg %p72
        %s164 = sand.u32 %s62, 1
        %s165 = sand.u32 %s62, 1
        %s166 = smul.addr %s165, 16
        %s167 = scalar_lea.vmem [#allocation3], %s166
        %v168 = vld [vmem:[%s152] sm:$0xff]
        %v169 = vld [vmem:[%s152 + $0x8] sm:$0xff]
        %v170 = vadd.f32 %v168, %v169
        %v171 = vrot.slane %v170, 4
        %v172 = vadd.f32 %v170, %v171
        %v173 = vrot.slane %v172, 2
        %v174 = vadd.f32 %v172, %v173
        %v175 = vrot.slane %v174, 1
        %v176 = vadd.f32 %v174, %v175
        %v177 = vrcp.pop 16.0
        %v178 = vmul.f32 16.0, %v177
        %v179 = vsub.f32 1.0, %v178
        %v180 = vmul.f32 %v177, %v179
        %v181 = vadd.f32 %v177, %v180
        %vm182 = vweird.f32 %v177
        %v183 = vsel %vm182, %v177, %v181
        %v184 = vmul.f32 %v176, %v183
        %v185 = vsub.f32 %v168, %v184
        %v186 = vsub.f32 %v169, %v184
        %v187 = vmul.f32 %v185, %v185
        %v188 = vmul.f32 %v186, %v186
        %v189 = vadd.f32 %v187, %v188
        %v190 = vrot.slane %v189, 4
        %v191 = vadd.f32 %v189, %v190
        %v192 = vrot.slane %v191, 2
        %v193 = vadd.f32 %v191, %v192
        %v194 = vrot.slane %v193, 1
        %v195 = vadd.f32 %v193, %v194
        %v196 = vmul.f32 %v195, %v183
        %v197 = vadd.f32 %v196, 1e-05
        %v198 = vrsqrt.pop %v197
        %v199 = vmul.f32 %v198, %v197
        %v200 = vmul.f32 %v199, %v198
        %v201 = vmul.f32 0.5, %v200
        %v202 = vsub.f32 1.5, %v201
        %v203 = vmul.f32 %v198, %v202
        %vm204 = vweird.f32 %v197
        %vm205 = vweird.f32 %v198
        %vm206 = vmor %vm204, %vm205
        %v207 = vsel %vm206, %v198, %v203
        %v208 = vmul.f32 %v185, %v207
        %v209 = vmul.f32 %v186, %v207
        %vm210 = vcmp.ge.f32.partialorder %v208, 0.0
        %vm211 = vcmp.ge.f32.partialorder %v209, 0.0
        %v212 = vmul.f32 %v208, 0.2
        %v213 = vmul.f32 %v209, 0.2
        %v214 = vsel %vm210, %v208, %v212
        %v215 = vsel %vm211, %v209, %v213
        %216 = vst [vmem:[%s167] sm:$0xff] %v214
        %217 = vst [vmem:[%s167 + $0x8] sm:$0xff] %v215
        %s218 = sand.u32 %s62, 1
        %s219 = sand.u32 %s62, 1
        %s220 = smul.addr %s219, 16
        %s221 = scalar_lea.vmem [#allocation3], %s220
        // Predicated region
        $region63: #{discriminator_forward.12} parent=57 // pred_check
          %p222 = pneg %p72
        $region64: #{discriminator_forward.12} parent=57 // pred_check_branch
          %224 = sbr.rel (%p222) target = $region66
        $region65: #{discriminator_forward.12} parent=57 // pred_region
          %s225 = smul.addr %s16, 4
          %s226 = sadd.s32 %s17, %s225
          %s227 = smul.addr %s226, 8
          %s228 = scalar_lea.vmem %s1, %s227
          // Predicated region
          $region67: #{discriminator_forward.12} parent=65 // pred_check
            _
          $region68: #{discriminator_forward.12} parent=65 // pred_check_branch
            %230 = sbr.rel (0) target = $region70
          $region69: #{discriminator_forward.12} parent=65 // pred_region
            // Predicated region
            $region71: #{discriminator_forward.12} parent=69 // pred_check
              _
            $region72: #{discriminator_forward.12} parent=69 // pred_check_branch
              %232 = sbr.rel (0) target = $region74
            $region73: #{discriminator_forward.12} parent=69 // pred_region
              // Predicated region
              $region86: #{discriminator_forward.12} parent=73 // pred_check
                _
              $region87: #{discriminator_forward.12} parent=73 // pred_check_branch
                %250 = sbr.rel (0) target = $region89
              $region88: #{discriminator_forward.12} parent=73 // pred_region
                loop: start=0, step=1, limit=1
                $region90: #{discriminator_forward.12} parent=88 // loop_pre_header
                  _
                $region91: #{discriminator_forward.12} parent=88 // loop_header
                  %s252 = sphi 0, %s256
                  %p253 = scmp.ge.s32.totalorder %s252, 1
                  %s257 = sphi %s221, %s221
                  %s258 = sphi %s228, %s228
                $region92: #{discriminator_forward.12} parent=88 // loop_header_branch
                  %255 = sbr.rel (%p253) target = $region96
                $region93: #{discriminator_forward.12} parent=88 // loop_body
                  %v259 = vld [vmem:[%s257] sm:$0xff]
                  %260 = vst [vmem:[%s258] sm:$0xff] %v259
                  %v261 = vld [vmem:[%s257 + $0x8] sm:$0xff]
                  %262 = vst [vmem:[%s258 + $0x10] sm:$0xff] %v261
                $region94: #{discriminator_forward.12} parent=88 // loop_footer
                  %s256 = sadd.s32 1, %s252
                $region95: #{discriminator_forward.12} parent=88 // loop_footer_branch
                  %251 = sbr.rel target = $region91
                $region96: #{discriminator_forward.12} parent=88 // loop_exit
                  _
              $region89: #{discriminator_forward.12} parent=73 // pred_fallthru
                _
              // Predicated region
              $region97: #{discriminator_forward.12} parent=73 // pred_check
                _
              $region98: #{discriminator_forward.12} parent=73 // pred_check_branch
                %264 = sbr.rel target = $region100
              $region99: #{discriminator_forward.12} parent=73 // pred_region
                _
              $region100: #{discriminator_forward.12} parent=73 // pred_fallthru
                _
            $region74: #{discriminator_forward.12} parent=69 // pred_fallthru
              _
            // Predicated region
            $region75: #{discriminator_forward.12} parent=69 // pred_check
              _
            $region76: #{discriminator_forward.12} parent=69 // pred_check_branch
              %234 = sbr.rel target = $region78
            $region77: #{discriminator_forward.12} parent=69 // pred_region
              %s236 = ssub.s32 256, 1
              loop: start=0, step=1, limit=1
              $region79: #{discriminator_forward.12} parent=77 // loop_pre_header
                _
              $region80: #{discriminator_forward.12} parent=77 // loop_header
                %s238 = sphi 0, %s242
                %p239 = scmp.ge.s32.totalorder %s238, 1
                %s243 = sphi %s221, %s221
                %s244 = sphi %s228, %s228
              $region81: #{discriminator_forward.12} parent=77 // loop_header_branch
                %241 = sbr.rel (%p239) target = $region85
              $region82: #{discriminator_forward.12} parent=77 // loop_body
                %v245 = vld [vmem:[%s243] sm:%s236]
                %246 = vst [vmem:[%s244] sm:%s236] %v245
                %v247 = vld [vmem:[%s243 + $0x8] sm:%s236]
                %248 = vst [vmem:[%s244 + $0x10] sm:%s236] %v247
              $region83: #{discriminator_forward.12} parent=77 // loop_footer
                %s242 = sadd.s32 1, %s238
              $region84: #{discriminator_forward.12} parent=77 // loop_footer_branch
                %237 = sbr.rel target = $region80
              $region85: #{discriminator_forward.12} parent=77 // loop_exit
                _
            $region78: #{discriminator_forward.12} parent=69 // pred_fallthru
              _
          $region70: #{discriminator_forward.12} parent=65 // pred_fallthru
            _
          %265 = vnop
        $region66: #{discriminator_forward.12} parent=57 // pred_fallthru
          _
      $region58: #{discriminator_forward.12} parent=5 // pred_fallthru
        _
      %p266 = scmp.le.s32.totalorder 2, %s7
      // Predicated region
      $region101: #{discriminator_forward.12} parent=5 // pred_check
        %p267 = pneg %p266
      $region102: #{discriminator_forward.12} parent=5 // pred_check_branch
        %269 = sbr.rel (%p267) target = $region104
      $region103: #{discriminator_forward.12} parent=5 // pred_region
        %s270 = ssub.s32 %s7, 2
        // Predicated region
        $region105: #{discriminator_forward.12} parent=103 // pred_check
          %p271 = pneg %p78
        $region106: #{discriminator_forward.12} parent=103 // pred_check_branch
          %273 = sbr.rel (%p271) target = $region108
        $region107: #{discriminator_forward.12} parent=103 // pred_region
          %s274 = sand.u32 %s63, 1
          %s275 = sand.u32 %s63, 1
          %s276 = smul.addr %s275, 16
          %s277 = scalar_lea.vmem [#allocation3], %s276
        $region108: #{discriminator_forward.12} parent=103 // pred_fallthru
          _
      $region104: #{discriminator_forward.12} parent=5 // pred_fallthru
        _
    $region6: #{discriminator_forward.12} parent=1 // loop_footer
      %s11 = sadd.s32 1, %s7
    $region7: #{discriminator_forward.12} parent=1 // loop_footer_branch
      %6 = sbr.rel target = $region3
    $region8: #{discriminator_forward.12} parent=1 // loop_exit
      _

// kernel: discriminator_forward.11
$region0: #{discriminator_forward.11}
  #allocation0 [shape = 'u32[]', space=smem, size = 0x4, offset = 0x4, fixed_abs, tag = 'smem constant byte address 0x4 - core index']
  #allocation1 [shape = 'u32[72,128]{1,0:T(1,128)}', space=vmem, size = 0x9000, scoped, tag = 'internal scratch']
  #allocation2 [shape = 'f32[32,256]{1,0:T(8,128)}', space=vmem, size = 0x8000, scoped, tag = 'scratch operand']
  %s0 = inlined_call_operand.vmem [shape: bf16[32,2048], index: 0, kind: input, shape index: {}]
  %s1 = inlined_call_operand.vmem [shape: bf16[2048,256], index: 1, kind: input, shape index: {}]
  %s2 = inlined_call_operand.vmem [shape: f32[32,256], index: 2, kind: output, shape index: {}]
  %s3 = sld [smem:[#allocation0]]
  $region72: #{discriminator_forward.11} parent=0
    _
  %s5 = ssub.s32 1, %s3
  %s6 = scalar_select 0, %s5, %s3
  $region1: #{discriminator_forward.11} parent=0
    #allocation3 [shape = 'u8[65536]{0}', space=vmem, size = 0x10000, scoped, tag = 'input window, operand 0']
    loop: start=0, step=1, limit=6
    $region2: #{discriminator_forward.11} parent=1 // loop_pre_header
      _
    $region3: #{discriminator_forward.11} parent=1 // loop_header
      %s8 = sphi 0, %s12
      %p9 = scmp.ge.s32.totalorder %s8, 6
      %s15 = sphi 0, %s34
      %s16 = sphi 0, %s30
      %s17 = sphi 0, %s26
      %s18 = sphi 0, %s15
      %s19 = sphi 0, %s16
      %s20 = sphi 0, %s17
      %s21 = sphi 0, %s18
      %s22 = sphi 0, %s19
      %s23 = sphi 0, %s20
      %s39 = sphi 0, %s41
      %s42 = sphi 0, %s39
      %s43 = sphi 0, %s42
      %s59 = sphi 0, %s43
      %s67 = sphi 0, %s69
      %s70 = sphi 0, %s67
      %s71 = sphi 0, %s70
      %s87 = sphi 0, %s71
      %s95 = sphi 0, %s97
      %s98 = sphi 0, %s95
      %s99 = sphi 0, %s98
      %s115 = sphi 0, %s99
    $region4: #{discriminator_forward.11} parent=1 // loop_header_branch
      %11 = sbr.rel (%p9) target = $region8
    $region5: #{discriminator_forward.11} parent=1 // loop_body
      %s13 = ssub.s32 %s8, 1
      %s14 = ssub.s32 %s8, 2
      %s24 = sadd.s32 1, %s17
      %p25 = scmp.ge.s32.totalorder %s24, 4
      %s26 = scalar_select %p25, 0, %s24
      %s27 = sadd.s32 1, %s16
      %s28 = scalar_select %p25, %s27, %s16
      %p29 = scmp.ge.s32.totalorder %s28, 1
      %s30 = scalar_select %p29, 0, %s28
      %s31 = sadd.s32 1, %s15
      %s32 = scalar_select %p29, %s31, %s15
      %p33 = scmp.ge.s32.totalorder %s32, 1
      %s34 = scalar_select %p33, 0, %s32
      %s35 = ssub.s32 %s15, %s34
      %s36 = ssub.s32 %s17, %s26
      %s37 = sor.u32 %s35, %s36
      %p38 = scmp.eq.s32.totalorder %s37, 0
      %s40 = sadd.s32 %s39, 1
      %s41 = scalar_select %p38, %s39, %s40
      %p44 = pneg %p38
      %p45 = scmp.eq.s32.totalorder %s8, 3
      %p46 = por %p44, %p45
      %p47 = scmp.ne.s32.totalorder %s39, %s42
      %p48 = scmp.eq.s32.totalorder %s8, 0
      %p49 = por %p47, %p48
      %p50 = scmp.ne.s32.totalorder %s39, %s42
      %p51 = scmp.eq.s32.totalorder %s13, 3
      %p52 = por %p50, %p51
      %p53 = scmp.ne.s32.totalorder %s42, %s43
      %p54 = scmp.eq.s32.totalorder %s13, 0
      %p55 = por %p53, %p54
      %p56 = scmp.ne.s32.totalorder %s42, %s43
      %p57 = scmp.eq.s32.totalorder %s14, 3
      %p58 = por %p56, %p57
      %p60 = scmp.ne.s32.totalorder %s43, %s59
      %p61 = scmp.eq.s32.totalorder %s14, 0
      %p62 = por %p60, %p61
      %s63 = ssub.s32 %s17, %s26
      %s64 = ssub.s32 %s16, %s30
      %s65 = sor.u32 %s63, %s64
      %p66 = scmp.eq.s32.totalorder %s65, 0
      %s68 = sadd.s32 %s67, 1
      %s69 = scalar_select %p66, %s67, %s68
      %p72 = pneg %p66
      %p73 = scmp.eq.s32.totalorder %s8, 3
      %p74 = por %p72, %p73
      %p75 = scmp.ne.s32.totalorder %s67, %s70
      %p76 = scmp.eq.s32.totalorder %s8, 0
      %p77 = por %p75, %p76
      %p78 = scmp.ne.s32.totalorder %s67, %s70
      %p79 = scmp.eq.s32.totalorder %s13, 3
      %p80 = por %p78, %p79
      %p81 = scmp.ne.s32.totalorder %s70, %s71
      %p82 = scmp.eq.s32.totalorder %s13, 0
      %p83 = por %p81, %p82
      %p84 = scmp.ne.s32.totalorder %s70, %s71
      %p85 = scmp.eq.s32.totalorder %s14, 3
      %p86 = por %p84, %p85
      %p88 = scmp.ne.s32.totalorder %s71, %s87
      %p89 = scmp.eq.s32.totalorder %s14, 0
      %p90 = por %p88, %p89
      %s91 = ssub.s32 %s15, %s34
      %s92 = ssub.s32 %s16, %s30
      %s93 = sor.u32 %s91, %s92
      %p94 = scmp.eq.s32.totalorder %s93, 0
      %s96 = sadd.s32 %s95, 1
      %s97 = scalar_select %p94, %s95, %s96
      %p100 = pneg %p94
      %p101 = scmp.eq.s32.totalorder %s8, 3
      %p102 = por %p100, %p101
      %p103 = scmp.ne.s32.totalorder %s95, %s98
      %p104 = scmp.eq.s32.totalorder %s8, 0
      %p105 = por %p103, %p104
      %p106 = scmp.ne.s32.totalorder %s95, %s98
      %p107 = scmp.eq.s32.totalorder %s13, 3
      %p108 = por %p106, %p107
      %p109 = scmp.ne.s32.totalorder %s98, %s99
      %p110 = scmp.eq.s32.totalorder %s13, 0
      %p111 = por %p109, %p110
      %p112 = scmp.ne.s32.totalorder %s98, %s99
      %p113 = scmp.eq.s32.totalorder %s14, 3
      %p114 = por %p112, %p113
      %p116 = scmp.ne.s32.totalorder %s99, %s115
      %p117 = scmp.eq.s32.totalorder %s14, 0
      %p118 = por %p116, %p117
      %p119 = scmp.le.s32.totalorder 1, %s8
      %p120 = scmp.lt.s32.totalorder %s8, 5
      %p121 = pnand %p119, %p120
      %p122 = pneg %p121
      // Predicated region
      $region9: #{discriminator_forward.11} parent=5 // pred_check
        _
      $region10: #{discriminator_forward.11} parent=5 // pred_check_branch
        %124 = sbr.rel (%p121) target = $region12
      $region11: #{discriminator_forward.11} parent=5 // pred_region
        %s125 = ssub.s32 %s8, 1
      $region12: #{discriminator_forward.11} parent=5 // pred_fallthru
        _
      %p126 = scmp.lt.s32.totalorder %s8, 4
      // Predicated region
      $region13: #{discriminator_forward.11} parent=5 // pred_check
        %p127 = pneg %p126
      $region14: #{discriminator_forward.11} parent=5 // pred_check_branch
        %129 = sbr.rel (%p127) target = $region16
      $region15: #{discriminator_forward.11} parent=5 // pred_region
        // Predicated region
        $region17: #{discriminator_forward.11} parent=15 // pred_check
          %p130 = pneg %p49
        $region18: #{discriminator_forward.11} parent=15 // pred_check_branch
          %132 = sbr.rel (%p130) target = $region20
        $region19: #{discriminator_forward.11} parent=15 // pred_region
          %s133 = sand.u32 %s39, 1
          %s134 = sand.u32 %s39, 1
          %s135 = smul.addr %s134, 64
          %s136 = scalar_lea.vmem [#allocation3], %s135
          %s137 = smul.u32 4, %s15
          %s138 = smul.u32 4, %s17
          %s139 = smul.addr %s137, 16
          %s140 = sadd.s32 %s138, %s139
          %s141 = smul.addr %s140, 4
          %s142 = scalar_lea.vmem %s0, %s141
          // Predicated region
          $region21: #{discriminator_forward.11} parent=19 // pred_check
            _
          $region22: #{discriminator_forward.11} parent=19 // pred_check_branch
            %144 = sbr.rel (0) target = $region24
          $region23: #{discriminator_forward.11} parent=19 // pred_region
            // Predicated region
            $region25: #{discriminator_forward.11} parent=23 // pred_check
              _
            $region26: #{discriminator_forward.11} parent=23 // pred_check_branch
              %146 = sbr.rel (0) target = $region28
            $region27: #{discriminator_forward.11} parent=23 // pred_region
              loop: start=0, step=1, limit=1
              $region29: #{discriminator_forward.11} parent=27 // loop_pre_header
                _
              $region30: #{discriminator_forward.11} parent=27 // loop_header
                %s148 = sphi 0, %s152
                %p149 = scmp.ge.s32.totalorder %s148, 1
                %s153 = sphi %s142, %s142
                %s154 = sphi %s136, %s136
              $region31: #{discriminator_forward.11} parent=27 // loop_header_branch
                %151 = sbr.rel (%p149) target = $region35
              $region32: #{discriminator_forward.11} parent=27 // loop_body
                %v155 = vld [vmem:[%s153] sm:$0xff]
                %156 = vst [vmem:[%s154] sm:$0xff] %v155
                %v157 = vld [vmem:[%s153 + $0x8] sm:$0xff]
                %158 = vst [vmem:[%s154 + $0x8] sm:$0xff] %v157
                %v159 = vld [vmem:[%s153 + $0x40] sm:$0xff]
                %160 = vst [vmem:[%s154 + $0x10] sm:$0xff] %v159
                %v161 = vld [vmem:[%s153 + $0x48] sm:$0xff]
                %162 = vst [vmem:[%s154 + $0x18] sm:$0xff] %v161
                %v163 = vld [vmem:[%s153 + $0x80] sm:$0xff]
                %164 = vst [vmem:[%s154 + $0x20] sm:$0xff] %v163
                %v165 = vld [vmem:[%s153 + $0x88] sm:$0xff]
                %166 = vst [vmem:[%s154 + $0x28] sm:$0xff] %v165
                %v167 = vld [vmem:[%s153 + $0xc0] sm:$0xff]
                %168 = vst [vmem:[%s154 + $0x30] sm:$0xff] %v167
                %v169 = vld [vmem:[%s153 + $0xc8] sm:$0xff]
                %170 = vst [vmem:[%s154 + $0x38] sm:$0xff] %v169
              $region33: #{discriminator_forward.11} parent=27 // loop_footer
                %s152 = sadd.s32 1, %s148
              $region34: #{discriminator_forward.11} parent=27 // loop_footer_branch
                %147 = sbr.rel target = $region30
              $region35: #{discriminator_forward.11} parent=27 // loop_exit
                _
            $region28: #{discriminator_forward.11} parent=23 // pred_fallthru
              _
            // Predicated region
            $region36: #{discriminator_forward.11} parent=23 // pred_check
              _
            $region37: #{discriminator_forward.11} parent=23 // pred_check_branch
              %172 = sbr.rel target = $region39
            $region38: #{discriminator_forward.11} parent=23 // pred_region
              _
            $region39: #{discriminator_forward.11} parent=23 // pred_fallthru
              _
          $region24: #{discriminator_forward.11} parent=19 // pred_fallthru
            _
          %173 = vnop
        $region20: #{discriminator_forward.11} parent=15 // pred_fallthru
          _
        // Predicated region
        $region40: #{discriminator_forward.11} parent=15 // pred_check
          %p174 = pneg %p77
        $region41: #{discriminator_forward.11} parent=15 // pred_check_branch
          %176 = sbr.rel (%p174) target = $region43
        $region42: #{discriminator_forward.11} parent=15 // pred_region
          %s177 = smul.u32 64, %s17
          %s178 = smul.u32 2, %s16
          %p179 = scmp.lt.s32.totalorder %s177, 255
          %s180 = scalar_select %p179, %s177, 255
          %p181 = scmp.lt.s32.totalorder %s178, 1
          %s182 = scalar_select %p181, %s178, 1
          %s183 = smul.addr %s180, 2
          %s184 = sadd.s32 %s182, %s183
          %s185 = smul.addr %s184, 4
          %s186 = scalar_lea.vmem %s1, %s185
          %s187 = smul.u32 64, %s17
          %s188 = smul.u32 2, %s16
        $region43: #{discriminator_forward.11} parent=15 // pred_fallthru
          _
      $region16: #{discriminator_forward.11} parent=5 // pred_fallthru
        _
      %p189 = scmp.le.s32.totalorder 1, %s8
      %p190 = scmp.lt.s32.totalorder %s8, 5
      %p191 = pnand %p189, %p190
      %p192 = pneg %p191
      // Predicated region
      $region44: #{discriminator_forward.11} parent=5 // pred_check
        _
      $region45: #{discriminator_forward.11} parent=5 // pred_check_branch
        %194 = sbr.rel (%p191) target = $region47
      $region46: #{discriminator_forward.11} parent=5 // pred_region
        %s195 = ssub.s32 %s8, 1
        %s196 = sand.u32 %s42, 1
        %s197 = sand.u32 %s42, 1
        %s198 = smul.addr %s197, 64
        %s199 = scalar_lea.vmem [#allocation3], %s198
        // Predicated region
        $region48: #{discriminator_forward.11} parent=46 // pred_check
          %p200 = pneg %p55
        $region49: #{discriminator_forward.11} parent=46 // pred_check_branch
          %202 = sbr.rel (%p200) target = $region51
        $region50: #{discriminator_forward.11} parent=46 // pred_region
          _
        $region51: #{discriminator_forward.11} parent=46 // pred_fallthru
          _
        %s203 = sand.u32 %s42, 1
        %s204 = sand.u32 %s42, 1
        %s205 = smul.addr %s204, 64
        %s206 = scalar_lea.vmem [#allocation3], %s205
        %p207 = pneg %p55
        %p208 = pneg %p52
        %s209 = smul.u32 64, %s20
        %s210 = smul.u32 2, %s19
        %p211 = scmp.lt.s32.totalorder %s209, 255
        %s212 = scalar_select %p211, %s209, 255
        %p213 = scmp.lt.s32.totalorder %s210, 1
        %s214 = scalar_select %p213, %s210, 1
        %s215 = smul.addr %s212, 2
        %s216 = sadd.s32 %s214, %s215
        %s217 = smul.addr %s216, 4
        %s218 = scalar_lea.vmem %s1, %s217
        %p219 = pneg %p83
        %p220 = pneg %p80
        %p221 = pneg %p111
        %p222 = pneg %p108
        %s223 = smul.u32 4, %s18
        %s224 = smul.u32 2, %s19
        %p225 = scmp.lt.s32.totalorder %s223, 3
        %s226 = scalar_select %p225, %s223, 3
        %p227 = scmp.lt.s32.totalorder %s224, 1
        %s228 = scalar_select %p227, %s224, 1
        %s229 = smul.addr %s226, 2
        %s230 = sadd.s32 %s228, %s229
        %s231 = smul.addr %s230, 8
        %s232 = scalar_lea.vmem %s2, %s231
        %s233 = smul.u32 4, %s18
        %s234 = smul.u32 4, %s20
        %s235 = smul.u32 64, %s20
        %s236 = smul.u32 2, %s19
        %p237 = scmp.lt.s32.totalorder %s235, 255
        %s238 = scalar_select %p237, %s235, 255
        %p239 = scmp.lt.s32.totalorder %s236, 1
        %s240 = scalar_select %p239, %s236, 1
        %s241 = smul.addr %s238, 2
        %s242 = sadd.s32 %s240, %s241
        %s243 = smul.addr %s242, 4
        %s244 = scalar_lea.vmem %s1, %s243
        %s245 = smul.u32 64, %s20
        %s246 = smul.u32 2, %s19
        %s247 = smul.u32 4, %s18
        %s248 = smul.u32 2, %s19
        %p249 = scmp.lt.s32.totalorder %s247, 3
        %s250 = scalar_select %p249, %s247, 3
        %p251 = scmp.lt.s32.totalorder %s248, 1
        %s252 = scalar_select %p251, %s248, 1
        %s253 = smul.addr %s250, 2
        %s254 = sadd.s32 %s252, %s253
        %s255 = smul.addr %s254, 8
        %s256 = scalar_lea.vmem %s2, %s255
        %s257 = smul.u32 4, %s18
        %s258 = smul.u32 2, %s19
        %p259 = scmp.eq.s32.totalorder %s20, 0
        // Predicated region
        $region52: #{discriminator_forward.11} parent=46 // pred_check
          %p260 = pneg %p259
        $region53: #{discriminator_forward.11} parent=46 // pred_check_branch
          %262 = sbr.rel (%p260) target = $region55
        $region54: #{discriminator_forward.11} parent=46 // pred_region
          %263 = vst [vmem:[#allocation2] sm:$0xff] 0.0
          %264 = vst [vmem:[#allocation2 + $0x8] sm:$0xff] 0.0
          %265 = vst [vmem:[#allocation2 + $0x10] sm:$0xff] 0.0
          %266 = vst [vmem:[#allocation2 + $0x18] sm:$0xff] 0.0
          %267 = vst [vmem:[#allocation2 + $0x20] sm:$0xff] 0.0
          %268 = vst [vmem:[#allocation2 + $0x28] sm:$0xff] 0.0
          %269 = vst [vmem:[#allocation2 + $0x30] sm:$0xff] 0.0
          %270 = vst [vmem:[#allocation2 + $0x38] sm:$0xff] 0.0
        $region55: #{discriminator_forward.11} parent=46 // pred_fallthru
          _
        %v271 = vld [vmem:[#allocation2] sm:$0xff]
        %v272 = vld [vmem:[#allocation2 + $0x8] sm:$0xff]
        %v273 = vld [vmem:[#allocation2 + $0x10] sm:$0xff]
        %v274 = vld [vmem:[#allocation2 + $0x18] sm:$0xff]
        %v275 = vld [vmem:[#allocation2 + $0x20] sm:$0xff]
        %v276 = vld [vmem:[#allocation2 + $0x28] sm:$0xff]
        %v277 = vld [vmem:[#allocation2 + $0x30] sm:$0xff]
        %v278 = vld [vmem:[#allocation2 + $0x38] sm:$0xff]
        %v279 = vld [vmem:[%s199] sm:$0xff]
        %v280 = vld [vmem:[%s199 + $0x8] sm:$0xff]
        %v281 = vld [vmem:[%s199 + $0x10] sm:$0xff]
        %v282 = vld [vmem:[%s199 + $0x18] sm:$0xff]
        %v283 = vld [vmem:[%s199 + $0x20] sm:$0xff]
        %v284 = vld [vmem:[%s199 + $0x28] sm:$0xff]
        %v285 = vld [vmem:[%s199 + $0x30] sm:$0xff]
        %v286 = vld [vmem:[%s199 + $0x38] sm:$0xff]
        %v287 = vld [vmem:[%s244] sm:$0xff]
        %v288 = vld [vmem:[%s244 + $0x8] sm:$0xff]
        %v289 = vld [vmem:[%s244 + $0x10] sm:$0xff]
        %v290 = vld [vmem:[%s244 + $0x18] sm:$0xff]
        %v291 = vld [vmem:[%s244 + $0x20] sm:$0xff]
        %v292 = vld [vmem:[%s244 + $0x28] sm:$0xff]
        %v293 = vld [vmem:[%s244 + $0x30] sm:$0xff]
        %v294 = vld [vmem:[%s244 + $0x38] sm:$0xff]
        %v295 = vld [vmem:[%s244 + $0x40] sm:$0xff]
        %v296 = vld [vmem:[%s244 + $0x48] sm:$0xff]
        %v297 = vld [vmem:[%s244 + $0x50] sm:$0xff]
        %v298 = vld [vmem:[%s244 + $0x58] sm:$0xff]
        %v299 = vld [vmem:[%s244 + $0x60] sm:$0xff]
        %v300 = vld [vmem:[%s244 + $0x68] sm:$0xff]
        %v301 = vld [vmem:[%s244 + $0x70] sm:$0xff]
        %v302 = vld [vmem:[%s244 + $0x78] sm:$0xff]
        %v303 = vld [vmem:[%s244 + $0x80] sm:$0xff]
        %v304 = vld [vmem:[%s244 + $0x88] sm:$0xff]
        %v305 = vld [vmem:[%s244 + $0x90] sm:$0xff]
        %v306 = vld [vmem:[%s244 + $0x98] sm:$0xff]
        %v307 = vld [vmem:[%s244 + $0xa0] sm:$0xff]
        %v308 = vld [vmem:[%s244 + $0xa8] sm:$0xff]
        %v309 = vld [vmem:[%s244 + $0xb0] sm:$0xff]
        %v310 = vld [vmem:[%s244 + $0xb8] sm:$0xff]
        %v311 = vld [vmem:[%s244 + $0xc0] sm:$0xff]
        %v312 = vld [vmem:[%s244 + $0xc8] sm:$0xff]
        %v313 = vld [vmem:[%s244 + $0xd0] sm:$0xff]
        %v314 = vld [vmem:[%s244 + $0xd8] sm:$0xff]
        %v315 = vld [vmem:[%s244 + $0xe0] sm:$0xff]
        %v316 = vld [vmem:[%s244 + $0xe8] sm:$0xff]
        %v317 = vld [vmem:[%s244 + $0xf0] sm:$0xff]
        %v318 = vld [vmem:[%s244 + $0xf8] sm:$0xff]
        %v319 = vld [vmem:[%s244 + $0x100] sm:$0xff]
        %v320 = vld [vmem:[%s244 + $0x108] sm:$0xff]
        %v321 = vld [vmem:[%s244 + $0x110] sm:$0xff]
        %v322 = vld [vmem:[%s244 + $0x118] sm:$0xff]
        %v323 = vld [vmem:[%s244 + $0x120] sm:$0xff]
        %v324 = vld [vmem:[%s244 + $0x128] sm:$0xff]
        %v325 = vld [vmem:[%s244 + $0x130] sm:$0xff]
        %v326 = vld [vmem:[%s244 + $0x138] sm:$0xff]
        %v327 = vld [vmem:[%s244 + $0x140] sm:$0xff]
        %v328 = vld [vmem:[%s244 + $0x148] sm:$0xff]
        %v329 = vld [vmem:[%s244 + $0x150] sm:$0xff]
        %v330 = vld [vmem:[%s244 + $0x158] sm:$0xff]
        %v331 = vld [vmem:[%s244 + $0x160] sm:$0xff]
        %v332 = vld [vmem:[%s244 + $0x168] sm:$0xff]
        %v333 = vld [vmem:[%s244 + $0x170] sm:$0xff]
        %v334 = vld [vmem:[%s244 + $0x178] sm:$0xff]
        %v335 = vld [vmem:[%s244 + $0x180] sm:$0xff]
        %v336 = vld [vmem:[%s244 + $0x188] sm:$0xff]
        %v337 = vld [vmem:[%s244 + $0x190] sm:$0xff]
        %v338 = vld [vmem:[%s244 + $0x198] sm:$0xff]
        %v339 = vld [vmem:[%s244 + $0x1a0] sm:$0xff]
        %v340 = vld [vmem:[%s244 + $0x1a8] sm:$0xff]
        %v341 = vld [vmem:[%s244 + $0x1b0] sm:$0xff]
        %v342 = vld [vmem:[%s244 + $0x1b8] sm:$0xff]
        %v343 = vld [vmem:[%s244 + $0x1c0] sm:$0xff]
        %v344 = vld [vmem:[%s244 + $0x1c8] sm:$0xff]
        %v345 = vld [vmem:[%s244 + $0x1d0] sm:$0xff]
        %v346 = vld [vmem:[%s244 + $0x1d8] sm:$0xff]
        %v347 = vld [vmem:[%s244 + $0x1e0] sm:$0xff]
        %v348 = vld [vmem:[%s244 + $0x1e8] sm:$0xff]
        %v349 = vld [vmem:[%s244 + $0x1f0] sm:$0xff]
        %v350 = vld [vmem:[%s244 + $0x1f8] sm:$0xff]
        %v359 = vunpack.c.l.b16 %v279
        %v360 = vunpack.c.h.b16 %v279
        %v361 = vunpack.c.l.b16 %v280
        %v362 = vunpack.c.h.b16 %v280
        %v363 = vunpack.c.l.b16 %v281
        %v364 = vunpack.c.h.b16 %v281
        %v365 = vunpack.c.l.b16 %v282
        %v366 = vunpack.c.h.b16 %v282
        %v367 = vunpack.c.l.b16 %v283
        %v368 = vunpack.c.h.b16 %v283
        %v369 = vunpack.c.l.b16 %v284
        %v370 = vunpack.c.h.b16 %v284
        %v371 = vunpack.c.l.b16 %v285
        %v372 = vunpack.c.h.b16 %v285
        %v373 = vunpack.c.l.b16 %v286
        %v374 = vunpack.c.h.b16 %v286
        %v375 = vpack.c.b16 %v363, %v359
        %v376 = vpack.c.b16 %v364, %v360
        %v377 = vpack.c.b16 %v365, %v361
        %v378 = vpack.c.b16 %v366, %v362
        %v379 = vpack.c.b16 %v371, %v367
        %v380 = vpack.c.b16 %v372, %v368
        %v381 = vpack.c.b16 %v373, %v369
        %v382 = vpack.c.b16 %v374, %v370
        %v455 = vunpack.c.l.b16 %v287
        %v456 = vunpack.c.h.b16 %v287
        %v457 = vunpack.c.l.b16 %v288
        %v458 = vunpack.c.h.b16 %v288
        %v459 = vunpack.c.l.b16 %v289
        %v460 = vunpack.c.h.b16 %v289
        %v461 = vunpack.c.l.b16 %v290
        %v462 = vunpack.c.h.b16 %v290
        %v463 = vunpack.c.l.b16 %v291
        %v464 = vunpack.c.h.b16 %v291
        %v465 = vunpack.c.l.b16 %v292
        %v466 = vunpack.c.h.b16 %v292
        %v467 = vunpack.c.l.b16 %v293
        %v468 = vunpack.c.h.b16 %v293
        %v469 = vunpack.c.l.b16 %v294
        %v470 = vunpack.c.h.b16 %v294
        %v471 = vunpack.c.l.b16 %v295
        %v472 = vunpack.c.h.b16 %v295
        %v473 = vunpack.c.l.b16 %v296
        %v474 = vunpack.c.h.b16 %v296
        %v475 = vunpack.c.l.b16 %v297
        %v476 = vunpack.c.h.b16 %v297
        %v477 = vunpack.c.l.b16 %v298
        %v478 = vunpack.c.h.b16 %v298
        %v479 = vunpack.c.l.b16 %v299
        %v480 = vunpack.c.h.b16 %v299
        %v481 = vunpack.c.l.b16 %v300
        %v482 = vunpack.c.h.b16 %v300
        %v483 = vunpack.c.l.b16 %v301
        %v484 = vunpack.c.h.b16 %v301
        %v485 = vunpack.c.l.b16 %v302
        %v486 = vunpack.c.h.b16 %v302
        %v487 = vunpack.c.l.b16 %v303
        %v488 = vunpack.c.h.b16 %v303
        %v489 = vunpack.c.l.b16 %v304
        %v490 = vunpack.c.h.b16 %v304
        %v491 = vunpack.c.l.b16 %v305
        %v492 = vunpack.c.h.b16 %v305
        %v493 = vunpack.c.l.b16 %v306
        %v494 = vunpack.c.h.b16 %v306
        %v495 = vunpack.c.l.b16 %v307
        %v496 = vunpack.c.h.b16 %v307
        %v497 = vunpack.c.l.b16 %v308
        %v498 = vunpack.c.h.b16 %v308
        %v499 = vunpack.c.l.b16 %v309
        %v500 = vunpack.c.h.b16 %v309
        %v501 = vunpack.c.l.b16 %v310
        %v502 = vunpack.c.h.b16 %v310
        %v503 = vunpack.c.l.b16 %v311
        %v504 = vunpack.c.h.b16 %v311
        %v505 = vunpack.c.l.b16 %v312
        %v506 = vunpack.c.h.b16 %v312
        %v507 = vunpack.c.l.b16 %v313
        %v508 = vunpack.c.h.b16 %v313
        %v509 = vunpack.c.l.b16 %v314
        %v510 = vunpack.c.h.b16 %v314
        %v511 = vunpack.c.l.b16 %v315
        %v512 = vunpack.c.h.b16 %v315
        %v513 = vunpack.c.l.b16 %v316
        %v514 = vunpack.c.h.b16 %v316
        %v515 = vunpack.c.l.b16 %v317
        %v516 = vunpack.c.h.b16 %v317
        %v517 = vunpack.c.l.b16 %v318
        %v518 = vunpack.c.h.b16 %v318
        %v519 = vunpack.c.l.b16 %v319
        %v520 = vunpack.c.h.b16 %v319
        %v521 = vunpack.c.l.b16 %v320
        %v522 = vunpack.c.h.b16 %v320
        %v523 = vunpack.c.l.b16 %v321
        %v524 = vunpack.c.h.b16 %v321
        %v525 = vunpack.c.l.b16 %v322
        %v526 = vunpack.c.h.b16 %v322
        %v527 = vunpack.c.l.b16 %v323
        %v528 = vunpack.c.h.b16 %v323
        %v529 = vunpack.c.l.b16 %v324
        %v530 = vunpack.c.h.b16 %v324
        %v531 = vunpack.c.l.b16 %v325
        %v532 = vunpack.c.h.b16 %v325
        %v533 = vunpack.c.l.b16 %v326
        %v534 = vunpack.c.h.b16 %v326
        %v535 = vunpack.c.l.b16 %v327
        %v536 = vunpack.c.h.b16 %v327
        %v537 = vunpack.c.l.b16 %v328
        %v538 = vunpack.c.h.b16 %v328
        %v539 = vunpack.c.l.b16 %v329
        %v540 = vunpack.c.h.b16 %v329
        %v541 = vunpack.c.l.b16 %v330
        %v542 = vunpack.c.h.b16 %v330
        %v543 = vunpack.c.l.b16 %v331
        %v544 = vunpack.c.h.b16 %v331
        %v545 = vunpack.c.l.b16 %v332
        %v546 = vunpack.c.h.b16 %v332
        %v547 = vunpack.c.l.b16 %v333
        %v548 = vunpack.c.h.b16 %v333
        %v549 = vunpack.c.l.b16 %v334
        %v550 = vunpack.c.h.b16 %v334
        %v551 = vunpack.c.l.b16 %v335
        %v552 = vunpack.c.h.b16 %v335
        %v553 = vunpack.c.l.b16 %v336
        %v554 = vunpack.c.h.b16 %v336
        %v555 = vunpack.c.l.b16 %v337
        %v556 = vunpack.c.h.b16 %v337
        %v557 = vunpack.c.l.b16 %v338
        %v558 = vunpack.c.h.b16 %v338
        %v559 = vunpack.c.l.b16 %v339
        %v560 = vunpack.c.h.b16 %v339
        %v561 = vunpack.c.l.b16 %v340
        %v562 = vunpack.c.h.b16 %v340
        %v563 = vunpack.c.l.b16 %v341
        %v564 = vunpack.c.h.b16 %v341
        %v565 = vunpack.c.l.b16 %v342
        %v566 = vunpack.c.h.b16 %v342
        %v567 = vunpack.c.l.b16 %v343
        %v568 = vunpack.c.h.b16 %v343
        %v569 = vunpack.c.l.b16 %v344
        %v570 = vunpack.c.h.b16 %v344
        %v571 = vunpack.c.l.b16 %v345
        %v572 = vunpack.c.h.b16 %v345
        %v573 = vunpack.c.l.b16 %v346
        %v574 = vunpack.c.h.b16 %v346
        %v575 = vunpack.c.l.b16 %v347
        %v576 = vunpack.c.h.b16 %v347
        %v577 = vunpack.c.l.b16 %v348
        %v578 = vunpack.c.h.b16 %v348
        %v579 = vunpack.c.l.b16 %v349
        %v580 = vunpack.c.h.b16 %v349
        %v581 = vunpack.c.l.b16 %v350
        %v582 = vunpack.c.h.b16 %v350
        %v583 = vpack.c.b16 %v457, %v455
        %v584 = vpack.c.b16 %v458, %v456
        %v585 = vpack.c.b16 %v461, %v459
        %v586 = vpack.c.b16 %v462, %v460
        %v587 = vpack.c.b16 %v465, %v463
        %v588 = vpack.c.b16 %v466, %v464
        %v589 = vpack.c.b16 %v469, %v467
        %v590 = vpack.c.b16 %v470, %v468
        %v591 = vpack.c.b16 %v473, %v471
        %v592 = vpack.c.b16 %v474, %v472
        %v593 = vpack.c.b16 %v477, %v475
        %v594 = vpack.c.b16 %v478, %v476
        %v595 = vpack.c.b16 %v481, %v479
        %v596 = vpack.c.b16 %v482, %v480
        %v597 = vpack.c.b16 %v485, %v483
        %v598 = vpack.c.b16 %v486, %v484
        %v599 = vpack.c.b16 %v489, %v487
        %v600 = vpack.c.b16 %v490, %v488
        %v601 = vpack.c.b16 %v493, %v491
        %v602 = vpack.c.b16 %v494, %v492
        %v603 = vpack.c.b16 %v497, %v495
        %v604 = vpack.c.b16 %v498, %v496
        %v605 = vpack.c.b16 %v501, %v499
        %v606 = vpack.c.b16 %v502, %v500
        %v607 = vpack.c.b16 %v505, %v503
        %v608 = vpack.c.b16 %v506, %v504
        %v609 = vpack.c.b16 %v509, %v507
        %v610 = vpack.c.b16 %v510, %v508
        %v611 = vpack.c.b16 %v513, %v511
        %v612 = vpack.c.b16 %v514, %v512
        %v613 = vpack.c.b16 %v517, %v515
        %v614 = vpack.c.b16 %v518, %v516
        %v615 = vpack.c.b16 %v521, %v519
        %v616 = vpack.c.b16 %v522, %v520
        %v617 = vpack.c.b16 %v525, %v523
        %v618 = vpack.c.b16 %v526, %v524
        %v619 = vpack.c.b16 %v529, %v527
        %v620 = vpack.c.b16 %v530, %v528
        %v621 = vpack.c.b16 %v533, %v531
        %v622 = vpack.c.b16 %v534, %v532
        %v623 = vpack.c.b16 %v537, %v535
        %v624 = vpack.c.b16 %v538, %v536
        %v625 = vpack.c.b16 %v541, %v539
        %v626 = vpack.c.b16 %v542, %v540
        %v627 = vpack.c.b16 %v545, %v543
        %v628 = vpack.c.b16 %v546, %v544
        %v629 = vpack.c.b16 %v549, %v547
        %v630 = vpack.c.b16 %v550, %v548
        %v631 = vpack.c.b16 %v553, %v551
        %v632 = vpack.c.b16 %v554, %v552
        %v633 = vpack.c.b16 %v557, %v555
        %v634 = vpack.c.b16 %v558, %v556
        %v635 = vpack.c.b16 %v561, %v559
        %v636 = vpack.c.b16 %v562, %v560
        %v637 = vpack.c.b16 %v565, %v563
        %v638 = vpack.c.b16 %v566, %v564
        %v639 = vpack.c.b16 %v569, %v567
        %v640 = vpack.c.b16 %v570, %v568
        %v641 = vpack.c.b16 %v573, %v571
        %v642 = vpack.c.b16 %v574, %v572
        %v643 = vpack.c.b16 %v577, %v575
        %v644 = vpack.c.b16 %v578, %v576
        %v645 = vpack.c.b16 %v581, %v579
        %v646 = vpack.c.b16 %v582, %v580
        %711 = vmatpush.bf16.msra.mxu0 %v597
        %712 = vmatpush.bf16.msra.mxu0 %v595
        %713 = vmatpush.bf16.msra.mxu0 %v593
        %714 = vmatpush.bf16.msra.mxu0 %v591
        %715 = vmatpush.bf16.msra.mxu0 %v589
        %716 = vmatpush.bf16.msra.mxu0 %v587
        %717 = vmatpush.bf16.msra.mxu0 %v585
        %718 = vmatpush.bf16.msra.mxu0 %v583
        %719 = vmatmul.bf16.gmra.mxu0 %v375
        %v720 = vpop.f32.mrf.mxu0
        %v721 = vadd.f32 0.0, %v720
        %v722 = vpop.f32.mrf.mxu0
        %v723 = vadd.f32 0.0, %v722
        %724 = vmatmul.bf16.gmra.mxu0 %v379
        %v725 = vpop.f32.mrf.mxu0
        %v726 = vadd.f32 0.0, %v725
        %v727 = vpop.f32.mrf.mxu0
        %v728 = vadd.f32 0.0, %v727
        %729 = vdwg.mxu0
        %730 = vmatpush.bf16.msra.mxu0 %v613
        %731 = vmatpush.bf16.msra.mxu0 %v611
        %732 = vmatpush.bf16.msra.mxu0 %v609
        %733 = vmatpush.bf16.msra.mxu0 %v607
        %734 = vmatpush.bf16.msra.mxu0 %v605
        %735 = vmatpush.bf16.msra.mxu0 %v603
        %736 = vmatpush.bf16.msra.mxu0 %v601
        %737 = vmatpush.bf16.msra.mxu0 %v599
        %738 = vmatmul.bf16.gmra.mxu0 %v376
        %v739 = vpop.f32.mrf.mxu0
        %v740 = vadd.f32 %v721, %v739
        %v741 = vpop.f32.mrf.mxu0
        %v742 = vadd.f32 %v723, %v741
        %743 = vmatmul.bf16.gmra.mxu0 %v380
        %v744 = vpop.f32.mrf.mxu0
        %v745 = vadd.f32 %v726, %v744
        %v746 = vpop.f32.mrf.mxu0
        %v747 = vadd.f32 %v728, %v746
        %748 = vdwg.mxu0
        %749 = vmatpush.bf16.msra.mxu0 %v629
        %750 = vmatpush.bf16.msra.mxu0 %v627
        %751 = vmatpush.bf16.msra.mxu0 %v625
        %752 = vmatpush.bf16.msra.mxu0 %v623
        %753 = vmatpush.bf16.msra.mxu0 %v621
        %754 = vmatpush.bf16.msra.mxu0 %v619
        %755 = vmatpush.bf16.msra.mxu0 %v617
        %756 = vmatpush.bf16.msra.mxu0 %v615
        %757 = vmatmul.bf16.gmra.mxu0 %v377
        %v758 = vpop.f32.mrf.mxu0
        %v759 = vadd.f32 %v740, %v758
        %v760 = vpop.f32.mrf.mxu0
        %v761 = vadd.f32 %v742, %v760
        %762 = vmatmul.bf16.gmra.mxu0 %v381
        %v763 = vpop.f32.mrf.mxu0
        %v764 = vadd.f32 %v745, %v763
        %v765 = vpop.f32.mrf.mxu0
        %v766 = vadd.f32 %v747, %v765
        %767 = vdwg.mxu0
        %768 = vmatpush.bf16.msra.mxu0 %v645
        %769 = vmatpush.bf16.msra.mxu0 %v643
        %770 = vmatpush.bf16.msra.mxu0 %v641
        %771 = vmatpush.bf16.msra.mxu0 %v639
        %772 = vmatpush.bf16.msra.mxu0 %v637
        %773 = vmatpush.bf16.msra.mxu0 %v635
        %774 = vmatpush.bf16.msra.mxu0 %v633
        %775 = vmatpush.bf16.msra.mxu0 %v631
        %776 = vmatmul.bf16.gmra.mxu0 %v378
        %v777 = vpop.f32.mrf.mxu0
        %v778 = vadd.f32 %v759, %v777
        %v779 = vpop.f32.mrf.mxu0
        %v780 = vadd.f32 %v761, %v779
        %781 = vmatmul.bf16.gmra.mxu0 %v382
        %v782 = vpop.f32.mrf.mxu0
        %v783 = vadd.f32 %v764, %v782
        %v784 = vpop.f32.mrf.mxu0
        %v785 = vadd.f32 %v766, %v784
        %786 = vdwg.mxu0
        %787 = vmatpush.bf16.msra.mxu0 %v598
        %788 = vmatpush.bf16.msra.mxu0 %v596
        %789 = vmatpush.bf16.msra.mxu0 %v594
        %790 = vmatpush.bf16.msra.mxu0 %v592
        %791 = vmatpush.bf16.msra.mxu0 %v590
        %792 = vmatpush.bf16.msra.mxu0 %v588
        %793 = vmatpush.bf16.msra.mxu0 %v586
        %794 = vmatpush.bf16.msra.mxu0 %v584
        %795 = vmatmul.bf16.gmra.mxu0 %v375
        %v796 = vpop.f32.mrf.mxu0
        %v797 = vadd.f32 0.0, %v796
        %v798 = vpop.f32.mrf.mxu0
        %v799 = vadd.f32 0.0, %v798
        %800 = vmatmul.bf16.gmra.mxu0 %v379
        %v801 = vpop.f32.mrf.mxu0
        %v802 = vadd.f32 0.0, %v801
        %v803 = vpop.f32.mrf.mxu0
        %v804 = vadd.f32 0.0, %v803
        %805 = vdwg.mxu0
        %806 = vmatpush.bf16.msra.mxu0 %v614
        %807 = vmatpush.bf16.msra.mxu0 %v612
        %808 = vmatpush.bf16.msra.mxu0 %v610
        %809 = vmatpush.bf16.msra.mxu0 %v608
        %810 = vmatpush.bf16.msra.mxu0 %v606
        %811 = vmatpush.bf16.msra.mxu0 %v604
        %812 = vmatpush.bf16.msra.mxu0 %v602
        %813 = vmatpush.bf16.msra.mxu0 %v600
        %814 = vmatmul.bf16.gmra.mxu0 %v376
        %v815 = vpop.f32.mrf.mxu0
        %v816 = vadd.f32 %v797, %v815
        %v817 = vpop.f32.mrf.mxu0
        %v818 = vadd.f32 %v799, %v817
        %819 = vmatmul.bf16.gmra.mxu0 %v380
        %v820 = vpop.f32.mrf.mxu0
        %v821 = vadd.f32 %v802, %v820
        %v822 = vpop.f32.mrf.mxu0
        %v823 = vadd.f32 %v804, %v822
        %824 = vdwg.mxu0
        %825 = vmatpush.bf16.msra.mxu0 %v630
        %826 = vmatpush.bf16.msra.mxu0 %v628
        %827 = vmatpush.bf16.msra.mxu0 %v626
        %828 = vmatpush.bf16.msra.mxu0 %v624
        %829 = vmatpush.bf16.msra.mxu0 %v622
        %830 = vmatpush.bf16.msra.mxu0 %v620
        %831 = vmatpush.bf16.msra.mxu0 %v618
        %832 = vmatpush.bf16.msra.mxu0 %v616
        %833 = vmatmul.bf16.gmra.mxu0 %v377
        %v834 = vpop.f32.mrf.mxu0
        %v835 = vadd.f32 %v816, %v834
        %v836 = vpop.f32.mrf.mxu0
        %v837 = vadd.f32 %v818, %v836
        %838 = vmatmul.bf16.gmra.mxu0 %v381
        %v839 = vpop.f32.mrf.mxu0
        %v840 = vadd.f32 %v821, %v839
        %v841 = vpop.f32.mrf.mxu0
        %v842 = vadd.f32 %v823, %v841
        %843 = vdwg.mxu0
        %844 = vmatpush.bf16.msra.mxu0 %v646
        %845 = vmatpush.bf16.msra.mxu0 %v644
        %846 = vmatpush.bf16.msra.mxu0 %v642
        %847 = vmatpush.bf16.msra.mxu0 %v640
        %848 = vmatpush.bf16.msra.mxu0 %v638
        %849 = vmatpush.bf16.msra.mxu0 %v636
        %850 = vmatpush.bf16.msra.mxu0 %v634
        %851 = vmatpush.bf16.msra.mxu0 %v632
        %852 = vmatmul.bf16.gmra.mxu0 %v378
        %v853 = vpop.f32.mrf.mxu0
        %v854 = vadd.f32 %v835, %v853
        %v855 = vpop.f32.mrf.mxu0
        %v856 = vadd.f32 %v837, %v855
        %857 = vmatmul.bf16.gmra.mxu0 %v382
        %v858 = vpop.f32.mrf.mxu0
        %v859 = vadd.f32 %v840, %v858
        %v860 = vpop.f32.mrf.mxu0
        %v861 = vadd.f32 %v842, %v860
        %862 = vdwg.mxu0
        %v863 = vadd.f32 %v271, %v778
        %v864 = vadd.f32 %v272, %v854
        %v865 = vadd.f32 %v273, %v780
        %v866 = vadd.f32 %v274, %v856
        %v867 = vadd.f32 %v275, %v783
        %v868 = vadd.f32 %v276, %v859
        %v869 = vadd.f32 %v277, %v785
        %v870 = vadd.f32 %v278, %v861
        %871 = vst [vmem:[#allocation2] sm:$0xff] %v863
        %872 = vst [vmem:[#allocation2 + $0x8] sm:$0xff] %v864
        %873 = vst [vmem:[#allocation2 + $0x10] sm:$0xff] %v865
        %874 = vst [vmem:[#allocation2 + $0x18] sm:$0xff] %v866
        %875 = vst [vmem:[#allocation2 + $0x20] sm:$0xff] %v867
        %876 = vst [vmem:[#allocation2 + $0x28] sm:$0xff] %v868
        %877 = vst [vmem:[#allocation2 + $0x30] sm:$0xff] %v869
        %878 = vst [vmem:[#allocation2 + $0x38] sm:$0xff] %v870
        %p879 = scmp.eq.s32.totalorder %s20, 3
        // Predicated region
        $region56: #{discriminator_forward.11} parent=46 // pred_check
          %p880 = pneg %p879
        $region57: #{discriminator_forward.11} parent=46 // pred_check_branch
          %882 = sbr.rel (%p880) target = $region59
        $region58: #{discriminator_forward.11} parent=46 // pred_region
          %v883 = vld [vmem:[#allocation2] sm:$0xff]
          %v884 = vld [vmem:[#allocation2 + $0x8] sm:$0xff]
          %v885 = vld [vmem:[#allocation2 + $0x10] sm:$0xff]
          %v886 = vld [vmem:[#allocation2 + $0x18] sm:$0xff]
          %v887 = vld [vmem:[#allocation2 + $0x20] sm:$0xff]
          %v888 = vld [vmem:[#allocation2 + $0x28] sm:$0xff]
          %v889 = vld [vmem:[#allocation2 + $0x30] sm:$0xff]
          %v890 = vld [vmem:[#allocation2 + $0x38] sm:$0xff]
          %891 = vst [vmem:[%s256] sm:$0xff] %v883
          %892 = vst [vmem:[%s256 + $0x8] sm:$0xff] %v884
          %893 = vst [vmem:[%s256 + $0x10] sm:$0xff] %v885
          %894 = vst [vmem:[%s256 + $0x18] sm:$0xff] %v886
          %895 = vst [vmem:[%s256 + $0x20] sm:$0xff] %v887
          %896 = vst [vmem:[%s256 + $0x28] sm:$0xff] %v888
          %897 = vst [vmem:[%s256 + $0x30] sm:$0xff] %v889
          %898 = vst [vmem:[%s256 + $0x38] sm:$0xff] %v890
        $region59: #{discriminator_forward.11} parent=46 // pred_fallthru
          _
        %s899 = smul.u32 4, %s18
        %s900 = smul.u32 2, %s19
        %p901 = scmp.lt.s32.totalorder %s899, 3
        %s902 = scalar_select %p901, %s899, 3
        %p903 = scmp.lt.s32.totalorder %s900, 1
        %s904 = scalar_select %p903, %s900, 1
        %s905 = smul.addr %s902, 2
        %s906 = sadd.s32 %s904, %s905
        %s907 = smul.addr %s906, 8
        %s908 = scalar_lea.vmem %s2, %s907
        // Predicated region
        $region60: #{discriminator_forward.11} parent=46 // pred_check
          %p909 = pneg %p108
        $region61: #{discriminator_forward.11} parent=46 // pred_check_branch
          %911 = sbr.rel (%p909) target = $region63
        $region62: #{discriminator_forward.11} parent=46 // pred_region
          %s912 = smul.u32 4, %s18
          %s913 = smul.u32 2, %s19
        $region63: #{discriminator_forward.11} parent=46 // pred_fallthru
          _
        // Predicated region
        $region64: #{discriminator_forward.11} parent=46 // pred_check
          %p914 = pneg %p108
        $region65: #{discriminator_forward.11} parent=46 // pred_check_branch
          %916 = sbr.rel (%p914) target = $region67
        $region66: #{discriminator_forward.11} parent=46 // pred_region
          %s917 = smul.u32 4, %s18
          %s918 = smul.u32 2, %s19
          %p919 = scmp.lt.s32.totalorder %s917, 3
          %s920 = scalar_select %p919, %s917, 3
          %p921 = scmp.lt.s32.totalorder %s918, 1
          %s922 = scalar_select %p921, %s918, 1
          %s923 = smul.addr %s920, 2
          %s924 = sadd.s32 %s922, %s923
          %s925 = smul.addr %s924, 8
          %s926 = scalar_lea.vmem %s2, %s925
        $region67: #{discriminator_forward.11} parent=46 // pred_fallthru
          _
      $region47: #{discriminator_forward.11} parent=5 // pred_fallthru
        _
      %p927 = scmp.le.s32.totalorder 2, %s8
      // Predicated region
      $region68: #{discriminator_forward.11} parent=5 // pred_check
        %p928 = pneg %p927
      $region69: #{discriminator_forward.11} parent=5 // pred_check_branch
        %930 = sbr.rel (%p928) target = $region71
      $region70: #{discriminator_forward.11} parent=5 // pred_region
        %s931 = ssub.s32 %s8, 2
      $region71: #{discriminator_forward.11} parent=5 // pred_fallthru
        _
    $region6: #{discriminator_forward.11} parent=1 // loop_footer
      %s12 = sadd.s32 1, %s8
    $region7: #{discriminator_forward.11} parent=1 // loop_footer_branch
      %7 = sbr.rel target = $region3
    $region8: #{discriminator_forward.11} parent=1 // loop_exit
      _

// kernel: discriminator_forward.14
$region0: #{discriminator_forward.14}
  #allocation0 [shape = 'u32[]', space=smem, size = 0x4, offset = 0x4, fixed_abs, tag = 'smem constant byte address 0x4 - core index']
  #allocation1 [shape = 'u32[72,128]{1,0:T(1,128)}', space=vmem, size = 0x9000, scoped, tag = 'internal scratch']
  %s0 = inlined_call_operand.vmem [shape: f32[2,9,512], index: 0, kind: input, shape index: {}]
  %s1 = inlined_call_operand.vmem [shape: f32[2,9,512], index: 1, kind: output, shape index: {}]
  %s2 = sld [smem:[#allocation0]]
  $region109: #{discriminator_forward.14} parent=0
    _
  %s4 = ssub.s32 1, %s2
  %s5 = scalar_select 0, %s4, %s2
  $region1: #{discriminator_forward.14} parent=0
    #allocation2 [shape = 'u8[16384]{0}', space=vmem, size = 0x4000, scoped, tag = 'input window, operand 0']
    #allocation3 [shape = 'u8[16384]{0}', space=vmem, size = 0x4000, scoped, tag = 'output window, operand 0']
    loop: start=0, step=1, limit=10
    $region2: #{discriminator_forward.14} parent=1 // loop_pre_header
      _
    $region3: #{discriminator_forward.14} parent=1 // loop_header
      %s7 = sphi 0, %s11
      %p8 = scmp.ge.s32.totalorder %s7, 10
      %s14 = sphi 0, %s26
      %s15 = sphi 0, %s22
      %s16 = sphi 0, %s14
      %s17 = sphi 0, %s15
      %s18 = sphi 0, %s16
      %s19 = sphi 0, %s17
      %s31 = sphi 0, %s33
      %s34 = sphi 0, %s31
      %s35 = sphi 0, %s34
      %s51 = sphi 0, %s35
      %s59 = sphi 0, %s61
      %s62 = sphi 0, %s59
      %s63 = sphi 0, %s62
      %s79 = sphi 0, %s63
    $region4: #{discriminator_forward.14} parent=1 // loop_header_branch
      %10 = sbr.rel (%p8) target = $region8
    $region5: #{discriminator_forward.14} parent=1 // loop_body
      %s12 = ssub.s32 %s7, 1
      %s13 = ssub.s32 %s7, 2
      %s20 = sadd.s32 1, %s15
      %p21 = scmp.ge.s32.totalorder %s20, 4
      %s22 = scalar_select %p21, 0, %s20
      %s23 = sadd.s32 1, %s14
      %s24 = scalar_select %p21, %s23, %s14
      %p25 = scmp.ge.s32.totalorder %s24, 2
      %s26 = scalar_select %p25, 0, %s24
      %s27 = ssub.s32 %s14, %s26
      %s28 = ssub.s32 %s15, %s22
      %s29 = sor.u32 %s27, %s28
      %p30 = scmp.eq.s32.totalorder %s29, 0
      %s32 = sadd.s32 %s31, 1
      %s33 = scalar_select %p30, %s31, %s32
      %p36 = pneg %p30
      %p37 = scmp.eq.s32.totalorder %s7, 7
      %p38 = por %p36, %p37
      %p39 = scmp.ne.s32.totalorder %s31, %s34
      %p40 = scmp.eq.s32.totalorder %s7, 0
      %p41 = por %p39, %p40
      %p42 = scmp.ne.s32.totalorder %s31, %s34
      %p43 = scmp.eq.s32.totalorder %s12, 7
      %p44 = por %p42, %p43
      %p45 = scmp.ne.s32.totalorder %s34, %s35
      %p46 = scmp.eq.s32.totalorder %s12, 0
      %p47 = por %p45, %p46
      %p48 = scmp.ne.s32.totalorder %s34, %s35
      %p49 = scmp.eq.s32.totalorder %s13, 7
      %p50 = por %p48, %p49
      %p52 = scmp.ne.s32.totalorder %s35, %s51
      %p53 = scmp.eq.s32.totalorder %s13, 0
      %p54 = por %p52, %p53
      %s55 = ssub.s32 %s14, %s26
      %s56 = ssub.s32 %s15, %s22
      %s57 = sor.u32 %s55, %s56
      %p58 = scmp.eq.s32.totalorder %s57, 0
      %s60 = sadd.s32 %s59, 1
      %s61 = scalar_select %p58, %s59, %s60
      %p64 = pneg %p58
      %p65 = scmp.eq.s32.totalorder %s7, 7
      %p66 = por %p64, %p65
      %p67 = scmp.ne.s32.totalorder %s59, %s62
      %p68 = scmp.eq.s32.totalorder %s7, 0
      %p69 = por %p67, %p68
      %p70 = scmp.ne.s32.totalorder %s59, %s62
      %p71 = scmp.eq.s32.totalorder %s12, 7
      %p72 = por %p70, %p71
      %p73 = scmp.ne.s32.totalorder %s62, %s63
      %p74 = scmp.eq.s32.totalorder %s12, 0
      %p75 = por %p73, %p74
      %p76 = scmp.ne.s32.totalorder %s62, %s63
      %p77 = scmp.eq.s32.totalorder %s13, 7
      %p78 = por %p76, %p77
      %p80 = scmp.ne.s32.totalorder %s63, %s79
      %p81 = scmp.eq.s32.totalorder %s13, 0
      %p82 = por %p80, %p81
      %p83 = scmp.le.s32.totalorder 1, %s7
      %p84 = scmp.lt.s32.totalorder %s7, 9
      %p85 = pnand %p83, %p84
      %p86 = pneg %p85
      // Predicated region
      $region9: #{discriminator_forward.14} parent=5 // pred_check
        _
      $region10: #{discriminator_forward.14} parent=5 // pred_check_branch
        %88 = sbr.rel (%p85) target = $region12
      $region11: #{discriminator_forward.14} parent=5 // pred_region
        %s89 = ssub.s32 %s7, 1
      $region12: #{discriminator_forward.14} parent=5 // pred_fallthru
        _
      %p90 = scmp.lt.s32.totalorder %s7, 8
      // Predicated region
      $region13: #{discriminator_forward.14} parent=5 // pred_check
        %p91 = pneg %p90
      $region14: #{discriminator_forward.14} parent=5 // pred_check_branch
        %93 = sbr.rel (%p91) target = $region16
      $region15: #{discriminator_forward.14} parent=5 // pred_region
        // Predicated region
        $region17: #{discriminator_forward.14} parent=15 // pred_check
          %p94 = pneg %p41
        $region18: #{discriminator_forward.14} parent=15 // pred_check_branch
          %96 = sbr.rel (%p94) target = $region20
        $region19: #{discriminator_forward.14} parent=15 // pred_region
          %s97 = sand.u32 %s31, 1
          %s98 = sand.u32 %s31, 1
          %s99 = smul.addr %s98, 16
          %s100 = scalar_lea.vmem [#allocation2], %s99
          %s101 = smul.addr %s14, 8
          %s102 = sadd.s32 %s15, %s101
          %s103 = smul.addr %s102, 8
          %s104 = scalar_lea.vmem %s0, %s103
          // Predicated region
          $region21: #{discriminator_forward.14} parent=19 // pred_check
            _
          $region22: #{discriminator_forward.14} parent=19 // pred_check_branch
            %106 = sbr.rel (0) target = $region24
          $region23: #{discriminator_forward.14} parent=19 // pred_region
            // Predicated region
            $region25: #{discriminator_forward.14} parent=23 // pred_check
              _
            $region26: #{discriminator_forward.14} parent=23 // pred_check_branch
              %108 = sbr.rel (0) target = $region28
            $region27: #{discriminator_forward.14} parent=23 // pred_region
              // Predicated region
              $region40: #{discriminator_forward.14} parent=27 // pred_check
                _
              $region41: #{discriminator_forward.14} parent=27 // pred_check_branch
                %126 = sbr.rel (0) target = $region43
              $region42: #{discriminator_forward.14} parent=27 // pred_region
                loop: start=0, step=1, limit=1
                $region44: #{discriminator_forward.14} parent=42 // loop_pre_header
                  _
                $region45: #{discriminator_forward.14} parent=42 // loop_header
                  %s128 = sphi 0, %s132
                  %p129 = scmp.ge.s32.totalorder %s128, 1
                  %s133 = sphi %s104, %s104
                  %s134 = sphi %s100, %s100
                $region46: #{discriminator_forward.14} parent=42 // loop_header_branch
                  %131 = sbr.rel (%p129) target = $region50
                $region47: #{discriminator_forward.14} parent=42 // loop_body
                  %v135 = vld [vmem:[%s133] sm:$0xff]
                  %136 = vst [vmem:[%s134] sm:$0xff] %v135
                  %v137 = vld [vmem:[%s133 + $0x20] sm:$0xff]
                  %138 = vst [vmem:[%s134 + $0x8] sm:$0xff] %v137
                $region48: #{discriminator_forward.14} parent=42 // loop_footer
                  %s132 = sadd.s32 1, %s128
                $region49: #{discriminator_forward.14} parent=42 // loop_footer_branch
                  %127 = sbr.rel target = $region45
                $region50: #{discriminator_forward.14} parent=42 // loop_exit
                  _
              $region43: #{discriminator_forward.14} parent=27 // pred_fallthru
                _
              // Predicated region
              $region51: #{discriminator_forward.14} parent=27 // pred_check
                _
              $region52: #{discriminator_forward.14} parent=27 // pred_check_branch
                %140 = sbr.rel target = $region54
              $region53: #{discriminator_forward.14} parent=27 // pred_region
                _
              $region54: #{discriminator_forward.14} parent=27 // pred_fallthru
                _
            $region28: #{discriminator_forward.14} parent=23 // pred_fallthru
              _
            // Predicated region
            $region29: #{discriminator_forward.14} parent=23 // pred_check
              _
            $region30: #{discriminator_forward.14} parent=23 // pred_check_branch
              %110 = sbr.rel target = $region32
            $region31: #{discriminator_forward.14} parent=23 // pred_region
              %s112 = ssub.s32 256, 1
              loop: start=0, step=1, limit=1
              $region33: #{discriminator_forward.14} parent=31 // loop_pre_header
                _
              $region34: #{discriminator_forward.14} parent=31 // loop_header
                %s114 = sphi 0, %s118
                %p115 = scmp.ge.s32.totalorder %s114, 1
                %s119 = sphi %s104, %s104
                %s120 = sphi %s100, %s100
              $region35: #{discriminator_forward.14} parent=31 // loop_header_branch
                %117 = sbr.rel (%p115) target = $region39
              $region36: #{discriminator_forward.14} parent=31 // loop_body
                %v121 = vld [vmem:[%s119] sm:%s112]
                %122 = vst [vmem:[%s120] sm:%s112] %v121
                %v123 = vld [vmem:[%s119 + $0x20] sm:%s112]
                %124 = vst [vmem:[%s120 + $0x8] sm:%s112] %v123
              $region37: #{discriminator_forward.14} parent=31 // loop_footer
                %s118 = sadd.s32 1, %s114
              $region38: #{discriminator_forward.14} parent=31 // loop_footer_branch
                %113 = sbr.rel target = $region34
              $region39: #{discriminator_forward.14} parent=31 // loop_exit
                _
            $region32: #{discriminator_forward.14} parent=23 // pred_fallthru
              _
          $region24: #{discriminator_forward.14} parent=19 // pred_fallthru
            _
          %141 = vnop
        $region20: #{discriminator_forward.14} parent=15 // pred_fallthru
          _
      $region16: #{discriminator_forward.14} parent=5 // pred_fallthru
        _
      %p142 = scmp.le.s32.totalorder 1, %s7
      %p143 = scmp.lt.s32.totalorder %s7, 9
      %p144 = pnand %p142, %p143
      %p145 = pneg %p144
      // Predicated region
      $region55: #{discriminator_forward.14} parent=5 // pred_check
        _
      $region56: #{discriminator_forward.14} parent=5 // pred_check_branch
        %147 = sbr.rel (%p144) target = $region58
      $region57: #{discriminator_forward.14} parent=5 // pred_region
        %s148 = ssub.s32 %s7, 1
        %s149 = sand.u32 %s34, 1
        %s150 = sand.u32 %s34, 1
        %s151 = smul.addr %s150, 16
        %s152 = scalar_lea.vmem [#allocation2], %s151
        // Predicated region
        $region59: #{discriminator_forward.14} parent=57 // pred_check
          %p153 = pneg %p47
        $region60: #{discriminator_forward.14} parent=57 // pred_check_branch
          %155 = sbr.rel (%p153) target = $region62
        $region61: #{discriminator_forward.14} parent=57 // pred_region
          _
        $region62: #{discriminator_forward.14} parent=57 // pred_fallthru
          _
        %s156 = sand.u32 %s34, 1
        %s157 = sand.u32 %s34, 1
        %s158 = smul.addr %s157, 16
        %s159 = scalar_lea.vmem [#allocation2], %s158
        %p160 = pneg %p47
        %p161 = pneg %p44
        %p162 = pneg %p75
        %p163 = pneg %p72
        %s164 = sand.u32 %s62, 1
        %s165 = sand.u32 %s62, 1
        %s166 = smul.addr %s165, 16
        %s167 = scalar_lea.vmem [#allocation3], %s166
        %v168 = vld [vmem:[%s152] sm:$0xff]
        %v169 = vld [vmem:[%s152 + $0x8] sm:$0x1]
        %vm170 = vcmask 1040384
        %v171 = vsel %vm170, %v169, 0.0
        %v172 = vadd.f32 %v168, %v171
        %v173 = vrot.slane %v172, 4
        %v174 = vadd.f32 %v172, %v173
        %v175 = vrot.slane %v174, 2
        %v176 = vadd.f32 %v174, %v175
        %v177 = vrot.slane %v176, 1
        %v178 = vadd.f32 %v176, %v177
        %v179 = vrcp.pop 9.0
        %v180 = vmul.f32 9.0, %v179
        %v181 = vsub.f32 1.0, %v180
        %v182 = vmul.f32 %v179, %v181
        %v183 = vadd.f32 %v179, %v182
        %vm184 = vweird.f32 %v179
        %v185 = vsel %vm184, %v179, %v183
        %v186 = vmul.f32 %v178, %v185
        %v187 = vsub.f32 %v168, %v186
        %v188 = vsub.f32 %v169, %v186
        %v189 = vmul.f32 %v187, %v187
        %v190 = vmul.f32 %v188, %v188
        %v191 = vsel %vm170, %v190, 0.0
        %v192 = vadd.f32 %v189, %v191
        %v193 = vrot.slane %v192, 4
        %v194 = vadd.f32 %v192, %v193
        %v195 = vrot.slane %v194, 2
        %v196 = vadd.f32 %v194, %v195
        %v197 = vrot.slane %v196, 1
        %v198 = vadd.f32 %v196, %v197
        %v199 = vmul.f32 %v198, %v185
        %v200 = vadd.f32 %v199, 1e-05
        %v201 = vrsqrt.pop %v200
        %v202 = vmul.f32 %v201, %v200
        %v203 = vmul.f32 %v202, %v201
        %v204 = vmul.f32 0.5, %v203
        %v205 = vsub.f32 1.5, %v204
        %v206 = vmul.f32 %v201, %v205
        %vm207 = vweird.f32 %v200
        %vm208 = vweird.f32 %v201
        %vm209 = vmor %vm207, %vm208
        %v210 = vsel %vm209, %v201, %v206
        %v211 = vmul.f32 %v187, %v210
        %v212 = vmul.f32 %v188, %v210
        %vm213 = vcmp.ge.f32.partialorder %v211, 0.0
        %vm214 = vcmp.ge.f32.partialorder %v212, 0.0
        %v215 = vmul.f32 %v211, 0.2
        %v216 = vmul.f32 %v212, 0.2
        %v217 = vsel %vm213, %v211, %v215
        %v218 = vsel %vm214, %v212, %v216
        %219 = vst [vmem:[%s167] sm:$0xff] %v217
        %220 = vst [vmem:[%s167 + $0x8] sm:$0x1] %v218
        %s221 = sand.u32 %s62, 1
        %s222 = sand.u32 %s62, 1
        %s223 = smul.addr %s222, 16
        %s224 = scalar_lea.vmem [#allocation3], %s223
        // Predicated region
        $region63: #{discriminator_forward.14} parent=57 // pred_check
          %p225 = pneg %p72
        $region64: #{discriminator_forward.14} parent=57 // pred_check_branch
          %227 = sbr.rel (%p225) target = $region66
        $region65: #{discriminator_forward.14} parent=57 // pred_region
          %s228 = smul.addr %s16, 8
          %s229 = sadd.s32 %s17, %s228
          %s230 = smul.addr %s229, 8
          %s231 = scalar_lea.vmem %s1, %s230
          // Predicated region
          $region67: #{discriminator_forward.14} parent=65 // pred_check
            _
          $region68: #{discriminator_forward.14} parent=65 // pred_check_branch
            %233 = sbr.rel (0) target = $region70
          $region69: #{discriminator_forward.14} parent=65 // pred_region
            // Predicated region
            $region71: #{discriminator_forward.14} parent=69 // pred_check
              _
            $region72: #{discriminator_forward.14} parent=69 // pred_check_branch
              %235 = sbr.rel (0) target = $region74
            $region73: #{discriminator_forward.14} parent=69 // pred_region
              // Predicated region
              $region86: #{discriminator_forward.14} parent=73 // pred_check
                _
              $region87: #{discriminator_forward.14} parent=73 // pred_check_branch
                %253 = sbr.rel (0) target = $region89
              $region88: #{discriminator_forward.14} parent=73 // pred_region
                loop: start=0, step=1, limit=1
                $region90: #{discriminator_forward.14} parent=88 // loop_pre_header
                  _
                $region91: #{discriminator_forward.14} parent=88 // loop_header
                  %s255 = sphi 0, %s259
                  %p256 = scmp.ge.s32.totalorder %s255, 1
                  %s260 = sphi %s224, %s224
                  %s261 = sphi %s231, %s231
                $region92: #{discriminator_forward.14} parent=88 // loop_header_branch
                  %258 = sbr.rel (%p256) target = $region96
                $region93: #{discriminator_forward.14} parent=88 // loop_body
                  %v262 = vld [vmem:[%s260] sm:$0xff]
                  %263 = vst [vmem:[%s261] sm:$0xff] %v262
                  %v264 = vld [vmem:[%s260 + $0x8] sm:$0xff]
                  %265 = vst [vmem:[%s261 + $0x20] sm:$0xff] %v264
                $region94: #{discriminator_forward.14} parent=88 // loop_footer
                  %s259 = sadd.s32 1, %s255
                $region95: #{discriminator_forward.14} parent=88 // loop_footer_branch
                  %254 = sbr.rel target = $region91
                $region96: #{discriminator_forward.14} parent=88 // loop_exit
                  _
              $region89: #{discriminator_forward.14} parent=73 // pred_fallthru
                _
              // Predicated region
              $region97: #{discriminator_forward.14} parent=73 // pred_check
                _
              $region98: #{discriminator_forward.14} parent=73 // pred_check_branch
                %267 = sbr.rel target = $region100
              $region99: #{discriminator_forward.14} parent=73 // pred_region
                _
              $region100: #{discriminator_forward.14} parent=73 // pred_fallthru
                _
            $region74: #{discriminator_forward.14} parent=69 // pred_fallthru
              _
            // Predicated region
            $region75: #{discriminator_forward.14} parent=69 // pred_check
              _
            $region76: #{discriminator_forward.14} parent=69 // pred_check_branch
              %237 = sbr.rel target = $region78
            $region77: #{discriminator_forward.14} parent=69 // pred_region
              %s239 = ssub.s32 256, 1
              loop: start=0, step=1, limit=1
              $region79: #{discriminator_forward.14} parent=77 // loop_pre_header
                _
              $region80: #{discriminator_forward.14} parent=77 // loop_header
                %s241 = sphi 0, %s245
                %p242 = scmp.ge.s32.totalorder %s241, 1
                %s246 = sphi %s224, %s224
                %s247 = sphi %s231, %s231
              $region81: #{discriminator_forward.14} parent=77 // loop_header_branch
                %244 = sbr.rel (%p242) target = $region85
              $region82: #{discriminator_forward.14} parent=77 // loop_body
                %v248 = vld [vmem:[%s246] sm:%s239]
                %249 = vst [vmem:[%s247] sm:%s239] %v248
                %v250 = vld [vmem:[%s246 + $0x8] sm:%s239]
                %251 = vst [vmem:[%s247 + $0x20] sm:%s239] %v250
              $region83: #{discriminator_forward.14} parent=77 // loop_footer
                %s245 = sadd.s32 1, %s241
              $region84: #{discriminator_forward.14} parent=77 // loop_footer_branch
                %240 = sbr.rel target = $region80
              $region85: #{discriminator_forward.14} parent=77 // loop_exit
                _
            $region78: #{discriminator_forward.14} parent=69 // pred_fallthru
              _
          $region70: #{discriminator_forward.14} parent=65 // pred_fallthru
            _
          %268 = vnop
        $region66: #{discriminator_forward.14} parent=57 // pred_fallthru
          _
      $region58: #{discriminator_forward.14} parent=5 // pred_fallthru
        _
      %p269 = scmp.le.s32.totalorder 2, %s7
      // Predicated region
      $region101: #{discriminator_forward.14} parent=5 // pred_check
        %p270 = pneg %p269
      $region102: #{discriminator_forward.14} parent=5 // pred_check_branch
        %272 = sbr.rel (%p270) target = $region104
      $region103: #{discriminator_forward.14} parent=5 // pred_region
        %s273 = ssub.s32 %s7, 2
        // Predicated region
        $region105: #{discriminator_forward.14} parent=103 // pred_check
          %p274 = pneg %p78
        $region106: #{discriminator_forward.14} parent=103 // pred_check_branch
          %276 = sbr.rel (%p274) target = $region108
        $region107: #{discriminator_forward.14} parent=103 // pred_region
          %s277 = sand.u32 %s63, 1
          %s278 = sand.u32 %s63, 1
          %s279 = smul.addr %s278, 16
          %s280 = scalar_lea.vmem [#allocation3], %s279
        $region108: #{discriminator_forward.14} parent=103 // pred_fallthru
          _
      $region104: #{discriminator_forward.14} parent=5 // pred_fallthru
        _
    $region6: #{discriminator_forward.14} parent=1 // loop_footer
      %s11 = sadd.s32 1, %s7
    $region7: #{discriminator_forward.14} parent=1 // loop_footer_branch
      %6 = sbr.rel target = $region3
    $region8: #{discriminator_forward.14} parent=1 // loop_exit
      _

// kernel: discriminator_forward.13
$region0: #{discriminator_forward.13}
  #allocation0 [shape = 'u32[]', space=smem, size = 0x4, offset = 0x4, fixed_abs, tag = 'smem constant byte address 0x4 - core index']
  #allocation1 [shape = 'u32[72,128]{1,0:T(1,128)}', space=vmem, size = 0x9000, scoped, tag = 'internal scratch']
  #allocation2 [shape = 'f32[24,256]{1,0:T(8,128)}', space=vmem, size = 0x6000, scoped, tag = 'scratch operand']
  %s0 = inlined_call_operand.vmem [shape: bf16[24,4096], index: 0, kind: input, shape index: {}]
  %s1 = inlined_call_operand.vmem [shape: bf16[4096,512], index: 1, kind: input, shape index: {}]
  %s2 = inlined_call_operand.vmem [shape: f32[24,512], index: 2, kind: output, shape index: {}]
  %s3 = sld [smem:[#allocation0]]
  $region129: #{discriminator_forward.13} parent=0
    _
  %s5 = ssub.s32 1, %s3
  %s6 = scalar_select 0, %s5, %s3
  $region1: #{discriminator_forward.13} parent=0
    #allocation3 [shape = 'u8[49152]{0}', space=vmem, size = 0xc000, scoped, tag = 'input window, operand 0']
    #allocation4 [shape = 'u8[524288]{0}', space=vmem, size = 0x80000, scoped, tag = 'input window, operand 1']
    #allocation5 [shape = 'u8[49152]{0}', space=vmem, size = 0xc000, scoped, tag = 'output window, operand 0']
    loop: start=0, step=1, limit=18
    $region2: #{discriminator_forward.13} parent=1 // loop_pre_header
      _
    $region3: #{discriminator_forward.13} parent=1 // loop_header
      %s8 = sphi 0, %s12
      %p9 = scmp.ge.s32.totalorder %s8, 18
      %s15 = sphi 0, %s34
      %s16 = sphi 0, %s30
      %s17 = sphi 0, %s26
      %s18 = sphi 0, %s15
      %s19 = sphi 0, %s16
      %s20 = sphi 0, %s17
      %s21 = sphi 0, %s18
      %s22 = sphi 0, %s19
      %s23 = sphi 0, %s20
      %s39 = sphi 0, %s41
      %s42 = sphi 0, %s39
      %s43 = sphi 0, %s42
      %s59 = sphi 0, %s43
      %s67 = sphi 0, %s69
      %s70 = sphi 0, %s67
      %s71 = sphi 0, %s70
      %s87 = sphi 0, %s71
      %s95 = sphi 0, %s97
      %s98 = sphi 0, %s95
      %s99 = sphi 0, %s98
      %s115 = sphi 0, %s99
    $region4: #{discriminator_forward.13} parent=1 // loop_header_branch
      %11 = sbr.rel (%p9) target = $region8
    $region5: #{discriminator_forward.13} parent=1 // loop_body
      %s13 = ssub.s32 %s8, 1
      %s14 = ssub.s32 %s8, 2
      %s24 = sadd.s32 1, %s17
      %p25 = scmp.ge.s32.totalorder %s24, 8
      %s26 = scalar_select %p25, 0, %s24
      %s27 = sadd.s32 1, %s16
      %s28 = scalar_select %p25, %s27, %s16
      %p29 = scmp.ge.s32.totalorder %s28, 2
      %s30 = scalar_select %p29, 0, %s28
      %s31 = sadd.s32 1, %s15
      %s32 = scalar_select %p29, %s31, %s15
      %p33 = scmp.ge.s32.totalorder %s32, 1
      %s34 = scalar_select %p33, 0, %s32
      %s35 = ssub.s32 %s15, %s34
      %s36 = ssub.s32 %s17, %s26
      %s37 = sor.u32 %s35, %s36
      %p38 = scmp.eq.s32.totalorder %s37, 0
      %s40 = sadd.s32 %s39, 1
      %s41 = scalar_select %p38, %s39, %s40
      %p44 = pneg %p38
      %p45 = scmp.eq.s32.totalorder %s8, 15
      %p46 = por %p44, %p45
      %p47 = scmp.ne.s32.totalorder %s39, %s42
      %p48 = scmp.eq.s32.totalorder %s8, 0
      %p49 = por %p47, %p48
      %p50 = scmp.ne.s32.totalorder %s39, %s42
      %p51 = scmp.eq.s32.totalorder %s13, 15
      %p52 = por %p50, %p51
      %p53 = scmp.ne.s32.totalorder %s42, %s43
      %p54 = scmp.eq.s32.totalorder %s13, 0
      %p55 = por %p53, %p54
      %p56 = scmp.ne.s32.totalorder %s42, %s43
      %p57 = scmp.eq.s32.totalorder %s14, 15
      %p58 = por %p56, %p57
      %p60 = scmp.ne.s32.totalorder %s43, %s59
      %p61 = scmp.eq.s32.totalorder %s14, 0
      %p62 = por %p60, %p61
      %s63 = ssub.s32 %s17, %s26
      %s64 = ssub.s32 %s16, %s30
      %s65 = sor.u32 %s63, %s64
      %p66 = scmp.eq.s32.totalorder %s65, 0
      %s68 = sadd.s32 %s67, 1
      %s69 = scalar_select %p66, %s67, %s68
      %p72 = pneg %p66
      %p73 = scmp.eq.s32.totalorder %s8, 15
      %p74 = por %p72, %p73
      %p75 = scmp.ne.s32.totalorder %s67, %s70
      %p76 = scmp.eq.s32.totalorder %s8, 0
      %p77 = por %p75, %p76
      %p78 = scmp.ne.s32.totalorder %s67, %s70
      %p79 = scmp.eq.s32.totalorder %s13, 15
      %p80 = por %p78, %p79
      %p81 = scmp.ne.s32.totalorder %s70, %s71
      %p82 = scmp.eq.s32.totalorder %s13, 0
      %p83 = por %p81, %p82
      %p84 = scmp.ne.s32.totalorder %s70, %s71
      %p85 = scmp.eq.s32.totalorder %s14, 15
      %p86 = por %p84, %p85
      %p88 = scmp.ne.s32.totalorder %s71, %s87
      %p89 = scmp.eq.s32.totalorder %s14, 0
      %p90 = por %p88, %p89
      %s91 = ssub.s32 %s15, %s34
      %s92 = ssub.s32 %s16, %s30
      %s93 = sor.u32 %s91, %s92
      %p94 = scmp.eq.s32.totalorder %s93, 0
      %s96 = sadd.s32 %s95, 1
      %s97 = scalar_select %p94, %s95, %s96
      %p100 = pneg %p94
      %p101 = scmp.eq.s32.totalorder %s8, 15
      %p102 = por %p100, %p101
      %p103 = scmp.ne.s32.totalorder %s95, %s98
      %p104 = scmp.eq.s32.totalorder %s8, 0
      %p105 = por %p103, %p104
      %p106 = scmp.ne.s32.totalorder %s95, %s98
      %p107 = scmp.eq.s32.totalorder %s13, 15
      %p108 = por %p106, %p107
      %p109 = scmp.ne.s32.totalorder %s98, %s99
      %p110 = scmp.eq.s32.totalorder %s13, 0
      %p111 = por %p109, %p110
      %p112 = scmp.ne.s32.totalorder %s98, %s99
      %p113 = scmp.eq.s32.totalorder %s14, 15
      %p114 = por %p112, %p113
      %p116 = scmp.ne.s32.totalorder %s99, %s115
      %p117 = scmp.eq.s32.totalorder %s14, 0
      %p118 = por %p116, %p117
      %p119 = scmp.le.s32.totalorder 1, %s8
      %p120 = scmp.lt.s32.totalorder %s8, 17
      %p121 = pnand %p119, %p120
      %p122 = pneg %p121
      // Predicated region
      $region9: #{discriminator_forward.13} parent=5 // pred_check
        _
      $region10: #{discriminator_forward.13} parent=5 // pred_check_branch
        %124 = sbr.rel (%p121) target = $region12
      $region11: #{discriminator_forward.13} parent=5 // pred_region
        %s125 = ssub.s32 %s8, 1
      $region12: #{discriminator_forward.13} parent=5 // pred_fallthru
        _
      %p126 = scmp.lt.s32.totalorder %s8, 16
      // Predicated region
      $region13: #{discriminator_forward.13} parent=5 // pred_check
        %p127 = pneg %p126
      $region14: #{discriminator_forward.13} parent=5 // pred_check_branch
        %129 = sbr.rel (%p127) target = $region16
      $region15: #{discriminator_forward.13} parent=5 // pred_region
        // Predicated region
        $region17: #{discriminator_forward.13} parent=15 // pred_check
          %p130 = pneg %p49
        $region18: #{discriminator_forward.13} parent=15 // pred_check_branch
          %132 = sbr.rel (%p130) target = $region20
        $region19: #{discriminator_forward.13} parent=15 // pred_region
          %s133 = sand.u32 %s39, 1
          %s134 = sand.u32 %s39, 1
          %s135 = smul.addr %s134, 48
          %s136 = scalar_lea.vmem [#allocation3], %s135
          %s137 = smul.u32 3, %s15
          %s138 = smul.u32 4, %s17
          %s139 = smul.addr %s137, 32
          %s140 = sadd.s32 %s138, %s139
          %s141 = smul.addr %s140, 4
          %s142 = scalar_lea.vmem %s0, %s141
          // Predicated region
          $region21: #{discriminator_forward.13} parent=19 // pred_check
            _
          $region22: #{discriminator_forward.13} parent=19 // pred_check_branch
            %144 = sbr.rel (0) target = $region24
          $region23: #{discriminator_forward.13} parent=19 // pred_region
            // Predicated region
            $region25: #{discriminator_forward.13} parent=23 // pred_check
              _
            $region26: #{discriminator_forward.13} parent=23 // pred_check_branch
              %146 = sbr.rel (0) target = $region28
            $region27: #{discriminator_forward.13} parent=23 // pred_region
              loop: start=0, step=1, limit=1
              $region29: #{discriminator_forward.13} parent=27 // loop_pre_header
                _
              $region30: #{discriminator_forward.13} parent=27 // loop_header
                %s148 = sphi 0, %s152
                %p149 = scmp.ge.s32.totalorder %s148, 1
                %s153 = sphi %s142, %s142
                %s154 = sphi %s136, %s136
              $region31: #{discriminator_forward.13} parent=27 // loop_header_branch
                %151 = sbr.rel (%p149) target = $region35
              $region32: #{discriminator_forward.13} parent=27 // loop_body
                %v155 = vld [vmem:[%s153] sm:$0xff]
                %156 = vst [vmem:[%s154] sm:$0xff] %v155
                %v157 = vld [vmem:[%s153 + $0x8] sm:$0xff]
                %158 = vst [vmem:[%s154 + $0x8] sm:$0xff] %v157
                %v159 = vld [vmem:[%s153 + $0x80] sm:$0xff]
                %160 = vst [vmem:[%s154 + $0x10] sm:$0xff] %v159
                %v161 = vld [vmem:[%s153 + $0x88] sm:$0xff]
                %162 = vst [vmem:[%s154 + $0x18] sm:$0xff] %v161
                %v163 = vld [vmem:[%s153 + $0x100] sm:$0xff]
                %164 = vst [vmem:[%s154 + $0x20] sm:$0xff] %v163
                %v165 = vld [vmem:[%s153 + $0x108] sm:$0xff]
                %166 = vst [vmem:[%s154 + $0x28] sm:$0xff] %v165
              $region33: #{discriminator_forward.13} parent=27 // loop_footer
                %s152 = sadd.s32 1, %s148
              $region34: #{discriminator_forward.13} parent=27 // loop_footer_branch
                %147 = sbr.rel target = $region30
              $region35: #{discriminator_forward.13} parent=27 // loop_exit
                _
            $region28: #{discriminator_forward.13} parent=23 // pred_fallthru
              _
            // Predicated region
            $region36: #{discriminator_forward.13} parent=23 // pred_check
              _
            $region37: #{discriminator_forward.13} parent=23 // pred_check_branch
              %168 = sbr.rel target = $region39
            $region38: #{discriminator_forward.13} parent=23 // pred_region
              _
            $region39: #{discriminator_forward.13} parent=23 // pred_fallthru
              _
          $region24: #{discriminator_forward.13} parent=19 // pred_fallthru
            _
          %169 = vnop
        $region20: #{discriminator_forward.13} parent=15 // pred_fallthru
          _
        // Predicated region
        $region40: #{discriminator_forward.13} parent=15 // pred_check
          %p170 = pneg %p77
        $region41: #{discriminator_forward.13} parent=15 // pred_check_branch
          %172 = sbr.rel (%p170) target = $region43
        $region42: #{discriminator_forward.13} parent=15 // pred_region
          %s173 = sand.u32 %s67, 1
          %s174 = sand.u32 %s67, 1
          %s175 = smul.addr %s174, 512
          %s176 = scalar_lea.vmem [#allocation4], %s175
          %s177 = smul.u32 64, %s17
          %s178 = smul.u32 2, %s16
          %s179 = smul.addr %s177, 4
          %s180 = sadd.s32 %s178, %s179
          %s181 = smul.addr %s180, 4
          %s182 = scalar_lea.vmem %s1, %s181
          // Predicated region
          $region44: #{discriminator_forward.13} parent=42 // pred_check
            _
          $region45: #{discriminator_forward.13} parent=42 // pred_check_branch
            %184 = sbr.rel (0) target = $region47
          $region46: #{discriminator_forward.13} parent=42 // pred_region
            // Predicated region
            $region48: #{discriminator_forward.13} parent=46 // pred_check
              _
            $region49: #{discriminator_forward.13} parent=46 // pred_check_branch
              %186 = sbr.rel (0) target = $region51
            $region50: #{discriminator_forward.13} parent=46 // pred_region
              // Predicated region
              $region63: #{discriminator_forward.13} parent=50 // pred_check
                _
              $region64: #{discriminator_forward.13} parent=50 // pred_check_branch
                %328 = sbr.rel (0) target = $region66
              $region65: #{discriminator_forward.13} parent=50 // pred_region
                loop: start=0, step=1, limit=1
                $region67: #{discriminator_forward.13} parent=65 // loop_pre_header
                  _
                $region68: #{discriminator_forward.13} parent=65 // loop_header
                  %s330 = sphi 0, %s334
                  %p331 = scmp.ge.s32.totalorder %s330, 1
                  %s335 = sphi %s182, %s182
                  %s336 = sphi %s176, %s176
                $region69: #{discriminator_forward.13} parent=65 // loop_header_branch
                  %333 = sbr.rel (%p331) target = $region73
                $region70: #{discriminator_forward.13} parent=65 // loop_body
                  %v337 = vld [vmem:[%s335] sm:$0xff]
                  %338 = vst [vmem:[%s336] sm:$0xff] %v337
                  %v339 = vld [vmem:[%s335 + $0x10] sm:$0xff]
                  %340 = vst [vmem:[%s336 + $0x8] sm:$0xff] %v339
                  %v341 = vld [vmem:[%s335 + $0x20] sm:$0xff]
                  %342 = vst [vmem:[%s336 + $0x10] sm:$0xff] %v341
                  %v343 = vld [vmem:[%s335 + $0x30] sm:$0xff]
                  %344 = vst [vmem:[%s336 + $0x18] sm:$0xff] %v343
                  %v345 = vld [vmem:[%s335 + $0x40] sm:$0xff]
                  %346 = vst [vmem:[%s336 + $0x20] sm:$0xff] %v345
                  %v347 = vld [vmem:[%s335 + $0x50] sm:$0xff]
                  %348 = vst [vmem:[%s336 + $0x28] sm:$0xff] %v347
                  %v349 = vld [vmem:[%s335 + $0x60] sm:$0xff]
                  %350 = vst [vmem:[%s336 + $0x30] sm:$0xff] %v349
                  %v351 = vld [vmem:[%s335 + $0x70] sm:$0xff]
                  %352 = vst [vmem:[%s336 + $0x38] sm:$0xff] %v351
                  %v353 = vld [vmem:[%s335 + $0x80] sm:$0xff]
                  %354 = vst [vmem:[%s336 + $0x40] sm:$0xff] %v353
                  %v355 = vld [vmem:[%s335 + $0x90] sm:$0xff]
                  %356 = vst [vmem:[%s336 + $0x48] sm:$0xff] %v355
                  %v357 = vld [vmem:[%s335 + $0xa0] sm:$0xff]
                  %358 = vst [vmem:[%s336 + $0x50] sm:$0xff] %v357
                  %v359 = vld [vmem:[%s335 + $0xb0] sm:$0xff]
                  %360 = vst [vmem:[%s336 + $0x58] sm:$0xff] %v359
                  %v361 = vld [vmem:[%s335 + $0xc0] sm:$0xff]
                  %362 = vst [vmem:[%s336 + $0x60] sm:$0xff] %v361
                  %v363 = vld [vmem:[%s335 + $0xd0] sm:$0xff]
                  %364 = vst [vmem:[%s336 + $0x68] sm:$0xff] %v363
                  %v365 = vld [vmem:[%s335 + $0xe0] sm:$0xff]
                  %366 = vst [vmem:[%s336 + $0x70] sm:$0xff] %v365
                  %v367 = vld [vmem:[%s335 + $0xf0] sm:$0xff]
                  %368 = vst [vmem:[%s336 + $0x78] sm:$0xff] %v367
                  %v369 = vld [vmem:[%s335 + $0x100] sm:$0xff]
                  %370 = vst [vmem:[%s336 + $0x80] sm:$0xff] %v369
                  %v371 = vld [vmem:[%s335 + $0x110] sm:$0xff]
                  %372 = vst [vmem:[%s336 + $0x88] sm:$0xff] %v371
                  %v373 = vld [vmem:[%s335 + $0x120] sm:$0xff]
                  %374 = vst [vmem:[%s336 + $0x90] sm:$0xff] %v373
                  %v375 = vld [vmem:[%s335 + $0x130] sm:$0xff]
                  %376 = vst [vmem:[%s336 + $0x98] sm:$0xff] %v375
                  %v377 = vld [vmem:[%s335 + $0x140] sm:$0xff]
                  %378 = vst [vmem:[%s336 + $0xa0] sm:$0xff] %v377
                  %v379 = vld [vmem:[%s335 + $0x150] sm:$0xff]
                  %380 = vst [vmem:[%s336 + $0xa8] sm:$0xff] %v379
                  %v381 = vld [vmem:[%s335 + $0x160] sm:$0xff]
                  %382 = vst [vmem:[%s336 + $0xb0] sm:$0xff] %v381
                  %v383 = vld [vmem:[%s335 + $0x170] sm:$0xff]
                  %384 = vst [vmem:[%s336 + $0xb8] sm:$0xff] %v383
                  %v385 = vld [vmem:[%s335 + $0x180] sm:$0xff]
                  %386 = vst [vmem:[%s336 + $0xc0] sm:$0xff] %v385
                  %v387 = vld [vmem:[%s335 + $0x190] sm:$0xff]
                  %388 = vst [vmem:[%s336 + $0xc8] sm:$0xff] %v387
                  %v389 = vld [vmem:[%s335 + $0x1a0] sm:$0xff]
                  %390 = vst [vmem:[%s336 + $0xd0] sm:$0xff] %v389
                  %v391 = vld [vmem:[%s335 + $0x1b0] sm:$0xff]
                  %392 = vst [vmem:[%s336 + $0xd8] sm:$0xff] %v391
                  %v393 = vld [vmem:[%s335 + $0x1c0] sm:$0xff]
                  %394 = vst [vmem:[%s336 + $0xe0] sm:$0xff] %v393
                  %v395 = vld [vmem:[%s335 + $0x1d0] sm:$0xff]
                  %396 = vst [vmem:[%s336 + $0xe8] sm:$0xff] %v395
                  %v397 = vld [vmem:[%s335 + $0x1e0] sm:$0xff]
                  %398 = vst [vmem:[%s336 + $0xf0] sm:$0xff] %v397
                  %v399 = vld [vmem:[%s335 + $0x1f0] sm:$0xff]
                  %400 = vst [vmem:[%s336 + $0xf8] sm:$0xff] %v399
                  %v401 = vld [vmem:[%s335 + $0x200] sm:$0xff]
                  %402 = vst [vmem:[%s336 + $0x100] sm:$0xff] %v401
                  %v403 = vld [vmem:[%s335 + $0x210] sm:$0xff]
                  %404 = vst [vmem:[%s336 + $0x108] sm:$0xff] %v403
                  %v405 = vld [vmem:[%s335 + $0x220] sm:$0xff]
                  %406 = vst [vmem:[%s336 + $0x110] sm:$0xff] %v405
                  %v407 = vld [vmem:[%s335 + $0x230] sm:$0xff]
                  %408 = vst [vmem:[%s336 + $0x118] sm:$0xff] %v407
                  %v409 = vld [vmem:[%s335 + $0x240] sm:$0xff]
                  %410 = vst [vmem:[%s336 + $0x120] sm:$0xff] %v409
                  %v411 = vld [vmem:[%s335 + $0x250] sm:$0xff]
                  %412 = vst [vmem:[%s336 + $0x128] sm:$0xff] %v411
                  %v413 = vld [vmem:[%s335 + $0x260] sm:$0xff]
                  %414 = vst [vmem:[%s336 + $0x130] sm:$0xff] %v413
                  %v415 = vld [vmem:[%s335 + $0x270] sm:$0xff]
                  %416 = vst [vmem:[%s336 + $0x138] sm:$0xff] %v415
                  %v417 = vld [vmem:[%s335 + $0x280] sm:$0xff]
                  %418 = vst [vmem:[%s336 + $0x140] sm:$0xff] %v417
                  %v419 = vld [vmem:[%s335 + $0x290] sm:$0xff]
                  %420 = vst [vmem:[%s336 + $0x148] sm:$0xff] %v419
                  %v421 = vld [vmem:[%s335 + $0x2a0] sm:$0xff]
                  %422 = vst [vmem:[%s336 + $0x150] sm:$0xff] %v421
                  %v423 = vld [vmem:[%s335 + $0x2b0] sm:$0xff]
                  %424 = vst [vmem:[%s336 + $0x158] sm:$0xff] %v423
                  %v425 = vld [vmem:[%s335 + $0x2c0] sm:$0xff]
                  %426 = vst [vmem:[%s336 + $0x160] sm:$0xff] %v425
                  %v427 = vld [vmem:[%s335 + $0x2d0] sm:$0xff]
                  %428 = vst [vmem:[%s336 + $0x168] sm:$0xff] %v427
                  %v429 = vld [vmem:[%s335 + $0x2e0] sm:$0xff]
                  %430 = vst [vmem:[%s336 + $0x170] sm:$0xff] %v429
                  %v431 = vld [vmem:[%s335 + $0x2f0] sm:$0xff]
                  %432 = vst [vmem:[%s336 + $0x178] sm:$0xff] %v431
                  %v433 = vld [vmem:[%s335 + $0x300] sm:$0xff]
                  %434 = vst [vmem:[%s336 + $0x180] sm:$0xff] %v433
                  %v435 = vld [vmem:[%s335 + $0x310] sm:$0xff]
                  %436 = vst [vmem:[%s336 + $0x188] sm:$0xff] %v435
                  %v437 = vld [vmem:[%s335 + $0x320] sm:$0xff]
                  %438 = vst [vmem:[%s336 + $0x190] sm:$0xff] %v437
                  %v439 = vld [vmem:[%s335 + $0x330] sm:$0xff]
                  %440 = vst [vmem:[%s336 + $0x198] sm:$0xff] %v439
                  %v441 = vld [vmem:[%s335 + $0x340] sm:$0xff]
                  %442 = vst [vmem:[%s336 + $0x1a0] sm:$0xff] %v441
                  %v443 = vld [vmem:[%s335 + $0x350] sm:$0xff]
                  %444 = vst [vmem:[%s336 + $0x1a8] sm:$0xff] %v443
                  %v445 = vld [vmem:[%s335 + $0x360] sm:$0xff]
                  %446 = vst [vmem:[%s336 + $0x1b0] sm:$0xff] %v445
                  %v447 = vld [vmem:[%s335 + $0x370] sm:$0xff]
                  %448 = vst [vmem:[%s336 + $0x1b8] sm:$0xff] %v447
                  %v449 = vld [vmem:[%s335 + $0x380] sm:$0xff]
                  %450 = vst [vmem:[%s336 + $0x1c0] sm:$0xff] %v449
                  %v451 = vld [vmem:[%s335 + $0x390] sm:$0xff]
                  %452 = vst [vmem:[%s336 + $0x1c8] sm:$0xff] %v451
                  %v453 = vld [vmem:[%s335 + $0x3a0] sm:$0xff]
                  %454 = vst [vmem:[%s336 + $0x1d0] sm:$0xff] %v453
                  %v455 = vld [vmem:[%s335 + $0x3b0] sm:$0xff]
                  %456 = vst [vmem:[%s336 + $0x1d8] sm:$0xff] %v455
                  %v457 = vld [vmem:[%s335 + $0x3c0] sm:$0xff]
                  %458 = vst [vmem:[%s336 + $0x1e0] sm:$0xff] %v457
                  %v459 = vld [vmem:[%s335 + $0x3d0] sm:$0xff]
                  %460 = vst [vmem:[%s336 + $0x1e8] sm:$0xff] %v459
                  %v461 = vld [vmem:[%s335 + $0x3e0] sm:$0xff]
                  %462 = vst [vmem:[%s336 + $0x1f0] sm:$0xff] %v461
                  %v463 = vld [vmem:[%s335 + $0x3f0] sm:$0xff]
                  %464 = vst [vmem:[%s336 + $0x1f8] sm:$0xff] %v463
                $region71: #{discriminator_forward.13} parent=65 // loop_footer
                  %s334 = sadd.s32 1, %s330
                $region72: #{discriminator_forward.13} parent=65 // loop_footer_branch
                  %329 = sbr.rel target = $region68
                $region73: #{discriminator_forward.13} parent=65 // loop_exit
                  _
              $region66: #{discriminator_forward.13} parent=50 // pred_fallthru
                _
              // Predicated region
              $region74: #{discriminator_forward.13} parent=50 // pred_check
                _
              $region75: #{discriminator_forward.13} parent=50 // pred_check_branch
                %466 = sbr.rel target = $region77
              $region76: #{discriminator_forward.13} parent=50 // pred_region
                _
              $region77: #{discriminator_forward.13} parent=50 // pred_fallthru
                _
            $region51: #{discriminator_forward.13} parent=46 // pred_fallthru
              _
            // Predicated region
            $region52: #{discriminator_forward.13} parent=46 // pred_check
              _
            $region53: #{discriminator_forward.13} parent=46 // pred_check_branch
              %188 = sbr.rel target = $region55
            $region54: #{discriminator_forward.13} parent=46 // pred_region
              %s190 = ssub.s32 256, 1
              loop: start=0, step=1, limit=1
              $region56: #{discriminator_forward.13} parent=54 // loop_pre_header
                _
              $region57: #{discriminator_forward.13} parent=54 // loop_header
                %s192 = sphi 0, %s196
                %p193 = scmp.ge.s32.totalorder %s192, 1
                %s197 = sphi %s182, %s182
                %s198 = sphi %s176, %s176
              $region58: #{discriminator_forward.13} parent=54 // loop_header_branch
                %195 = sbr.rel (%p193) target = $region62
              $region59: #{discriminator_forward.13} parent=54 // loop_body
                %v199 = vld [vmem:[%s197] sm:%s190]
                %200 = vst [vmem:[%s198] sm:%s190] %v199
                %v201 = vld [vmem:[%s197 + $0x10] sm:%s190]
                %202 = vst [vmem:[%s198 + $0x8] sm:%s190] %v201
                %v203 = vld [vmem:[%s197 + $0x20] sm:%s190]
                %204 = vst [vmem:[%s198 + $0x10] sm:%s190] %v203
                %v205 = vld [vmem:[%s197 + $0x30] sm:%s190]
                %206 = vst [vmem:[%s198 + $0x18] sm:%s190] %v205
                %v207 = vld [vmem:[%s197 + $0x40] sm:%s190]
                %208 = vst [vmem:[%s198 + $0x20] sm:%s190] %v207
                %v209 = vld [vmem:[%s197 + $0x50] sm:%s190]
                %210 = vst [vmem:[%s198 + $0x28] sm:%s190] %v209
                %v211 = vld [vmem:[%s197 + $0x60] sm:%s190]
                %212 = vst [vmem:[%s198 + $0x30] sm:%s190] %v211
                %v213 = vld [vmem:[%s197 + $0x70] sm:%s190]
                %214 = vst [vmem:[%s198 + $0x38] sm:%s190] %v213
                %v215 = vld [vmem:[%s197 + $0x80] sm:%s190]
                %216 = vst [vmem:[%s198 + $0x40] sm:%s190] %v215
                %v217 = vld [vmem:[%s197 + $0x90] sm:%s190]
                %218 = vst [vmem:[%s198 + $0x48] sm:%s190] %v217
                %v219 = vld [vmem:[%s197 + $0xa0] sm:%s190]
                %220 = vst [vmem:[%s198 + $0x50] sm:%s190] %v219
                %v221 = vld [vmem:[%s197 + $0xb0] sm:%s190]
                %222 = vst [vmem:[%s198 + $0x58] sm:%s190] %v221
                %v223 = vld [vmem:[%s197 + $0xc0] sm:%s190]
                %224 = vst [vmem:[%s198 + $0x60] sm:%s190] %v223
                %v225 = vld [vmem:[%s197 + $0xd0] sm:%s190]
                %226 = vst [vmem:[%s198 + $0x68] sm:%s190] %v225
                %v227 = vld [vmem:[%s197 + $0xe0] sm:%s190]
                %228 = vst [vmem:[%s198 + $0x70] sm:%s190] %v227
                %v229 = vld [vmem:[%s197 + $0xf0] sm:%s190]
                %230 = vst [vmem:[%s198 + $0x78] sm:%s190] %v229
                %v231 = vld [vmem:[%s197 + $0x100] sm:%s190]
                %232 = vst [vmem:[%s198 + $0x80] sm:%s190] %v231
                %v233 = vld [vmem:[%s197 + $0x110] sm:%s190]
                %234 = vst [vmem:[%s198 + $0x88] sm:%s190] %v233
                %v235 = vld [vmem:[%s197 + $0x120] sm:%s190]
                %236 = vst [vmem:[%s198 + $0x90] sm:%s190] %v235
                %v237 = vld [vmem:[%s197 + $0x130] sm:%s190]
                %238 = vst [vmem:[%s198 + $0x98] sm:%s190] %v237
                %v239 = vld [vmem:[%s197 + $0x140] sm:%s190]
                %240 = vst [vmem:[%s198 + $0xa0] sm:%s190] %v239
                %v241 = vld [vmem:[%s197 + $0x150] sm:%s190]
                %242 = vst [vmem:[%s198 + $0xa8] sm:%s190] %v241
                %v243 = vld [vmem:[%s197 + $0x160] sm:%s190]
                %244 = vst [vmem:[%s198 + $0xb0] sm:%s190] %v243
                %v245 = vld [vmem:[%s197 + $0x170] sm:%s190]
                %246 = vst [vmem:[%s198 + $0xb8] sm:%s190] %v245
                %v247 = vld [vmem:[%s197 + $0x180] sm:%s190]
                %248 = vst [vmem:[%s198 + $0xc0] sm:%s190] %v247
                %v249 = vld [vmem:[%s197 + $0x190] sm:%s190]
                %250 = vst [vmem:[%s198 + $0xc8] sm:%s190] %v249
                %v251 = vld [vmem:[%s197 + $0x1a0] sm:%s190]
                %252 = vst [vmem:[%s198 + $0xd0] sm:%s190] %v251
                %v253 = vld [vmem:[%s197 + $0x1b0] sm:%s190]
                %254 = vst [vmem:[%s198 + $0xd8] sm:%s190] %v253
                %v255 = vld [vmem:[%s197 + $0x1c0] sm:%s190]
                %256 = vst [vmem:[%s198 + $0xe0] sm:%s190] %v255
                %v257 = vld [vmem:[%s197 + $0x1d0] sm:%s190]
                %258 = vst [vmem:[%s198 + $0xe8] sm:%s190] %v257
                %v259 = vld [vmem:[%s197 + $0x1e0] sm:%s190]
                %260 = vst [vmem:[%s198 + $0xf0] sm:%s190] %v259
                %v261 = vld [vmem:[%s197 + $0x1f0] sm:%s190]
                %262 = vst [vmem:[%s198 + $0xf8] sm:%s190] %v261
                %v263 = vld [vmem:[%s197 + $0x200] sm:%s190]
                %264 = vst [vmem:[%s198 + $0x100] sm:%s190] %v263
                %v265 = vld [vmem:[%s197 + $0x210] sm:%s190]
                %266 = vst [vmem:[%s198 + $0x108] sm:%s190] %v265
                %v267 = vld [vmem:[%s197 + $0x220] sm:%s190]
                %268 = vst [vmem:[%s198 + $0x110] sm:%s190] %v267
                %v269 = vld [vmem:[%s197 + $0x230] sm:%s190]
                %270 = vst [vmem:[%s198 + $0x118] sm:%s190] %v269
                %v271 = vld [vmem:[%s197 + $0x240] sm:%s190]
                %272 = vst [vmem:[%s198 + $0x120] sm:%s190] %v271
                %v273 = vld [vmem:[%s197 + $0x250] sm:%s190]
                %274 = vst [vmem:[%s198 + $0x128] sm:%s190] %v273
                %v275 = vld [vmem:[%s197 + $0x260] sm:%s190]
                %276 = vst [vmem:[%s198 + $0x130] sm:%s190] %v275
                %v277 = vld [vmem:[%s197 + $0x270] sm:%s190]
                %278 = vst [vmem:[%s198 + $0x138] sm:%s190] %v277
                %v279 = vld [vmem:[%s197 + $0x280] sm:%s190]
                %280 = vst [vmem:[%s198 + $0x140] sm:%s190] %v279
                %v281 = vld [vmem:[%s197 + $0x290] sm:%s190]
                %282 = vst [vmem:[%s198 + $0x148] sm:%s190] %v281
                %v283 = vld [vmem:[%s197 + $0x2a0] sm:%s190]
                %284 = vst [vmem:[%s198 + $0x150] sm:%s190] %v283
                %v285 = vld [vmem:[%s197 + $0x2b0] sm:%s190]
                %286 = vst [vmem:[%s198 + $0x158] sm:%s190] %v285
                %v287 = vld [vmem:[%s197 + $0x2c0] sm:%s190]
                %288 = vst [vmem:[%s198 + $0x160] sm:%s190] %v287
                %v289 = vld [vmem:[%s197 + $0x2d0] sm:%s190]
                %290 = vst [vmem:[%s198 + $0x168] sm:%s190] %v289
                %v291 = vld [vmem:[%s197 + $0x2e0] sm:%s190]
                %292 = vst [vmem:[%s198 + $0x170] sm:%s190] %v291
                %v293 = vld [vmem:[%s197 + $0x2f0] sm:%s190]
                %294 = vst [vmem:[%s198 + $0x178] sm:%s190] %v293
                %v295 = vld [vmem:[%s197 + $0x300] sm:%s190]
                %296 = vst [vmem:[%s198 + $0x180] sm:%s190] %v295
                %v297 = vld [vmem:[%s197 + $0x310] sm:%s190]
                %298 = vst [vmem:[%s198 + $0x188] sm:%s190] %v297
                %v299 = vld [vmem:[%s197 + $0x320] sm:%s190]
                %300 = vst [vmem:[%s198 + $0x190] sm:%s190] %v299
                %v301 = vld [vmem:[%s197 + $0x330] sm:%s190]
                %302 = vst [vmem:[%s198 + $0x198] sm:%s190] %v301
                %v303 = vld [vmem:[%s197 + $0x340] sm:%s190]
                %304 = vst [vmem:[%s198 + $0x1a0] sm:%s190] %v303
                %v305 = vld [vmem:[%s197 + $0x350] sm:%s190]
                %306 = vst [vmem:[%s198 + $0x1a8] sm:%s190] %v305
                %v307 = vld [vmem:[%s197 + $0x360] sm:%s190]
                %308 = vst [vmem:[%s198 + $0x1b0] sm:%s190] %v307
                %v309 = vld [vmem:[%s197 + $0x370] sm:%s190]
                %310 = vst [vmem:[%s198 + $0x1b8] sm:%s190] %v309
                %v311 = vld [vmem:[%s197 + $0x380] sm:%s190]
                %312 = vst [vmem:[%s198 + $0x1c0] sm:%s190] %v311
                %v313 = vld [vmem:[%s197 + $0x390] sm:%s190]
                %314 = vst [vmem:[%s198 + $0x1c8] sm:%s190] %v313
                %v315 = vld [vmem:[%s197 + $0x3a0] sm:%s190]
                %316 = vst [vmem:[%s198 + $0x1d0] sm:%s190] %v315
                %v317 = vld [vmem:[%s197 + $0x3b0] sm:%s190]
                %318 = vst [vmem:[%s198 + $0x1d8] sm:%s190] %v317
                %v319 = vld [vmem:[%s197 + $0x3c0] sm:%s190]
                %320 = vst [vmem:[%s198 + $0x1e0] sm:%s190] %v319
                %v321 = vld [vmem:[%s197 + $0x3d0] sm:%s190]
                %322 = vst [vmem:[%s198 + $0x1e8] sm:%s190] %v321
                %v323 = vld [vmem:[%s197 + $0x3e0] sm:%s190]
                %324 = vst [vmem:[%s198 + $0x1f0] sm:%s190] %v323
                %v325 = vld [vmem:[%s197 + $0x3f0] sm:%s190]
                %326 = vst [vmem:[%s198 + $0x1f8] sm:%s190] %v325
              $region60: #{discriminator_forward.13} parent=54 // loop_footer
                %s196 = sadd.s32 1, %s192
              $region61: #{discriminator_forward.13} parent=54 // loop_footer_branch
                %191 = sbr.rel target = $region57
              $region62: #{discriminator_forward.13} parent=54 // loop_exit
                _
            $region55: #{discriminator_forward.13} parent=46 // pred_fallthru
              _
          $region47: #{discriminator_forward.13} parent=42 // pred_fallthru
            _
          %467 = vnop
        $region43: #{discriminator_forward.13} parent=15 // pred_fallthru
          _
      $region16: #{discriminator_forward.13} parent=5 // pred_fallthru
        _
      %p468 = scmp.le.s32.totalorder 1, %s8
      %p469 = scmp.lt.s32.totalorder %s8, 17
      %p470 = pnand %p468, %p469
      %p471 = pneg %p470
      // Predicated region
      $region78: #{discriminator_forward.13} parent=5 // pred_check
        _
      $region79: #{discriminator_forward.13} parent=5 // pred_check_branch
        %473 = sbr.rel (%p470) target = $region81
      $region80: #{discriminator_forward.13} parent=5 // pred_region
        %s474 = ssub.s32 %s8, 1
        %s475 = sand.u32 %s42, 1
        %s476 = sand.u32 %s42, 1
        %s477 = smul.addr %s476, 48
        %s478 = scalar_lea.vmem [#allocation3], %s477
        // Predicated region
        $region82: #{discriminator_forward.13} parent=80 // pred_check
          %p479 = pneg %p55
        $region83: #{discriminator_forward.13} parent=80 // pred_check_branch
          %481 = sbr.rel (%p479) target = $region85
        $region84: #{discriminator_forward.13} parent=80 // pred_region
          _
        $region85: #{discriminator_forward.13} parent=80 // pred_fallthru
          _
        %s482 = sand.u32 %s70, 1
        %s483 = sand.u32 %s70, 1
        %s484 = smul.addr %s483, 512
        %s485 = scalar_lea.vmem [#allocation4], %s484
        // Predicated region
        $region86: #{discriminator_forward.13} parent=80 // pred_check
          %p486 = pneg %p83
        $region87: #{discriminator_forward.13} parent=80 // pred_check_branch
          %488 = sbr.rel (%p486) target = $region89
        $region88: #{discriminator_forward.13} parent=80 // pred_region
          _
        $region89: #{discriminator_forward.13} parent=80 // pred_fallthru
          _
        %s489 = sand.u32 %s42, 1
        %s490 = sand.u32 %s42, 1
        %s491 = smul.addr %s490, 48
        %s492 = scalar_lea.vmem [#allocation3], %s491
        %p493 = pneg %p55
        %p494 = pneg %p52
        %s495 = sand.u32 %s70, 1
        %s496 = sand.u32 %s70, 1
        %s497 = smul.addr %s496, 512
        %s498 = scalar_lea.vmem [#allocation4], %s497
        %p499 = pneg %p83
        %p500 = pneg %p80
        %p501 = pneg %p111
        %p502 = pneg %p108
        %s503 = sand.u32 %s98, 1
        %s504 = sand.u32 %s98, 1
        %s505 = smul.addr %s504, 48
        %s506 = scalar_lea.vmem [#allocation5], %s505
        %s507 = smul.u32 3, %s18
        %s508 = smul.u32 4, %s20
        %s509 = smul.u32 64, %s20
        %s510 = smul.u32 2, %s19
        %s511 = smul.u32 3, %s18
        %s512 = smul.u32 2, %s19
        %p513 = scmp.eq.s32.totalorder %s20, 0
        // Predicated region
        $region90: #{discriminator_forward.13} parent=80 // pred_check
          %p514 = pneg %p513
        $region91: #{discriminator_forward.13} parent=80 // pred_check_branch
          %516 = sbr.rel (%p514) target = $region93
        $region92: #{discriminator_forward.13} parent=80 // pred_region
          %517 = vst [vmem:[#allocation2] sm:$0xff] 0.0
          %518 = vst [vmem:[#allocation2 + $0x8] sm:$0xff] 0.0
          %519 = vst [vmem:[#allocation2 + $0x10] sm:$0xff] 0.0
          %520 = vst [vmem:[#allocation2 + $0x18] sm:$0xff] 0.0
          %521 = vst [vmem:[#allocation2 + $0x20] sm:$0xff] 0.0
          %522 = vst [vmem:[#allocation2 + $0x28] sm:$0xff] 0.0
        $region93: #{discriminator_forward.13} parent=80 // pred_fallthru
          _
        %v523 = vld [vmem:[#allocation2] sm:$0xff]
        %v524 = vld [vmem:[#allocation2 + $0x8] sm:$0xff]
        %v525 = vld [vmem:[#allocation2 + $0x10] sm:$0xff]
        %v526 = vld [vmem:[#allocation2 + $0x18] sm:$0xff]
        %v527 = vld [vmem:[#allocation2 + $0x20] sm:$0xff]
        %v528 = vld [vmem:[#allocation2 + $0x28] sm:$0xff]
        %v529 = vld [vmem:[%s478] sm:$0xff]
        %v530 = vld [vmem:[%s478 + $0x8] sm:$0xff]
        %v531 = vld [vmem:[%s478 + $0x10] sm:$0xff]
        %v532 = vld [vmem:[%s478 + $0x18] sm:$0xff]
        %v533 = vld [vmem:[%s478 + $0x20] sm:$0xff]
        %v534 = vld [vmem:[%s478 + $0x28] sm:$0xff]
        %v535 = vld [vmem:[%s485] sm:$0xff]
        %v536 = vld [vmem:[%s485 + $0x8] sm:$0xff]
        %v537 = vld [vmem:[%s485 + $0x10] sm:$0xff]
        %v538 = vld [vmem:[%s485 + $0x18] sm:$0xff]
        %v539 = vld [vmem:[%s485 + $0x20] sm:$0xff]
        %v540 = vld [vmem:[%s485 + $0x28] sm:$0xff]
        %v541 = vld [vmem:[%s485 + $0x30] sm:$0xff]
        %v542 = vld [vmem:[%s485 + $0x38] sm:$0xff]
        %v543 = vld [vmem:[%s485 + $0x40] sm:$0xff]
        %v544 = vld [vmem:[%s485 + $0x48] sm:$0xff]
        %v545 = vld [vmem:[%s485 + $0x50] sm:$0xff]
        %v546 = vld [vmem:[%s485 + $0x58] sm:$0xff]
        %v547 = vld [vmem:[%s485 + $0x60] sm:$0xff]
        %v548 = vld [vmem:[%s485 + $0x68] sm:$0xff]
        %v549 = vld [vmem:[%s485 + $0x70] sm:$0xff]
        %v550 = vld [vmem:[%s485 + $0x78] sm:$0xff]
        %v551 = vld [vmem:[%s485 + $0x80] sm:$0xff]
        %v552 = vld [vmem:[%s485 + $0x88] sm:$0xff]
        %v553 = vld [vmem:[%s485 + $0x90] sm:$0xff]
        %v554 = vld [vmem:[%s485 + $0x98] sm:$0xff]
        %v555 = vld [vmem:[%s485 + $0xa0] sm:$0xff]
        %v556 = vld [vmem:[%s485 + $0xa8] sm:$0xff]
        %v557 = vld [vmem:[%s485 + $0xb0] sm:$0xff]
        %v558 = vld [vmem:[%s485 + $0xb8] sm:$0xff]
        %v559 = vld [vmem:[%s485 + $0xc0] sm:$0xff]
        %v560 = vld [vmem:[%s485 + $0xc8] sm:$0xff]
        %v561 = vld [vmem:[%s485 + $0xd0] sm:$0xff]
        %v562 = vld [vmem:[%s485 + $0xd8] sm:$0xff]
        %v563 = vld [vmem:[%s485 + $0xe0] sm:$0xff]
        %v564 = vld [vmem:[%s485 + $0xe8] sm:$0xff]
        %v565 = vld [vmem:[%s485 + $0xf0] sm:$0xff]
        %v566 = vld [vmem:[%s485 + $0xf8] sm:$0xff]
        %v567 = vld [vmem:[%s485 + $0x100] sm:$0xff]
        %v568 = vld [vmem:[%s485 + $0x108] sm:$0xff]
        %v569 = vld [vmem:[%s485 + $0x110] sm:$0xff]
        %v570 = vld [vmem:[%s485 + $0x118] sm:$0xff]
        %v571 = vld [vmem:[%s485 + $0x120] sm:$0xff]
        %v572 = vld [vmem:[%s485 + $0x128] sm:$0xff]
        %v573 = vld [vmem:[%s485 + $0x130] sm:$0xff]
        %v574 = vld [vmem:[%s485 + $0x138] sm:$0xff]
        %v575 = vld [vmem:[%s485 + $0x140] sm:$0xff]
        %v576 = vld [vmem:[%s485 + $0x148] sm:$0xff]
        %v577 = vld [vmem:[%s485 + $0x150] sm:$0xff]
        %v578 = vld [vmem:[%s485 + $0x158] sm:$0xff]
        %v579 = vld [vmem:[%s485 + $0x160] sm:$0xff]
        %v580 = vld [vmem:[%s485 + $0x168] sm:$0xff]
        %v581 = vld [vmem:[%s485 + $0x170] sm:$0xff]
        %v582 = vld [vmem:[%s485 + $0x178] sm:$0xff]
        %v583 = vld [vmem:[%s485 + $0x180] sm:$0xff]
        %v584 = vld [vmem:[%s485 + $0x188] sm:$0xff]
        %v585 = vld [vmem:[%s485 + $0x190] sm:$0xff]
        %v586 = vld [vmem:[%s485 + $0x198] sm:$0xff]
        %v587 = vld [vmem:[%s485 + $0x1a0] sm:$0xff]
        %v588 = vld [vmem:[%s485 + $0x1a8] sm:$0xff]
        %v589 = vld [vmem:[%s485 + $0x1b0] sm:$0xff]
        %v590 = vld [vmem:[%s485 + $0x1b8] sm:$0xff]
        %v591 = vld [vmem:[%s485 + $0x1c0] sm:$0xff]
        %v592 = vld [vmem:[%s485 + $0x1c8] sm:$0xff]
        %v593 = vld [vmem:[%s485 + $0x1d0] sm:$0xff]
        %v594 = vld [vmem:[%s485 + $0x1d8] sm:$0xff]
        %v595 = vld [vmem:[%s485 + $0x1e0] sm:$0xff]
        %v596 = vld [vmem:[%s485 + $0x1e8] sm:$0xff]
        %v597 = vld [vmem:[%s485 + $0x1f0] sm:$0xff]
        %v598 = vld [vmem:[%s485 + $0x1f8] sm:$0xff]
        %v605 = vunpack.c.l.b16 %v529
        %v606 = vunpack.c.h.b16 %v529
        %v607 = vunpack.c.l.b16 %v530
        %v608 = vunpack.c.h.b16 %v530
        %v609 = vunpack.c.l.b16 %v531
        %v610 = vunpack.c.h.b16 %v531
        %v611 = vunpack.c.l.b16 %v532
        %v612 = vunpack.c.h.b16 %v532
        %v613 = vunpack.c.l.b16 %v533
        %v614 = vunpack.c.h.b16 %v533
        %v615 = vunpack.c.l.b16 %v534
        %v616 = vunpack.c.h.b16 %v534
        %v617 = vpack.c.b16 %v609, %v605
        %v618 = vpack.c.b16 %v610, %v606
        %v619 = vpack.c.b16 %v611, %v607
        %v620 = vpack.c.b16 %v612, %v608
        %v621 = vpack.c.b16 %v613, %v613
        %v622 = vpack.c.b16 %v614, %v614
        %v623 = vpack.c.b16 %v615, %v615
        %v624 = vpack.c.b16 %v616, %v616
        %v697 = vunpack.c.l.b16 %v535
        %v698 = vunpack.c.h.b16 %v535
        %v699 = vunpack.c.l.b16 %v536
        %v700 = vunpack.c.h.b16 %v536
        %v701 = vunpack.c.l.b16 %v537
        %v702 = vunpack.c.h.b16 %v537
        %v703 = vunpack.c.l.b16 %v538
        %v704 = vunpack.c.h.b16 %v538
        %v705 = vunpack.c.l.b16 %v539
        %v706 = vunpack.c.h.b16 %v539
        %v707 = vunpack.c.l.b16 %v540
        %v708 = vunpack.c.h.b16 %v540
        %v709 = vunpack.c.l.b16 %v541
        %v710 = vunpack.c.h.b16 %v541
        %v711 = vunpack.c.l.b16 %v542
        %v712 = vunpack.c.h.b16 %v542
        %v713 = vunpack.c.l.b16 %v543
        %v714 = vunpack.c.h.b16 %v543
        %v715 = vunpack.c.l.b16 %v544
        %v716 = vunpack.c.h.b16 %v544
        %v717 = vunpack.c.l.b16 %v545
        %v718 = vunpack.c.h.b16 %v545
        %v719 = vunpack.c.l.b16 %v546
        %v720 = vunpack.c.h.b16 %v546
        %v721 = vunpack.c.l.b16 %v547
        %v722 = vunpack.c.h.b16 %v547
        %v723 = vunpack.c.l.b16 %v548
        %v724 = vunpack.c.h.b16 %v548
        %v725 = vunpack.c.l.b16 %v549
        %v726 = vunpack.c.h.b16 %v549
        %v727 = vunpack.c.l.b16 %v550
        %v728 = vunpack.c.h.b16 %v550
        %v729 = vunpack.c.l.b16 %v551
        %v730 = vunpack.c.h.b16 %v551
        %v731 = vunpack.c.l.b16 %v552
        %v732 = vunpack.c.h.b16 %v552
        %v733 = vunpack.c.l.b16 %v553
        %v734 = vunpack.c.h.b16 %v553
        %v735 = vunpack.c.l.b16 %v554
        %v736 = vunpack.c.h.b16 %v554
        %v737 = vunpack.c.l.b16 %v555
        %v738 = vunpack.c.h.b16 %v555
        %v739 = vunpack.c.l.b16 %v556
        %v740 = vunpack.c.h.b16 %v556
        %v741 = vunpack.c.l.b16 %v557
        %v742 = vunpack.c.h.b16 %v557
        %v743 = vunpack.c.l.b16 %v558
        %v744 = vunpack.c.h.b16 %v558
        %v745 = vunpack.c.l.b16 %v559
        %v746 = vunpack.c.h.b16 %v559
        %v747 = vunpack.c.l.b16 %v560
        %v748 = vunpack.c.h.b16 %v560
        %v749 = vunpack.c.l.b16 %v561
        %v750 = vunpack.c.h.b16 %v561
        %v751 = vunpack.c.l.b16 %v562
        %v752 = vunpack.c.h.b16 %v562
        %v753 = vunpack.c.l.b16 %v563
        %v754 = vunpack.c.h.b16 %v563
        %v755 = vunpack.c.l.b16 %v564
        %v756 = vunpack.c.h.b16 %v564
        %v757 = vunpack.c.l.b16 %v565
        %v758 = vunpack.c.h.b16 %v565
        %v759 = vunpack.c.l.b16 %v566
        %v760 = vunpack.c.h.b16 %v566
        %v761 = vunpack.c.l.b16 %v567
        %v762 = vunpack.c.h.b16 %v567
        %v763 = vunpack.c.l.b16 %v568
        %v764 = vunpack.c.h.b16 %v568
        %v765 = vunpack.c.l.b16 %v569
        %v766 = vunpack.c.h.b16 %v569
        %v767 = vunpack.c.l.b16 %v570
        %v768 = vunpack.c.h.b16 %v570
        %v769 = vunpack.c.l.b16 %v571
        %v770 = vunpack.c.h.b16 %v571
        %v771 = vunpack.c.l.b16 %v572
        %v772 = vunpack.c.h.b16 %v572
        %v773 = vunpack.c.l.b16 %v573
        %v774 = vunpack.c.h.b16 %v573
        %v775 = vunpack.c.l.b16 %v574
        %v776 = vunpack.c.h.b16 %v574
        %v777 = vunpack.c.l.b16 %v575
        %v778 = vunpack.c.h.b16 %v575
        %v779 = vunpack.c.l.b16 %v576
        %v780 = vunpack.c.h.b16 %v576
        %v781 = vunpack.c.l.b16 %v577
        %v782 = vunpack.c.h.b16 %v577
        %v783 = vunpack.c.l.b16 %v578
        %v784 = vunpack.c.h.b16 %v578
        %v785 = vunpack.c.l.b16 %v579
        %v786 = vunpack.c.h.b16 %v579
        %v787 = vunpack.c.l.b16 %v580
        %v788 = vunpack.c.h.b16 %v580
        %v789 = vunpack.c.l.b16 %v581
        %v790 = vunpack.c.h.b16 %v581
        %v791 = vunpack.c.l.b16 %v582
        %v792 = vunpack.c.h.b16 %v582
        %v793 = vunpack.c.l.b16 %v583
        %v794 = vunpack.c.h.b16 %v583
        %v795 = vunpack.c.l.b16 %v584
        %v796 = vunpack.c.h.b16 %v584
        %v797 = vunpack.c.l.b16 %v585
        %v798 = vunpack.c.h.b16 %v585
        %v799 = vunpack.c.l.b16 %v586
        %v800 = vunpack.c.h.b16 %v586
        %v801 = vunpack.c.l.b16 %v587
        %v802 = vunpack.c.h.b16 %v587
        %v803 = vunpack.c.l.b16 %v588
        %v804 = vunpack.c.h.b16 %v588
        %v805 = vunpack.c.l.b16 %v589
        %v806 = vunpack.c.h.b16 %v589
        %v807 = vunpack.c.l.b16 %v590
        %v808 = vunpack.c.h.b16 %v590
        %v809 = vunpack.c.l.b16 %v591
        %v810 = vunpack.c.h.b16 %v591
        %v811 = vunpack.c.l.b16 %v592
        %v812 = vunpack.c.h.b16 %v592
        %v813 = vunpack.c.l.b16 %v593
        %v814 = vunpack.c.h.b16 %v593
        %v815 = vunpack.c.l.b16 %v594
        %v816 = vunpack.c.h.b16 %v594
        %v817 = vunpack.c.l.b16 %v595
        %v818 = vunpack.c.h.b16 %v595
        %v819 = vunpack.c.l.b16 %v596
        %v820 = vunpack.c.h.b16 %v596
        %v821 = vunpack.c.l.b16 %v597
        %v822 = vunpack.c.h.b16 %v597
        %v823 = vunpack.c.l.b16 %v598
        %v824 = vunpack.c.h.b16 %v598
        %v825 = vpack.c.b16 %v699, %v697
        %v826 = vpack.c.b16 %v700, %v698
        %v827 = vpack.c.b16 %v703, %v701
        %v828 = vpack.c.b16 %v704, %v702
        %v829 = vpack.c.b16 %v707, %v705
        %v830 = vpack.c.b16 %v708, %v706
        %v831 = vpack.c.b16 %v711, %v709
        %v832 = vpack.c.b16 %v712, %v710
        %v833 = vpack.c.b16 %v715, %v713
        %v834 = vpack.c.b16 %v716, %v714
        %v835 = vpack.c.b16 %v719, %v717
        %v836 = vpack.c.b16 %v720, %v718
        %v837 = vpack.c.b16 %v723, %v721
        %v838 = vpack.c.b16 %v724, %v722
        %v839 = vpack.c.b16 %v727, %v725
        %v840 = vpack.c.b16 %v728, %v726
        %v841 = vpack.c.b16 %v731, %v729
        %v842 = vpack.c.b16 %v732, %v730
        %v843 = vpack.c.b16 %v735, %v733
        %v844 = vpack.c.b16 %v736, %v734
        %v845 = vpack.c.b16 %v739, %v737
        %v846 = vpack.c.b16 %v740, %v738
        %v847 = vpack.c.b16 %v743, %v741
        %v848 = vpack.c.b16 %v744, %v742
        %v849 = vpack.c.b16 %v747, %v745
        %v850 = vpack.c.b16 %v748, %v746
        %v851 = vpack.c.b16 %v751, %v749
        %v852 = vpack.c.b16 %v752, %v750
        %v853 = vpack.c.b16 %v755, %v753
        %v854 = vpack.c.b16 %v756, %v754
        %v855 = vpack.c.b16 %v759, %v757
        %v856 = vpack.c.b16 %v760, %v758
        %v857 = vpack.c.b16 %v763, %v761
        %v858 = vpack.c.b16 %v764, %v762
        %v859 = vpack.c.b16 %v767, %v765
        %v860 = vpack.c.b16 %v768, %v766
        %v861 = vpack.c.b16 %v771, %v769
        %v862 = vpack.c.b16 %v772, %v770
        %v863 = vpack.c.b16 %v775, %v773
        %v864 = vpack.c.b16 %v776, %v774
        %v865 = vpack.c.b16 %v779, %v777
        %v866 = vpack.c.b16 %v780, %v778
        %v867 = vpack.c.b16 %v783, %v781
        %v868 = vpack.c.b16 %v784, %v782
        %v869 = vpack.c.b16 %v787, %v785
        %v870 = vpack.c.b16 %v788, %v786
        %v871 = vpack.c.b16 %v791, %v789
        %v872 = vpack.c.b16 %v792, %v790
        %v873 = vpack.c.b16 %v795, %v793
        %v874 = vpack.c.b16 %v796, %v794
        %v875 = vpack.c.b16 %v799, %v797
        %v876 = vpack.c.b16 %v800, %v798
        %v877 = vpack.c.b16 %v803, %v801
        %v878 = vpack.c.b16 %v804, %v802
        %v879 = vpack.c.b16 %v807, %v805
        %v880 = vpack.c.b16 %v808, %v806
        %v881 = vpack.c.b16 %v811, %v809
        %v882 = vpack.c.b16 %v812, %v810
        %v883 = vpack.c.b16 %v815, %v813
        %v884 = vpack.c.b16 %v816, %v814
        %v885 = vpack.c.b16 %v819, %v817
        %v886 = vpack.c.b16 %v820, %v818
        %v887 = vpack.c.b16 %v823, %v821
        %v888 = vpack.c.b16 %v824, %v822
        %953 = vmatpush.bf16.msra.mxu0 %v839
        %954 = vmatpush.bf16.msra.mxu0 %v837
        %955 = vmatpush.bf16.msra.mxu0 %v835
        %956 = vmatpush.bf16.msra.mxu0 %v833
        %957 = vmatpush.bf16.msra.mxu0 %v831
        %958 = vmatpush.bf16.msra.mxu0 %v829
        %959 = vmatpush.bf16.msra.mxu0 %v827
        %960 = vmatpush.bf16.msra.mxu0 %v825
        %961 = vmatmul.bf16.gmra.mxu0 %v617
        %v962 = vpop.f32.mrf.mxu0
        %v963 = vadd.f32 0.0, %v962
        %v964 = vpop.f32.mrf.mxu0
        %v965 = vadd.f32 0.0, %v964
        %966 = vmatmul.bf16.gmra.mxu0 %v621
        %v967 = vpop.f32.mrf.mxu0
        %v968 = vadd.f32 0.0, %v967
        %v969 = vpop.f32.mrf.mxu0
        %970 = vdwg.mxu0
        %971 = vmatpush.bf16.msra.mxu0 %v855
        %972 = vmatpush.bf16.msra.mxu0 %v853
        %973 = vmatpush.bf16.msra.mxu0 %v851
        %974 = vmatpush.bf16.msra.mxu0 %v849
        %975 = vmatpush.bf16.msra.mxu0 %v847
        %976 = vmatpush.bf16.msra.mxu0 %v845
        %977 = vmatpush.bf16.msra.mxu0 %v843
        %978 = vmatpush.bf16.msra.mxu0 %v841
        %979 = vmatmul.bf16.gmra.mxu0 %v618
        %v980 = vpop.f32.mrf.mxu0
        %v981 = vadd.f32 %v963, %v980
        %v982 = vpop.f32.mrf.mxu0
        %v983 = vadd.f32 %v965, %v982
        %984 = vmatmul.bf16.gmra.mxu0 %v622
        %v985 = vpop.f32.mrf.mxu0
        %v986 = vadd.f32 %v968, %v985
        %v987 = vpop.f32.mrf.mxu0
        %988 = vdwg.mxu0
        %989 = vmatpush.bf16.msra.mxu0 %v871
        %990 = vmatpush.bf16.msra.mxu0 %v869
        %991 = vmatpush.bf16.msra.mxu0 %v867
        %992 = vmatpush.bf16.msra.mxu0 %v865
        %993 = vmatpush.bf16.msra.mxu0 %v863
        %994 = vmatpush.bf16.msra.mxu0 %v861
        %995 = vmatpush.bf16.msra.mxu0 %v859
        %996 = vmatpush.bf16.msra.mxu0 %v857
        %997 = vmatmul.bf16.gmra.mxu0 %v619
        %v998 = vpop.f32.mrf.mxu0
        %v999 = vadd.f32 %v981, %v998
        %v1000 = vpop.f32.mrf.mxu0
        %v1001 = vadd.f32 %v983, %v1000
        %1002 = vmatmul.bf16.gmra.mxu0 %v623
        %v1003 = vpop.f32.mrf.mxu0
        %v1004 = vadd.f32 %v986, %v1003
        %v1005 = vpop.f32.mrf.mxu0
        %1006 = vdwg.mxu0
        %1007 = vmatpush.bf16.msra.mxu0 %v887
        %1008 = vmatpush.bf16.msra.mxu0 %v885
        %1009 = vmatpush.bf16.msra.mxu0 %v883
        %1010 = vmatpush.bf16.msra.mxu0 %v881
        %1011 = vmatpush.bf16.msra.mxu0 %v879
        %1012 = vmatpush.bf16.msra.mxu0 %v877
        %1013 = vmatpush.bf16.msra.mxu0 %v875
        %1014 = vmatpush.bf16.msra.mxu0 %v873
        %1015 = vmatmul.bf16.gmra.mxu0 %v620
        %v1016 = vpop.f32.mrf.mxu0
        %v1017 = vadd.f32 %v999, %v1016
        %v1018 = vpop.f32.mrf.mxu0
        %v1019 = vadd.f32 %v1001, %v1018
        %1020 = vmatmul.bf16.gmra.mxu0 %v624
        %v1021 = vpop.f32.mrf.mxu0
        %v1022 = vadd.f32 %v1004, %v1021
        %v1023 = vpop.f32.mrf.mxu0
        %1024 = vdwg.mxu0
        %1025 = vmatpush.bf16.msra.mxu0 %v840
        %1026 = vmatpush.bf16.msra.mxu0 %v838
        %1027 = vmatpush.bf16.msra.mxu0 %v836
        %1028 = vmatpush.bf16.msra.mxu0 %v834
        %1029 = vmatpush.bf16.msra.mxu0 %v832
        %1030 = vmatpush.bf16.msra.mxu0 %v830
        %1031 = vmatpush.bf16.msra.mxu0 %v828
        %1032 = vmatpush.bf16.msra.mxu0 %v826
        %1033 = vmatmul.bf16.gmra.mxu0 %v617
        %v1034 = vpop.f32.mrf.mxu0
        %v1035 = vadd.f32 0.0, %v1034
        %v1036 = vpop.f32.mrf.mxu0
        %v1037 = vadd.f32 0.0, %v1036
        %1038 = vmatmul.bf16.gmra.mxu0 %v621
        %v1039 = vpop.f32.mrf.mxu0
        %v1040 = vadd.f32 0.0, %v1039
        %v1041 = vpop.f32.mrf.mxu0
        %1042 = vdwg.mxu0
        %1043 = vmatpush.bf16.msra.mxu0 %v856
        %1044 = vmatpush.bf16.msra.mxu0 %v854
        %1045 = vmatpush.bf16.msra.mxu0 %v852
        %1046 = vmatpush.bf16.msra.mxu0 %v850
        %1047 = vmatpush.bf16.msra.mxu0 %v848
        %1048 = vmatpush.bf16.msra.mxu0 %v846
        %1049 = vmatpush.bf16.msra.mxu0 %v844
        %1050 = vmatpush.bf16.msra.mxu0 %v842
        %1051 = vmatmul.bf16.gmra.mxu0 %v618
        %v1052 = vpop.f32.mrf.mxu0
        %v1053 = vadd.f32 %v1035, %v1052
        %v1054 = vpop.f32.mrf.mxu0
        %v1055 = vadd.f32 %v1037, %v1054
        %1056 = vmatmul.bf16.gmra.mxu0 %v622
        %v1057 = vpop.f32.mrf.mxu0
        %v1058 = vadd.f32 %v1040, %v1057
        %v1059 = vpop.f32.mrf.mxu0
        %1060 = vdwg.mxu0
        %1061 = vmatpush.bf16.msra.mxu0 %v872
        %1062 = vmatpush.bf16.msra.mxu0 %v870
        %1063 = vmatpush.bf16.msra.mxu0 %v868
        %1064 = vmatpush.bf16.msra.mxu0 %v866
        %1065 = vmatpush.bf16.msra.mxu0 %v864
        %1066 = vmatpush.bf16.msra.mxu0 %v862
        %1067 = vmatpush.bf16.msra.mxu0 %v860
        %1068 = vmatpush.bf16.msra.mxu0 %v858
        %1069 = vmatmul.bf16.gmra.mxu0 %v619
        %v1070 = vpop.f32.mrf.mxu0
        %v1071 = vadd.f32 %v1053, %v1070
        %v1072 = vpop.f32.mrf.mxu0
        %v1073 = vadd.f32 %v1055, %v1072
        %1074 = vmatmul.bf16.gmra.mxu0 %v623
        %v1075 = vpop.f32.mrf.mxu0
        %v1076 = vadd.f32 %v1058, %v1075
        %v1077 = vpop.f32.mrf.mxu0
        %1078 = vdwg.mxu0
        %1079 = vmatpush.bf16.msra.mxu0 %v888
        %1080 = vmatpush.bf16.msra.mxu0 %v886
        %1081 = vmatpush.bf16.msra.mxu0 %v884
        %1082 = vmatpush.bf16.msra.mxu0 %v882
        %1083 = vmatpush.bf16.msra.mxu0 %v880
        %1084 = vmatpush.bf16.msra.mxu0 %v878
        %1085 = vmatpush.bf16.msra.mxu0 %v876
        %1086 = vmatpush.bf16.msra.mxu0 %v874
        %1087 = vmatmul.bf16.gmra.mxu0 %v620
        %v1088 = vpop.f32.mrf.mxu0
        %v1089 = vadd.f32 %v1071, %v1088
        %v1090 = vpop.f32.mrf.mxu0
        %v1091 = vadd.f32 %v1073, %v1090
        %1092 = vmatmul.bf16.gmra.mxu0 %v624
        %v1093 = vpop.f32.mrf.mxu0
        %v1094 = vadd.f32 %v1076, %v1093
        %v1095 = vpop.f32.mrf.mxu0
        %1096 = vdwg.mxu0
        %v1097 = vadd.f32 %v523, %v1017
        %v1098 = vadd.f32 %v524, %v1089
        %v1099 = vadd.f32 %v525, %v1019
        %v1100 = vadd.f32 %v526, %v1091
        %v1101 = vadd.f32 %v527, %v1022
        %v1102 = vadd.f32 %v528, %v1094
        %1103 = vst [vmem:[#allocation2] sm:$0xff] %v1097
        %1104 = vst [vmem:[#allocation2 + $0x8] sm:$0xff] %v1098
        %1105 = vst [vmem:[#allocation2 + $0x10] sm:$0xff] %v1099
        %1106 = vst [vmem:[#allocation2 + $0x18] sm:$0xff] %v1100
        %1107 = vst [vmem:[#allocation2 + $0x20] sm:$0xff] %v1101
        %1108 = vst [vmem:[#allocation2 + $0x28] sm:$0xff] %v1102
        %p1109 = scmp.eq.s32.totalorder %s20, 7
        // Predicated region
        $region94: #{discriminator_forward.13} parent=80 // pred_check
          %p1110 = pneg %p1109
        $region95: #{discriminator_forward.13} parent=80 // pred_check_branch
          %1112 = sbr.rel (%p1110) target = $region97
        $region96: #{discriminator_forward.13} parent=80 // pred_region
          %v1113 = vld [vmem:[#allocation2] sm:$0xff]
          %v1114 = vld [vmem:[#allocation2 + $0x8] sm:$0xff]
          %v1115 = vld [vmem:[#allocation2 + $0x10] sm:$0xff]
          %v1116 = vld [vmem:[#allocation2 + $0x18] sm:$0xff]
          %v1117 = vld [vmem:[#allocation2 + $0x20] sm:$0xff]
          %v1118 = vld [vmem:[#allocation2 + $0x28] sm:$0xff]
          %1119 = vst [vmem:[%s506] sm:$0xff] %v1113
          %1120 = vst [vmem:[%s506 + $0x8] sm:$0xff] %v1114
          %1121 = vst [vmem:[%s506 + $0x10] sm:$0xff] %v1115
          %1122 = vst [vmem:[%s506 + $0x18] sm:$0xff] %v1116
          %1123 = vst [vmem:[%s506 + $0x20] sm:$0xff] %v1117
          %1124 = vst [vmem:[%s506 + $0x28] sm:$0xff] %v1118
        $region97: #{discriminator_forward.13} parent=80 // pred_fallthru
          _
        %s1125 = sand.u32 %s98, 1
        %s1126 = sand.u32 %s98, 1
        %s1127 = smul.addr %s1126, 48
        %s1128 = scalar_lea.vmem [#allocation5], %s1127
        // Predicated region
        $region98: #{discriminator_forward.13} parent=80 // pred_check
          %p1129 = pneg %p108
        $region99: #{discriminator_forward.13} parent=80 // pred_check_branch
          %1131 = sbr.rel (%p1129) target = $region101
        $region100: #{discriminator_forward.13} parent=80 // pred_region
          %s1132 = smul.u32 3, %s18
          %s1133 = smul.u32 2, %s19
          %s1134 = smul.addr %s1132, 4
          %s1135 = sadd.s32 %s1133, %s1134
          %s1136 = smul.addr %s1135, 8
          %s1137 = scalar_lea.vmem %s2, %s1136
          // Predicated region
          $region102: #{discriminator_forward.13} parent=100 // pred_check
            _
          $region103: #{discriminator_forward.13} parent=100 // pred_check_branch
            %1139 = sbr.rel (0) target = $region105
          $region104: #{discriminator_forward.13} parent=100 // pred_region
            // Predicated region
            $region106: #{discriminator_forward.13} parent=104 // pred_check
              _
            $region107: #{discriminator_forward.13} parent=104 // pred_check_branch
              %1141 = sbr.rel (0) target = $region109
            $region108: #{discriminator_forward.13} parent=104 // pred_region
              loop: start=0, step=1, limit=1
              $region110: #{discriminator_forward.13} parent=108 // loop_pre_header
                _
              $region111: #{discriminator_forward.13} parent=108 // loop_header
                %s1143 = sphi 0, %s1147
                %p1144 = scmp.ge.s32.totalorder %s1143, 1
                %s1148 = sphi %s1128, %s1128
                %s1149 = sphi %s1137, %s1137
              $region112: #{discriminator_forward.13} parent=108 // loop_header_branch
                %1146 = sbr.rel (%p1144) target = $region116
              $region113: #{discriminator_forward.13} parent=108 // loop_body
                %v1150 = vld [vmem:[%s1148] sm:$0xff]
                %1151 = vst [vmem:[%s1149] sm:$0xff] %v1150
                %v1152 = vld [vmem:[%s1148 + $0x8] sm:$0xff]
                %1153 = vst [vmem:[%s1149 + $0x8] sm:$0xff] %v1152
                %v1154 = vld [vmem:[%s1148 + $0x10] sm:$0xff]
                %1155 = vst [vmem:[%s1149 + $0x20] sm:$0xff] %v1154
                %v1156 = vld [vmem:[%s1148 + $0x18] sm:$0xff]
                %1157 = vst [vmem:[%s1149 + $0x28] sm:$0xff] %v1156
                %v1158 = vld [vmem:[%s1148 + $0x20] sm:$0xff]
                %1159 = vst [vmem:[%s1149 + $0x40] sm:$0xff] %v1158
                %v1160 = vld [vmem:[%s1148 + $0x28] sm:$0xff]
                %1161 = vst [vmem:[%s1149 + $0x48] sm:$0xff] %v1160
              $region114: #{discriminator_forward.13} parent=108 // loop_footer
                %s1147 = sadd.s32 1, %s1143
              $region115: #{discriminator_forward.13} parent=108 // loop_footer_branch
                %1142 = sbr.rel target = $region111
              $region116: #{discriminator_forward.13} parent=108 // loop_exit
                _
            $region109: #{discriminator_forward.13} parent=104 // pred_fallthru
              _
            // Predicated region
            $region117: #{discriminator_forward.13} parent=104 // pred_check
              _
            $region118: #{discriminator_forward.13} parent=104 // pred_check_branch
              %1163 = sbr.rel target = $region120
            $region119: #{discriminator_forward.13} parent=104 // pred_region
              _
            $region120: #{discriminator_forward.13} parent=104 // pred_fallthru
              _
          $region105: #{discriminator_forward.13} parent=100 // pred_fallthru
            _
          %1164 = vnop
        $region101: #{discriminator_forward.13} parent=80 // pred_fallthru
          _
      $region81: #{discriminator_forward.13} parent=5 // pred_fallthru
        _
      %p1165 = scmp.le.s32.totalorder 2, %s8
      // Predicated region
      $region121: #{discriminator_forward.13} parent=5 // pred_check
        %p1166 = pneg %p1165
      $region122: #{discriminator_forward.13} parent=5 // pred_check_branch
        %1168 = sbr.rel (%p1166) target = $region124
      $region123: #{discriminator_forward.13} parent=5 // pred_region
        %s1169 = ssub.s32 %s8, 2
        // Predicated region
        $region125: #{discriminator_forward.13} parent=123 // pred_check
          %p1170 = pneg %p114
        $region126: #{discriminator_forward.13} parent=123 // pred_check_branch
          %1172 = sbr.rel (%p1170) target = $region128
        $region127: #{discriminator_forward.13} parent=123 // pred_region
          %s1173 = sand.u32 %s99, 1
          %s1174 = sand.u32 %s99, 1
          %s1175 = smul.addr %s1174, 48
          %s1176 = scalar_lea.vmem [#allocation5], %s1175
        $region128: #{discriminator_forward.13} parent=123 // pred_fallthru
          _
      $region124: #{discriminator_forward.13} parent=5 // pred_fallthru
        _
    $region6: #{discriminator_forward.13} parent=1 // loop_footer
      %s12 = sadd.s32 1, %s8
    $region7: #{discriminator_forward.13} parent=1 // loop_footer_branch
      %7 = sbr.rel target = $region3
    $region8: #{discriminator_forward.13} parent=1 // loop_exit
      _

// kernel: discriminator_forward.15
$region0: #{discriminator_forward.15}
  #allocation0 [shape = 'u32[]', space=smem, size = 0x4, offset = 0x4, fixed_abs, tag = 'smem constant byte address 0x4 - core index']
  #allocation1 [shape = 'u32[72,128]{1,0:T(1,128)}', space=vmem, size = 0x9000, scoped, tag = 'internal scratch']
  #allocation2 [shape = 'f32[8,128]{1,0:T(8,128)}', space=vmem, size = 0x1000, scoped, tag = 'scratch operand']
  %s0 = inlined_call_operand.vmem [shape: bf16[8,8192], index: 0, kind: input, shape index: {}]
  %s1 = inlined_call_operand.vmem [shape: bf16[8192,128], index: 1, kind: input, shape index: {}]
  %s2 = inlined_call_operand.vmem [shape: f32[1,128], index: 2, kind: input, shape index: {}]
  %s3 = inlined_call_operand.vmem [shape: f32[8,128], index: 3, kind: output, shape index: {}]
  %s4 = sld [smem:[#allocation0]]
  $region53: #{discriminator_forward.15} parent=0
    _
  %s6 = ssub.s32 1, %s4
  %s7 = scalar_select 0, %s6, %s4
  loop: start=0, step=1, limit=18
  $region2: #{discriminator_forward.15} parent=0 // loop_pre_header
    _
  $region3: #{discriminator_forward.15} parent=0 // loop_header
    %s9 = sphi 0, %s13
    %p10 = scmp.ge.s32.totalorder %s9, 18
    %s16 = sphi 0, %s35
    %s17 = sphi 0, %s31
    %s18 = sphi 0, %s27
    %s19 = sphi 0, %s16
    %s20 = sphi 0, %s17
    %s21 = sphi 0, %s18
    %s22 = sphi 0, %s19
    %s23 = sphi 0, %s20
    %s24 = sphi 0, %s21
    %s40 = sphi 0, %s42
    %s43 = sphi 0, %s40
    %s44 = sphi 0, %s43
    %s60 = sphi 0, %s44
    %s68 = sphi 0, %s70
    %s71 = sphi 0, %s68
    %s72 = sphi 0, %s71
    %s88 = sphi 0, %s72
    %s94 = sphi 0, %s96
    %s97 = sphi 0, %s94
    %s98 = sphi 0, %s97
    %s114 = sphi 0, %s98
    %s122 = sphi 0, %s124
    %s125 = sphi 0, %s122
    %s126 = sphi 0, %s125
    %s142 = sphi 0, %s126
  $region4: #{discriminator_forward.15} parent=0 // loop_header_branch
    %12 = sbr.rel (%p10) target = $region8
  $region5: #{discriminator_forward.15} parent=0 // loop_body
    %s14 = ssub.s32 %s9, 1
    %s15 = ssub.s32 %s9, 2
    %s25 = sadd.s32 1, %s18
    %p26 = scmp.ge.s32.totalorder %s25, 16
    %s27 = scalar_select %p26, 0, %s25
    %s28 = sadd.s32 1, %s17
    %s29 = scalar_select %p26, %s28, %s17
    %p30 = scmp.ge.s32.totalorder %s29, 1
    %s31 = scalar_select %p30, 0, %s29
    %s32 = sadd.s32 1, %s16
    %s33 = scalar_select %p30, %s32, %s16
    %p34 = scmp.ge.s32.totalorder %s33, 1
    %s35 = scalar_select %p34, 0, %s33
    %s36 = ssub.s32 %s16, %s35
    %s37 = ssub.s32 %s18, %s27
    %s38 = sor.u32 %s36, %s37
    %p39 = scmp.eq.s32.totalorder %s38, 0
    %s41 = sadd.s32 %s40, 1
    %s42 = scalar_select %p39, %s40, %s41
    %p45 = pneg %p39
    %p46 = scmp.eq.s32.totalorder %s9, 15
    %p47 = por %p45, %p46
    %p48 = scmp.ne.s32.totalorder %s40, %s43
    %p49 = scmp.eq.s32.totalorder %s9, 0
    %p50 = por %p48, %p49
    %p51 = scmp.ne.s32.totalorder %s40, %s43
    %p52 = scmp.eq.s32.totalorder %s14, 15
    %p53 = por %p51, %p52
    %p54 = scmp.ne.s32.totalorder %s43, %s44
    %p55 = scmp.eq.s32.totalorder %s14, 0
    %p56 = por %p54, %p55
    %p57 = scmp.ne.s32.totalorder %s43, %s44
    %p58 = scmp.eq.s32.totalorder %s15, 15
    %p59 = por %p57, %p58
    %p61 = scmp.ne.s32.totalorder %s44, %s60
    %p62 = scmp.eq.s32.totalorder %s15, 0
    %p63 = por %p61, %p62
    %s64 = ssub.s32 %s18, %s27
    %s65 = ssub.s32 %s17, %s31
    %s66 = sor.u32 %s64, %s65
    %p67 = scmp.eq.s32.totalorder %s66, 0
    %s69 = sadd.s32 %s68, 1
    %s70 = scalar_select %p67, %s68, %s69
    %p73 = pneg %p67
    %p74 = scmp.eq.s32.totalorder %s9, 15
    %p75 = por %p73, %p74
    %p76 = scmp.ne.s32.totalorder %s68, %s71
    %p77 = scmp.eq.s32.totalorder %s9, 0
    %p78 = por %p76, %p77
    %p79 = scmp.ne.s32.totalorder %s68, %s71
    %p80 = scmp.eq.s32.totalorder %s14, 15
    %p81 = por %p79, %p80
    %p82 = scmp.ne.s32.totalorder %s71, %s72
    %p83 = scmp.eq.s32.totalorder %s14, 0
    %p84 = por %p82, %p83
    %p85 = scmp.ne.s32.totalorder %s71, %s72
    %p86 = scmp.eq.s32.totalorder %s15, 15
    %p87 = por %p85, %p86
    %p89 = scmp.ne.s32.totalorder %s72, %s88
    %p90 = scmp.eq.s32.totalorder %s15, 0
    %p91 = por %p89, %p90
    %s92 = ssub.s32 %s17, %s31
    %p93 = scmp.eq.s32.totalorder %s92, 0
    %s95 = sadd.s32 %s94, 1
    %s96 = scalar_select %p93, %s94, %s95
    %p99 = pneg %p93
    %p100 = scmp.eq.s32.totalorder %s9, 15
    %p101 = por %p99, %p100
    %p102 = scmp.ne.s32.totalorder %s94, %s97
    %p103 = scmp.eq.s32.totalorder %s9, 0
    %p104 = por %p102, %p103
    %p105 = scmp.ne.s32.totalorder %s94, %s97
    %p106 = scmp.eq.s32.totalorder %s14, 15
    %p107 = por %p105, %p106
    %p108 = scmp.ne.s32.totalorder %s97, %s98
    %p109 = scmp.eq.s32.totalorder %s14, 0
    %p110 = por %p108, %p109
    %p111 = scmp.ne.s32.totalorder %s97, %s98
    %p112 = scmp.eq.s32.totalorder %s15, 15
    %p113 = por %p111, %p112
    %p115 = scmp.ne.s32.totalorder %s98, %s114
    %p116 = scmp.eq.s32.totalorder %s15, 0
    %p117 = por %p115, %p116
    %s118 = ssub.s32 %s16, %s35
    %s119 = ssub.s32 %s17, %s31
    %s120 = sor.u32 %s118, %s119
    %p121 = scmp.eq.s32.totalorder %s120, 0
    %s123 = sadd.s32 %s122, 1
    %s124 = scalar_select %p121, %s122, %s123
    %p127 = pneg %p121
    %p128 = scmp.eq.s32.totalorder %s9, 15
    %p129 = por %p127, %p128
    %p130 = scmp.ne.s32.totalorder %s122, %s125
    %p131 = scmp.eq.s32.totalorder %s9, 0
    %p132 = por %p130, %p131
    %p133 = scmp.ne.s32.totalorder %s122, %s125
    %p134 = scmp.eq.s32.totalorder %s14, 15
    %p135 = por %p133, %p134
    %p136 = scmp.ne.s32.totalorder %s125, %s126
    %p137 = scmp.eq.s32.totalorder %s14, 0
    %p138 = por %p136, %p137
    %p139 = scmp.ne.s32.totalorder %s125, %s126
    %p140 = scmp.eq.s32.totalorder %s15, 15
    %p141 = por %p139, %p140
    %p143 = scmp.ne.s32.totalorder %s126, %s142
    %p144 = scmp.eq.s32.totalorder %s15, 0
    %p145 = por %p143, %p144
    %p146 = scmp.le.s32.totalorder 1, %s9
    %p147 = scmp.lt.s32.totalorder %s9, 17
    %p148 = pnand %p146, %p147
    %p149 = pneg %p148
    // Predicated region
    $region9: #{discriminator_forward.15} parent=5 // pred_check
      _
    $region10: #{discriminator_forward.15} parent=5 // pred_check_branch
      %151 = sbr.rel (%p148) target = $region12
    $region11: #{discriminator_forward.15} parent=5 // pred_region
      %s152 = ssub.s32 %s9, 1
      // Predicated region
      $region13: #{discriminator_forward.15} parent=11 // pred_check
        %p153 = pneg %p110
      $region14: #{discriminator_forward.15} parent=11 // pred_check_branch
        %155 = sbr.rel (%p153) target = $region16
      $region15: #{discriminator_forward.15} parent=11 // pred_region
        %p156 = scmp.lt.s32.totalorder %s20, 0
        %s157 = scalar_select %p156, %s20, 0
        %s158 = scalar_lea.vmem %s2, %s157
      $region16: #{discriminator_forward.15} parent=11 // pred_fallthru
        _
    $region12: #{discriminator_forward.15} parent=5 // pred_fallthru
      _
    %p159 = scmp.lt.s32.totalorder %s9, 16
    // Predicated region
    $region17: #{discriminator_forward.15} parent=5 // pred_check
      %p160 = pneg %p159
    $region18: #{discriminator_forward.15} parent=5 // pred_check_branch
      %162 = sbr.rel (%p160) target = $region20
    $region19: #{discriminator_forward.15} parent=5 // pred_region
      // Predicated region
      $region21: #{discriminator_forward.15} parent=19 // pred_check
        %p163 = pneg %p50
      $region22: #{discriminator_forward.15} parent=19 // pred_check_branch
        %165 = sbr.rel (%p163) target = $region24
      $region23: #{discriminator_forward.15} parent=19 // pred_region
        %s166 = smul.u32 4, %s18
        %p167 = scmp.lt.s32.totalorder %s16, 0
        %s168 = scalar_select %p167, %s16, 0
        %p169 = scmp.lt.s32.totalorder %s166, 63
        %s170 = scalar_select %p169, %s166, 63
        %s171 = smul.addr %s168, 64
        %s172 = sadd.s32 %s170, %s171
        %s173 = smul.addr %s172, 4
        %s174 = scalar_lea.vmem %s0, %s173
        %s175 = smul.u32 4, %s18
      $region24: #{discriminator_forward.15} parent=19 // pred_fallthru
        _
      // Predicated region
      $region25: #{discriminator_forward.15} parent=19 // pred_check
        %p176 = pneg %p78
      $region26: #{discriminator_forward.15} parent=19 // pred_check_branch
        %178 = sbr.rel (%p176) target = $region28
      $region27: #{discriminator_forward.15} parent=19 // pred_region
        %s179 = smul.u32 64, %s18
        %p180 = scmp.lt.s32.totalorder %s179, 1023
        %s181 = scalar_select %p180, %s179, 1023
        %p182 = scmp.lt.s32.totalorder %s17, 0
        %s183 = scalar_select %p182, %s17, 0
        %s184 = sadd.s32 %s183, %s181
        %s185 = smul.addr %s184, 4
        %s186 = scalar_lea.vmem %s1, %s185
        %s187 = smul.u32 64, %s18
      $region28: #{discriminator_forward.15} parent=19 // pred_fallthru
        _
    $region20: #{discriminator_forward.15} parent=5 // pred_fallthru
      _
    %p188 = scmp.le.s32.totalorder 1, %s9
    %p189 = scmp.lt.s32.totalorder %s9, 17
    %p190 = pnand %p188, %p189
    %p191 = pneg %p190
    // Predicated region
    $region29: #{discriminator_forward.15} parent=5 // pred_check
      _
    $region30: #{discriminator_forward.15} parent=5 // pred_check_branch
      %193 = sbr.rel (%p190) target = $region32
    $region31: #{discriminator_forward.15} parent=5 // pred_region
      %s194 = ssub.s32 %s9, 1
      %s195 = smul.u32 4, %s21
      %p196 = scmp.lt.s32.totalorder %s19, 0
      %s197 = scalar_select %p196, %s19, 0
      %p198 = scmp.lt.s32.totalorder %s195, 63
      %s199 = scalar_select %p198, %s195, 63
      %s200 = smul.addr %s197, 64
      %s201 = sadd.s32 %s199, %s200
      %s202 = smul.addr %s201, 4
      %s203 = scalar_lea.vmem %s0, %s202
      %p204 = pneg %p56
      %p205 = pneg %p53
      %s206 = smul.u32 64, %s21
      %p207 = scmp.lt.s32.totalorder %s206, 1023
      %s208 = scalar_select %p207, %s206, 1023
      %p209 = scmp.lt.s32.totalorder %s20, 0
      %s210 = scalar_select %p209, %s20, 0
      %s211 = sadd.s32 %s210, %s208
      %s212 = smul.addr %s211, 4
      %s213 = scalar_lea.vmem %s1, %s212
      %p214 = pneg %p84
      %p215 = pneg %p81
      %p216 = scmp.lt.s32.totalorder %s20, 0
      %s217 = scalar_select %p216, %s20, 0
      %s218 = scalar_lea.vmem %s2, %s217
      %p219 = pneg %p110
      %p220 = pneg %p107
      %p221 = pneg %p138
      %p222 = pneg %p135
      %p223 = scmp.lt.s32.totalorder %s19, 0
      %s224 = scalar_select %p223, %s19, 0
      %p225 = scmp.lt.s32.totalorder %s20, 0
      %s226 = scalar_select %p225, %s20, 0
      %s227 = sadd.s32 %s226, %s224
      %s228 = smul.addr %s227, 8
      %s229 = scalar_lea.vmem %s3, %s228
      %s230 = smul.u32 4, %s21
      %p231 = scmp.lt.s32.totalorder %s19, 0
      %s232 = scalar_select %p231, %s19, 0
      %p233 = scmp.lt.s32.totalorder %s230, 63
      %s234 = scalar_select %p233, %s230, 63
      %s235 = smul.addr %s232, 64
      %s236 = sadd.s32 %s234, %s235
      %s237 = smul.addr %s236, 4
      %s238 = scalar_lea.vmem %s0, %s237
      %s239 = smul.u32 4, %s21
      %s240 = smul.u32 64, %s21
      %p241 = scmp.lt.s32.totalorder %s240, 1023
      %s242 = scalar_select %p241, %s240, 1023
      %p243 = scmp.lt.s32.totalorder %s20, 0
      %s244 = scalar_select %p243, %s20, 0
      %s245 = sadd.s32 %s244, %s242
      %s246 = smul.addr %s245, 4
      %s247 = scalar_lea.vmem %s1, %s246
      %s248 = smul.u32 64, %s21
      %p249 = scmp.lt.s32.totalorder %s20, 0
      %s250 = scalar_select %p249, %s20, 0
      %s251 = scalar_lea.vmem %s2, %s250
      %p252 = scmp.lt.s32.totalorder %s19, 0
      %s253 = scalar_select %p252, %s19, 0
      %p254 = scmp.lt.s32.totalorder %s20, 0
      %s255 = scalar_select %p254, %s20, 0
      %s256 = sadd.s32 %s255, %s253
      %s257 = smul.addr %s256, 8
      %s258 = scalar_lea.vmem %s3, %s257
      %p259 = scmp.eq.s32.totalorder %s21, 0
      // Predicated region
      $region33: #{discriminator_forward.15} parent=31 // pred_check
        %p260 = pneg %p259
      $region34: #{discriminator_forward.15} parent=31 // pred_check_branch
        %262 = sbr.rel (%p260) target = $region36
      $region35: #{discriminator_forward.15} parent=31 // pred_region
        %263 = vst [vmem:[#allocation2] sm:$0xff] 0.0
      $region36: #{discriminator_forward.15} parent=31 // pred_fallthru
        _
      %v264 = vld [vmem:[#allocation2] sm:$0xff]
      %v265 = vld [vmem:[%s238] sm:$0xff]
      %v266 = vld [vmem:[%s238 + $0x8] sm:$0xff]
      %v267 = vld [vmem:[%s247] sm:$0xf]
      %v268 = vld [vmem:[%s247 + $0x4] sm:$0xf]
      %v269 = vld [vmem:[%s247 + $0x8] sm:$0xf]
      %v270 = vld [vmem:[%s247 + $0xc] sm:$0xf]
      %v271 = vld [vmem:[%s247 + $0x10] sm:$0xf]
      %v272 = vld [vmem:[%s247 + $0x14] sm:$0xf]
      %v273 = vld [vmem:[%s247 + $0x18] sm:$0xf]
      %v274 = vld [vmem:[%s247 + $0x1c] sm:$0xf]
      %v275 = vld [vmem:[%s247 + $0x20] sm:$0xf]
      %v276 = vld [vmem:[%s247 + $0x24] sm:$0xf]
      %v277 = vld [vmem:[%s247 + $0x28] sm:$0xf]
      %v278 = vld [vmem:[%s247 + $0x2c] sm:$0xf]
      %v279 = vld [vmem:[%s247 + $0x30] sm:$0xf]
      %v280 = vld [vmem:[%s247 + $0x34] sm:$0xf]
      %v281 = vld [vmem:[%s247 + $0x38] sm:$0xf]
      %v282 = vld [vmem:[%s247 + $0x3c] sm:$0xf]
      %v283 = vld [vmem:[%s247 + $0x40] sm:$0xf]
      %v284 = vld [vmem:[%s247 + $0x44] sm:$0xf]
      %v285 = vld [vmem:[%s247 + $0x48] sm:$0xf]
      %v286 = vld [vmem:[%s247 + $0x4c] sm:$0xf]
      %v287 = vld [vmem:[%s247 + $0x50] sm:$0xf]
      %v288 = vld [vmem:[%s247 + $0x54] sm:$0xf]
      %v289 = vld [vmem:[%s247 + $0x58] sm:$0xf]
      %v290 = vld [vmem:[%s247 + $0x5c] sm:$0xf]
      %v291 = vld [vmem:[%s247 + $0x60] sm:$0xf]
      %v292 = vld [vmem:[%s247 + $0x64] sm:$0xf]
      %v293 = vld [vmem:[%s247 + $0x68] sm:$0xf]
      %v294 = vld [vmem:[%s247 + $0x6c] sm:$0xf]
      %v295 = vld [vmem:[%s247 + $0x70] sm:$0xf]
      %v296 = vld [vmem:[%s247 + $0x74] sm:$0xf]
      %v297 = vld [vmem:[%s247 + $0x78] sm:$0xf]
      %v298 = vld [vmem:[%s247 + $0x7c] sm:$0xf]
      %v299 = vld [vmem:[%s247 + $0x80] sm:$0xf]
      %v300 = vld [vmem:[%s247 + $0x84] sm:$0xf]
      %v301 = vld [vmem:[%s247 + $0x88] sm:$0xf]
      %v302 = vld [vmem:[%s247 + $0x8c] sm:$0xf]
      %v303 = vld [vmem:[%s247 + $0x90] sm:$0xf]
      %v304 = vld [vmem:[%s247 + $0x94] sm:$0xf]
      %v305 = vld [vmem:[%s247 + $0x98] sm:$0xf]
      %v306 = vld [vmem:[%s247 + $0x9c] sm:$0xf]
      %v307 = vld [vmem:[%s247 + $0xa0] sm:$0xf]
      %v308 = vld [vmem:[%s247 + $0xa4] sm:$0xf]
      %v309 = vld [vmem:[%s247 + $0xa8] sm:$0xf]
      %v310 = vld [vmem:[%s247 + $0xac] sm:$0xf]
      %v311 = vld [vmem:[%s247 + $0xb0] sm:$0xf]
      %v312 = vld [vmem:[%s247 + $0xb4] sm:$0xf]
      %v313 = vld [vmem:[%s247 + $0xb8] sm:$0xf]
      %v314 = vld [vmem:[%s247 + $0xbc] sm:$0xf]
      %v315 = vld [vmem:[%s247 + $0xc0] sm:$0xf]
      %v316 = vld [vmem:[%s247 + $0xc4] sm:$0xf]
      %v317 = vld [vmem:[%s247 + $0xc8] sm:$0xf]
      %v318 = vld [vmem:[%s247 + $0xcc] sm:$0xf]
      %v319 = vld [vmem:[%s247 + $0xd0] sm:$0xf]
      %v320 = vld [vmem:[%s247 + $0xd4] sm:$0xf]
      %v321 = vld [vmem:[%s247 + $0xd8] sm:$0xf]
      %v322 = vld [vmem:[%s247 + $0xdc] sm:$0xf]
      %v323 = vld [vmem:[%s247 + $0xe0] sm:$0xf]
      %v324 = vld [vmem:[%s247 + $0xe4] sm:$0xf]
      %v325 = vld [vmem:[%s247 + $0xe8] sm:$0xf]
      %v326 = vld [vmem:[%s247 + $0xec] sm:$0xf]
      %v327 = vld [vmem:[%s247 + $0xf0] sm:$0xf]
      %v328 = vld [vmem:[%s247 + $0xf4] sm:$0xf]
      %v329 = vld [vmem:[%s247 + $0xf8] sm:$0xf]
      %v330 = vld [vmem:[%s247 + $0xfc] sm:$0xf]
      %v333 = vunpack.c.l.b16 %v265
      %v334 = vunpack.c.h.b16 %v265
      %v335 = vunpack.c.l.b16 %v266
      %v336 = vunpack.c.h.b16 %v266
      %v337 = vpack.c.b16 %v333, %v333
      %v338 = vpack.c.b16 %v334, %v334
      %v339 = vpack.c.b16 %v335, %v335
      %v340 = vpack.c.b16 %v336, %v336
      %v409 = vunpack.c.l.b16 %v267
      %v410 = vunpack.c.l.b16 %v268
      %v411 = vunpack.c.l.b16 %v269
      %v412 = vunpack.c.l.b16 %v270
      %v413 = vunpack.c.l.b16 %v271
      %v414 = vunpack.c.l.b16 %v272
      %v415 = vunpack.c.l.b16 %v273
      %v416 = vunpack.c.l.b16 %v274
      %v417 = vunpack.c.l.b16 %v275
      %v418 = vunpack.c.l.b16 %v276
      %v419 = vunpack.c.l.b16 %v277
      %v420 = vunpack.c.l.b16 %v278
      %v421 = vunpack.c.l.b16 %v279
      %v422 = vunpack.c.l.b16 %v280
      %v423 = vunpack.c.l.b16 %v281
      %v424 = vunpack.c.l.b16 %v282
      %v425 = vunpack.c.l.b16 %v283
      %v426 = vunpack.c.l.b16 %v284
      %v427 = vunpack.c.l.b16 %v285
      %v428 = vunpack.c.l.b16 %v286
      %v429 = vunpack.c.l.b16 %v287
      %v430 = vunpack.c.l.b16 %v288
      %v431 = vunpack.c.l.b16 %v289
      %v432 = vunpack.c.l.b16 %v290
      %v433 = vunpack.c.l.b16 %v291
      %v434 = vunpack.c.l.b16 %v292
      %v435 = vunpack.c.l.b16 %v293
      %v436 = vunpack.c.l.b16 %v294
      %v437 = vunpack.c.l.b16 %v295
      %v438 = vunpack.c.l.b16 %v296
      %v439 = vunpack.c.l.b16 %v297
      %v440 = vunpack.c.l.b16 %v298
      %v441 = vunpack.c.l.b16 %v299
      %v442 = vunpack.c.l.b16 %v300
      %v443 = vunpack.c.l.b16 %v301
      %v444 = vunpack.c.l.b16 %v302
      %v445 = vunpack.c.l.b16 %v303
      %v446 = vunpack.c.l.b16 %v304
      %v447 = vunpack.c.l.b16 %v305
      %v448 = vunpack.c.l.b16 %v306
      %v449 = vunpack.c.l.b16 %v307
      %v450 = vunpack.c.l.b16 %v308
      %v451 = vunpack.c.l.b16 %v309
      %v452 = vunpack.c.l.b16 %v310
      %v453 = vunpack.c.l.b16 %v311
      %v454 = vunpack.c.l.b16 %v312
      %v455 = vunpack.c.l.b16 %v313
      %v456 = vunpack.c.l.b16 %v314
      %v457 = vunpack.c.l.b16 %v315
      %v458 = vunpack.c.l.b16 %v316
      %v459 = vunpack.c.l.b16 %v317
      %v460 = vunpack.c.l.b16 %v318
      %v461 = vunpack.c.l.b16 %v319
      %v462 = vunpack.c.l.b16 %v320
      %v463 = vunpack.c.l.b16 %v321
      %v464 = vunpack.c.l.b16 %v322
      %v465 = vunpack.c.l.b16 %v323
      %v466 = vunpack.c.l.b16 %v324
      %v467 = vunpack.c.l.b16 %v325
      %v468 = vunpack.c.l.b16 %v326
      %v469 = vunpack.c.l.b16 %v327
      %v470 = vunpack.c.l.b16 %v328
      %v471 = vunpack.c.l.b16 %v329
      %v472 = vunpack.c.l.b16 %v330
      %v473 = vpack.c.b16 %v410, %v409
      %v474 = vpack.c.b16 %v412, %v411
      %v475 = vpack.c.b16 %v414, %v413
      %v476 = vpack.c.b16 %v416, %v415
      %v477 = vpack.c.b16 %v418, %v417
      %v478 = vpack.c.b16 %v420, %v419
      %v479 = vpack.c.b16 %v422, %v421
      %v480 = vpack.c.b16 %v424, %v423
      %v481 = vpack.c.b16 %v426, %v425
      %v482 = vpack.c.b16 %v428, %v427
      %v483 = vpack.c.b16 %v430, %v429
      %v484 = vpack.c.b16 %v432, %v431
      %v485 = vpack.c.b16 %v434, %v433
      %v486 = vpack.c.b16 %v436, %v435
      %v487 = vpack.c.b16 %v438, %v437
      %v488 = vpack.c.b16 %v440, %v439
      %v489 = vpack.c.b16 %v442, %v441
      %v490 = vpack.c.b16 %v444, %v443
      %v491 = vpack.c.b16 %v446, %v445
      %v492 = vpack.c.b16 %v448, %v447
      %v493 = vpack.c.b16 %v450, %v449
      %v494 = vpack.c.b16 %v452, %v451
      %v495 = vpack.c.b16 %v454, %v453
      %v496 = vpack.c.b16 %v456, %v455
      %v497 = vpack.c.b16 %v458, %v457
      %v498 = vpack.c.b16 %v460, %v459
      %v499 = vpack.c.b16 %v462, %v461
      %v500 = vpack.c.b16 %v464, %v463
      %v501 = vpack.c.b16 %v466, %v465
      %v502 = vpack.c.b16 %v468, %v467
      %v503 = vpack.c.b16 %v470, %v469
      %v504 = vpack.c.b16 %v472, %v471
      %537 = vmatpush.bf16.msra.mxu0 %v480
      %538 = vmatpush.bf16.msra.mxu0 %v479
      %539 = vmatpush.bf16.msra.mxu0 %v478
      %540 = vmatpush.bf16.msra.mxu0 %v477
      %541 = vmatpush.bf16.msra.mxu0 %v476
      %542 = vmatpush.bf16.msra.mxu0 %v475
      %543 = vmatpush.bf16.msra.mxu0 %v474
      %544 = vmatpush.bf16.msra.mxu0 %v473
      %545 = vmatmul.bf16.gmra.mxu0 %v337
      %v546 = vpop.f32.mrf.mxu0
      %v547 = vadd.f32 0.0, %v546
      %v548 = vpop.f32.mrf.mxu0
      %549 = vdwg.mxu0
      %550 = vmatpush.bf16.msra.mxu0 %v488
      %551 = vmatpush.bf16.msra.mxu0 %v487
      %552 = vmatpush.bf16.msra.mxu0 %v486
      %553 = vmatpush.bf16.msra.mxu0 %v485
      %554 = vmatpush.bf16.msra.mxu0 %v484
      %555 = vmatpush.bf16.msra.mxu0 %v483
      %556 = vmatpush.bf16.msra.mxu0 %v482
      %557 = vmatpush.bf16.msra.mxu0 %v481
      %558 = vmatmul.bf16.gmra.mxu0 %v338
      %v559 = vpop.f32.mrf.mxu0
      %v560 = vadd.f32 %v547, %v559
      %v561 = vpop.f32.mrf.mxu0
      %562 = vdwg.mxu0
      %563 = vmatpush.bf16.msra.mxu0 %v496
      %564 = vmatpush.bf16.msra.mxu0 %v495
      %565 = vmatpush.bf16.msra.mxu0 %v494
      %566 = vmatpush.bf16.msra.mxu0 %v493
      %567 = vmatpush.bf16.msra.mxu0 %v492
      %568 = vmatpush.bf16.msra.mxu0 %v491
      %569 = vmatpush.bf16.msra.mxu0 %v490
      %570 = vmatpush.bf16.msra.mxu0 %v489
      %571 = vmatmul.bf16.gmra.mxu0 %v339
      %v572 = vpop.f32.mrf.mxu0
      %v573 = vadd.f32 %v560, %v572
      %v574 = vpop.f32.mrf.mxu0
      %575 = vdwg.mxu0
      %576 = vmatpush.bf16.msra.mxu0 %v504
      %577 = vmatpush.bf16.msra.mxu0 %v503
      %578 = vmatpush.bf16.msra.mxu0 %v502
      %579 = vmatpush.bf16.msra.mxu0 %v501
      %580 = vmatpush.bf16.msra.mxu0 %v500
      %581 = vmatpush.bf16.msra.mxu0 %v499
      %582 = vmatpush.bf16.msra.mxu0 %v498
      %583 = vmatpush.bf16.msra.mxu0 %v497
      %584 = vmatmul.bf16.gmra.mxu0 %v340
      %v585 = vpop.f32.mrf.mxu0
      %v586 = vadd.f32 %v573, %v585
      %v587 = vpop.f32.mrf.mxu0
      %588 = vdwg.mxu0
      %v589 = vadd.f32 %v264, %v586
      %590 = vst [vmem:[#allocation2] sm:$0xff] %v589
      %p591 = scmp.eq.s32.totalorder %s21, 15
      // Predicated region
      $region37: #{discriminator_forward.15} parent=31 // pred_check
        %p592 = pneg %p591
      $region38: #{discriminator_forward.15} parent=31 // pred_check_branch
        %594 = sbr.rel (%p592) target = $region40
      $region39: #{discriminator_forward.15} parent=31 // pred_region
        %v595 = vld [vmem:[#allocation2] sm:$0xff]
        %v596 = vld [vmem:[%s251] sm:$0x1]
        %v598 = vperm.slane %v596, 0
        %v600 = vadd.f32 %v595, %v598
        %601 = vst [vmem:[%s258] sm:$0xff] %v600
      $region40: #{discriminator_forward.15} parent=31 // pred_fallthru
        _
      %p602 = scmp.lt.s32.totalorder %s19, 0
      %s603 = scalar_select %p602, %s19, 0
      %p604 = scmp.lt.s32.totalorder %s20, 0
      %s605 = scalar_select %p604, %s20, 0
      %s606 = sadd.s32 %s605, %s603
      %s607 = smul.addr %s606, 8
      %s608 = scalar_lea.vmem %s3, %s607
      // Predicated region
      $region41: #{discriminator_forward.15} parent=31 // pred_check
        %p609 = pneg %p135
      $region42: #{discriminator_forward.15} parent=31 // pred_check_branch
        %611 = sbr.rel (%p609) target = $region44
      $region43: #{discriminator_forward.15} parent=31 // pred_region
        _
      $region44: #{discriminator_forward.15} parent=31 // pred_fallthru
        _
      // Predicated region
      $region45: #{discriminator_forward.15} parent=31 // pred_check
        %p612 = pneg %p135
      $region46: #{discriminator_forward.15} parent=31 // pred_check_branch
        %614 = sbr.rel (%p612) target = $region48
      $region47: #{discriminator_forward.15} parent=31 // pred_region
        %p615 = scmp.lt.s32.totalorder %s19, 0
        %s616 = scalar_select %p615, %s19, 0
        %p617 = scmp.lt.s32.totalorder %s20, 0
        %s618 = scalar_select %p617, %s20, 0
        %s619 = sadd.s32 %s618, %s616
        %s620 = smul.addr %s619, 8
        %s621 = scalar_lea.vmem %s3, %s620
      $region48: #{discriminator_forward.15} parent=31 // pred_fallthru
        _
    $region32: #{discriminator_forward.15} parent=5 // pred_fallthru
      _
    %p622 = scmp.le.s32.totalorder 2, %s9
    // Predicated region
    $region49: #{discriminator_forward.15} parent=5 // pred_check
      %p623 = pneg %p622
    $region50: #{discriminator_forward.15} parent=5 // pred_check_branch
      %625 = sbr.rel (%p623) target = $region52
    $region51: #{discriminator_forward.15} parent=5 // pred_region
      %s626 = ssub.s32 %s9, 2
    $region52: #{discriminator_forward.15} parent=5 // pred_fallthru
      _
  $region6: #{discriminator_forward.15} parent=0 // loop_footer
    %s13 = sadd.s32 1, %s9
  $region7: #{discriminator_forward.15} parent=0 // loop_footer_branch
    %8 = sbr.rel target = $region3
  $region8: #{discriminator_forward.15} parent=0 // loop_exit
    _

</llo_original>
